<compile_context>
chip_gen: v6e
topology: v6e:2x2x1
jax: 0.10.0
libtpu: 0.0.40
codegen_flags: <defaults>
</compile_context>

<pallas_src>
import functools

import jax
import jax.numpy as jnp
from jax.experimental import pallas as pl
from jax.experimental.pallas import tpu as pltpu

EPS = 1e-6  # GroupNorm eps from the PyTorch module
_MIB = 1024 * 1024


def _round_up(x, m):
    return (x + m - 1) // m * m


def _tpu_vmem_capacity():
    try:
        return int(pltpu.get_tpu_info().vmem_capacity_bytes)
    except Exception:
        return 64 * _MIB  # conservative fallback (v7x per-TensorCore VMEM)


def _prefers_256_contraction():
    # v6e / v7x MXUs are 2x256x256 -> prefer K tile 256; v5e's 4x128^2 is matched by 128.
    try:
        kind = jax.devices()[0].device_kind.lower()
        return "v5" not in kind
    except Exception:
        return True


def _compiler_params(semantics, est_bytes):
    cap = _tpu_vmem_capacity()
    limit = int(min(0.9 * cap, max(32 * _MIB, 1.3 * est_bytes)))
    return pltpu.CompilerParams(dimension_semantics=semantics,
                                vmem_limit_bytes=limit)


# ---------------------------------------------------------------------------
# Fused GroupNorm(num_groups) + SiLU kernel.  One grid step = one sample.
#   Input : "rows" layout   [R = H*Wp, C]   (Wp - W zero/junk columns per image row).
#   Output: "padded" layout [P, C] bf16 -- the zero-padded image the 3x3 conv kernel
#           reads directly (valid data starts at the 16-aligned flat offset `doff`).
# ---------------------------------------------------------------------------
def _gn_silu_kernel(x_ref, m_ref, cg_ref, gc_ref, g_ref, b_ref, o_ref, *, inv_count, doff):
    P, C = o_ref.shape[1], o_ref.shape[2]
    R = x_ref.shape[1]
    x = x_ref[0].astype(jnp.float32)                # [R, C]
    m = m_ref[...]                                  # [R, 1] validity mask (1 on real pixels)
    xm = x * m
    s1 = jnp.sum(xm, axis=0, keepdims=True)         # [1, C] per-channel sum   (XLU reduce)
    s2 = jnp.sum(xm * xm, axis=0, keepdims=True)    # [1, C] per-channel sum of squares
    # Per-group stats via tiny [2,C]x[C,G] / [2,G]x[G,C] matmuls (groups are contiguous).
    gs = jnp.dot(jnp.concatenate([s1, s2], axis=0), cg_ref[...],
                 preferred_element_type=jnp.float32)            # [2, G]
    gmean = gs[0:1] * inv_count
    # TODO(synk): E[x^2]-E[x]^2 in f32; switch to shifted variance if tolerance tightens.
    gvar = gs[1:2] * inv_count - gmean * gmean
    ga = jax.lax.rsqrt(gvar + EPS)                              # [1, G]
    gb = -gmean * ga
    ab = jnp.dot(jnp.concatenate([ga, gb], axis=0), gc_ref[...],
                 preferred_element_type=jnp.float32)            # [2, C]
    a = ab[0:1] * g_ref[...]
    b = ab[1:2] * g_ref[...] + b_ref[...]
    y = x * a + b
    y = y * jax.nn.sigmoid(y)                                   # SiLU
    y = (y * m).astype(jnp.bfloat16)                            # zero the junk columns
    # Conv-ready zero-padded layout; all offsets/sizes are sublane-aligned by construction.
    o_ref[0, 0:doff, :] = jnp.zeros((doff, C), jnp.bfloat16)
    o_ref[0, doff:doff + R, :] = y
    o_ref[0, doff + R:P, :] = jnp.zeros((P - doff - R, C), jnp.bfloat16)


def gn_silu_pad(x_rows, mask, gamma, beta, *, num_groups, H, W, Wp, doff, P):
    N, R, C = x_rows.shape
    G = num_groups
    cpg = C // G
    gidx = jnp.arange(C) // cpg
    cg = (gidx[:, None] == jnp.arange(G)[None, :]).astype(jnp.float32)  # [C, G]
    gc = jnp.transpose(cg)                                              # [G, C]
    kernel = functools.partial(_gn_silu_kernel,
                               inv_count=1.0 / float(cpg * H * W), doff=doff)
    est = (2 * R * C * x_rows.dtype.itemsize     # input blocks (double buffered)
           + 2 * P * C * 2                       # bf16 padded output blocks
           + (2 * C * G + 2 * C + R) * 4)
    return pl.pallas_call(
        kernel,
        out_shape=jax.ShapeDtypeStruct((N, P, C), jnp.bfloat16),
        grid=(N,),
        in_specs=[
            pl.BlockSpec((1, R, C), lambda n: (n, 0, 0)),
            pl.BlockSpec((R, 1), lambda n: (0, 0)),
            pl.BlockSpec((C, G), lambda n: (0, 0)),
            pl.BlockSpec((G, C), lambda n: (0, 0)),
            pl.BlockSpec((1, C), lambda n: (0, 0)),
            pl.BlockSpec((1, C), lambda n: (0, 0)),
        ],
        out_specs=pl.BlockSpec((1, P, C), lambda n: (n, 0, 0)),
        compiler_params=_compiler_params(("parallel",), est),
    )(x_rows, mask, cg, gc,
      gamma.reshape(1, C).astype(jnp.float32),
      beta.reshape(1, C).astype(jnp.float32))


# ---------------------------------------------------------------------------
# 3x3 conv as 9 shifted matmuls on the padded row-flattened sample, f32 accumulation.
# Optional fused residual (1x1 projection or identity).  Output: rows layout [R, Cout].
# ---------------------------------------------------------------------------
def _taps_dot(xp_ref, w_ref, *, R, Wp, base):
    acc = None
    for ky in range(3):
        for kx in range(3):
            off = base + ky * Wp + kx                   # static offset
            patch = xp_ref[0, off:off + R, :]           # [R, tcin] bf16, contiguous slice
            d = jnp.dot(patch, w_ref[ky * 3 + kx],
                        preferred_element_type=jnp.float32)
            acc = d if acc is None else acc + d
    return acc


# -- KT == 1 (no K tiling): accumulate in registers, single store. -----------
def _conv_kernel(xp_ref, w_ref, b_ref, o_ref, *, R, Wp, base):
    acc = _taps_dot(xp_ref, w_ref, R=R, Wp=Wp, base=base) + b_ref[...]
    o_ref[0] = acc.astype(o_ref.dtype)


def _conv_kernel_res_id(xp_ref, w_ref, b_ref, xr_ref, o_ref, *, R, Wp, base):
    acc = (_taps_dot(xp_ref, w_ref, R=R, Wp=Wp, base=base) + b_ref[...]
           + xr_ref[0].astype(jnp.float32))             # identity residual kept in f32
    o_ref[0] = acc.astype(o_ref.dtype)


def _conv_kernel_res_proj(xp_ref, w_ref, b_ref, xr_ref, wr_ref, br_ref, o_ref, *, R, Wp, base):
    res = jnp.dot(xr_ref[0], wr_ref[...], preferred_element_type=jnp.float32) + br_ref[...]
    acc = _taps_dot(xp_ref, w_ref, R=R, Wp=Wp, base=base) + b_ref[...] + res
    o_ref[0] = acc.astype(o_ref.dtype)


# -- KT > 1: VMEM f32 accumulator, residual folded into the k==0 init. -------
def _conv_kernel_kt(xp_ref, w_ref, b_ref, o_ref, acc_ref, *, R, Wp, base):
    k = pl.program_id(2)

    @pl.when(k == 0)
    def _init():
        acc_ref[...] = jnp.zeros_like(acc_ref)

    acc_ref[...] = acc_ref[...] + _taps_dot(xp_ref, w_ref, R=R, Wp=Wp, base=base)

    @pl.when(k == pl.num_programs(2) - 1)
    def _fin():
        o_ref[0] = (acc_ref[...] + b_ref[...]).astype(o_ref.dtype)


def _conv_kernel_kt_res_id(xp_ref, w_ref, b_ref, xr_ref, o_ref, acc_ref, *, R, Wp, base):
    k = pl.program_id(2)

    @pl.when(k == 0)
    def _init():
        acc_ref[...] = xr_ref[0].astype(jnp.float32)

    acc_ref[...] = acc_ref[...] + _taps_dot(xp_ref, w_ref, R=R, Wp=Wp, base=base)

    @pl.when(k == pl.num_programs(2) - 1)
    def _fin():
        o_ref[0] = (acc_ref[...] + b_ref[...]).astype(o_ref.dtype)


def _conv_kernel_kt_res_proj(xp_ref, w_ref, b_ref, xr_ref, wr_ref, br_ref,
                             o_ref, acc_ref, *, R, Wp, base):
    k = pl.program_id(2)

    @pl.when(k == 0)
    def _init():
        acc_ref[...] = (jnp.dot(xr_ref[0], wr_ref[...],
                                preferred_element_type=jnp.float32) + br_ref[...])

    acc_ref[...] = acc_ref[...] + _taps_dot(xp_ref, w_ref, R=R, Wp=Wp, base=base)

    @pl.when(k == pl.num_programs(2) - 1)
    def _fin():
        o_ref[0] = (acc_ref[...] + b_ref[...]).astype(o_ref.dtype)


def conv3x3_rows(xp, w9, b, *, H, W, Wp, doff, residual=None, res_w=None, res_b=None,
                 out_dtype=jnp.float32):
    # xp: [N, P, Cin] bf16 padded rows; w9: [9, Cin, Cout] bf16 tap-major weights.
    N, P, Cin = xp.shape
    Cout = w9.shape[2]
    R = H * Wp
    base = doff - Wp - 1
    out_bytes = jnp.dtype(out_dtype).itemsize

    cap = _tpu_vmem_capacity()
    budget = int(0.55 * cap)

    # Cout tile: bounds weight/accumulator/output blocks; extra parallel axis for v7x.
    tcout = Cout
    if Cout > 256 and Cout % 256 == 0:
        tcout = 256
    elif Cout > 256 and Cout % 128 == 0:
        tcout = 128
    COT = Cout // tcout

    def est(tcin, ktiled):
        bts = 2 * P * tcin * 2 + 2 * 9 * tcin * tcout * 2 + 2 * R * tcout * out_bytes
        if residual is not None:
            bts += 2 * R * residual.shape[-1] * residual.dtype.itemsize
        if res_w is not None:
            bts += 2 * (res_w.shape[0] * tcout * 2 + tcout * 4)
        if ktiled:
            bts += R * tcout * 4
        return bts

    # K (input-channel) tile: only tile when the untiled working set does not fit; when
    # tiling, use the MXU-native contraction width (256 on v6e/v7x, 128 on v5e).
    tcin = Cin
    if Cin > 128 and est(Cin, False) > budget:
        pref = 256 if _prefers_256_contraction() else 128
        if Cin % pref == 0 and Cin > pref:
            tcin = pref
        elif Cin % 128 == 0:
            tcin = 128
    KT = Cin // tcin
    ktiled = KT > 1

    in_specs = [
        pl.BlockSpec((1, P, tcin), lambda n, j, k: (n, 0, k)),
        pl.BlockSpec((9, tcin, tcout), lambda n, j, k: (0, k, j)),
        pl.BlockSpec((1, tcout), lambda n, j, k: (0, j)),
    ]
    args = [xp, w9, b.reshape(1, Cout).astype(jnp.float32)]

    if residual is None:
        kernel = _conv_kernel_kt if ktiled else _conv_kernel
    elif res_w is None:                         # identity residual (Cr == Cout), f32
        in_specs.append(pl.BlockSpec((1, R, tcout), lambda n, j, k: (n, 0, j)))
        args.append(residual)
        kernel = _conv_kernel_kt_res_id if ktiled else _conv_kernel_res_id
    else:                                       # fused 1x1 projection residual
        Cr = residual.shape[-1]
        in_specs.append(pl.BlockSpec((1, R, Cr), lambda n, j, k: (n, 0, 0)))
        in_specs.append(pl.BlockSpec((Cr, tcout), lambda n, j, k: (0, j)))
        in_specs.append(pl.BlockSpec((1, tcout), lambda n, j, k: (0, j)))
        args.extend([residual, res_w, res_b.reshape(1, Cout).astype(jnp.float32)])
        kernel = _conv_kernel_kt_res_proj if ktiled else _conv_kernel_res_proj

    kernel = functools.partial(kernel, R=R, Wp=Wp, base=base)
    scratch = [pltpu.VMEM((R, tcout), jnp.float32)] if ktiled else []

    return pl.pallas_call(
        kernel,
        out_shape=jax.ShapeDtypeStruct((N, R, Cout), out_dtype),
        grid=(N, COT, KT),
        in_specs=in_specs,
        out_specs=pl.BlockSpec((1, R, tcout), lambda n, j, k: (n, 0, j)),
        scratch_shapes=scratch,
        compiler_params=_compiler_params(("parallel", "parallel", "arbitrary"),
                                         est(tcin, ktiled)),
    )(*args)


# ---------------------------------------------------------------------------
# Resnet forward (matches the PyTorch module semantics).
# ---------------------------------------------------------------------------
def resnet_forward(x, params, num_groups=32):
    N, Cin, H, W = x.shape
    Cout = params["conv1_w"].shape[0]

    # Row stride padded to a multiple of 8 sublanes; padded-data offset aligned to 16 so
    # the bf16 GN store and the kx==1 conv-tap slices are (8,128)-tile aligned.
    Wp = _round_up(W + 2, 8)
    doff = _round_up(Wp + 1, 16)
    R = H * Wp
    P = doff + (H + 2) * Wp

    # NCHW -> rows layout (transposes only at the module boundary).
    x_nhwc = jnp.transpose(x, (0, 2, 3, 1)).astype(jnp.float32)
    x_rows = jnp.pad(x_nhwc, ((0, 0), (0, 0), (0, Wp - W), (0, 0))).reshape(N, R, Cin)
    mask = ((jnp.arange(R) % Wp) < W).astype(jnp.float32).reshape(R, 1)

    # Conv weights: [Cout, Cin, 3, 3] -> tap-major [9, Cin, Cout], bf16 MXU operands.
    w1 = jnp.transpose(params["conv1_w"], (2, 3, 1, 0)).reshape(9, Cin, Cout).astype(jnp.bfloat16)
    w2 = jnp.transpose(params["conv2_w"], (2, 3, 1, 0)).reshape(9, Cout, Cout).astype(jnp.bfloat16)

    # GN1 + SiLU (writes conv-ready padded layout), then conv1 -> bf16 intermediate.
    h1 = gn_silu_pad(x_rows, mask, params["gn1_g"], params["gn1_b"],
                     num_groups=num_groups, H=H, W=W, Wp=Wp, doff=doff, P=P)
    c1 = conv3x3_rows(h1, w1, params["conv1_b"], H=H, W=W, Wp=Wp, doff=doff,
                      out_dtype=jnp.bfloat16)

    # GN2 + SiLU, then conv2 with the residual fused into its accumulator/epilogue.
    h2 = gn_silu_pad(c1, mask, params["gn2_g"], params["gn2_b"],
                     num_groups=num_groups, H=H, W=W, Wp=Wp, doff=doff, P=P)
    if "res_w" in params:                               # dim_in != dim_out -> 1x1 projection
        wr = params["res_w"][:, :, 0, 0].T.astype(jnp.bfloat16)   # [Cin, Cout]
        out = conv3x3_rows(h2, w2, params["conv2_b"], H=H, W=W, Wp=Wp, doff=doff,
                           residual=x_rows.astype(jnp.bfloat16),
                           res_w=wr, res_b=params["res_b"], out_dtype=jnp.float32)
    else:                                               # identity residual, exact f32
        out = conv3x3_rows(h2, w2, params["conv2_b"], H=H, W=W, Wp=Wp, doff=doff,
                           residual=x_rows, out_dtype=jnp.float32)

    # Drop the junk columns per row and go back to NCHW at the boundary.
    out = out.reshape(N, H, Wp, Cout)[:, :, :W, :]
    return jnp.transpose(out, (0, 3, 1, 2))


# ---------------------------------------------------------------------------
# Pure-JAX reference (correctness sanity check).
# ---------------------------------------------------------------------------
def _reference_forward(x, params, num_groups=32):
    def gn(h, g, b):
        N, C, H, W = h.shape
        hg = h.reshape(N, num_groups, (C // num_groups) * H * W)
        mean = hg.mean(axis=2, keepdims=True)
        var = hg.var(axis=2, keepdims=True)
        hn = ((hg - mean) / jnp.sqrt(var + EPS)).reshape(N, C, H, W)
        return hn * g.reshape(1, C, 1, 1) + b.reshape(1, C, 1, 1)

    def silu(h):
        return h * jax.nn.sigmoid(h)

    def conv(h, w, b, pad):
        out = jax.lax.conv_general_dilated(
            h, w, (1, 1), ((pad, pad), (pad, pad)),
            dimension_numbers=("NCHW", "OIHW", "NCHW"))
        return out + b.reshape(1, -1, 1, 1)

    h = conv(silu(gn(x, params["gn1_g"], params["gn1_b"])),
             params["conv1_w"], params["conv1_b"], 1)
    h = conv(silu(gn(h, params["gn2_g"], params["gn2_b"])),
             params["conv2_w"], params["conv2_b"], 1)
    if "res_w" in params:
        res = conv(x, params["res_w"], params["res_b"], 0)
    else:
        res = x
    return res + h


if __name__ == "__main__":
    key = jax.random.PRNGKey(0)
    keys = jax.random.split(key, 16)

    def rnd(k, shape, scale=0.05):
        return scale * jax.random.normal(k, shape, dtype=jnp.float32)

    def make_params(ks, dim_in, dim_out, with_res):
        p = {
            "gn1_g": jnp.ones((dim_in,), jnp.float32) + rnd(ks[0], (dim_in,)),
            "gn1_b": rnd(ks[1], (dim_in,)),
            "conv1_w": rnd(ks[2], (dim_out, dim_in, 3, 3)),
            "conv1_b": rnd(ks[3], (dim_out,)),
            "gn2_g": jnp.ones((dim_out,), jnp.float32) + rnd(ks[4], (dim_out,)),
            "gn2_b": rnd(ks[5], (dim_out,)),
            "conv2_w": rnd(ks[6], (dim_out, dim_out, 3, 3)),
            "conv2_b": rnd(ks[7], (dim_out,)),
        }
        if with_res:
            p["res_w"] = rnd(ks[8], (dim_out, dim_in, 1, 1))
            p["res_b"] = rnd(ks[9], (dim_out,))
        return p

    N, H, W = 2, 8, 8
    fwd = jax.jit(resnet_forward)

    # dim_in != dim_out -> 1x1 projection residual (GroupNorm(32) needs channels % 32 == 0).
    params_a = make_params(keys[:10], 32, 64, True)
    x_a = jax.random.normal(keys[10], (N, 32, H, W), dtype=jnp.float32)
    out_a = fwd(x_a, params_a)
    jax.block_until_ready(out_a)
    assert out_a.shape == (N, 64, H, W) and out_a.dtype == jnp.float32
    assert bool(jnp.allclose(out_a, _reference_forward(x_a, params_a), atol=5e-2, rtol=5e-2))

    # dim_in == dim_out -> identity residual (kept in f32).
    params_b = make_params(keys[5:15], 64, 64, False)
    x_b = jax.random.normal(keys[15], (N, 64, H, W), dtype=jnp.float32)
    out_b = fwd(x_b, params_b)
    jax.block_until_ready(out_b)
    assert out_b.shape == (N, 64, H, W) and out_b.dtype == jnp.float32
    assert bool(jnp.allclose(out_b, _reference_forward(x_b, params_b), atol=5e-2, rtol=5e-2))

    print("KERNEL_OK")
</pallas_src>

<mosaic_0001>
module attributes {stable_mosaic.version = 11 : i64} {
  func.func @_gn_silu_kernel(%arg0: i32, %arg1: memref<1x128x32xf32, #tpu.memory_space<vmem>>, %arg2: memref<128x1xf32, #tpu.memory_space<vmem>>, %arg3: memref<32x32xf32, #tpu.memory_space<vmem>>, %arg4: memref<32x32xf32, #tpu.memory_space<vmem>>, %arg5: memref<1x32xf32, #tpu.memory_space<vmem>>, %arg6: memref<1x32xf32, #tpu.memory_space<vmem>>, %arg7: memref<1x192x32xbf16, #tpu.memory_space<vmem>>) attributes {dimension_semantics = [#tpu.dimension_semantics<parallel>], iteration_bounds = array<i64: 2>, scalar_prefetch = 0 : i64, scratch_operands = 0 : i64, tpu.core_type = #tpu.core_type<tc>, window_params = [{transform_indices = @transform_0, window_bounds = array<i64: 1, 128, 32>}, {pipeline_mode = #tpu.pipeline_mode<synchronous>, transform_indices = @transform_1, window_bounds = array<i64: 128, 1>}, {pipeline_mode = #tpu.pipeline_mode<synchronous>, transform_indices = @transform_2, window_bounds = array<i64: 32, 32>}, {pipeline_mode = #tpu.pipeline_mode<synchronous>, transform_indices = @transform_3, window_bounds = array<i64: 32, 32>}, {pipeline_mode = #tpu.pipeline_mode<synchronous>, transform_indices = @transform_4, window_bounds = array<i64: 1, 32>}, {pipeline_mode = #tpu.pipeline_mode<synchronous>, transform_indices = @transform_5, window_bounds = array<i64: 1, 32>}, {transform_indices = @transform_6, window_bounds = array<i64: 1, 192, 32>}]} {
    %c0 = arith.constant 0 : index
    %c0_0 = arith.constant 0 : index
    %c0_1 = arith.constant 0 : index
    %0 = vector.load %arg1[%c0, %c0_0, %c0_1] : memref<1x128x32xf32, #tpu.memory_space<vmem>>, vector<1x128x32xf32>
    %1 = vector.shape_cast %0 : vector<1x128x32xf32> to vector<128x32xf32>
    %c0_2 = arith.constant 0 : index
    %c0_3 = arith.constant 0 : index
    %2 = vector.load %arg2[%c0_2, %c0_3] : memref<128x1xf32, #tpu.memory_space<vmem>>, vector<128x1xf32>
    %3 = vector.broadcast %2 : vector<128x1xf32> to vector<128x32xf32>
    %4 = arith.mulf %1, %3 : vector<128x32xf32>
    %cst = arith.constant dense<0.000000e+00> : vector<32xf32>
    %5 = vector.multi_reduction <add>, %4, %cst [0] : vector<128x32xf32> to vector<32xf32>
    %6 = vector.shape_cast %5 : vector<32xf32> to vector<1x32xf32>
    %7 = arith.mulf %4, %4 : vector<128x32xf32>
    %cst_4 = arith.constant dense<0.000000e+00> : vector<32xf32>
    %8 = vector.multi_reduction <add>, %7, %cst_4 [0] : vector<128x32xf32> to vector<32xf32>
    %9 = vector.shape_cast %8 : vector<32xf32> to vector<1x32xf32>
    %10 = tpu.concatenate %6, %9 in 0 : vector<1x32xf32>, vector<1x32xf32> -> vector<2x32xf32>
    %c0_5 = arith.constant 0 : index
    %c0_6 = arith.constant 0 : index
    %11 = vector.load %arg3[%c0_5, %c0_6] : memref<32x32xf32, #tpu.memory_space<vmem>>, vector<32x32xf32>
    %cst_7 = arith.constant dense<0.000000e+00> : vector<2x32xf32>
    %12 = tpu.matmul %10, %11, %cst_7 {dimension_numbers = #tpu.dot_dimension_numbers<[1], [0], [0], [1], [0, 0, 1, 1], [], []>} : vector<2x32xf32>, vector<32x32xf32>, vector<2x32xf32> -> vector<2x32xf32>
    %13 = vector.extract_strided_slice %12 {offsets = [0, 0], sizes = [1, 32], strides = [1, 1]} : vector<2x32xf32> to vector<1x32xf32>
    %cst_8 = arith.constant 1.562500e-02 : f32
    %14 = vector.broadcast %cst_8 : f32 to vector<1x32xf32>
    %15 = arith.mulf %13, %14 : vector<1x32xf32>
    %16 = vector.extract_strided_slice %12 {offsets = [1, 0], sizes = [1, 32], strides = [1, 1]} : vector<2x32xf32> to vector<1x32xf32>
    %cst_9 = arith.constant 1.562500e-02 : f32
    %17 = vector.broadcast %cst_9 : f32 to vector<1x32xf32>
    %18 = arith.mulf %16, %17 : vector<1x32xf32>
    %19 = arith.mulf %15, %15 : vector<1x32xf32>
    %20 = arith.subf %18, %19 : vector<1x32xf32>
    %cst_10 = arith.constant 9.99999997E-7 : f32
    %21 = vector.broadcast %cst_10 : f32 to vector<1x32xf32>
    %22 = arith.addf %20, %21 : vector<1x32xf32>
    %23 = math.rsqrt %22 : vector<1x32xf32>
    %cst_11 = arith.constant 0.000000e+00 : f32
    %24 = vector.broadcast %cst_11 : f32 to vector<1x32xf32>
    %25 = arith.subf %24, %15 : vector<1x32xf32>
    %26 = arith.mulf %25, %23 : vector<1x32xf32>
    %27 = tpu.concatenate %23, %26 in 0 : vector<1x32xf32>, vector<1x32xf32> -> vector<2x32xf32>
    %c0_12 = arith.constant 0 : index
    %c0_13 = arith.constant 0 : index
    %28 = vector.load %arg4[%c0_12, %c0_13] : memref<32x32xf32, #tpu.memory_space<vmem>>, vector<32x32xf32>
    %cst_14 = arith.constant dense<0.000000e+00> : vector<2x32xf32>
    %29 = tpu.matmul %27, %28, %cst_14 {dimension_numbers = #tpu.dot_dimension_numbers<[1], [0], [0], [1], [0, 0, 1, 1], [], []>} : vector<2x32xf32>, vector<32x32xf32>, vector<2x32xf32> -> vector<2x32xf32>
    %30 = vector.extract_strided_slice %29 {offsets = [0, 0], sizes = [1, 32], strides = [1, 1]} : vector<2x32xf32> to vector<1x32xf32>
    %c0_15 = arith.constant 0 : index
    %c0_16 = arith.constant 0 : index
    %31 = vector.load %arg5[%c0_15, %c0_16] : memref<1x32xf32, #tpu.memory_space<vmem>>, vector<1x32xf32>
    %32 = arith.mulf %30, %31 : vector<1x32xf32>
    %33 = vector.extract_strided_slice %29 {offsets = [1, 0], sizes = [1, 32], strides = [1, 1]} : vector<2x32xf32> to vector<1x32xf32>
    %c0_17 = arith.constant 0 : index
    %c0_18 = arith.constant 0 : index
    %34 = vector.load %arg5[%c0_17, %c0_18] : memref<1x32xf32, #tpu.memory_space<vmem>>, vector<1x32xf32>
    %35 = arith.mulf %33, %34 : vector<1x32xf32>
    %c0_19 = arith.constant 0 : index
    %c0_20 = arith.constant 0 : index
    %36 = vector.load %arg6[%c0_19, %c0_20] : memref<1x32xf32, #tpu.memory_space<vmem>>, vector<1x32xf32>
    %37 = arith.addf %35, %36 : vector<1x32xf32>
    %38 = vector.broadcast %32 : vector<1x32xf32> to vector<128x32xf32>
    %39 = arith.mulf %1, %38 : vector<128x32xf32>
    %40 = vector.broadcast %37 : vector<1x32xf32> to vector<128x32xf32>
    %41 = arith.addf %39, %40 : vector<128x32xf32>
    %42 = arith.negf %41 : vector<128x32xf32>
    %43 = math.exp %42 : vector<128x32xf32>
    %cst_21 = arith.constant 1.000000e+00 : f32
    %44 = vector.broadcast %cst_21 : f32 to vector<128x32xf32>
    %45 = arith.addf %44, %43 : vector<128x32xf32>
    %46 = arith.divf %44, %45 : vector<128x32xf32>
    %47 = arith.mulf %41, %46 : vector<128x32xf32>
    %48 = vector.broadcast %2 : vector<128x1xf32> to vector<128x32xf32>
    %49 = arith.mulf %47, %48 : vector<128x32xf32>
    %50 = arith.truncf %49 : vector<128x32xf32> to vector<128x32xbf16>
    %cst_22 = arith.constant 0.000000e+00 : bf16
    %51 = vector.broadcast %cst_22 : bf16 to vector<32x32xbf16>
    %c0_23 = arith.constant 0 : index
    %c0_24 = arith.constant 0 : index
    %c0_25 = arith.constant 0 : index
    %52 = vector.load %arg7[%c0_23, %c0_24, %c0_25] : memref<1x192x32xbf16, #tpu.memory_space<vmem>>, vector<1x32x32xbf16>
    %53 = vector.shape_cast %52 : vector<1x32x32xbf16> to vector<32x32xbf16>
    %54 = vector.shape_cast %51 : vector<32x32xbf16> to vector<1x32x32xbf16>
    tpu.vector_store %arg7[%c0_23, %c0_24, %c0_25], %54 {strides = array<i32>} : memref<1x192x32xbf16, #tpu.memory_space<vmem>>, vector<1x32x32xbf16>,
    %c0_26 = arith.constant 0 : index
    %c32 = arith.constant 32 : index
    %c0_27 = arith.constant 0 : index
    %55 = vector.load %arg7[%c0_26, %c32, %c0_27] : memref<1x192x32xbf16, #tpu.memory_space<vmem>>, vector<1x128x32xbf16>
    %56 = vector.shape_cast %55 : vector<1x128x32xbf16> to vector<128x32xbf16>
    %57 = vector.shape_cast %50 : vector<128x32xbf16> to vector<1x128x32xbf16>
    tpu.vector_store %arg7[%c0_26, %c32, %c0_27], %57 {strides = array<i32>} : memref<1x192x32xbf16, #tpu.memory_space<vmem>>, vector<1x128x32xbf16>,
    %cst_28 = arith.constant 0.000000e+00 : bf16
    %58 = vector.broadcast %cst_28 : bf16 to vector<32x32xbf16>
    %c0_29 = arith.constant 0 : index
    %c160 = arith.constant 160 : index
    %c0_30 = arith.constant 0 : index
    %59 = vector.load %arg7[%c0_29, %c160, %c0_30] : memref<1x192x32xbf16, #tpu.memory_space<vmem>>, vector<1x32x32xbf16>
    %60 = vector.shape_cast %59 : vector<1x32x32xbf16> to vector<32x32xbf16>
    %61 = vector.shape_cast %58 : vector<32x32xbf16> to vector<1x32x32xbf16>
    tpu.vector_store %arg7[%c0_29, %c160, %c0_30], %61 {strides = array<i32>} : memref<1x192x32xbf16, #tpu.memory_space<vmem>>, vector<1x32x32xbf16>,
    return
  }
  func.func @transform_0(%arg0: i32) -> (i32, i32, i32) {
    %c0_i32 = arith.constant 0 : i32
    %c0_i32_0 = arith.constant 0 : i32
    %c0_i32_1 = arith.constant 0 : i32
    return %arg0, %c0_i32, %c0_i32_0 : i32, i32, i32
  }
  func.func @transform_1(%arg0: i32) -> (i32, i32) {
    %c0_i32 = arith.constant 0 : i32
    %c0_i32_0 = arith.constant 0 : i32
    %c0_i32_1 = arith.constant 0 : i32
    return %c0_i32, %c0_i32_0 : i32, i32
  }
  func.func @transform_2(%arg0: i32) -> (i32, i32) {
    %c0_i32 = arith.constant 0 : i32
    %c0_i32_0 = arith.constant 0 : i32
    %c0_i32_1 = arith.constant 0 : i32
    return %c0_i32, %c0_i32_0 : i32, i32
  }
  func.func @transform_3(%arg0: i32) -> (i32, i32) {
    %c0_i32 = arith.constant 0 : i32
    %c0_i32_0 = arith.constant 0 : i32
    %c0_i32_1 = arith.constant 0 : i32
    return %c0_i32, %c0_i32_0 : i32, i32
  }
  func.func @transform_4(%arg0: i32) -> (i32, i32) {
    %c0_i32 = arith.constant 0 : i32
    %c0_i32_0 = arith.constant 0 : i32
    %c0_i32_1 = arith.constant 0 : i32
    return %c0_i32, %c0_i32_0 : i32, i32
  }
  func.func @transform_5(%arg0: i32) -> (i32, i32) {
    %c0_i32 = arith.constant 0 : i32
    %c0_i32_0 = arith.constant 0 : i32
    %c0_i32_1 = arith.constant 0 : i32
    return %c0_i32, %c0_i32_0 : i32, i32
  }
  func.func @transform_6(%arg0: i32) -> (i32, i32, i32) {
    %c0_i32 = arith.constant 0 : i32
    %c0_i32_0 = arith.constant 0 : i32
    %c0_i32_1 = arith.constant 0 : i32
    return %arg0, %c0_i32, %c0_i32_0 : i32, i32, i32
  }
}

module attributes {stable_mosaic.version = 11 : i64} {
  func.func @_conv_kernel(%arg0: i32, %arg1: i32, %arg2: i32, %arg3: memref<1x192x32xbf16, #tpu.memory_space<vmem>>, %arg4: memref<9x32x64xbf16, #tpu.memory_space<vmem>>, %arg5: memref<1x64xf32, #tpu.memory_space<vmem>>, %arg6: memref<1x128x64xbf16, #tpu.memory_space<vmem>>) attributes {dimension_semantics = [#tpu.dimension_semantics<parallel>, #tpu.dimension_semantics<parallel>, #tpu.dimension_semantics<arbitrary>], iteration_bounds = array<i64: 2, 1, 1>, scalar_prefetch = 0 : i64, scratch_operands = 0 : i64, tpu.core_type = #tpu.core_type<tc>, window_params = [{transform_indices = @transform_0, window_bounds = array<i64: 1, 192, 32>}, {transform_indices = @transform_1, window_bounds = array<i64: 9, 32, 64>}, {transform_indices = @transform_2, window_bounds = array<i64: 1, 64>}, {transform_indices = @transform_3, window_bounds = array<i64: 1, 128, 64>}]} {
    %c0 = arith.constant 0 : index
    %c15 = arith.constant 15 : index
    %c0_0 = arith.constant 0 : index
    %0 = vector.load %arg3[%c0, %c15, %c0_0] : memref<1x192x32xbf16, #tpu.memory_space<vmem>>, vector<1x128x32xbf16>
    %1 = vector.shape_cast %0 : vector<1x128x32xbf16> to vector<128x32xbf16>
    %c0_1 = arith.constant 0 : index
    %c0_2 = arith.constant 0 : index
    %c0_3 = arith.constant 0 : index
    %2 = vector.load %arg4[%c0_1, %c0_2, %c0_3] : memref<9x32x64xbf16, #tpu.memory_space<vmem>>, vector<1x32x64xbf16>
    %3 = vector.shape_cast %2 : vector<1x32x64xbf16> to vector<32x64xbf16>
    %cst = arith.constant dense<0.000000e+00> : vector<128x64xf32>
    %4 = tpu.matmul %1, %3, %cst {dimension_numbers = #tpu.dot_dimension_numbers<[1], [0], [0], [1], [0, 0, 1, 1], [], []>} : vector<128x32xbf16>, vector<32x64xbf16>, vector<128x64xf32> -> vector<128x64xf32>
    %c0_4 = arith.constant 0 : index
    %c16 = arith.constant 16 : index
    %c0_5 = arith.constant 0 : index
    %5 = vector.load %arg3[%c0_4, %c16, %c0_5] : memref<1x192x32xbf16, #tpu.memory_space<vmem>>, vector<1x128x32xbf16>
    %6 = vector.shape_cast %5 : vector<1x128x32xbf16> to vector<128x32xbf16>
    %c1 = arith.constant 1 : index
    %c0_6 = arith.constant 0 : index
    %c0_7 = arith.constant 0 : index
    %7 = vector.load %arg4[%c1, %c0_6, %c0_7] : memref<9x32x64xbf16, #tpu.memory_space<vmem>>, vector<1x32x64xbf16>
    %8 = vector.shape_cast %7 : vector<1x32x64xbf16> to vector<32x64xbf16>
    %cst_8 = arith.constant dense<0.000000e+00> : vector<128x64xf32>
    %9 = tpu.matmul %6, %8, %cst_8 {dimension_numbers = #tpu.dot_dimension_numbers<[1], [0], [0], [1], [0, 0, 1, 1], [], []>} : vector<128x32xbf16>, vector<32x64xbf16>, vector<128x64xf32> -> vector<128x64xf32>
    %10 = arith.addf %4, %9 : vector<128x64xf32>
    %c0_9 = arith.constant 0 : index
    %c17 = arith.constant 17 : index
    %c0_10 = arith.constant 0 : index
    %11 = vector.load %arg3[%c0_9, %c17, %c0_10] : memref<1x192x32xbf16, #tpu.memory_space<vmem>>, vector<1x128x32xbf16>
    %12 = vector.shape_cast %11 : vector<1x128x32xbf16> to vector<128x32xbf16>
    %c2 = arith.constant 2 : index
    %c0_11 = arith.constant 0 : index
    %c0_12 = arith.constant 0 : index
    %13 = vector.load %arg4[%c2, %c0_11, %c0_12] : memref<9x32x64xbf16, #tpu.memory_space<vmem>>, vector<1x32x64xbf16>
    %14 = vector.shape_cast %13 : vector<1x32x64xbf16> to vector<32x64xbf16>
    %cst_13 = arith.constant dense<0.000000e+00> : vector<128x64xf32>
    %15 = tpu.matmul %12, %14, %cst_13 {dimension_numbers = #tpu.dot_dimension_numbers<[1], [0], [0], [1], [0, 0, 1, 1], [], []>} : vector<128x32xbf16>, vector<32x64xbf16>, vector<128x64xf32> -> vector<128x64xf32>
    %16 = arith.addf %10, %15 : vector<128x64xf32>
    %c0_14 = arith.constant 0 : index
    %c31 = arith.constant 31 : index
    %c0_15 = arith.constant 0 : index
    %17 = vector.load %arg3[%c0_14, %c31, %c0_15] : memref<1x192x32xbf16, #tpu.memory_space<vmem>>, vector<1x128x32xbf16>
    %18 = vector.shape_cast %17 : vector<1x128x32xbf16> to vector<128x32xbf16>
    %c3 = arith.constant 3 : index
    %c0_16 = arith.constant 0 : index
    %c0_17 = arith.constant 0 : index
    %19 = vector.load %arg4[%c3, %c0_16, %c0_17] : memref<9x32x64xbf16, #tpu.memory_space<vmem>>, vector<1x32x64xbf16>
    %20 = vector.shape_cast %19 : vector<1x32x64xbf16> to vector<32x64xbf16>
    %cst_18 = arith.constant dense<0.000000e+00> : vector<128x64xf32>
    %21 = tpu.matmul %18, %20, %cst_18 {dimension_numbers = #tpu.dot_dimension_numbers<[1], [0], [0], [1], [0, 0, 1, 1], [], []>} : vector<128x32xbf16>, vector<32x64xbf16>, vector<128x64xf32> -> vector<128x64xf32>
    %22 = arith.addf %16, %21 : vector<128x64xf32>
    %c0_19 = arith.constant 0 : index
    %c32 = arith.constant 32 : index
    %c0_20 = arith.constant 0 : index
    %23 = vector.load %arg3[%c0_19, %c32, %c0_20] : memref<1x192x32xbf16, #tpu.memory_space<vmem>>, vector<1x128x32xbf16>
    %24 = vector.shape_cast %23 : vector<1x128x32xbf16> to vector<128x32xbf16>
    %c4 = arith.constant 4 : index
    %c0_21 = arith.constant 0 : index
    %c0_22 = arith.constant 0 : index
    %25 = vector.load %arg4[%c4, %c0_21, %c0_22] : memref<9x32x64xbf16, #tpu.memory_space<vmem>>, vector<1x32x64xbf16>
    %26 = vector.shape_cast %25 : vector<1x32x64xbf16> to vector<32x64xbf16>
    %cst_23 = arith.constant dense<0.000000e+00> : vector<128x64xf32>
    %27 = tpu.matmul %24, %26, %cst_23 {dimension_numbers = #tpu.dot_dimension_numbers<[1], [0], [0], [1], [0, 0, 1, 1], [], []>} : vector<128x32xbf16>, vector<32x64xbf16>, vector<128x64xf32> -> vector<128x64xf32>
    %28 = arith.addf %22, %27 : vector<128x64xf32>
    %c0_24 = arith.constant 0 : index
    %c33 = arith.constant 33 : index
    %c0_25 = arith.constant 0 : index
    %29 = vector.load %arg3[%c0_24, %c33, %c0_25] : memref<1x192x32xbf16, #tpu.memory_space<vmem>>, vector<1x128x32xbf16>
    %30 = vector.shape_cast %29 : vector<1x128x32xbf16> to vector<128x32xbf16>
    %c5 = arith.constant 5 : index
    %c0_26 = arith.constant 0 : index
    %c0_27 = arith.constant 0 : index
    %31 = vector.load %arg4[%c5, %c0_26, %c0_27] : memref<9x32x64xbf16, #tpu.memory_space<vmem>>, vector<1x32x64xbf16>
    %32 = vector.shape_cast %31 : vector<1x32x64xbf16> to vector<32x64xbf16>
    %cst_28 = arith.constant dense<0.000000e+00> : vector<128x64xf32>
    %33 = tpu.matmul %30, %32, %cst_28 {dimension_numbers = #tpu.dot_dimension_numbers<[1], [0], [0], [1], [0, 0, 1, 1], [], []>} : vector<128x32xbf16>, vector<32x64xbf16>, vector<128x64xf32> -> vector<128x64xf32>
    %34 = arith.addf %28, %33 : vector<128x64xf32>
    %c0_29 = arith.constant 0 : index
    %c47 = arith.constant 47 : index
    %c0_30 = arith.constant 0 : index
    %35 = vector.load %arg3[%c0_29, %c47, %c0_30] : memref<1x192x32xbf16, #tpu.memory_space<vmem>>, vector<1x128x32xbf16>
    %36 = vector.shape_cast %35 : vector<1x128x32xbf16> to vector<128x32xbf16>
    %c6 = arith.constant 6 : index
    %c0_31 = arith.constant 0 : index
    %c0_32 = arith.constant 0 : index
    %37 = vector.load %arg4[%c6, %c0_31, %c0_32] : memref<9x32x64xbf16, #tpu.memory_space<vmem>>, vector<1x32x64xbf16>
    %38 = vector.shape_cast %37 : vector<1x32x64xbf16> to vector<32x64xbf16>
    %cst_33 = arith.constant dense<0.000000e+00> : vector<128x64xf32>
    %39 = tpu.matmul %36, %38, %cst_33 {dimension_numbers = #tpu.dot_dimension_numbers<[1], [0], [0], [1], [0, 0, 1, 1], [], []>} : vector<128x32xbf16>, vector<32x64xbf16>, vector<128x64xf32> -> vector<128x64xf32>
    %40 = arith.addf %34, %39 : vector<128x64xf32>
    %c0_34 = arith.constant 0 : index
    %c48 = arith.constant 48 : index
    %c0_35 = arith.constant 0 : index
    %41 = vector.load %arg3[%c0_34, %c48, %c0_35] : memref<1x192x32xbf16, #tpu.memory_space<vmem>>, vector<1x128x32xbf16>
    %42 = vector.shape_cast %41 : vector<1x128x32xbf16> to vector<128x32xbf16>
    %c7 = arith.constant 7 : index
    %c0_36 = arith.constant 0 : index
    %c0_37 = arith.constant 0 : index
    %43 = vector.load %arg4[%c7, %c0_36, %c0_37] : memref<9x32x64xbf16, #tpu.memory_space<vmem>>, vector<1x32x64xbf16>
    %44 = vector.shape_cast %43 : vector<1x32x64xbf16> to vector<32x64xbf16>
    %cst_38 = arith.constant dense<0.000000e+00> : vector<128x64xf32>
    %45 = tpu.matmul %42, %44, %cst_38 {dimension_numbers = #tpu.dot_dimension_numbers<[1], [0], [0], [1], [0, 0, 1, 1], [], []>} : vector<128x32xbf16>, vector<32x64xbf16>, vector<128x64xf32> -> vector<128x64xf32>
    %46 = arith.addf %40, %45 : vector<128x64xf32>
    %c0_39 = arith.constant 0 : index
    %c49 = arith.constant 49 : index
    %c0_40 = arith.constant 0 : index
    %47 = vector.load %arg3[%c0_39, %c49, %c0_40] : memref<1x192x32xbf16, #tpu.memory_space<vmem>>, vector<1x128x32xbf16>
    %48 = vector.shape_cast %47 : vector<1x128x32xbf16> to vector<128x32xbf16>
    %c8 = arith.constant 8 : index
    %c0_41 = arith.constant 0 : index
    %c0_42 = arith.constant 0 : index
    %49 = vector.load %arg4[%c8, %c0_41, %c0_42] : memref<9x32x64xbf16, #tpu.memory_space<vmem>>, vector<1x32x64xbf16>
    %50 = vector.shape_cast %49 : vector<1x32x64xbf16> to vector<32x64xbf16>
    %cst_43 = arith.constant dense<0.000000e+00> : vector<128x64xf32>
    %51 = tpu.matmul %48, %50, %cst_43 {dimension_numbers = #tpu.dot_dimension_numbers<[1], [0], [0], [1], [0, 0, 1, 1], [], []>} : vector<128x32xbf16>, vector<32x64xbf16>, vector<128x64xf32> -> vector<128x64xf32>
    %52 = arith.addf %46, %51 : vector<128x64xf32>
    %c0_44 = arith.constant 0 : index
    %c0_45 = arith.constant 0 : index
    %53 = vector.load %arg5[%c0_44, %c0_45] : memref<1x64xf32, #tpu.memory_space<vmem>>, vector<1x64xf32>
    %54 = vector.broadcast %53 : vector<1x64xf32> to vector<128x64xf32>
    %55 = arith.addf %52, %54 : vector<128x64xf32>
    %56 = arith.truncf %55 : vector<128x64xf32> to vector<128x64xbf16>
    %c0_46 = arith.constant 0 : index
    %c0_47 = arith.constant 0 : index
    %c0_48 = arith.constant 0 : index
    %57 = vector.load %arg6[%c0_46, %c0_47, %c0_48] : memref<1x128x64xbf16, #tpu.memory_space<vmem>>, vector<1x128x64xbf16>
    %58 = vector.shape_cast %57 : vector<1x128x64xbf16> to vector<128x64xbf16>
    %59 = vector.shape_cast %56 : vector<128x64xbf16> to vector<1x128x64xbf16>
    tpu.vector_store %arg6[%c0_46, %c0_47, %c0_48], %59 {strides = array<i32>} : memref<1x128x64xbf16, #tpu.memory_space<vmem>>, vector<1x128x64xbf16>,
    return
  }
  func.func @transform_0(%arg0: i32, %arg1: i32, %arg2: i32) -> (i32, i32, i32) {
    %c0_i32 = arith.constant 0 : i32
    %c0_i32_0 = arith.constant 0 : i32
    return %arg0, %c0_i32, %arg2 : i32, i32, i32
  }
  func.func @transform_1(%arg0: i32, %arg1: i32, %arg2: i32) -> (i32, i32, i32) {
    %c0_i32 = arith.constant 0 : i32
    %c0_i32_0 = arith.constant 0 : i32
    return %c0_i32, %arg2, %arg1 : i32, i32, i32
  }
  func.func @transform_2(%arg0: i32, %arg1: i32, %arg2: i32) -> (i32, i32) {
    %c0_i32 = arith.constant 0 : i32
    %c0_i32_0 = arith.constant 0 : i32
    return %c0_i32, %arg1 : i32, i32
  }
  func.func @transform_3(%arg0: i32, %arg1: i32, %arg2: i32) -> (i32, i32, i32) {
    %c0_i32 = arith.constant 0 : i32
    %c0_i32_0 = arith.constant 0 : i32
    return %arg0, %c0_i32, %arg1 : i32, i32, i32
  }
}

module attributes {stable_mosaic.version = 11 : i64} {
  func.func @_gn_silu_kernel(%arg0: i32, %arg1: memref<1x128x64xbf16, #tpu.memory_space<vmem>>, %arg2: memref<128x1xf32, #tpu.memory_space<vmem>>, %arg3: memref<64x32xf32, #tpu.memory_space<vmem>>, %arg4: memref<32x64xf32, #tpu.memory_space<vmem>>, %arg5: memref<1x64xf32, #tpu.memory_space<vmem>>, %arg6: memref<1x64xf32, #tpu.memory_space<vmem>>, %arg7: memref<1x192x64xbf16, #tpu.memory_space<vmem>>) attributes {dimension_semantics = [#tpu.dimension_semantics<parallel>], iteration_bounds = array<i64: 2>, scalar_prefetch = 0 : i64, scratch_operands = 0 : i64, tpu.core_type = #tpu.core_type<tc>, window_params = [{transform_indices = @transform_0, window_bounds = array<i64: 1, 128, 64>}, {pipeline_mode = #tpu.pipeline_mode<synchronous>, transform_indices = @transform_1, window_bounds = array<i64: 128, 1>}, {pipeline_mode = #tpu.pipeline_mode<synchronous>, transform_indices = @transform_2, window_bounds = array<i64: 64, 32>}, {pipeline_mode = #tpu.pipeline_mode<synchronous>, transform_indices = @transform_3, window_bounds = array<i64: 32, 64>}, {pipeline_mode = #tpu.pipeline_mode<synchronous>, transform_indices = @transform_4, window_bounds = array<i64: 1, 64>}, {pipeline_mode = #tpu.pipeline_mode<synchronous>, transform_indices = @transform_5, window_bounds = array<i64: 1, 64>}, {transform_indices = @transform_6, window_bounds = array<i64: 1, 192, 64>}]} {
    %c0 = arith.constant 0 : index
    %c0_0 = arith.constant 0 : index
    %c0_1 = arith.constant 0 : index
    %0 = vector.load %arg1[%c0, %c0_0, %c0_1] : memref<1x128x64xbf16, #tpu.memory_space<vmem>>, vector<1x128x64xbf16>
    %1 = vector.shape_cast %0 : vector<1x128x64xbf16> to vector<128x64xbf16>
    %2 = arith.extf %1 : vector<128x64xbf16> to vector<128x64xf32>
    %c0_2 = arith.constant 0 : index
    %c0_3 = arith.constant 0 : index
    %3 = vector.load %arg2[%c0_2, %c0_3] : memref<128x1xf32, #tpu.memory_space<vmem>>, vector<128x1xf32>
    %4 = vector.broadcast %3 : vector<128x1xf32> to vector<128x64xf32>
    %5 = arith.mulf %2, %4 : vector<128x64xf32>
    %cst = arith.constant dense<0.000000e+00> : vector<64xf32>
    %6 = vector.multi_reduction <add>, %5, %cst [0] : vector<128x64xf32> to vector<64xf32>
    %7 = vector.shape_cast %6 : vector<64xf32> to vector<1x64xf32>
    %8 = arith.mulf %5, %5 : vector<128x64xf32>
    %cst_4 = arith.constant dense<0.000000e+00> : vector<64xf32>
    %9 = vector.multi_reduction <add>, %8, %cst_4 [0] : vector<128x64xf32> to vector<64xf32>
    %10 = vector.shape_cast %9 : vector<64xf32> to vector<1x64xf32>
    %11 = tpu.concatenate %7, %10 in 0 : vector<1x64xf32>, vector<1x64xf32> -> vector<2x64xf32>
    %c0_5 = arith.constant 0 : index
    %c0_6 = arith.constant 0 : index
    %12 = vector.load %arg3[%c0_5, %c0_6] : memref<64x32xf32, #tpu.memory_space<vmem>>, vector<64x32xf32>
    %cst_7 = arith.constant dense<0.000000e+00> : vector<2x32xf32>
    %13 = tpu.matmul %11, %12, %cst_7 {dimension_numbers = #tpu.dot_dimension_numbers<[1], [0], [0], [1], [0, 0, 1, 1], [], []>} : vector<2x64xf32>, vector<64x32xf32>, vector<2x32xf32> -> vector<2x32xf32>
    %14 = vector.extract_strided_slice %13 {offsets = [0, 0], sizes = [1, 32], strides = [1, 1]} : vector<2x32xf32> to vector<1x32xf32>
    %cst_8 = arith.constant 7.812500e-03 : f32
    %15 = vector.broadcast %cst_8 : f32 to vector<1x32xf32>
    %16 = arith.mulf %14, %15 : vector<1x32xf32>
    %17 = vector.extract_strided_slice %13 {offsets = [1, 0], sizes = [1, 32], strides = [1, 1]} : vector<2x32xf32> to vector<1x32xf32>
    %cst_9 = arith.constant 7.812500e-03 : f32
    %18 = vector.broadcast %cst_9 : f32 to vector<1x32xf32>
    %19 = arith.mulf %17, %18 : vector<1x32xf32>
    %20 = arith.mulf %16, %16 : vector<1x32xf32>
    %21 = arith.subf %19, %20 : vector<1x32xf32>
    %cst_10 = arith.constant 9.99999997E-7 : f32
    %22 = vector.broadcast %cst_10 : f32 to vector<1x32xf32>
    %23 = arith.addf %21, %22 : vector<1x32xf32>
    %24 = math.rsqrt %23 : vector<1x32xf32>
    %cst_11 = arith.constant 0.000000e+00 : f32
    %25 = vector.broadcast %cst_11 : f32 to vector<1x32xf32>
    %26 = arith.subf %25, %16 : vector<1x32xf32>
    %27 = arith.mulf %26, %24 : vector<1x32xf32>
    %28 = tpu.concatenate %24, %27 in 0 : vector<1x32xf32>, vector<1x32xf32> -> vector<2x32xf32>
    %c0_12 = arith.constant 0 : index
    %c0_13 = arith.constant 0 : index
    %29 = vector.load %arg4[%c0_12, %c0_13] : memref<32x64xf32, #tpu.memory_space<vmem>>, vector<32x64xf32>
    %cst_14 = arith.constant dense<0.000000e+00> : vector<2x64xf32>
    %30 = tpu.matmul %28, %29, %cst_14 {dimension_numbers = #tpu.dot_dimension_numbers<[1], [0], [0], [1], [0, 0, 1, 1], [], []>} : vector<2x32xf32>, vector<32x64xf32>, vector<2x64xf32> -> vector<2x64xf32>
    %31 = vector.extract_strided_slice %30 {offsets = [0, 0], sizes = [1, 64], strides = [1, 1]} : vector<2x64xf32> to vector<1x64xf32>
    %c0_15 = arith.constant 0 : index
    %c0_16 = arith.constant 0 : index
    %32 = vector.load %arg5[%c0_15, %c0_16] : memref<1x64xf32, #tpu.memory_space<vmem>>, vector<1x64xf32>
    %33 = arith.mulf %31, %32 : vector<1x64xf32>
    %34 = vector.extract_strided_slice %30 {offsets = [1, 0], sizes = [1, 64], strides = [1, 1]} : vector<2x64xf32> to vector<1x64xf32>
    %c0_17 = arith.constant 0 : index
    %c0_18 = arith.constant 0 : index
    %35 = vector.load %arg5[%c0_17, %c0_18] : memref<1x64xf32, #tpu.memory_space<vmem>>, vector<1x64xf32>
    %36 = arith.mulf %34, %35 : vector<1x64xf32>
    %c0_19 = arith.constant 0 : index
    %c0_20 = arith.constant 0 : index
    %37 = vector.load %arg6[%c0_19, %c0_20] : memref<1x64xf32, #tpu.memory_space<vmem>>, vector<1x64xf32>
    %38 = arith.addf %36, %37 : vector<1x64xf32>
    %39 = vector.broadcast %33 : vector<1x64xf32> to vector<128x64xf32>
    %40 = arith.mulf %2, %39 : vector<128x64xf32>
    %41 = vector.broadcast %38 : vector<1x64xf32> to vector<128x64xf32>
    %42 = arith.addf %40, %41 : vector<128x64xf32>
    %43 = arith.negf %42 : vector<128x64xf32>
    %44 = math.exp %43 : vector<128x64xf32>
    %cst_21 = arith.constant 1.000000e+00 : f32
    %45 = vector.broadcast %cst_21 : f32 to vector<128x64xf32>
    %46 = arith.addf %45, %44 : vector<128x64xf32>
    %47 = arith.divf %45, %46 : vector<128x64xf32>
    %48 = arith.mulf %42, %47 : vector<128x64xf32>
    %49 = vector.broadcast %3 : vector<128x1xf32> to vector<128x64xf32>
    %50 = arith.mulf %48, %49 : vector<128x64xf32>
    %51 = arith.truncf %50 : vector<128x64xf32> to vector<128x64xbf16>
    %cst_22 = arith.constant 0.000000e+00 : bf16
    %52 = vector.broadcast %cst_22 : bf16 to vector<32x64xbf16>
    %c0_23 = arith.constant 0 : index
    %c0_24 = arith.constant 0 : index
    %c0_25 = arith.constant 0 : index
    %53 = vector.load %arg7[%c0_23, %c0_24, %c0_25] : memref<1x192x64xbf16, #tpu.memory_space<vmem>>, vector<1x32x64xbf16>
    %54 = vector.shape_cast %53 : vector<1x32x64xbf16> to vector<32x64xbf16>
    %55 = vector.shape_cast %52 : vector<32x64xbf16> to vector<1x32x64xbf16>
    tpu.vector_store %arg7[%c0_23, %c0_24, %c0_25], %55 {strides = array<i32>} : memref<1x192x64xbf16, #tpu.memory_space<vmem>>, vector<1x32x64xbf16>,
    %c0_26 = arith.constant 0 : index
    %c32 = arith.constant 32 : index
    %c0_27 = arith.constant 0 : index
    %56 = vector.load %arg7[%c0_26, %c32, %c0_27] : memref<1x192x64xbf16, #tpu.memory_space<vmem>>, vector<1x128x64xbf16>
    %57 = vector.shape_cast %56 : vector<1x128x64xbf16> to vector<128x64xbf16>
    %58 = vector.shape_cast %51 : vector<128x64xbf16> to vector<1x128x64xbf16>
    tpu.vector_store %arg7[%c0_26, %c32, %c0_27], %58 {strides = array<i32>} : memref<1x192x64xbf16, #tpu.memory_space<vmem>>, vector<1x128x64xbf16>,
    %cst_28 = arith.constant 0.000000e+00 : bf16
    %59 = vector.broadcast %cst_28 : bf16 to vector<32x64xbf16>
    %c0_29 = arith.constant 0 : index
    %c160 = arith.constant 160 : index
    %c0_30 = arith.constant 0 : index
    %60 = vector.load %arg7[%c0_29, %c160, %c0_30] : memref<1x192x64xbf16, #tpu.memory_space<vmem>>, vector<1x32x64xbf16>
    %61 = vector.shape_cast %60 : vector<1x32x64xbf16> to vector<32x64xbf16>
    %62 = vector.shape_cast %59 : vector<32x64xbf16> to vector<1x32x64xbf16>
    tpu.vector_store %arg7[%c0_29, %c160, %c0_30], %62 {strides = array<i32>} : memref<1x192x64xbf16, #tpu.memory_space<vmem>>, vector<1x32x64xbf16>,
    return
  }
  func.func @transform_0(%arg0: i32) -> (i32, i32, i32) {
    %c0_i32 = arith.constant 0 : i32
    %c0_i32_0 = arith.constant 0 : i32
    %c0_i32_1 = arith.constant 0 : i32
    return %arg0, %c0_i32, %c0_i32_0 : i32, i32, i32
  }
  func.func @transform_1(%arg0: i32) -> (i32, i32) {
    %c0_i32 = arith.constant 0 : i32
    %c0_i32_0 = arith.constant 0 : i32
    %c0_i32_1 = arith.constant 0 : i32
    return %c0_i32, %c0_i32_0 : i32, i32
  }
  func.func @transform_2(%arg0: i32) -> (i32, i32) {
    %c0_i32 = arith.constant 0 : i32
    %c0_i32_0 = arith.constant 0 : i32
    %c0_i32_1 = arith.constant 0 : i32
    return %c0_i32, %c0_i32_0 : i32, i32
  }
  func.func @transform_3(%arg0: i32) -> (i32, i32) {
    %c0_i32 = arith.constant 0 : i32
    %c0_i32_0 = arith.constant 0 : i32
    %c0_i32_1 = arith.constant 0 : i32
    return %c0_i32, %c0_i32_0 : i32, i32
  }
  func.func @transform_4(%arg0: i32) -> (i32, i32) {
    %c0_i32 = arith.constant 0 : i32
    %c0_i32_0 = arith.constant 0 : i32
    %c0_i32_1 = arith.constant 0 : i32
    return %c0_i32, %c0_i32_0 : i32, i32
  }
  func.func @transform_5(%arg0: i32) -> (i32, i32) {
    %c0_i32 = arith.constant 0 : i32
    %c0_i32_0 = arith.constant 0 : i32
    %c0_i32_1 = arith.constant 0 : i32
    return %c0_i32, %c0_i32_0 : i32, i32
  }
  func.func @transform_6(%arg0: i32) -> (i32, i32, i32) {
    %c0_i32 = arith.constant 0 : i32
    %c0_i32_0 = arith.constant 0 : i32
    %c0_i32_1 = arith.constant 0 : i32
    return %arg0, %c0_i32, %c0_i32_0 : i32, i32, i32
  }
}

module attributes {stable_mosaic.version = 11 : i64} {
  func.func @_conv_kernel_res_proj(%arg0: i32, %arg1: i32, %arg2: i32, %arg3: memref<1x192x64xbf16, #tpu.memory_space<vmem>>, %arg4: memref<9x64x64xbf16, #tpu.memory_space<vmem>>, %arg5: memref<1x64xf32, #tpu.memory_space<vmem>>, %arg6: memref<1x128x32xbf16, #tpu.memory_space<vmem>>, %arg7: memref<32x64xbf16, #tpu.memory_space<vmem>>, %arg8: memref<1x64xf32, #tpu.memory_space<vmem>>, %arg9: memref<1x128x64xf32, #tpu.memory_space<vmem>>) attributes {dimension_semantics = [#tpu.dimension_semantics<parallel>, #tpu.dimension_semantics<parallel>, #tpu.dimension_semantics<arbitrary>], iteration_bounds = array<i64: 2, 1, 1>, scalar_prefetch = 0 : i64, scratch_operands = 0 : i64, tpu.core_type = #tpu.core_type<tc>, window_params = [{transform_indices = @transform_0, window_bounds = array<i64: 1, 192, 64>}, {transform_indices = @transform_1, window_bounds = array<i64: 9, 64, 64>}, {transform_indices = @transform_2, window_bounds = array<i64: 1, 64>}, {transform_indices = @transform_3, window_bounds = array<i64: 1, 128, 32>}, {transform_indices = @transform_4, window_bounds = array<i64: 32, 64>}, {transform_indices = @transform_5, window_bounds = array<i64: 1, 64>}, {transform_indices = @transform_6, window_bounds = array<i64: 1, 128, 64>}]} {
    %c0 = arith.constant 0 : index
    %c0_0 = arith.constant 0 : index
    %c0_1 = arith.constant 0 : index
    %0 = vector.load %arg6[%c0, %c0_0, %c0_1] : memref<1x128x32xbf16, #tpu.memory_space<vmem>>, vector<1x128x32xbf16>
    %1 = vector.shape_cast %0 : vector<1x128x32xbf16> to vector<128x32xbf16>
    %c0_2 = arith.constant 0 : index
    %c0_3 = arith.constant 0 : index
    %2 = vector.load %arg7[%c0_2, %c0_3] : memref<32x64xbf16, #tpu.memory_space<vmem>>, vector<32x64xbf16>
    %cst = arith.constant dense<0.000000e+00> : vector<128x64xf32>
    %3 = tpu.matmul %1, %2, %cst {dimension_numbers = #tpu.dot_dimension_numbers<[1], [0], [0], [1], [0, 0, 1, 1], [], []>} : vector<128x32xbf16>, vector<32x64xbf16>, vector<128x64xf32> -> vector<128x64xf32>
    %c0_4 = arith.constant 0 : index
    %c0_5 = arith.constant 0 : index
    %4 = vector.load %arg8[%c0_4, %c0_5] : memref<1x64xf32, #tpu.memory_space<vmem>>, vector<1x64xf32>
    %5 = vector.broadcast %4 : vector<1x64xf32> to vector<128x64xf32>
    %6 = arith.addf %3, %5 : vector<128x64xf32>
    %c0_6 = arith.constant 0 : index
    %c15 = arith.constant 15 : index
    %c0_7 = arith.constant 0 : index
    %7 = vector.load %arg3[%c0_6, %c15, %c0_7] : memref<1x192x64xbf16, #tpu.memory_space<vmem>>, vector<1x128x64xbf16>
    %8 = vector.shape_cast %7 : vector<1x128x64xbf16> to vector<128x64xbf16>
    %c0_8 = arith.constant 0 : index
    %c0_9 = arith.constant 0 : index
    %c0_10 = arith.constant 0 : index
    %9 = vector.load %arg4[%c0_8, %c0_9, %c0_10] : memref<9x64x64xbf16, #tpu.memory_space<vmem>>, vector<1x64x64xbf16>
    %10 = vector.shape_cast %9 : vector<1x64x64xbf16> to vector<64x64xbf16>
    %cst_11 = arith.constant dense<0.000000e+00> : vector<128x64xf32>
    %11 = tpu.matmul %8, %10, %cst_11 {dimension_numbers = #tpu.dot_dimension_numbers<[1], [0], [0], [1], [0, 0, 1, 1], [], []>} : vector<128x64xbf16>, vector<64x64xbf16>, vector<128x64xf32> -> vector<128x64xf32>
    %c0_12 = arith.constant 0 : index
    %c16 = arith.constant 16 : index
    %c0_13 = arith.constant 0 : index
    %12 = vector.load %arg3[%c0_12, %c16, %c0_13] : memref<1x192x64xbf16, #tpu.memory_space<vmem>>, vector<1x128x64xbf16>
    %13 = vector.shape_cast %12 : vector<1x128x64xbf16> to vector<128x64xbf16>
    %c1 = arith.constant 1 : index
    %c0_14 = arith.constant 0 : index
    %c0_15 = arith.constant 0 : index
    %14 = vector.load %arg4[%c1, %c0_14, %c0_15] : memref<9x64x64xbf16, #tpu.memory_space<vmem>>, vector<1x64x64xbf16>
    %15 = vector.shape_cast %14 : vector<1x64x64xbf16> to vector<64x64xbf16>
    %cst_16 = arith.constant dense<0.000000e+00> : vector<128x64xf32>
    %16 = tpu.matmul %13, %15, %cst_16 {dimension_numbers = #tpu.dot_dimension_numbers<[1], [0], [0], [1], [0, 0, 1, 1], [], []>} : vector<128x64xbf16>, vector<64x64xbf16>, vector<128x64xf32> -> vector<128x64xf32>
    %17 = arith.addf %11, %16 : vector<128x64xf32>
    %c0_17 = arith.constant 0 : index
    %c17 = arith.constant 17 : index
    %c0_18 = arith.constant 0 : index
    %18 = vector.load %arg3[%c0_17, %c17, %c0_18] : memref<1x192x64xbf16, #tpu.memory_space<vmem>>, vector<1x128x64xbf16>
    %19 = vector.shape_cast %18 : vector<1x128x64xbf16> to vector<128x64xbf16>
    %c2 = arith.constant 2 : index
    %c0_19 = arith.constant 0 : index
    %c0_20 = arith.constant 0 : index
    %20 = vector.load %arg4[%c2, %c0_19, %c0_20] : memref<9x64x64xbf16, #tpu.memory_space<vmem>>, vector<1x64x64xbf16>
    %21 = vector.shape_cast %20 : vector<1x64x64xbf16> to vector<64x64xbf16>
    %cst_21 = arith.constant dense<0.000000e+00> : vector<128x64xf32>
    %22 = tpu.matmul %19, %21, %cst_21 {dimension_numbers = #tpu.dot_dimension_numbers<[1], [0], [0], [1], [0, 0, 1, 1], [], []>} : vector<128x64xbf16>, vector<64x64xbf16>, vector<128x64xf32> -> vector<128x64xf32>
    %23 = arith.addf %17, %22 : vector<128x64xf32>
    %c0_22 = arith.constant 0 : index
    %c31 = arith.constant 31 : index
    %c0_23 = arith.constant 0 : index
    %24 = vector.load %arg3[%c0_22, %c31, %c0_23] : memref<1x192x64xbf16, #tpu.memory_space<vmem>>, vector<1x128x64xbf16>
    %25 = vector.shape_cast %24 : vector<1x128x64xbf16> to vector<128x64xbf16>
    %c3 = arith.constant 3 : index
    %c0_24 = arith.constant 0 : index
    %c0_25 = arith.constant 0 : index
    %26 = vector.load %arg4[%c3, %c0_24, %c0_25] : memref<9x64x64xbf16, #tpu.memory_space<vmem>>, vector<1x64x64xbf16>
    %27 = vector.shape_cast %26 : vector<1x64x64xbf16> to vector<64x64xbf16>
    %cst_26 = arith.constant dense<0.000000e+00> : vector<128x64xf32>
    %28 = tpu.matmul %25, %27, %cst_26 {dimension_numbers = #tpu.dot_dimension_numbers<[1], [0], [0], [1], [0, 0, 1, 1], [], []>} : vector<128x64xbf16>, vector<64x64xbf16>, vector<128x64xf32> -> vector<128x64xf32>
    %29 = arith.addf %23, %28 : vector<128x64xf32>
    %c0_27 = arith.constant 0 : index
    %c32 = arith.constant 32 : index
    %c0_28 = arith.constant 0 : index
    %30 = vector.load %arg3[%c0_27, %c32, %c0_28] : memref<1x192x64xbf16, #tpu.memory_space<vmem>>, vector<1x128x64xbf16>
    %31 = vector.shape_cast %30 : vector<1x128x64xbf16> to vector<128x64xbf16>
    %c4 = arith.constant 4 : index
    %c0_29 = arith.constant 0 : index
    %c0_30 = arith.constant 0 : index
    %32 = vector.load %arg4[%c4, %c0_29, %c0_30] : memref<9x64x64xbf16, #tpu.memory_space<vmem>>, vector<1x64x64xbf16>
    %33 = vector.shape_cast %32 : vector<1x64x64xbf16> to vector<64x64xbf16>
    %cst_31 = arith.constant dense<0.000000e+00> : vector<128x64xf32>
    %34 = tpu.matmul %31, %33, %cst_31 {dimension_numbers = #tpu.dot_dimension_numbers<[1], [0], [0], [1], [0, 0, 1, 1], [], []>} : vector<128x64xbf16>, vector<64x64xbf16>, vector<128x64xf32> -> vector<128x64xf32>
    %35 = arith.addf %29, %34 : vector<128x64xf32>
    %c0_32 = arith.constant 0 : index
    %c33 = arith.constant 33 : index
    %c0_33 = arith.constant 0 : index
    %36 = vector.load %arg3[%c0_32, %c33, %c0_33] : memref<1x192x64xbf16, #tpu.memory_space<vmem>>, vector<1x128x64xbf16>
    %37 = vector.shape_cast %36 : vector<1x128x64xbf16> to vector<128x64xbf16>
    %c5 = arith.constant 5 : index
    %c0_34 = arith.constant 0 : index
    %c0_35 = arith.constant 0 : index
    %38 = vector.load %arg4[%c5, %c0_34, %c0_35] : memref<9x64x64xbf16, #tpu.memory_space<vmem>>, vector<1x64x64xbf16>
    %39 = vector.shape_cast %38 : vector<1x64x64xbf16> to vector<64x64xbf16>
    %cst_36 = arith.constant dense<0.000000e+00> : vector<128x64xf32>
    %40 = tpu.matmul %37, %39, %cst_36 {dimension_numbers = #tpu.dot_dimension_numbers<[1], [0], [0], [1], [0, 0, 1, 1], [], []>} : vector<128x64xbf16>, vector<64x64xbf16>, vector<128x64xf32> -> vector<128x64xf32>
    %41 = arith.addf %35, %40 : vector<128x64xf32>
    %c0_37 = arith.constant 0 : index
    %c47 = arith.constant 47 : index
    %c0_38 = arith.constant 0 : index
    %42 = vector.load %arg3[%c0_37, %c47, %c0_38] : memref<1x192x64xbf16, #tpu.memory_space<vmem>>, vector<1x128x64xbf16>
    %43 = vector.shape_cast %42 : vector<1x128x64xbf16> to vector<128x64xbf16>
    %c6 = arith.constant 6 : index
    %c0_39 = arith.constant 0 : index
    %c0_40 = arith.constant 0 : index
    %44 = vector.load %arg4[%c6, %c0_39, %c0_40] : memref<9x64x64xbf16, #tpu.memory_space<vmem>>, vector<1x64x64xbf16>
    %45 = vector.shape_cast %44 : vector<1x64x64xbf16> to vector<64x64xbf16>
    %cst_41 = arith.constant dense<0.000000e+00> : vector<128x64xf32>
    %46 = tpu.matmul %43, %45, %cst_41 {dimension_numbers = #tpu.dot_dimension_numbers<[1], [0], [0], [1], [0, 0, 1, 1], [], []>} : vector<128x64xbf16>, vector<64x64xbf16>, vector<128x64xf32> -> vector<128x64xf32>
    %47 = arith.addf %41, %46 : vector<128x64xf32>
    %c0_42 = arith.constant 0 : index
    %c48 = arith.constant 48 : index
    %c0_43 = arith.constant 0 : index
    %48 = vector.load %arg3[%c0_42, %c48, %c0_43] : memref<1x192x64xbf16, #tpu.memory_space<vmem>>, vector<1x128x64xbf16>
    %49 = vector.shape_cast %48 : vector<1x128x64xbf16> to vector<128x64xbf16>
    %c7 = arith.constant 7 : index
    %c0_44 = arith.constant 0 : index
    %c0_45 = arith.constant 0 : index
    %50 = vector.load %arg4[%c7, %c0_44, %c0_45] : memref<9x64x64xbf16, #tpu.memory_space<vmem>>, vector<1x64x64xbf16>
    %51 = vector.shape_cast %50 : vector<1x64x64xbf16> to vector<64x64xbf16>
    %cst_46 = arith.constant dense<0.000000e+00> : vector<128x64xf32>
    %52 = tpu.matmul %49, %51, %cst_46 {dimension_numbers = #tpu.dot_dimension_numbers<[1], [0], [0], [1], [0, 0, 1, 1], [], []>} : vector<128x64xbf16>, vector<64x64xbf16>, vector<128x64xf32> -> vector<128x64xf32>
    %53 = arith.addf %47, %52 : vector<128x64xf32>
    %c0_47 = arith.constant 0 : index
    %c49 = arith.constant 49 : index
    %c0_48 = arith.constant 0 : index
    %54 = vector.load %arg3[%c0_47, %c49, %c0_48] : memref<1x192x64xbf16, #tpu.memory_space<vmem>>, vector<1x128x64xbf16>
    %55 = vector.shape_cast %54 : vector<1x128x64xbf16> to vector<128x64xbf16>
    %c8 = arith.constant 8 : index
    %c0_49 = arith.constant 0 : index
    %c0_50 = arith.constant 0 : index
    %56 = vector.load %arg4[%c8, %c0_49, %c0_50] : memref<9x64x64xbf16, #tpu.memory_space<vmem>>, vector<1x64x64xbf16>
    %57 = vector.shape_cast %56 : vector<1x64x64xbf16> to vector<64x64xbf16>
    %cst_51 = arith.constant dense<0.000000e+00> : vector<128x64xf32>
    %58 = tpu.matmul %55, %57, %cst_51 {dimension_numbers = #tpu.dot_dimension_numbers<[1], [0], [0], [1], [0, 0, 1, 1], [], []>} : vector<128x64xbf16>, vector<64x64xbf16>, vector<128x64xf32> -> vector<128x64xf32>
    %59 = arith.addf %53, %58 : vector<128x64xf32>
    %c0_52 = arith.constant 0 : index
    %c0_53 = arith.constant 0 : index
    %60 = vector.load %arg5[%c0_52, %c0_53] : memref<1x64xf32, #tpu.memory_space<vmem>>, vector<1x64xf32>
    %61 = vector.broadcast %60 : vector<1x64xf32> to vector<128x64xf32>
    %62 = arith.addf %59, %61 : vector<128x64xf32>
    %63 = arith.addf %62, %6 : vector<128x64xf32>
    %c0_54 = arith.constant 0 : index
    %c0_55 = arith.constant 0 : index
    %c0_56 = arith.constant 0 : index
    %64 = vector.load %arg9[%c0_54, %c0_55, %c0_56] : memref<1x128x64xf32, #tpu.memory_space<vmem>>, vector<1x128x64xf32>
    %65 = vector.shape_cast %64 : vector<1x128x64xf32> to vector<128x64xf32>
    %66 = vector.shape_cast %63 : vector<128x64xf32> to vector<1x128x64xf32>
    tpu.vector_store %arg9[%c0_54, %c0_55, %c0_56], %66 {strides = array<i32>} : memref<1x128x64xf32, #tpu.memory_space<vmem>>, vector<1x128x64xf32>,
    return
  }
  func.func @transform_0(%arg0: i32, %arg1: i32, %arg2: i32) -> (i32, i32, i32) {
    %c0_i32 = arith.constant 0 : i32
    %c0_i32_0 = arith.constant 0 : i32
    return %arg0, %c0_i32, %arg2 : i32, i32, i32
  }
  func.func @transform_1(%arg0: i32, %arg1: i32, %arg2: i32) -> (i32, i32, i32) {
    %c0_i32 = arith.constant 0 : i32
    %c0_i32_0 = arith.constant 0 : i32
    return %c0_i32, %arg2, %arg1 : i32, i32, i32
  }
  func.func @transform_2(%arg0: i32, %arg1: i32, %arg2: i32) -> (i32, i32) {
    %c0_i32 = arith.constant 0 : i32
    %c0_i32_0 = arith.constant 0 : i32
    return %c0_i32, %arg1 : i32, i32
  }
  func.func @transform_3(%arg0: i32, %arg1: i32, %arg2: i32) -> (i32, i32, i32) {
    %c0_i32 = arith.constant 0 : i32
    %c0_i32_0 = arith.constant 0 : i32
    %c0_i32_1 = arith.constant 0 : i32
    return %arg0, %c0_i32, %c0_i32_0 : i32, i32, i32
  }
  func.func @transform_4(%arg0: i32, %arg1: i32, %arg2: i32) -> (i32, i32) {
    %c0_i32 = arith.constant 0 : i32
    %c0_i32_0 = arith.constant 0 : i32
    return %c0_i32, %arg1 : i32, i32
  }
  func.func @transform_5(%arg0: i32, %arg1: i32, %arg2: i32) -> (i32, i32) {
    %c0_i32 = arith.constant 0 : i32
    %c0_i32_0 = arith.constant 0 : i32
    return %c0_i32, %arg1 : i32, i32
  }
  func.func @transform_6(%arg0: i32, %arg1: i32, %arg2: i32) -> (i32, i32, i32) {
    %c0_i32 = arith.constant 0 : i32
    %c0_i32_0 = arith.constant 0 : i32
    return %arg0, %c0_i32, %arg1 : i32, i32, i32
  }
}

</mosaic_0001>

<llo_original>
// kernel: resnet_forward.4
$region0: #{resnet_forward.4}
  #allocation0 [shape = 'u32[]', space=smem, size = 0x4, offset = 0x4, fixed_abs, tag = 'smem constant byte address 0x4 - core index']
  #allocation1 [shape = 'u32[144,128]{1,0:T(1,128)}', space=vmem, size = 0x12000, scoped, tag = 'internal scratch']
  %s0 = inlined_call_operand.vmem [shape: f32[2,128,32], index: 0, kind: input, shape index: {}]
  %s1 = inlined_call_operand.vmem [shape: f32[128,1], index: 1, kind: input, shape index: {}]
  %s2 = inlined_call_operand.vmem [shape: f32[32,32], index: 2, kind: input, shape index: {}]
  %s3 = inlined_call_operand.vmem [shape: f32[32,32], index: 3, kind: input, shape index: {}]
  %s4 = inlined_call_operand.vmem [shape: f32[1,32], index: 4, kind: input, shape index: {}]
  %s5 = inlined_call_operand.vmem [shape: f32[1,32], index: 5, kind: input, shape index: {}]
  %s6 = inlined_call_operand.vmem [shape: bf16[2,192,32], index: 6, kind: output, shape index: {}]
  %s7 = sld [smem:[#allocation0]]
  $region57: #{resnet_forward.4} parent=0
    _
  %s9 = ssub.s32 1, %s7
  %s10 = scalar_select 0, %s9, %s7
  loop: start=0, step=1, limit=4
  $region2: #{resnet_forward.4} parent=0 // loop_pre_header
    _
  $region3: #{resnet_forward.4} parent=0 // loop_header
    %s12 = sphi 0, %s16
    %p13 = scmp.ge.s32.totalorder %s12, 4
    %s22 = sphi 0, %s24
    %s25 = sphi 0, %s22
    %s26 = sphi 0, %s25
    %s42 = sphi 0, %s26
    %s46 = sphi 0, %s46
    %s48 = sphi 0, %s46
    %s49 = sphi 0, %s48
    %s63 = sphi 0, %s49
    %s67 = sphi 0, %s67
    %s69 = sphi 0, %s67
    %s70 = sphi 0, %s69
    %s84 = sphi 0, %s70
    %s88 = sphi 0, %s88
    %s90 = sphi 0, %s88
    %s91 = sphi 0, %s90
    %s105 = sphi 0, %s91
    %s109 = sphi 0, %s109
    %s111 = sphi 0, %s109
    %s112 = sphi 0, %s111
    %s126 = sphi 0, %s112
    %s130 = sphi 0, %s130
    %s132 = sphi 0, %s130
    %s133 = sphi 0, %s132
    %s147 = sphi 0, %s133
    %s153 = sphi 0, %s155
    %s156 = sphi 0, %s153
    %s157 = sphi 0, %s156
    %s173 = sphi 0, %s157
  $region4: #{resnet_forward.4} parent=0 // loop_header_branch
    %15 = sbr.rel (%p13) target = $region8
  $region5: #{resnet_forward.4} parent=0 // loop_body
    %s17 = ssub.s32 %s12, 1
    %s18 = ssub.s32 %s12, 2
    %s19 = sadd.s32 %s12, 1
    %s20 = ssub.s32 %s12, %s19
    %p21 = scmp.eq.s32.totalorder %s20, 0
    %s23 = sadd.s32 %s22, 1
    %s24 = scalar_select %p21, %s22, %s23
    %p27 = pneg %p21
    %p28 = scmp.eq.s32.totalorder %s12, 1
    %p29 = por %p27, %p28
    %p30 = scmp.ne.s32.totalorder %s22, %s25
    %p31 = scmp.eq.s32.totalorder %s12, 0
    %p32 = por %p30, %p31
    %p33 = scmp.ne.s32.totalorder %s22, %s25
    %p34 = scmp.eq.s32.totalorder %s17, 1
    %p35 = por %p33, %p34
    %p36 = scmp.ne.s32.totalorder %s25, %s26
    %p37 = scmp.eq.s32.totalorder %s17, 0
    %p38 = por %p36, %p37
    %p39 = scmp.ne.s32.totalorder %s25, %s26
    %p40 = scmp.eq.s32.totalorder %s18, 1
    %p41 = por %p39, %p40
    %p43 = scmp.ne.s32.totalorder %s26, %s42
    %p44 = scmp.eq.s32.totalorder %s18, 0
    %p45 = por %p43, %p44
    %s47 = sadd.s32 %s46, 1
    %p50 = scmp.eq.s32.totalorder %s12, 1
    %p51 = scmp.ne.s32.totalorder %s46, %s48
    %p52 = scmp.eq.s32.totalorder %s12, 0
    %p53 = por %p51, %p52
    %p54 = scmp.ne.s32.totalorder %s46, %s48
    %p55 = scmp.eq.s32.totalorder %s17, 1
    %p56 = por %p54, %p55
    %p57 = scmp.ne.s32.totalorder %s48, %s49
    %p58 = scmp.eq.s32.totalorder %s17, 0
    %p59 = por %p57, %p58
    %p60 = scmp.ne.s32.totalorder %s48, %s49
    %p61 = scmp.eq.s32.totalorder %s18, 1
    %p62 = por %p60, %p61
    %p64 = scmp.ne.s32.totalorder %s49, %s63
    %p65 = scmp.eq.s32.totalorder %s18, 0
    %p66 = por %p64, %p65
    %s68 = sadd.s32 %s67, 1
    %p71 = scmp.eq.s32.totalorder %s12, 1
    %p72 = scmp.ne.s32.totalorder %s67, %s69
    %p73 = scmp.eq.s32.totalorder %s12, 0
    %p74 = por %p72, %p73
    %p75 = scmp.ne.s32.totalorder %s67, %s69
    %p76 = scmp.eq.s32.totalorder %s17, 1
    %p77 = por %p75, %p76
    %p78 = scmp.ne.s32.totalorder %s69, %s70
    %p79 = scmp.eq.s32.totalorder %s17, 0
    %p80 = por %p78, %p79
    %p81 = scmp.ne.s32.totalorder %s69, %s70
    %p82 = scmp.eq.s32.totalorder %s18, 1
    %p83 = por %p81, %p82
    %p85 = scmp.ne.s32.totalorder %s70, %s84
    %p86 = scmp.eq.s32.totalorder %s18, 0
    %p87 = por %p85, %p86
    %s89 = sadd.s32 %s88, 1
    %p92 = scmp.eq.s32.totalorder %s12, 1
    %p93 = scmp.ne.s32.totalorder %s88, %s90
    %p94 = scmp.eq.s32.totalorder %s12, 0
    %p95 = por %p93, %p94
    %p96 = scmp.ne.s32.totalorder %s88, %s90
    %p97 = scmp.eq.s32.totalorder %s17, 1
    %p98 = por %p96, %p97
    %p99 = scmp.ne.s32.totalorder %s90, %s91
    %p100 = scmp.eq.s32.totalorder %s17, 0
    %p101 = por %p99, %p100
    %p102 = scmp.ne.s32.totalorder %s90, %s91
    %p103 = scmp.eq.s32.totalorder %s18, 1
    %p104 = por %p102, %p103
    %p106 = scmp.ne.s32.totalorder %s91, %s105
    %p107 = scmp.eq.s32.totalorder %s18, 0
    %p108 = por %p106, %p107
    %s110 = sadd.s32 %s109, 1
    %p113 = scmp.eq.s32.totalorder %s12, 1
    %p114 = scmp.ne.s32.totalorder %s109, %s111
    %p115 = scmp.eq.s32.totalorder %s12, 0
    %p116 = por %p114, %p115
    %p117 = scmp.ne.s32.totalorder %s109, %s111
    %p118 = scmp.eq.s32.totalorder %s17, 1
    %p119 = por %p117, %p118
    %p120 = scmp.ne.s32.totalorder %s111, %s112
    %p121 = scmp.eq.s32.totalorder %s17, 0
    %p122 = por %p120, %p121
    %p123 = scmp.ne.s32.totalorder %s111, %s112
    %p124 = scmp.eq.s32.totalorder %s18, 1
    %p125 = por %p123, %p124
    %p127 = scmp.ne.s32.totalorder %s112, %s126
    %p128 = scmp.eq.s32.totalorder %s18, 0
    %p129 = por %p127, %p128
    %s131 = sadd.s32 %s130, 1
    %p134 = scmp.eq.s32.totalorder %s12, 1
    %p135 = scmp.ne.s32.totalorder %s130, %s132
    %p136 = scmp.eq.s32.totalorder %s12, 0
    %p137 = por %p135, %p136
    %p138 = scmp.ne.s32.totalorder %s130, %s132
    %p139 = scmp.eq.s32.totalorder %s17, 1
    %p140 = por %p138, %p139
    %p141 = scmp.ne.s32.totalorder %s132, %s133
    %p142 = scmp.eq.s32.totalorder %s17, 0
    %p143 = por %p141, %p142
    %p144 = scmp.ne.s32.totalorder %s132, %s133
    %p145 = scmp.eq.s32.totalorder %s18, 1
    %p146 = por %p144, %p145
    %p148 = scmp.ne.s32.totalorder %s133, %s147
    %p149 = scmp.eq.s32.totalorder %s18, 0
    %p150 = por %p148, %p149
    %s151 = ssub.s32 %s12, %s19
    %p152 = scmp.eq.s32.totalorder %s151, 0
    %s154 = sadd.s32 %s153, 1
    %s155 = scalar_select %p152, %s153, %s154
    %p158 = pneg %p152
    %p159 = scmp.eq.s32.totalorder %s12, 1
    %p160 = por %p158, %p159
    %p161 = scmp.ne.s32.totalorder %s153, %s156
    %p162 = scmp.eq.s32.totalorder %s12, 0
    %p163 = por %p161, %p162
    %p164 = scmp.ne.s32.totalorder %s153, %s156
    %p165 = scmp.eq.s32.totalorder %s17, 1
    %p166 = por %p164, %p165
    %p167 = scmp.ne.s32.totalorder %s156, %s157
    %p168 = scmp.eq.s32.totalorder %s17, 0
    %p169 = por %p167, %p168
    %p170 = scmp.ne.s32.totalorder %s156, %s157
    %p171 = scmp.eq.s32.totalorder %s18, 1
    %p172 = por %p170, %p171
    %p174 = scmp.ne.s32.totalorder %s157, %s173
    %p175 = scmp.eq.s32.totalorder %s18, 0
    %p176 = por %p174, %p175
    %p177 = scmp.le.s32.totalorder 1, %s12
    %p178 = scmp.lt.s32.totalorder %s12, 3
    %p179 = pnand %p177, %p178
    %p180 = pneg %p179
    // Predicated region
    $region9: #{resnet_forward.4} parent=5 // pred_check
      _
    $region10: #{resnet_forward.4} parent=5 // pred_check_branch
      %182 = sbr.rel (%p179) target = $region12
    $region11: #{resnet_forward.4} parent=5 // pred_region
      %s183 = ssub.s32 %s12, 1
      // Predicated region
      $region13: #{resnet_forward.4} parent=11 // pred_check
        %p184 = pneg %p59
      $region14: #{resnet_forward.4} parent=11 // pred_check_branch
        %186 = sbr.rel (%p184) target = $region16
      $region15: #{resnet_forward.4} parent=11 // pred_region
        _
      $region16: #{resnet_forward.4} parent=11 // pred_fallthru
        _
      // Predicated region
      $region17: #{resnet_forward.4} parent=11 // pred_check
        %p187 = pneg %p80
      $region18: #{resnet_forward.4} parent=11 // pred_check_branch
        %189 = sbr.rel (%p187) target = $region20
      $region19: #{resnet_forward.4} parent=11 // pred_region
        _
      $region20: #{resnet_forward.4} parent=11 // pred_fallthru
        _
      // Predicated region
      $region21: #{resnet_forward.4} parent=11 // pred_check
        %p190 = pneg %p101
      $region22: #{resnet_forward.4} parent=11 // pred_check_branch
        %192 = sbr.rel (%p190) target = $region24
      $region23: #{resnet_forward.4} parent=11 // pred_region
        _
      $region24: #{resnet_forward.4} parent=11 // pred_fallthru
        _
      // Predicated region
      $region25: #{resnet_forward.4} parent=11 // pred_check
        %p193 = pneg %p122
      $region26: #{resnet_forward.4} parent=11 // pred_check_branch
        %195 = sbr.rel (%p193) target = $region28
      $region27: #{resnet_forward.4} parent=11 // pred_region
        _
      $region28: #{resnet_forward.4} parent=11 // pred_fallthru
        _
      // Predicated region
      $region29: #{resnet_forward.4} parent=11 // pred_check
        %p196 = pneg %p143
      $region30: #{resnet_forward.4} parent=11 // pred_check_branch
        %198 = sbr.rel (%p196) target = $region32
      $region31: #{resnet_forward.4} parent=11 // pred_region
        _
      $region32: #{resnet_forward.4} parent=11 // pred_fallthru
        _
    $region12: #{resnet_forward.4} parent=5 // pred_fallthru
      _
    %p199 = scmp.lt.s32.totalorder %s12, 2
    // Predicated region
    $region33: #{resnet_forward.4} parent=5 // pred_check
      %p200 = pneg %p199
    $region34: #{resnet_forward.4} parent=5 // pred_check_branch
      %202 = sbr.rel (%p200) target = $region36
    $region35: #{resnet_forward.4} parent=5 // pred_region
      // Predicated region
      $region37: #{resnet_forward.4} parent=35 // pred_check
        %p203 = pneg %p32
      $region38: #{resnet_forward.4} parent=35 // pred_check_branch
        %205 = sbr.rel (%p203) target = $region40
      $region39: #{resnet_forward.4} parent=35 // pred_region
        %p206 = scmp.lt.s32.totalorder %s12, 1
        %s207 = scalar_select %p206, %s12, 1
        %s208 = smul.addr %s207, 16
        %s209 = smul.addr %s208, 8
        %s210 = scalar_lea.vmem %s0, %s209
      $region40: #{resnet_forward.4} parent=35 // pred_fallthru
        _
    $region36: #{resnet_forward.4} parent=5 // pred_fallthru
      _
    %p211 = scmp.le.s32.totalorder 1, %s12
    %p212 = scmp.lt.s32.totalorder %s12, 3
    %p213 = pnand %p211, %p212
    %p214 = pneg %p213
    // Predicated region
    $region41: #{resnet_forward.4} parent=5 // pred_check
      _
    $region42: #{resnet_forward.4} parent=5 // pred_check_branch
      %216 = sbr.rel (%p213) target = $region44
    $region43: #{resnet_forward.4} parent=5 // pred_region
      %s217 = ssub.s32 %s12, 1
      %p218 = scmp.lt.s32.totalorder %s17, 1
      %s219 = scalar_select %p218, %s17, 1
      %s220 = smul.addr %s219, 16
      %s221 = smul.addr %s220, 8
      %s222 = scalar_lea.vmem %s0, %s221
      %p223 = pneg %p38
      %p224 = pneg %p35
      %p225 = pneg %p59
      %p226 = pneg %p56
      %p227 = pneg %p80
      %p228 = pneg %p77
      %p229 = pneg %p101
      %p230 = pneg %p98
      %p231 = pneg %p122
      %p232 = pneg %p119
      %p233 = pneg %p143
      %p234 = pneg %p140
      %p235 = pneg %p169
      %p236 = pneg %p166
      %p237 = scmp.lt.s32.totalorder %s17, 1
      %s238 = scalar_select %p237, %s17, 1
      %s239 = smul.addr %s238, 24
      %s240 = smul.addr %s239, 4
      %s241 = scalar_lea.vmem %s6, %s240
      %p242 = scmp.lt.s32.totalorder %s17, 1
      %s243 = scalar_select %p242, %s17, 1
      %s244 = smul.addr %s243, 16
      %s245 = smul.addr %s244, 8
      %s246 = scalar_lea.vmem %s0, %s245
      %p247 = scmp.lt.s32.totalorder %s17, 1
      %s248 = scalar_select %p247, %s17, 1
      %s249 = smul.addr %s248, 24
      %s250 = smul.addr %s249, 4
      %s251 = scalar_lea.vmem %s6, %s250
      %v253 = vld [vmem:[%s246] sm:$0xff]
      %v254 = vld [vmem:[%s246 + $0x8] sm:$0xff]
      %v255 = vld [vmem:[%s246 + $0x10] sm:$0xff]
      %v256 = vld [vmem:[%s246 + $0x18] sm:$0xff]
      %v257 = vld [vmem:[%s246 + $0x20] sm:$0xff]
      %v258 = vld [vmem:[%s246 + $0x28] sm:$0xff]
      %v259 = vld [vmem:[%s246 + $0x30] sm:$0xff]
      %v260 = vld [vmem:[%s246 + $0x38] sm:$0xff]
      %v261 = vld [vmem:[%s246 + $0x40] sm:$0xff]
      %v262 = vld [vmem:[%s246 + $0x48] sm:$0xff]
      %v263 = vld [vmem:[%s246 + $0x50] sm:$0xff]
      %v264 = vld [vmem:[%s246 + $0x58] sm:$0xff]
      %v265 = vld [vmem:[%s246 + $0x60] sm:$0xff]
      %v266 = vld [vmem:[%s246 + $0x68] sm:$0xff]
      %v267 = vld [vmem:[%s246 + $0x70] sm:$0xff]
      %v268 = vld [vmem:[%s246 + $0x78] sm:$0xff]
      %v269 = vld [vmem:[%s1] sm:$0xff]
      %v270 = vld [vmem:[%s1 + $0x8] sm:$0xff]
      %v271 = vld [vmem:[%s1 + $0x10] sm:$0xff]
      %v272 = vld [vmem:[%s1 + $0x18] sm:$0xff]
      %v273 = vld [vmem:[%s1 + $0x20] sm:$0xff]
      %v274 = vld [vmem:[%s1 + $0x28] sm:$0xff]
      %v275 = vld [vmem:[%s1 + $0x30] sm:$0xff]
      %v276 = vld [vmem:[%s1 + $0x38] sm:$0xff]
      %v277 = vld [vmem:[%s1 + $0x40] sm:$0xff]
      %v278 = vld [vmem:[%s1 + $0x48] sm:$0xff]
      %v279 = vld [vmem:[%s1 + $0x50] sm:$0xff]
      %v280 = vld [vmem:[%s1 + $0x58] sm:$0xff]
      %v281 = vld [vmem:[%s1 + $0x60] sm:$0xff]
      %v282 = vld [vmem:[%s1 + $0x68] sm:$0xff]
      %v283 = vld [vmem:[%s1 + $0x70] sm:$0xff]
      %v284 = vld [vmem:[%s1 + $0x78] sm:$0xff]
      %286 = vset.pattern.permute.xlu0 0
      %287 = vperm.xlu0 %286, %v269
      %v288 = vpop.permute.xlu0 %287
      %291 = vset.pattern.permute.xlu0 0
      %292 = vperm.xlu0 %291, %v270
      %v293 = vpop.permute.xlu0 %292
      %296 = vset.pattern.permute.xlu0 0
      %297 = vperm.xlu0 %296, %v271
      %v298 = vpop.permute.xlu0 %297
      %301 = vset.pattern.permute.xlu0 0
      %302 = vperm.xlu0 %301, %v272
      %v303 = vpop.permute.xlu0 %302
      %306 = vset.pattern.permute.xlu0 0
      %307 = vperm.xlu0 %306, %v273
      %v308 = vpop.permute.xlu0 %307
      %311 = vset.pattern.permute.xlu0 0
      %312 = vperm.xlu0 %311, %v274
      %v313 = vpop.permute.xlu0 %312
      %316 = vset.pattern.permute.xlu0 0
      %317 = vperm.xlu0 %316, %v275
      %v318 = vpop.permute.xlu0 %317
      %321 = vset.pattern.permute.xlu0 0
      %322 = vperm.xlu0 %321, %v276
      %v323 = vpop.permute.xlu0 %322
      %326 = vset.pattern.permute.xlu0 0
      %327 = vperm.xlu0 %326, %v277
      %v328 = vpop.permute.xlu0 %327
      %331 = vset.pattern.permute.xlu0 0
      %332 = vperm.xlu0 %331, %v278
      %v333 = vpop.permute.xlu0 %332
      %336 = vset.pattern.permute.xlu0 0
      %337 = vperm.xlu0 %336, %v279
      %v338 = vpop.permute.xlu0 %337
      %341 = vset.pattern.permute.xlu0 0
      %342 = vperm.xlu0 %341, %v280
      %v343 = vpop.permute.xlu0 %342
      %346 = vset.pattern.permute.xlu0 0
      %347 = vperm.xlu0 %346, %v281
      %v348 = vpop.permute.xlu0 %347
      %351 = vset.pattern.permute.xlu0 0
      %352 = vperm.xlu0 %351, %v282
      %v353 = vpop.permute.xlu0 %352
      %356 = vset.pattern.permute.xlu0 0
      %357 = vperm.xlu0 %356, %v283
      %v358 = vpop.permute.xlu0 %357
      %361 = vset.pattern.permute.xlu0 0
      %362 = vperm.xlu0 %361, %v284
      %v363 = vpop.permute.xlu0 %362
      %v365 = vmul.f32 %v253, %v288
      %v366 = vmul.f32 %v254, %v293
      %v367 = vmul.f32 %v255, %v298
      %v368 = vmul.f32 %v256, %v303
      %v369 = vmul.f32 %v257, %v308
      %v370 = vmul.f32 %v258, %v313
      %v371 = vmul.f32 %v259, %v318
      %v372 = vmul.f32 %v260, %v323
      %v373 = vmul.f32 %v261, %v328
      %v374 = vmul.f32 %v262, %v333
      %v375 = vmul.f32 %v263, %v338
      %v376 = vmul.f32 %v264, %v343
      %v377 = vmul.f32 %v265, %v348
      %v378 = vmul.f32 %v266, %v353
      %v379 = vmul.f32 %v267, %v358
      %v380 = vmul.f32 %v268, %v363
      %vm381 = vcmask 261120
      %v382 = vsel %vm381, %v365, 0.0
      %v383 = vsel %vm381, %v366, 0.0
      %v384 = vadd.f32 %v382, %v383
      %v385 = vsel %vm381, %v367, 0.0
      %v386 = vadd.f32 %v384, %v385
      %v387 = vsel %vm381, %v368, 0.0
      %v388 = vadd.f32 %v386, %v387
      %v389 = vsel %vm381, %v369, 0.0
      %v390 = vadd.f32 %v388, %v389
      %v391 = vsel %vm381, %v370, 0.0
      %v392 = vadd.f32 %v390, %v391
      %v393 = vsel %vm381, %v371, 0.0
      %v394 = vadd.f32 %v392, %v393
      %v395 = vsel %vm381, %v372, 0.0
      %v396 = vadd.f32 %v394, %v395
      %v397 = vsel %vm381, %v373, 0.0
      %v398 = vadd.f32 %v396, %v397
      %v399 = vsel %vm381, %v374, 0.0
      %v400 = vadd.f32 %v398, %v399
      %v401 = vsel %vm381, %v375, 0.0
      %v402 = vadd.f32 %v400, %v401
      %v403 = vsel %vm381, %v376, 0.0
      %v404 = vadd.f32 %v402, %v403
      %v405 = vsel %vm381, %v377, 0.0
      %v406 = vadd.f32 %v404, %v405
      %v407 = vsel %vm381, %v378, 0.0
      %v408 = vadd.f32 %v406, %v407
      %v409 = vsel %vm381, %v379, 0.0
      %v410 = vadd.f32 %v408, %v409
      %v411 = vsel %vm381, %v380, 0.0
      %v412 = vadd.f32 %v410, %v411
      %v413 = vrot.slane %v412, 4
      %v414 = vadd.f32 %v412, %v413
      %v415 = vrot.slane %v414, 2
      %v416 = vadd.f32 %v414, %v415
      %v417 = vrot.slane %v416, 1
      %v418 = vadd.f32 %v416, %v417
      %v419 = vmul.f32 %v365, %v365
      %v420 = vmul.f32 %v366, %v366
      %v421 = vmul.f32 %v367, %v367
      %v422 = vmul.f32 %v368, %v368
      %v423 = vmul.f32 %v369, %v369
      %v424 = vmul.f32 %v370, %v370
      %v425 = vmul.f32 %v371, %v371
      %v426 = vmul.f32 %v372, %v372
      %v427 = vmul.f32 %v373, %v373
      %v428 = vmul.f32 %v374, %v374
      %v429 = vmul.f32 %v375, %v375
      %v430 = vmul.f32 %v376, %v376
      %v431 = vmul.f32 %v377, %v377
      %v432 = vmul.f32 %v378, %v378
      %v433 = vmul.f32 %v379, %v379
      %v434 = vmul.f32 %v380, %v380
      %v435 = vsel %vm381, %v419, 0.0
      %v436 = vsel %vm381, %v420, 0.0
      %v437 = vadd.f32 %v435, %v436
      %v438 = vsel %vm381, %v421, 0.0
      %v439 = vadd.f32 %v437, %v438
      %v440 = vsel %vm381, %v422, 0.0
      %v441 = vadd.f32 %v439, %v440
      %v442 = vsel %vm381, %v423, 0.0
      %v443 = vadd.f32 %v441, %v442
      %v444 = vsel %vm381, %v424, 0.0
      %v445 = vadd.f32 %v443, %v444
      %v446 = vsel %vm381, %v425, 0.0
      %v447 = vadd.f32 %v445, %v446
      %v448 = vsel %vm381, %v426, 0.0
      %v449 = vadd.f32 %v447, %v448
      %v450 = vsel %vm381, %v427, 0.0
      %v451 = vadd.f32 %v449, %v450
      %v452 = vsel %vm381, %v428, 0.0
      %v453 = vadd.f32 %v451, %v452
      %v454 = vsel %vm381, %v429, 0.0
      %v455 = vadd.f32 %v453, %v454
      %v456 = vsel %vm381, %v430, 0.0
      %v457 = vadd.f32 %v455, %v456
      %v458 = vsel %vm381, %v431, 0.0
      %v459 = vadd.f32 %v457, %v458
      %v460 = vsel %vm381, %v432, 0.0
      %v461 = vadd.f32 %v459, %v460
      %v462 = vsel %vm381, %v433, 0.0
      %v463 = vadd.f32 %v461, %v462
      %v464 = vsel %vm381, %v434, 0.0
      %v465 = vadd.f32 %v463, %v464
      %v466 = vrot.slane %v465, 4
      %v467 = vadd.f32 %v465, %v466
      %v468 = vrot.slane %v467, 2
      %v469 = vadd.f32 %v467, %v468
      %v470 = vrot.slane %v469, 1
      %v471 = vadd.f32 %v469, %v470
      %vm472 = vcmask 1040384
      %v473 = vsel %vm472, %v418, %v471
      %v474 = vld [vmem:[%s2] sm:$0xff]
      %v475 = vld [vmem:[%s2 + $0x8] sm:$0xff]
      %v476 = vld [vmem:[%s2 + $0x10] sm:$0xff]
      %v477 = vld [vmem:[%s2 + $0x18] sm:$0xff]
      %v479 = vsel %vm381, %v473, 0
      %481 = vmatprep.subr.mxu0 0.0
      %482 = vmatpush1.msra.mxu0 0.0
      %483 = vmatprep.subr.mxu0 0.0
      %484 = vmatpush1.msra.mxu0 0.0
      %485 = vmatprep.subr.mxu0 0.0
      %486 = vmatpush1.msra.mxu0 0.0
      %487 = vmatprep.subr.mxu0 0.0
      %488 = vmatpush1.msra.mxu0 0.0
      %489 = vmatprep.subr.mxu0 0.0
      %490 = vmatpush1.msra.mxu0 0.0
      %491 = vmatprep.subr.mxu0 0.0
      %492 = vmatpush1.msra.mxu0 0.0
      %493 = vmatprep.subr.mxu0 0.0
      %494 = vmatpush1.msra.mxu0 0.0
      %495 = vmatprep.subr.mxu0 0.0
      %496 = vmatpush1.msra.mxu0 0.0
      %497 = vmatprep.subr.mxu0 0.0
      %498 = vmatpush1.msra.mxu0 0.0
      %499 = vmatprep.subr.mxu0 0.0
      %500 = vmatpush1.msra.mxu0 0.0
      %501 = vmatprep.subr.mxu0 0.0
      %502 = vmatpush1.msra.mxu0 0.0
      %503 = vmatprep.subr.mxu0 0.0
      %504 = vmatpush1.msra.mxu0 0.0
      %505 = vmatprep.subr.mxu0 0.0
      %506 = vmatpush1.msra.mxu0 %v477
      %507 = vmatprep.subr.mxu0 0.0
      %508 = vmatpush1.msra.mxu0 %v476
      %509 = vmatprep.subr.mxu0 0.0
      %510 = vmatpush1.msra.mxu0 %v475
      %511 = vmatprep.subr.mxu0 0.0
      %512 = vmatpush1.msra.mxu0 %v474
      %513 = vmatprep.subr.mxu0 0.0
      %514 = vmatpush2.msra.mxu0 0.0
      %515 = vmatprep.subr.mxu0 0.0
      %516 = vmatpush2.msra.mxu0 0.0
      %517 = vmatprep.subr.mxu0 0.0
      %518 = vmatpush2.msra.mxu0 0.0
      %519 = vmatprep.subr.mxu0 0.0
      %520 = vmatpush2.msra.mxu0 0.0
      %521 = vmatprep.subr.mxu0 0.0
      %522 = vmatpush2.msra.mxu0 0.0
      %523 = vmatprep.subr.mxu0 0.0
      %524 = vmatpush2.msra.mxu0 0.0
      %525 = vmatprep.subr.mxu0 0.0
      %526 = vmatpush2.msra.mxu0 0.0
      %527 = vmatprep.subr.mxu0 0.0
      %528 = vmatpush2.msra.mxu0 0.0
      %529 = vmatprep.subr.mxu0 0.0
      %530 = vmatpush2.msra.mxu0 0.0
      %531 = vmatprep.subr.mxu0 0.0
      %532 = vmatpush2.msra.mxu0 0.0
      %533 = vmatprep.subr.mxu0 0.0
      %534 = vmatpush2.msra.mxu0 0.0
      %535 = vmatprep.subr.mxu0 0.0
      %536 = vmatpush2.msra.mxu0 0.0
      %537 = vmatprep.subr.mxu0 0.0
      %538 = vmatpush2.msra.mxu0 0.0
      %539 = vmatprep.subr.mxu0 0.0
      %540 = vmatpush2.msra.mxu0 0.0
      %541 = vmatprep.subr.mxu0 0.0
      %542 = vmatpush2.msra.mxu0 0.0
      %543 = vmatprep.subr.mxu0 0.0
      %544 = vmatpush2.msra.mxu0 0.0
      %545 = vmatprep.mubr.f32.mxu0 0.0
      %546 = vmatmul.mubr.f32.gmra.mxu0 %v479
      %v547 = vpop.f32.mrf.mxu0
      %v548 = vadd.f32 0.0, %v547
      %v549 = vpop.f32.mrf.mxu0
      %550 = vdwg.mxu0
      %v551 = vmul.f32 %v548, 0.015625
      %v552 = vmul.f32 %v551, %v551
      %v554 = vrot.slane %v552, 7
      %v556 = vsub.f32 %v551, %v554
      %v557 = vadd.f32 %v556, 1e-06
      %v558 = vrsqrt.pop %v557
      %v559 = vsub.f32 0.0, %v551
      %v561 = vrot.slane %v558, 1
      %v563 = vmul.f32 %v559, %v561
      %v565 = vrot.slane %v563, 7
      %v567 = vsel %vm472, %v561, %v565
      %v568 = vld [vmem:[%s3] sm:$0xff]
      %v569 = vld [vmem:[%s3 + $0x8] sm:$0xff]
      %v570 = vld [vmem:[%s3 + $0x10] sm:$0xff]
      %v571 = vld [vmem:[%s3 + $0x18] sm:$0xff]
      %v573 = vsel %vm381, %v567, 0
      %575 = vmatprep.subr.mxu0 0.0
      %576 = vmatpush1.msra.mxu0 0.0
      %577 = vmatprep.subr.mxu0 0.0
      %578 = vmatpush1.msra.mxu0 0.0
      %579 = vmatprep.subr.mxu0 0.0
      %580 = vmatpush1.msra.mxu0 0.0
      %581 = vmatprep.subr.mxu0 0.0
      %582 = vmatpush1.msra.mxu0 0.0
      %583 = vmatprep.subr.mxu0 0.0
      %584 = vmatpush1.msra.mxu0 0.0
      %585 = vmatprep.subr.mxu0 0.0
      %586 = vmatpush1.msra.mxu0 0.0
      %587 = vmatprep.subr.mxu0 0.0
      %588 = vmatpush1.msra.mxu0 0.0
      %589 = vmatprep.subr.mxu0 0.0
      %590 = vmatpush1.msra.mxu0 0.0
      %591 = vmatprep.subr.mxu0 0.0
      %592 = vmatpush1.msra.mxu0 0.0
      %593 = vmatprep.subr.mxu0 0.0
      %594 = vmatpush1.msra.mxu0 0.0
      %595 = vmatprep.subr.mxu0 0.0
      %596 = vmatpush1.msra.mxu0 0.0
      %597 = vmatprep.subr.mxu0 0.0
      %598 = vmatpush1.msra.mxu0 0.0
      %599 = vmatprep.subr.mxu0 0.0
      %600 = vmatpush1.msra.mxu0 %v571
      %601 = vmatprep.subr.mxu0 0.0
      %602 = vmatpush1.msra.mxu0 %v570
      %603 = vmatprep.subr.mxu0 0.0
      %604 = vmatpush1.msra.mxu0 %v569
      %605 = vmatprep.subr.mxu0 0.0
      %606 = vmatpush1.msra.mxu0 %v568
      %607 = vmatprep.subr.mxu0 0.0
      %608 = vmatpush2.msra.mxu0 0.0
      %609 = vmatprep.subr.mxu0 0.0
      %610 = vmatpush2.msra.mxu0 0.0
      %611 = vmatprep.subr.mxu0 0.0
      %612 = vmatpush2.msra.mxu0 0.0
      %613 = vmatprep.subr.mxu0 0.0
      %614 = vmatpush2.msra.mxu0 0.0
      %615 = vmatprep.subr.mxu0 0.0
      %616 = vmatpush2.msra.mxu0 0.0
      %617 = vmatprep.subr.mxu0 0.0
      %618 = vmatpush2.msra.mxu0 0.0
      %619 = vmatprep.subr.mxu0 0.0
      %620 = vmatpush2.msra.mxu0 0.0
      %621 = vmatprep.subr.mxu0 0.0
      %622 = vmatpush2.msra.mxu0 0.0
      %623 = vmatprep.subr.mxu0 0.0
      %624 = vmatpush2.msra.mxu0 0.0
      %625 = vmatprep.subr.mxu0 0.0
      %626 = vmatpush2.msra.mxu0 0.0
      %627 = vmatprep.subr.mxu0 0.0
      %628 = vmatpush2.msra.mxu0 0.0
      %629 = vmatprep.subr.mxu0 0.0
      %630 = vmatpush2.msra.mxu0 0.0
      %631 = vmatprep.subr.mxu0 0.0
      %632 = vmatpush2.msra.mxu0 0.0
      %633 = vmatprep.subr.mxu0 0.0
      %634 = vmatpush2.msra.mxu0 0.0
      %635 = vmatprep.subr.mxu0 0.0
      %636 = vmatpush2.msra.mxu0 0.0
      %637 = vmatprep.subr.mxu0 0.0
      %638 = vmatpush2.msra.mxu0 0.0
      %639 = vmatprep.mubr.f32.mxu0 0.0
      %640 = vmatmul.mubr.f32.gmra.mxu0 %v573
      %v641 = vpop.f32.mrf.mxu0
      %v642 = vadd.f32 0.0, %v641
      %v643 = vpop.f32.mrf.mxu0
      %644 = vdwg.mxu0
      %v645 = vld [vmem:[%s4] sm:$0x1]
      %v646 = vmul.f32 %v642, %v645
      %v648 = vlaneseq
      %v649 = vshrl.u32 %v648, 7
      %v650 = vsub.s32 0, %v649
      %v651 = vrot.slane %v645, %v650
      %v653 = vmul.f32 %v642, %v651
      %v654 = vld [vmem:[%s5] sm:$0x1]
      %v656 = vlaneseq
      %v657 = vshrl.u32 %v656, 7
      %v658 = vsub.s32 0, %v657
      %v659 = vrot.slane %v654, %v658
      %v661 = vadd.f32 %v653, %v659
      %v662 = vlaneseq
      %v663 = vshrl.u32 %v662, 7
      %v664 = vsub.s32 0, %v663
      %v665 = vrot.slane %v646, %v664
      %v666 = vmul.f32 %v253, %v665
      %v667 = vmul.f32 %v254, %v665
      %v668 = vmul.f32 %v255, %v665
      %v669 = vmul.f32 %v256, %v665
      %v670 = vmul.f32 %v257, %v665
      %v671 = vmul.f32 %v258, %v665
      %v672 = vmul.f32 %v259, %v665
      %v673 = vmul.f32 %v260, %v665
      %v674 = vmul.f32 %v261, %v665
      %v675 = vmul.f32 %v262, %v665
      %v676 = vmul.f32 %v263, %v665
      %v677 = vmul.f32 %v264, %v665
      %v678 = vmul.f32 %v265, %v665
      %v679 = vmul.f32 %v266, %v665
      %v680 = vmul.f32 %v267, %v665
      %v681 = vmul.f32 %v268, %v665
      %v682 = vlaneseq
      %v683 = vshrl.u32 %v682, 7
      %v684 = vsub.s32 1, %v683
      %v685 = vrot.slane %v661, %v684
      %v686 = vadd.f32 %v666, %v685
      %v687 = vadd.f32 %v667, %v685
      %v688 = vadd.f32 %v668, %v685
      %v689 = vadd.f32 %v669, %v685
      %v690 = vadd.f32 %v670, %v685
      %v691 = vadd.f32 %v671, %v685
      %v692 = vadd.f32 %v672, %v685
      %v693 = vadd.f32 %v673, %v685
      %v694 = vadd.f32 %v674, %v685
      %v695 = vadd.f32 %v675, %v685
      %v696 = vadd.f32 %v676, %v685
      %v697 = vadd.f32 %v677, %v685
      %v698 = vadd.f32 %v678, %v685
      %v699 = vadd.f32 %v679, %v685
      %v700 = vadd.f32 %v680, %v685
      %v701 = vadd.f32 %v681, %v685
      %v702 = vxor.u32 %v686, 2147483648
      %v703 = vxor.u32 %v687, 2147483648
      %v704 = vxor.u32 %v688, 2147483648
      %v705 = vxor.u32 %v689, 2147483648
      %v706 = vxor.u32 %v690, 2147483648
      %v707 = vxor.u32 %v691, 2147483648
      %v708 = vxor.u32 %v692, 2147483648
      %v709 = vxor.u32 %v693, 2147483648
      %v710 = vxor.u32 %v694, 2147483648
      %v711 = vxor.u32 %v695, 2147483648
      %v712 = vxor.u32 %v696, 2147483648
      %v713 = vxor.u32 %v697, 2147483648
      %v714 = vxor.u32 %v698, 2147483648
      %v715 = vxor.u32 %v699, 2147483648
      %v716 = vxor.u32 %v700, 2147483648
      %v717 = vxor.u32 %v701, 2147483648
      %v718 = vmul.f32 %v702, 1.442695
      %v719 = vpow.pop %v718
      %v720 = vmul.f32 %v703, 1.442695
      %v721 = vpow.pop %v720
      %v722 = vmul.f32 %v704, 1.442695
      %v723 = vpow.pop %v722
      %v724 = vmul.f32 %v705, 1.442695
      %v725 = vpow.pop %v724
      %v726 = vmul.f32 %v706, 1.442695
      %v727 = vpow.pop %v726
      %v728 = vmul.f32 %v707, 1.442695
      %v729 = vpow.pop %v728
      %v730 = vmul.f32 %v708, 1.442695
      %v731 = vpow.pop %v730
      %v732 = vmul.f32 %v709, 1.442695
      %v733 = vpow.pop %v732
      %v734 = vmul.f32 %v710, 1.442695
      %v735 = vpow.pop %v734
      %v736 = vmul.f32 %v711, 1.442695
      %v737 = vpow.pop %v736
      %v738 = vmul.f32 %v712, 1.442695
      %v739 = vpow.pop %v738
      %v740 = vmul.f32 %v713, 1.442695
      %v741 = vpow.pop %v740
      %v742 = vmul.f32 %v714, 1.442695
      %v743 = vpow.pop %v742
      %v744 = vmul.f32 %v715, 1.442695
      %v745 = vpow.pop %v744
      %v746 = vmul.f32 %v716, 1.442695
      %v747 = vpow.pop %v746
      %v748 = vmul.f32 %v717, 1.442695
      %v749 = vpow.pop %v748
      %v750 = vadd.f32 %v719, 1.0
      %v751 = vadd.f32 %v721, 1.0
      %v752 = vadd.f32 %v723, 1.0
      %v753 = vadd.f32 %v725, 1.0
      %v754 = vadd.f32 %v727, 1.0
      %v755 = vadd.f32 %v729, 1.0
      %v756 = vadd.f32 %v731, 1.0
      %v757 = vadd.f32 %v733, 1.0
      %v758 = vadd.f32 %v735, 1.0
      %v759 = vadd.f32 %v737, 1.0
      %v760 = vadd.f32 %v739, 1.0
      %v761 = vadd.f32 %v741, 1.0
      %v762 = vadd.f32 %v743, 1.0
      %v763 = vadd.f32 %v745, 1.0
      %v764 = vadd.f32 %v747, 1.0
      %v765 = vadd.f32 %v749, 1.0
      %v766 = vrcp.pop %v750
      %v767 = vmul.f32 1.0, %v766
      %v768 = vrcp.pop %v751
      %v769 = vmul.f32 1.0, %v768
      %v770 = vrcp.pop %v752
      %v771 = vmul.f32 1.0, %v770
      %v772 = vrcp.pop %v753
      %v773 = vmul.f32 1.0, %v772
      %v774 = vrcp.pop %v754
      %v775 = vmul.f32 1.0, %v774
      %v776 = vrcp.pop %v755
      %v777 = vmul.f32 1.0, %v776
      %v778 = vrcp.pop %v756
      %v779 = vmul.f32 1.0, %v778
      %v780 = vrcp.pop %v757
      %v781 = vmul.f32 1.0, %v780
      %v782 = vrcp.pop %v758
      %v783 = vmul.f32 1.0, %v782
      %v784 = vrcp.pop %v759
      %v785 = vmul.f32 1.0, %v784
      %v786 = vrcp.pop %v760
      %v787 = vmul.f32 1.0, %v786
      %v788 = vrcp.pop %v761
      %v789 = vmul.f32 1.0, %v788
      %v790 = vrcp.pop %v762
      %v791 = vmul.f32 1.0, %v790
      %v792 = vrcp.pop %v763
      %v793 = vmul.f32 1.0, %v792
      %v794 = vrcp.pop %v764
      %v795 = vmul.f32 1.0, %v794
      %v796 = vrcp.pop %v765
      %v797 = vmul.f32 1.0, %v796
      %v798 = vmul.f32 %v686, %v767
      %v799 = vmul.f32 %v687, %v769
      %v800 = vmul.f32 %v688, %v771
      %v801 = vmul.f32 %v689, %v773
      %v802 = vmul.f32 %v690, %v775
      %v803 = vmul.f32 %v691, %v777
      %v804 = vmul.f32 %v692, %v779
      %v805 = vmul.f32 %v693, %v781
      %v806 = vmul.f32 %v694, %v783
      %v807 = vmul.f32 %v695, %v785
      %v808 = vmul.f32 %v696, %v787
      %v809 = vmul.f32 %v697, %v789
      %v810 = vmul.f32 %v698, %v791
      %v811 = vmul.f32 %v699, %v793
      %v812 = vmul.f32 %v700, %v795
      %v813 = vmul.f32 %v701, %v797
      %v814 = vmul.f32 %v798, %v288
      %v815 = vmul.f32 %v799, %v293
      %v816 = vmul.f32 %v800, %v298
      %v817 = vmul.f32 %v801, %v303
      %v818 = vmul.f32 %v802, %v308
      %v819 = vmul.f32 %v803, %v313
      %v820 = vmul.f32 %v804, %v318
      %v821 = vmul.f32 %v805, %v323
      %v822 = vmul.f32 %v806, %v328
      %v823 = vmul.f32 %v807, %v333
      %v824 = vmul.f32 %v808, %v338
      %v825 = vmul.f32 %v809, %v343
      %v826 = vmul.f32 %v810, %v348
      %v827 = vmul.f32 %v811, %v353
      %v828 = vmul.f32 %v812, %v358
      %v829 = vmul.f32 %v813, %v363
      %v830 = vpack.c.bf16 %v815, %v814
      %v831 = vpack.c.bf16 %v817, %v816
      %v832 = vpack.c.bf16 %v819, %v818
      %v833 = vpack.c.bf16 %v821, %v820
      %v834 = vpack.c.bf16 %v823, %v822
      %v835 = vpack.c.bf16 %v825, %v824
      %v836 = vpack.c.bf16 %v827, %v826
      %v837 = vpack.c.bf16 %v829, %v828
      %vm838 = vcmask 257024
      %839 = vst.msk [vmem:[%s251] sm:$0xf] %vm838, 0
      %840 = vst.msk [vmem:[%s251 + $0x4] sm:$0xf] %vm838, 0
      %841 = vst.msk [vmem:[%s251 + $0x8] sm:$0xf] %vm838, 0
      %842 = vst.msk [vmem:[%s251 + $0xc] sm:$0xf] %vm838, 0
      %v851 = vunpack.c.l.b16 %v830
      %v852 = vunpack.c.h.b16 %v830
      %v853 = vunpack.c.l.b16 %v831
      %v854 = vunpack.c.h.b16 %v831
      %v855 = vunpack.c.l.b16 %v832
      %v856 = vunpack.c.h.b16 %v832
      %v857 = vunpack.c.l.b16 %v833
      %v858 = vunpack.c.h.b16 %v833
      %v859 = vunpack.c.l.b16 %v834
      %v860 = vunpack.c.h.b16 %v834
      %v861 = vunpack.c.l.b16 %v835
      %v862 = vunpack.c.h.b16 %v835
      %v863 = vunpack.c.l.b16 %v836
      %v864 = vunpack.c.h.b16 %v836
      %v865 = vunpack.c.l.b16 %v837
      %v866 = vunpack.c.h.b16 %v837
      %v867 = vpack.c.b16 %v851, %v851
      %v868 = vpack.c.b16 %v852, %v852
      %v869 = vpack.c.b16 %v853, %v853
      %v870 = vpack.c.b16 %v854, %v854
      %v871 = vpack.c.b16 %v855, %v855
      %v872 = vpack.c.b16 %v856, %v856
      %v873 = vpack.c.b16 %v857, %v857
      %v874 = vpack.c.b16 %v858, %v858
      %v875 = vpack.c.b16 %v859, %v859
      %v876 = vpack.c.b16 %v860, %v860
      %v877 = vpack.c.b16 %v861, %v861
      %v878 = vpack.c.b16 %v862, %v862
      %v879 = vpack.c.b16 %v863, %v863
      %v880 = vpack.c.b16 %v864, %v864
      %v881 = vpack.c.b16 %v865, %v865
      %v882 = vpack.c.b16 %v866, %v866
      %899 = vst.msk [vmem:[%s251 + $0x10] sm:$0xf] %vm838, %v867
      %900 = vst.msk [vmem:[%s251 + $0x14] sm:$0xf] %vm838, %v868
      %901 = vst.msk [vmem:[%s251 + $0x18] sm:$0xf] %vm838, %v869
      %902 = vst.msk [vmem:[%s251 + $0x1c] sm:$0xf] %vm838, %v870
      %903 = vst.msk [vmem:[%s251 + $0x20] sm:$0xf] %vm838, %v871
      %904 = vst.msk [vmem:[%s251 + $0x24] sm:$0xf] %vm838, %v872
      %905 = vst.msk [vmem:[%s251 + $0x28] sm:$0xf] %vm838, %v873
      %906 = vst.msk [vmem:[%s251 + $0x2c] sm:$0xf] %vm838, %v874
      %907 = vst.msk [vmem:[%s251 + $0x30] sm:$0xf] %vm838, %v875
      %908 = vst.msk [vmem:[%s251 + $0x34] sm:$0xf] %vm838, %v876
      %909 = vst.msk [vmem:[%s251 + $0x38] sm:$0xf] %vm838, %v877
      %910 = vst.msk [vmem:[%s251 + $0x3c] sm:$0xf] %vm838, %v878
      %911 = vst.msk [vmem:[%s251 + $0x40] sm:$0xf] %vm838, %v879
      %912 = vst.msk [vmem:[%s251 + $0x44] sm:$0xf] %vm838, %v880
      %913 = vst.msk [vmem:[%s251 + $0x48] sm:$0xf] %vm838, %v881
      %914 = vst.msk [vmem:[%s251 + $0x4c] sm:$0xf] %vm838, %v882
      %915 = vst.msk [vmem:[%s251 + $0x50] sm:$0xf] %vm838, 0
      %916 = vst.msk [vmem:[%s251 + $0x54] sm:$0xf] %vm838, 0
      %917 = vst.msk [vmem:[%s251 + $0x58] sm:$0xf] %vm838, 0
      %918 = vst.msk [vmem:[%s251 + $0x5c] sm:$0xf] %vm838, 0
      %p919 = scmp.lt.s32.totalorder %s17, 1
      %s920 = scalar_select %p919, %s17, 1
      %s921 = smul.addr %s920, 24
      %s922 = smul.addr %s921, 4
      %s923 = scalar_lea.vmem %s6, %s922
      // Predicated region
      $region45: #{resnet_forward.4} parent=43 // pred_check
        %p924 = pneg %p166
      $region46: #{resnet_forward.4} parent=43 // pred_check_branch
        %926 = sbr.rel (%p924) target = $region48
      $region47: #{resnet_forward.4} parent=43 // pred_region
        _
      $region48: #{resnet_forward.4} parent=43 // pred_fallthru
        _
    $region44: #{resnet_forward.4} parent=5 // pred_fallthru
      _
    %p927 = scmp.le.s32.totalorder 2, %s12
    // Predicated region
    $region49: #{resnet_forward.4} parent=5 // pred_check
      %p928 = pneg %p927
    $region50: #{resnet_forward.4} parent=5 // pred_check_branch
      %930 = sbr.rel (%p928) target = $region52
    $region51: #{resnet_forward.4} parent=5 // pred_region
      %s931 = ssub.s32 %s12, 2
      // Predicated region
      $region53: #{resnet_forward.4} parent=51 // pred_check
        %p932 = pneg %p172
      $region54: #{resnet_forward.4} parent=51 // pred_check_branch
        %934 = sbr.rel (%p932) target = $region56
      $region55: #{resnet_forward.4} parent=51 // pred_region
        %p935 = scmp.lt.s32.totalorder %s18, 1
        %s936 = scalar_select %p935, %s18, 1
        %s937 = smul.addr %s936, 24
        %s938 = smul.addr %s937, 4
        %s939 = scalar_lea.vmem %s6, %s938
      $region56: #{resnet_forward.4} parent=51 // pred_fallthru
        _
    $region52: #{resnet_forward.4} parent=5 // pred_fallthru
      _
  $region6: #{resnet_forward.4} parent=0 // loop_footer
    %s16 = sadd.s32 1, %s12
  $region7: #{resnet_forward.4} parent=0 // loop_footer_branch
    %11 = sbr.rel target = $region3
  $region8: #{resnet_forward.4} parent=0 // loop_exit
    _

// kernel: resnet_forward.6
$region0: #{resnet_forward.6}
  #allocation0 [shape = 'u32[]', space=smem, size = 0x4, offset = 0x4, fixed_abs, tag = 'smem constant byte address 0x4 - core index']
  #allocation1 [shape = 'u32[144,128]{1,0:T(1,128)}', space=vmem, size = 0x12000, scoped, tag = 'internal scratch']
  %s0 = inlined_call_operand.vmem [shape: bf16[2,128,64], index: 0, kind: input, shape index: {}]
  %s1 = inlined_call_operand.vmem [shape: f32[128,1], index: 1, kind: input, shape index: {}]
  %s2 = inlined_call_operand.vmem [shape: f32[64,32], index: 2, kind: input, shape index: {}]
  %s3 = inlined_call_operand.vmem [shape: f32[32,64], index: 3, kind: input, shape index: {}]
  %s4 = inlined_call_operand.vmem [shape: f32[1,64], index: 4, kind: input, shape index: {}]
  %s5 = inlined_call_operand.vmem [shape: f32[1,64], index: 5, kind: input, shape index: {}]
  %s6 = inlined_call_operand.vmem [shape: bf16[2,192,64], index: 6, kind: output, shape index: {}]
  %s7 = sld [smem:[#allocation0]]
  $region57: #{resnet_forward.6} parent=0
    _
  %s9 = ssub.s32 1, %s7
  %s10 = scalar_select 0, %s9, %s7
  loop: start=0, step=1, limit=4
  $region2: #{resnet_forward.6} parent=0 // loop_pre_header
    _
  $region3: #{resnet_forward.6} parent=0 // loop_header
    %s12 = sphi 0, %s16
    %p13 = scmp.ge.s32.totalorder %s12, 4
    %s22 = sphi 0, %s24
    %s25 = sphi 0, %s22
    %s26 = sphi 0, %s25
    %s42 = sphi 0, %s26
    %s46 = sphi 0, %s46
    %s48 = sphi 0, %s46
    %s49 = sphi 0, %s48
    %s63 = sphi 0, %s49
    %s67 = sphi 0, %s67
    %s69 = sphi 0, %s67
    %s70 = sphi 0, %s69
    %s84 = sphi 0, %s70
    %s88 = sphi 0, %s88
    %s90 = sphi 0, %s88
    %s91 = sphi 0, %s90
    %s105 = sphi 0, %s91
    %s109 = sphi 0, %s109
    %s111 = sphi 0, %s109
    %s112 = sphi 0, %s111
    %s126 = sphi 0, %s112
    %s130 = sphi 0, %s130
    %s132 = sphi 0, %s130
    %s133 = sphi 0, %s132
    %s147 = sphi 0, %s133
    %s153 = sphi 0, %s155
    %s156 = sphi 0, %s153
    %s157 = sphi 0, %s156
    %s173 = sphi 0, %s157
  $region4: #{resnet_forward.6} parent=0 // loop_header_branch
    %15 = sbr.rel (%p13) target = $region8
  $region5: #{resnet_forward.6} parent=0 // loop_body
    %s17 = ssub.s32 %s12, 1
    %s18 = ssub.s32 %s12, 2
    %s19 = sadd.s32 %s12, 1
    %s20 = ssub.s32 %s12, %s19
    %p21 = scmp.eq.s32.totalorder %s20, 0
    %s23 = sadd.s32 %s22, 1
    %s24 = scalar_select %p21, %s22, %s23
    %p27 = pneg %p21
    %p28 = scmp.eq.s32.totalorder %s12, 1
    %p29 = por %p27, %p28
    %p30 = scmp.ne.s32.totalorder %s22, %s25
    %p31 = scmp.eq.s32.totalorder %s12, 0
    %p32 = por %p30, %p31
    %p33 = scmp.ne.s32.totalorder %s22, %s25
    %p34 = scmp.eq.s32.totalorder %s17, 1
    %p35 = por %p33, %p34
    %p36 = scmp.ne.s32.totalorder %s25, %s26
    %p37 = scmp.eq.s32.totalorder %s17, 0
    %p38 = por %p36, %p37
    %p39 = scmp.ne.s32.totalorder %s25, %s26
    %p40 = scmp.eq.s32.totalorder %s18, 1
    %p41 = por %p39, %p40
    %p43 = scmp.ne.s32.totalorder %s26, %s42
    %p44 = scmp.eq.s32.totalorder %s18, 0
    %p45 = por %p43, %p44
    %s47 = sadd.s32 %s46, 1
    %p50 = scmp.eq.s32.totalorder %s12, 1
    %p51 = scmp.ne.s32.totalorder %s46, %s48
    %p52 = scmp.eq.s32.totalorder %s12, 0
    %p53 = por %p51, %p52
    %p54 = scmp.ne.s32.totalorder %s46, %s48
    %p55 = scmp.eq.s32.totalorder %s17, 1
    %p56 = por %p54, %p55
    %p57 = scmp.ne.s32.totalorder %s48, %s49
    %p58 = scmp.eq.s32.totalorder %s17, 0
    %p59 = por %p57, %p58
    %p60 = scmp.ne.s32.totalorder %s48, %s49
    %p61 = scmp.eq.s32.totalorder %s18, 1
    %p62 = por %p60, %p61
    %p64 = scmp.ne.s32.totalorder %s49, %s63
    %p65 = scmp.eq.s32.totalorder %s18, 0
    %p66 = por %p64, %p65
    %s68 = sadd.s32 %s67, 1
    %p71 = scmp.eq.s32.totalorder %s12, 1
    %p72 = scmp.ne.s32.totalorder %s67, %s69
    %p73 = scmp.eq.s32.totalorder %s12, 0
    %p74 = por %p72, %p73
    %p75 = scmp.ne.s32.totalorder %s67, %s69
    %p76 = scmp.eq.s32.totalorder %s17, 1
    %p77 = por %p75, %p76
    %p78 = scmp.ne.s32.totalorder %s69, %s70
    %p79 = scmp.eq.s32.totalorder %s17, 0
    %p80 = por %p78, %p79
    %p81 = scmp.ne.s32.totalorder %s69, %s70
    %p82 = scmp.eq.s32.totalorder %s18, 1
    %p83 = por %p81, %p82
    %p85 = scmp.ne.s32.totalorder %s70, %s84
    %p86 = scmp.eq.s32.totalorder %s18, 0
    %p87 = por %p85, %p86
    %s89 = sadd.s32 %s88, 1
    %p92 = scmp.eq.s32.totalorder %s12, 1
    %p93 = scmp.ne.s32.totalorder %s88, %s90
    %p94 = scmp.eq.s32.totalorder %s12, 0
    %p95 = por %p93, %p94
    %p96 = scmp.ne.s32.totalorder %s88, %s90
    %p97 = scmp.eq.s32.totalorder %s17, 1
    %p98 = por %p96, %p97
    %p99 = scmp.ne.s32.totalorder %s90, %s91
    %p100 = scmp.eq.s32.totalorder %s17, 0
    %p101 = por %p99, %p100
    %p102 = scmp.ne.s32.totalorder %s90, %s91
    %p103 = scmp.eq.s32.totalorder %s18, 1
    %p104 = por %p102, %p103
    %p106 = scmp.ne.s32.totalorder %s91, %s105
    %p107 = scmp.eq.s32.totalorder %s18, 0
    %p108 = por %p106, %p107
    %s110 = sadd.s32 %s109, 1
    %p113 = scmp.eq.s32.totalorder %s12, 1
    %p114 = scmp.ne.s32.totalorder %s109, %s111
    %p115 = scmp.eq.s32.totalorder %s12, 0
    %p116 = por %p114, %p115
    %p117 = scmp.ne.s32.totalorder %s109, %s111
    %p118 = scmp.eq.s32.totalorder %s17, 1
    %p119 = por %p117, %p118
    %p120 = scmp.ne.s32.totalorder %s111, %s112
    %p121 = scmp.eq.s32.totalorder %s17, 0
    %p122 = por %p120, %p121
    %p123 = scmp.ne.s32.totalorder %s111, %s112
    %p124 = scmp.eq.s32.totalorder %s18, 1
    %p125 = por %p123, %p124
    %p127 = scmp.ne.s32.totalorder %s112, %s126
    %p128 = scmp.eq.s32.totalorder %s18, 0
    %p129 = por %p127, %p128
    %s131 = sadd.s32 %s130, 1
    %p134 = scmp.eq.s32.totalorder %s12, 1
    %p135 = scmp.ne.s32.totalorder %s130, %s132
    %p136 = scmp.eq.s32.totalorder %s12, 0
    %p137 = por %p135, %p136
    %p138 = scmp.ne.s32.totalorder %s130, %s132
    %p139 = scmp.eq.s32.totalorder %s17, 1
    %p140 = por %p138, %p139
    %p141 = scmp.ne.s32.totalorder %s132, %s133
    %p142 = scmp.eq.s32.totalorder %s17, 0
    %p143 = por %p141, %p142
    %p144 = scmp.ne.s32.totalorder %s132, %s133
    %p145 = scmp.eq.s32.totalorder %s18, 1
    %p146 = por %p144, %p145
    %p148 = scmp.ne.s32.totalorder %s133, %s147
    %p149 = scmp.eq.s32.totalorder %s18, 0
    %p150 = por %p148, %p149
    %s151 = ssub.s32 %s12, %s19
    %p152 = scmp.eq.s32.totalorder %s151, 0
    %s154 = sadd.s32 %s153, 1
    %s155 = scalar_select %p152, %s153, %s154
    %p158 = pneg %p152
    %p159 = scmp.eq.s32.totalorder %s12, 1
    %p160 = por %p158, %p159
    %p161 = scmp.ne.s32.totalorder %s153, %s156
    %p162 = scmp.eq.s32.totalorder %s12, 0
    %p163 = por %p161, %p162
    %p164 = scmp.ne.s32.totalorder %s153, %s156
    %p165 = scmp.eq.s32.totalorder %s17, 1
    %p166 = por %p164, %p165
    %p167 = scmp.ne.s32.totalorder %s156, %s157
    %p168 = scmp.eq.s32.totalorder %s17, 0
    %p169 = por %p167, %p168
    %p170 = scmp.ne.s32.totalorder %s156, %s157
    %p171 = scmp.eq.s32.totalorder %s18, 1
    %p172 = por %p170, %p171
    %p174 = scmp.ne.s32.totalorder %s157, %s173
    %p175 = scmp.eq.s32.totalorder %s18, 0
    %p176 = por %p174, %p175
    %p177 = scmp.le.s32.totalorder 1, %s12
    %p178 = scmp.lt.s32.totalorder %s12, 3
    %p179 = pnand %p177, %p178
    %p180 = pneg %p179
    // Predicated region
    $region9: #{resnet_forward.6} parent=5 // pred_check
      _
    $region10: #{resnet_forward.6} parent=5 // pred_check_branch
      %182 = sbr.rel (%p179) target = $region12
    $region11: #{resnet_forward.6} parent=5 // pred_region
      %s183 = ssub.s32 %s12, 1
      // Predicated region
      $region13: #{resnet_forward.6} parent=11 // pred_check
        %p184 = pneg %p59
      $region14: #{resnet_forward.6} parent=11 // pred_check_branch
        %186 = sbr.rel (%p184) target = $region16
      $region15: #{resnet_forward.6} parent=11 // pred_region
        _
      $region16: #{resnet_forward.6} parent=11 // pred_fallthru
        _
      // Predicated region
      $region17: #{resnet_forward.6} parent=11 // pred_check
        %p187 = pneg %p80
      $region18: #{resnet_forward.6} parent=11 // pred_check_branch
        %189 = sbr.rel (%p187) target = $region20
      $region19: #{resnet_forward.6} parent=11 // pred_region
        _
      $region20: #{resnet_forward.6} parent=11 // pred_fallthru
        _
      // Predicated region
      $region21: #{resnet_forward.6} parent=11 // pred_check
        %p190 = pneg %p101
      $region22: #{resnet_forward.6} parent=11 // pred_check_branch
        %192 = sbr.rel (%p190) target = $region24
      $region23: #{resnet_forward.6} parent=11 // pred_region
        _
      $region24: #{resnet_forward.6} parent=11 // pred_fallthru
        _
      // Predicated region
      $region25: #{resnet_forward.6} parent=11 // pred_check
        %p193 = pneg %p122
      $region26: #{resnet_forward.6} parent=11 // pred_check_branch
        %195 = sbr.rel (%p193) target = $region28
      $region27: #{resnet_forward.6} parent=11 // pred_region
        _
      $region28: #{resnet_forward.6} parent=11 // pred_fallthru
        _
      // Predicated region
      $region29: #{resnet_forward.6} parent=11 // pred_check
        %p196 = pneg %p143
      $region30: #{resnet_forward.6} parent=11 // pred_check_branch
        %198 = sbr.rel (%p196) target = $region32
      $region31: #{resnet_forward.6} parent=11 // pred_region
        _
      $region32: #{resnet_forward.6} parent=11 // pred_fallthru
        _
    $region12: #{resnet_forward.6} parent=5 // pred_fallthru
      _
    %p199 = scmp.lt.s32.totalorder %s12, 2
    // Predicated region
    $region33: #{resnet_forward.6} parent=5 // pred_check
      %p200 = pneg %p199
    $region34: #{resnet_forward.6} parent=5 // pred_check_branch
      %202 = sbr.rel (%p200) target = $region36
    $region35: #{resnet_forward.6} parent=5 // pred_region
      // Predicated region
      $region37: #{resnet_forward.6} parent=35 // pred_check
        %p203 = pneg %p32
      $region38: #{resnet_forward.6} parent=35 // pred_check_branch
        %205 = sbr.rel (%p203) target = $region40
      $region39: #{resnet_forward.6} parent=35 // pred_region
        %p206 = scmp.lt.s32.totalorder %s12, 1
        %s207 = scalar_select %p206, %s12, 1
        %s208 = smul.addr %s207, 16
        %s209 = smul.addr %s208, 4
        %s210 = scalar_lea.vmem %s0, %s209
      $region40: #{resnet_forward.6} parent=35 // pred_fallthru
        _
    $region36: #{resnet_forward.6} parent=5 // pred_fallthru
      _
    %p211 = scmp.le.s32.totalorder 1, %s12
    %p212 = scmp.lt.s32.totalorder %s12, 3
    %p213 = pnand %p211, %p212
    %p214 = pneg %p213
    // Predicated region
    $region41: #{resnet_forward.6} parent=5 // pred_check
      _
    $region42: #{resnet_forward.6} parent=5 // pred_check_branch
      %216 = sbr.rel (%p213) target = $region44
    $region43: #{resnet_forward.6} parent=5 // pred_region
      %s217 = ssub.s32 %s12, 1
      %p218 = scmp.lt.s32.totalorder %s17, 1
      %s219 = scalar_select %p218, %s17, 1
      %s220 = smul.addr %s219, 16
      %s221 = smul.addr %s220, 4
      %s222 = scalar_lea.vmem %s0, %s221
      %p223 = pneg %p38
      %p224 = pneg %p35
      %p225 = pneg %p59
      %p226 = pneg %p56
      %p227 = pneg %p80
      %p228 = pneg %p77
      %p229 = pneg %p101
      %p230 = pneg %p98
      %p231 = pneg %p122
      %p232 = pneg %p119
      %p233 = pneg %p143
      %p234 = pneg %p140
      %p235 = pneg %p169
      %p236 = pneg %p166
      %p237 = scmp.lt.s32.totalorder %s17, 1
      %s238 = scalar_select %p237, %s17, 1
      %s239 = smul.addr %s238, 24
      %s240 = smul.addr %s239, 4
      %s241 = scalar_lea.vmem %s6, %s240
      %p242 = scmp.lt.s32.totalorder %s17, 1
      %s243 = scalar_select %p242, %s17, 1
      %s244 = smul.addr %s243, 16
      %s245 = smul.addr %s244, 4
      %s246 = scalar_lea.vmem %s0, %s245
      %p247 = scmp.lt.s32.totalorder %s17, 1
      %s248 = scalar_select %p247, %s17, 1
      %s249 = smul.addr %s248, 24
      %s250 = smul.addr %s249, 4
      %s251 = scalar_lea.vmem %s6, %s250
      %v253 = vld [vmem:[%s246] sm:$0xf]
      %v254 = vld [vmem:[%s246 + $0x4] sm:$0xf]
      %v255 = vld [vmem:[%s246 + $0x8] sm:$0xf]
      %v256 = vld [vmem:[%s246 + $0xc] sm:$0xf]
      %v257 = vld [vmem:[%s246 + $0x10] sm:$0xf]
      %v258 = vld [vmem:[%s246 + $0x14] sm:$0xf]
      %v259 = vld [vmem:[%s246 + $0x18] sm:$0xf]
      %v260 = vld [vmem:[%s246 + $0x1c] sm:$0xf]
      %v261 = vld [vmem:[%s246 + $0x20] sm:$0xf]
      %v262 = vld [vmem:[%s246 + $0x24] sm:$0xf]
      %v263 = vld [vmem:[%s246 + $0x28] sm:$0xf]
      %v264 = vld [vmem:[%s246 + $0x2c] sm:$0xf]
      %v265 = vld [vmem:[%s246 + $0x30] sm:$0xf]
      %v266 = vld [vmem:[%s246 + $0x34] sm:$0xf]
      %v267 = vld [vmem:[%s246 + $0x38] sm:$0xf]
      %v268 = vld [vmem:[%s246 + $0x3c] sm:$0xf]
      %v269 = vunpack.c.l.bf16 %v253
      %v270 = vunpack.c.l.bf16 %v254
      %v271 = vunpack.c.l.bf16 %v255
      %v272 = vunpack.c.l.bf16 %v256
      %v273 = vunpack.c.l.bf16 %v257
      %v274 = vunpack.c.l.bf16 %v258
      %v275 = vunpack.c.l.bf16 %v259
      %v276 = vunpack.c.l.bf16 %v260
      %v277 = vunpack.c.l.bf16 %v261
      %v278 = vunpack.c.l.bf16 %v262
      %v279 = vunpack.c.l.bf16 %v263
      %v280 = vunpack.c.l.bf16 %v264
      %v281 = vunpack.c.l.bf16 %v265
      %v282 = vunpack.c.l.bf16 %v266
      %v283 = vunpack.c.l.bf16 %v267
      %v284 = vunpack.c.l.bf16 %v268
      %v285 = vld [vmem:[%s1] sm:$0xff]
      %v286 = vld [vmem:[%s1 + $0x8] sm:$0xff]
      %v287 = vld [vmem:[%s1 + $0x10] sm:$0xff]
      %v288 = vld [vmem:[%s1 + $0x18] sm:$0xff]
      %v289 = vld [vmem:[%s1 + $0x20] sm:$0xff]
      %v290 = vld [vmem:[%s1 + $0x28] sm:$0xff]
      %v291 = vld [vmem:[%s1 + $0x30] sm:$0xff]
      %v292 = vld [vmem:[%s1 + $0x38] sm:$0xff]
      %v293 = vld [vmem:[%s1 + $0x40] sm:$0xff]
      %v294 = vld [vmem:[%s1 + $0x48] sm:$0xff]
      %v295 = vld [vmem:[%s1 + $0x50] sm:$0xff]
      %v296 = vld [vmem:[%s1 + $0x58] sm:$0xff]
      %v297 = vld [vmem:[%s1 + $0x60] sm:$0xff]
      %v298 = vld [vmem:[%s1 + $0x68] sm:$0xff]
      %v299 = vld [vmem:[%s1 + $0x70] sm:$0xff]
      %v300 = vld [vmem:[%s1 + $0x78] sm:$0xff]
      %302 = vset.pattern.permute.xlu0 0
      %303 = vperm.xlu0 %302, %v285
      %v304 = vpop.permute.xlu0 %303
      %307 = vset.pattern.permute.xlu0 0
      %308 = vperm.xlu0 %307, %v286
      %v309 = vpop.permute.xlu0 %308
      %312 = vset.pattern.permute.xlu0 0
      %313 = vperm.xlu0 %312, %v287
      %v314 = vpop.permute.xlu0 %313
      %317 = vset.pattern.permute.xlu0 0
      %318 = vperm.xlu0 %317, %v288
      %v319 = vpop.permute.xlu0 %318
      %322 = vset.pattern.permute.xlu0 0
      %323 = vperm.xlu0 %322, %v289
      %v324 = vpop.permute.xlu0 %323
      %327 = vset.pattern.permute.xlu0 0
      %328 = vperm.xlu0 %327, %v290
      %v329 = vpop.permute.xlu0 %328
      %332 = vset.pattern.permute.xlu0 0
      %333 = vperm.xlu0 %332, %v291
      %v334 = vpop.permute.xlu0 %333
      %337 = vset.pattern.permute.xlu0 0
      %338 = vperm.xlu0 %337, %v292
      %v339 = vpop.permute.xlu0 %338
      %342 = vset.pattern.permute.xlu0 0
      %343 = vperm.xlu0 %342, %v293
      %v344 = vpop.permute.xlu0 %343
      %347 = vset.pattern.permute.xlu0 0
      %348 = vperm.xlu0 %347, %v294
      %v349 = vpop.permute.xlu0 %348
      %352 = vset.pattern.permute.xlu0 0
      %353 = vperm.xlu0 %352, %v295
      %v354 = vpop.permute.xlu0 %353
      %357 = vset.pattern.permute.xlu0 0
      %358 = vperm.xlu0 %357, %v296
      %v359 = vpop.permute.xlu0 %358
      %362 = vset.pattern.permute.xlu0 0
      %363 = vperm.xlu0 %362, %v297
      %v364 = vpop.permute.xlu0 %363
      %367 = vset.pattern.permute.xlu0 0
      %368 = vperm.xlu0 %367, %v298
      %v369 = vpop.permute.xlu0 %368
      %372 = vset.pattern.permute.xlu0 0
      %373 = vperm.xlu0 %372, %v299
      %v374 = vpop.permute.xlu0 %373
      %377 = vset.pattern.permute.xlu0 0
      %378 = vperm.xlu0 %377, %v300
      %v379 = vpop.permute.xlu0 %378
      %v381 = vmul.f32 %v269, %v304
      %v382 = vmul.f32 %v270, %v309
      %v383 = vmul.f32 %v271, %v314
      %v384 = vmul.f32 %v272, %v319
      %v385 = vmul.f32 %v273, %v324
      %v386 = vmul.f32 %v274, %v329
      %v387 = vmul.f32 %v275, %v334
      %v388 = vmul.f32 %v276, %v339
      %v389 = vmul.f32 %v277, %v344
      %v390 = vmul.f32 %v278, %v349
      %v391 = vmul.f32 %v279, %v354
      %v392 = vmul.f32 %v280, %v359
      %v393 = vmul.f32 %v281, %v364
      %v394 = vmul.f32 %v282, %v369
      %v395 = vmul.f32 %v283, %v374
      %v396 = vmul.f32 %v284, %v379
      %vm397 = vcmask 523264
      %v398 = vsel %vm397, %v381, 0.0
      %v399 = vsel %vm397, %v382, 0.0
      %v400 = vadd.f32 %v398, %v399
      %v401 = vsel %vm397, %v383, 0.0
      %v402 = vadd.f32 %v400, %v401
      %v403 = vsel %vm397, %v384, 0.0
      %v404 = vadd.f32 %v402, %v403
      %v405 = vsel %vm397, %v385, 0.0
      %v406 = vadd.f32 %v404, %v405
      %v407 = vsel %vm397, %v386, 0.0
      %v408 = vadd.f32 %v406, %v407
      %v409 = vsel %vm397, %v387, 0.0
      %v410 = vadd.f32 %v408, %v409
      %v411 = vsel %vm397, %v388, 0.0
      %v412 = vadd.f32 %v410, %v411
      %v413 = vsel %vm397, %v389, 0.0
      %v414 = vadd.f32 %v412, %v413
      %v415 = vsel %vm397, %v390, 0.0
      %v416 = vadd.f32 %v414, %v415
      %v417 = vsel %vm397, %v391, 0.0
      %v418 = vadd.f32 %v416, %v417
      %v419 = vsel %vm397, %v392, 0.0
      %v420 = vadd.f32 %v418, %v419
      %v421 = vsel %vm397, %v393, 0.0
      %v422 = vadd.f32 %v420, %v421
      %v423 = vsel %vm397, %v394, 0.0
      %v424 = vadd.f32 %v422, %v423
      %v425 = vsel %vm397, %v395, 0.0
      %v426 = vadd.f32 %v424, %v425
      %v427 = vsel %vm397, %v396, 0.0
      %v428 = vadd.f32 %v426, %v427
      %v429 = vrot.slane %v428, 4
      %v430 = vadd.f32 %v428, %v429
      %v431 = vrot.slane %v430, 2
      %v432 = vadd.f32 %v430, %v431
      %v433 = vrot.slane %v432, 1
      %v434 = vadd.f32 %v432, %v433
      %v435 = vmul.f32 %v381, %v381
      %v436 = vmul.f32 %v382, %v382
      %v437 = vmul.f32 %v383, %v383
      %v438 = vmul.f32 %v384, %v384
      %v439 = vmul.f32 %v385, %v385
      %v440 = vmul.f32 %v386, %v386
      %v441 = vmul.f32 %v387, %v387
      %v442 = vmul.f32 %v388, %v388
      %v443 = vmul.f32 %v389, %v389
      %v444 = vmul.f32 %v390, %v390
      %v445 = vmul.f32 %v391, %v391
      %v446 = vmul.f32 %v392, %v392
      %v447 = vmul.f32 %v393, %v393
      %v448 = vmul.f32 %v394, %v394
      %v449 = vmul.f32 %v395, %v395
      %v450 = vmul.f32 %v396, %v396
      %v451 = vsel %vm397, %v435, 0.0
      %v452 = vsel %vm397, %v436, 0.0
      %v453 = vadd.f32 %v451, %v452
      %v454 = vsel %vm397, %v437, 0.0
      %v455 = vadd.f32 %v453, %v454
      %v456 = vsel %vm397, %v438, 0.0
      %v457 = vadd.f32 %v455, %v456
      %v458 = vsel %vm397, %v439, 0.0
      %v459 = vadd.f32 %v457, %v458
      %v460 = vsel %vm397, %v440, 0.0
      %v461 = vadd.f32 %v459, %v460
      %v462 = vsel %vm397, %v441, 0.0
      %v463 = vadd.f32 %v461, %v462
      %v464 = vsel %vm397, %v442, 0.0
      %v465 = vadd.f32 %v463, %v464
      %v466 = vsel %vm397, %v443, 0.0
      %v467 = vadd.f32 %v465, %v466
      %v468 = vsel %vm397, %v444, 0.0
      %v469 = vadd.f32 %v467, %v468
      %v470 = vsel %vm397, %v445, 0.0
      %v471 = vadd.f32 %v469, %v470
      %v472 = vsel %vm397, %v446, 0.0
      %v473 = vadd.f32 %v471, %v472
      %v474 = vsel %vm397, %v447, 0.0
      %v475 = vadd.f32 %v473, %v474
      %v476 = vsel %vm397, %v448, 0.0
      %v477 = vadd.f32 %v475, %v476
      %v478 = vsel %vm397, %v449, 0.0
      %v479 = vadd.f32 %v477, %v478
      %v480 = vsel %vm397, %v450, 0.0
      %v481 = vadd.f32 %v479, %v480
      %v482 = vrot.slane %v481, 4
      %v483 = vadd.f32 %v481, %v482
      %v484 = vrot.slane %v483, 2
      %v485 = vadd.f32 %v483, %v484
      %v486 = vrot.slane %v485, 1
      %v487 = vadd.f32 %v485, %v486
      %vm488 = vcmask 1040384
      %v489 = vsel %vm488, %v434, %v487
      %v490 = vld [vmem:[%s2] sm:$0xff]
      %v491 = vld [vmem:[%s2 + $0x8] sm:$0xff]
      %v492 = vld [vmem:[%s2 + $0x10] sm:$0xff]
      %v493 = vld [vmem:[%s2 + $0x18] sm:$0xff]
      %v494 = vld [vmem:[%s2 + $0x20] sm:$0xff]
      %v495 = vld [vmem:[%s2 + $0x28] sm:$0xff]
      %v496 = vld [vmem:[%s2 + $0x30] sm:$0xff]
      %v497 = vld [vmem:[%s2 + $0x38] sm:$0xff]
      %v499 = vsel %vm397, %v489, 0
      %501 = vmatprep.subr.mxu0 0.0
      %502 = vmatpush1.msra.mxu0 0.0
      %503 = vmatprep.subr.mxu0 0.0
      %504 = vmatpush1.msra.mxu0 0.0
      %505 = vmatprep.subr.mxu0 0.0
      %506 = vmatpush1.msra.mxu0 0.0
      %507 = vmatprep.subr.mxu0 0.0
      %508 = vmatpush1.msra.mxu0 0.0
      %509 = vmatprep.subr.mxu0 0.0
      %510 = vmatpush1.msra.mxu0 0.0
      %511 = vmatprep.subr.mxu0 0.0
      %512 = vmatpush1.msra.mxu0 0.0
      %513 = vmatprep.subr.mxu0 0.0
      %514 = vmatpush1.msra.mxu0 0.0
      %515 = vmatprep.subr.mxu0 0.0
      %516 = vmatpush1.msra.mxu0 0.0
      %517 = vmatprep.subr.mxu0 0.0
      %518 = vmatpush1.msra.mxu0 %v497
      %519 = vmatprep.subr.mxu0 0.0
      %520 = vmatpush1.msra.mxu0 %v496
      %521 = vmatprep.subr.mxu0 0.0
      %522 = vmatpush1.msra.mxu0 %v495
      %523 = vmatprep.subr.mxu0 0.0
      %524 = vmatpush1.msra.mxu0 %v494
      %525 = vmatprep.subr.mxu0 0.0
      %526 = vmatpush1.msra.mxu0 %v493
      %527 = vmatprep.subr.mxu0 0.0
      %528 = vmatpush1.msra.mxu0 %v492
      %529 = vmatprep.subr.mxu0 0.0
      %530 = vmatpush1.msra.mxu0 %v491
      %531 = vmatprep.subr.mxu0 0.0
      %532 = vmatpush1.msra.mxu0 %v490
      %533 = vmatprep.subr.mxu0 0.0
      %534 = vmatpush2.msra.mxu0 0.0
      %535 = vmatprep.subr.mxu0 0.0
      %536 = vmatpush2.msra.mxu0 0.0
      %537 = vmatprep.subr.mxu0 0.0
      %538 = vmatpush2.msra.mxu0 0.0
      %539 = vmatprep.subr.mxu0 0.0
      %540 = vmatpush2.msra.mxu0 0.0
      %541 = vmatprep.subr.mxu0 0.0
      %542 = vmatpush2.msra.mxu0 0.0
      %543 = vmatprep.subr.mxu0 0.0
      %544 = vmatpush2.msra.mxu0 0.0
      %545 = vmatprep.subr.mxu0 0.0
      %546 = vmatpush2.msra.mxu0 0.0
      %547 = vmatprep.subr.mxu0 0.0
      %548 = vmatpush2.msra.mxu0 0.0
      %549 = vmatprep.subr.mxu0 0.0
      %550 = vmatpush2.msra.mxu0 0.0
      %551 = vmatprep.subr.mxu0 0.0
      %552 = vmatpush2.msra.mxu0 0.0
      %553 = vmatprep.subr.mxu0 0.0
      %554 = vmatpush2.msra.mxu0 0.0
      %555 = vmatprep.subr.mxu0 0.0
      %556 = vmatpush2.msra.mxu0 0.0
      %557 = vmatprep.subr.mxu0 0.0
      %558 = vmatpush2.msra.mxu0 0.0
      %559 = vmatprep.subr.mxu0 0.0
      %560 = vmatpush2.msra.mxu0 0.0
      %561 = vmatprep.subr.mxu0 0.0
      %562 = vmatpush2.msra.mxu0 0.0
      %563 = vmatprep.subr.mxu0 0.0
      %564 = vmatpush2.msra.mxu0 0.0
      %565 = vmatprep.mubr.f32.mxu0 0.0
      %566 = vmatmul.mubr.f32.gmra.mxu0 %v499
      %v567 = vpop.f32.mrf.mxu0
      %v568 = vadd.f32 0.0, %v567
      %v569 = vpop.f32.mrf.mxu0
      %570 = vdwg.mxu0
      %v571 = vmul.f32 %v568, 0.0078125
      %v572 = vmul.f32 %v571, %v571
      %v574 = vrot.slane %v572, 7
      %v576 = vsub.f32 %v571, %v574
      %v577 = vadd.f32 %v576, 1e-06
      %v578 = vrsqrt.pop %v577
      %v579 = vsub.f32 0.0, %v571
      %v581 = vrot.slane %v578, 1
      %v583 = vmul.f32 %v579, %v581
      %v585 = vrot.slane %v583, 7
      %v587 = vsel %vm488, %v581, %v585
      %v588 = vld [vmem:[%s3] sm:$0xff]
      %v589 = vld [vmem:[%s3 + $0x8] sm:$0xff]
      %v590 = vld [vmem:[%s3 + $0x10] sm:$0xff]
      %v591 = vld [vmem:[%s3 + $0x18] sm:$0xff]
      %vm592 = vcmask 261120
      %v594 = vsel %vm592, %v587, 0
      %596 = vmatprep.subr.mxu0 0.0
      %597 = vmatpush1.msra.mxu0 0.0
      %598 = vmatprep.subr.mxu0 0.0
      %599 = vmatpush1.msra.mxu0 0.0
      %600 = vmatprep.subr.mxu0 0.0
      %601 = vmatpush1.msra.mxu0 0.0
      %602 = vmatprep.subr.mxu0 0.0
      %603 = vmatpush1.msra.mxu0 0.0
      %604 = vmatprep.subr.mxu0 0.0
      %605 = vmatpush1.msra.mxu0 0.0
      %606 = vmatprep.subr.mxu0 0.0
      %607 = vmatpush1.msra.mxu0 0.0
      %608 = vmatprep.subr.mxu0 0.0
      %609 = vmatpush1.msra.mxu0 0.0
      %610 = vmatprep.subr.mxu0 0.0
      %611 = vmatpush1.msra.mxu0 0.0
      %612 = vmatprep.subr.mxu0 0.0
      %613 = vmatpush1.msra.mxu0 0.0
      %614 = vmatprep.subr.mxu0 0.0
      %615 = vmatpush1.msra.mxu0 0.0
      %616 = vmatprep.subr.mxu0 0.0
      %617 = vmatpush1.msra.mxu0 0.0
      %618 = vmatprep.subr.mxu0 0.0
      %619 = vmatpush1.msra.mxu0 0.0
      %620 = vmatprep.subr.mxu0 0.0
      %621 = vmatpush1.msra.mxu0 %v591
      %622 = vmatprep.subr.mxu0 0.0
      %623 = vmatpush1.msra.mxu0 %v590
      %624 = vmatprep.subr.mxu0 0.0
      %625 = vmatpush1.msra.mxu0 %v589
      %626 = vmatprep.subr.mxu0 0.0
      %627 = vmatpush1.msra.mxu0 %v588
      %628 = vmatprep.subr.mxu0 0.0
      %629 = vmatpush2.msra.mxu0 0.0
      %630 = vmatprep.subr.mxu0 0.0
      %631 = vmatpush2.msra.mxu0 0.0
      %632 = vmatprep.subr.mxu0 0.0
      %633 = vmatpush2.msra.mxu0 0.0
      %634 = vmatprep.subr.mxu0 0.0
      %635 = vmatpush2.msra.mxu0 0.0
      %636 = vmatprep.subr.mxu0 0.0
      %637 = vmatpush2.msra.mxu0 0.0
      %638 = vmatprep.subr.mxu0 0.0
      %639 = vmatpush2.msra.mxu0 0.0
      %640 = vmatprep.subr.mxu0 0.0
      %641 = vmatpush2.msra.mxu0 0.0
      %642 = vmatprep.subr.mxu0 0.0
      %643 = vmatpush2.msra.mxu0 0.0
      %644 = vmatprep.subr.mxu0 0.0
      %645 = vmatpush2.msra.mxu0 0.0
      %646 = vmatprep.subr.mxu0 0.0
      %647 = vmatpush2.msra.mxu0 0.0
      %648 = vmatprep.subr.mxu0 0.0
      %649 = vmatpush2.msra.mxu0 0.0
      %650 = vmatprep.subr.mxu0 0.0
      %651 = vmatpush2.msra.mxu0 0.0
      %652 = vmatprep.subr.mxu0 0.0
      %653 = vmatpush2.msra.mxu0 0.0
      %654 = vmatprep.subr.mxu0 0.0
      %655 = vmatpush2.msra.mxu0 0.0
      %656 = vmatprep.subr.mxu0 0.0
      %657 = vmatpush2.msra.mxu0 0.0
      %658 = vmatprep.subr.mxu0 0.0
      %659 = vmatpush2.msra.mxu0 0.0
      %660 = vmatprep.mubr.f32.mxu0 0.0
      %661 = vmatmul.mubr.f32.gmra.mxu0 %v594
      %v662 = vpop.f32.mrf.mxu0
      %v663 = vadd.f32 0.0, %v662
      %v664 = vpop.f32.mrf.mxu0
      %665 = vdwg.mxu0
      %v666 = vld [vmem:[%s4] sm:$0x1]
      %v667 = vmul.f32 %v663, %v666
      %v669 = vlaneseq
      %v670 = vshrl.u32 %v669, 7
      %v671 = vsub.s32 0, %v670
      %v672 = vrot.slane %v666, %v671
      %v674 = vmul.f32 %v663, %v672
      %v675 = vld [vmem:[%s5] sm:$0x1]
      %v677 = vlaneseq
      %v678 = vshrl.u32 %v677, 7
      %v679 = vsub.s32 0, %v678
      %v680 = vrot.slane %v675, %v679
      %v682 = vadd.f32 %v674, %v680
      %v683 = vlaneseq
      %v684 = vshrl.u32 %v683, 7
      %v685 = vsub.s32 0, %v684
      %v686 = vrot.slane %v667, %v685
      %v687 = vmul.f32 %v269, %v686
      %v688 = vmul.f32 %v270, %v686
      %v689 = vmul.f32 %v271, %v686
      %v690 = vmul.f32 %v272, %v686
      %v691 = vmul.f32 %v273, %v686
      %v692 = vmul.f32 %v274, %v686
      %v693 = vmul.f32 %v275, %v686
      %v694 = vmul.f32 %v276, %v686
      %v695 = vmul.f32 %v277, %v686
      %v696 = vmul.f32 %v278, %v686
      %v697 = vmul.f32 %v279, %v686
      %v698 = vmul.f32 %v280, %v686
      %v699 = vmul.f32 %v281, %v686
      %v700 = vmul.f32 %v282, %v686
      %v701 = vmul.f32 %v283, %v686
      %v702 = vmul.f32 %v284, %v686
      %v703 = vlaneseq
      %v704 = vshrl.u32 %v703, 7
      %v705 = vsub.s32 1, %v704
      %v706 = vrot.slane %v682, %v705
      %v707 = vadd.f32 %v687, %v706
      %v708 = vadd.f32 %v688, %v706
      %v709 = vadd.f32 %v689, %v706
      %v710 = vadd.f32 %v690, %v706
      %v711 = vadd.f32 %v691, %v706
      %v712 = vadd.f32 %v692, %v706
      %v713 = vadd.f32 %v693, %v706
      %v714 = vadd.f32 %v694, %v706
      %v715 = vadd.f32 %v695, %v706
      %v716 = vadd.f32 %v696, %v706
      %v717 = vadd.f32 %v697, %v706
      %v718 = vadd.f32 %v698, %v706
      %v719 = vadd.f32 %v699, %v706
      %v720 = vadd.f32 %v700, %v706
      %v721 = vadd.f32 %v701, %v706
      %v722 = vadd.f32 %v702, %v706
      %v723 = vxor.u32 %v707, 2147483648
      %v724 = vxor.u32 %v708, 2147483648
      %v725 = vxor.u32 %v709, 2147483648
      %v726 = vxor.u32 %v710, 2147483648
      %v727 = vxor.u32 %v711, 2147483648
      %v728 = vxor.u32 %v712, 2147483648
      %v729 = vxor.u32 %v713, 2147483648
      %v730 = vxor.u32 %v714, 2147483648
      %v731 = vxor.u32 %v715, 2147483648
      %v732 = vxor.u32 %v716, 2147483648
      %v733 = vxor.u32 %v717, 2147483648
      %v734 = vxor.u32 %v718, 2147483648
      %v735 = vxor.u32 %v719, 2147483648
      %v736 = vxor.u32 %v720, 2147483648
      %v737 = vxor.u32 %v721, 2147483648
      %v738 = vxor.u32 %v722, 2147483648
      %v739 = vmul.f32 %v723, 1.442695
      %v740 = vpow.pop %v739
      %v741 = vmul.f32 %v724, 1.442695
      %v742 = vpow.pop %v741
      %v743 = vmul.f32 %v725, 1.442695
      %v744 = vpow.pop %v743
      %v745 = vmul.f32 %v726, 1.442695
      %v746 = vpow.pop %v745
      %v747 = vmul.f32 %v727, 1.442695
      %v748 = vpow.pop %v747
      %v749 = vmul.f32 %v728, 1.442695
      %v750 = vpow.pop %v749
      %v751 = vmul.f32 %v729, 1.442695
      %v752 = vpow.pop %v751
      %v753 = vmul.f32 %v730, 1.442695
      %v754 = vpow.pop %v753
      %v755 = vmul.f32 %v731, 1.442695
      %v756 = vpow.pop %v755
      %v757 = vmul.f32 %v732, 1.442695
      %v758 = vpow.pop %v757
      %v759 = vmul.f32 %v733, 1.442695
      %v760 = vpow.pop %v759
      %v761 = vmul.f32 %v734, 1.442695
      %v762 = vpow.pop %v761
      %v763 = vmul.f32 %v735, 1.442695
      %v764 = vpow.pop %v763
      %v765 = vmul.f32 %v736, 1.442695
      %v766 = vpow.pop %v765
      %v767 = vmul.f32 %v737, 1.442695
      %v768 = vpow.pop %v767
      %v769 = vmul.f32 %v738, 1.442695
      %v770 = vpow.pop %v769
      %v771 = vadd.f32 %v740, 1.0
      %v772 = vadd.f32 %v742, 1.0
      %v773 = vadd.f32 %v744, 1.0
      %v774 = vadd.f32 %v746, 1.0
      %v775 = vadd.f32 %v748, 1.0
      %v776 = vadd.f32 %v750, 1.0
      %v777 = vadd.f32 %v752, 1.0
      %v778 = vadd.f32 %v754, 1.0
      %v779 = vadd.f32 %v756, 1.0
      %v780 = vadd.f32 %v758, 1.0
      %v781 = vadd.f32 %v760, 1.0
      %v782 = vadd.f32 %v762, 1.0
      %v783 = vadd.f32 %v764, 1.0
      %v784 = vadd.f32 %v766, 1.0
      %v785 = vadd.f32 %v768, 1.0
      %v786 = vadd.f32 %v770, 1.0
      %v787 = vrcp.pop %v771
      %v788 = vmul.f32 1.0, %v787
      %v789 = vrcp.pop %v772
      %v790 = vmul.f32 1.0, %v789
      %v791 = vrcp.pop %v773
      %v792 = vmul.f32 1.0, %v791
      %v793 = vrcp.pop %v774
      %v794 = vmul.f32 1.0, %v793
      %v795 = vrcp.pop %v775
      %v796 = vmul.f32 1.0, %v795
      %v797 = vrcp.pop %v776
      %v798 = vmul.f32 1.0, %v797
      %v799 = vrcp.pop %v777
      %v800 = vmul.f32 1.0, %v799
      %v801 = vrcp.pop %v778
      %v802 = vmul.f32 1.0, %v801
      %v803 = vrcp.pop %v779
      %v804 = vmul.f32 1.0, %v803
      %v805 = vrcp.pop %v780
      %v806 = vmul.f32 1.0, %v805
      %v807 = vrcp.pop %v781
      %v808 = vmul.f32 1.0, %v807
      %v809 = vrcp.pop %v782
      %v810 = vmul.f32 1.0, %v809
      %v811 = vrcp.pop %v783
      %v812 = vmul.f32 1.0, %v811
      %v813 = vrcp.pop %v784
      %v814 = vmul.f32 1.0, %v813
      %v815 = vrcp.pop %v785
      %v816 = vmul.f32 1.0, %v815
      %v817 = vrcp.pop %v786
      %v818 = vmul.f32 1.0, %v817
      %v819 = vmul.f32 %v707, %v788
      %v820 = vmul.f32 %v708, %v790
      %v821 = vmul.f32 %v709, %v792
      %v822 = vmul.f32 %v710, %v794
      %v823 = vmul.f32 %v711, %v796
      %v824 = vmul.f32 %v712, %v798
      %v825 = vmul.f32 %v713, %v800
      %v826 = vmul.f32 %v714, %v802
      %v827 = vmul.f32 %v715, %v804
      %v828 = vmul.f32 %v716, %v806
      %v829 = vmul.f32 %v717, %v808
      %v830 = vmul.f32 %v718, %v810
      %v831 = vmul.f32 %v719, %v812
      %v832 = vmul.f32 %v720, %v814
      %v833 = vmul.f32 %v721, %v816
      %v834 = vmul.f32 %v722, %v818
      %v835 = vmul.f32 %v819, %v304
      %v836 = vmul.f32 %v820, %v309
      %v837 = vmul.f32 %v821, %v314
      %v838 = vmul.f32 %v822, %v319
      %v839 = vmul.f32 %v823, %v324
      %v840 = vmul.f32 %v824, %v329
      %v841 = vmul.f32 %v825, %v334
      %v842 = vmul.f32 %v826, %v339
      %v843 = vmul.f32 %v827, %v344
      %v844 = vmul.f32 %v828, %v349
      %v845 = vmul.f32 %v829, %v354
      %v846 = vmul.f32 %v830, %v359
      %v847 = vmul.f32 %v831, %v364
      %v848 = vmul.f32 %v832, %v369
      %v849 = vmul.f32 %v833, %v374
      %v850 = vmul.f32 %v834, %v379
      %v851 = vpack.c.bf16 %v836, %v835
      %v852 = vpack.c.bf16 %v838, %v837
      %v853 = vpack.c.bf16 %v840, %v839
      %v854 = vpack.c.bf16 %v842, %v841
      %v855 = vpack.c.bf16 %v844, %v843
      %v856 = vpack.c.bf16 %v846, %v845
      %v857 = vpack.c.bf16 %v848, %v847
      %v858 = vpack.c.bf16 %v850, %v849
      %vm859 = vcmask 519168
      %860 = vst.msk [vmem:[%s251] sm:$0xf] %vm859, 0
      %861 = vst.msk [vmem:[%s251 + $0x4] sm:$0xf] %vm859, 0
      %862 = vst.msk [vmem:[%s251 + $0x8] sm:$0xf] %vm859, 0
      %863 = vst.msk [vmem:[%s251 + $0xc] sm:$0xf] %vm859, 0
      %v872 = vunpack.c.l.b16 %v851
      %v873 = vunpack.c.h.b16 %v851
      %v874 = vunpack.c.l.b16 %v852
      %v875 = vunpack.c.h.b16 %v852
      %v876 = vunpack.c.l.b16 %v853
      %v877 = vunpack.c.h.b16 %v853
      %v878 = vunpack.c.l.b16 %v854
      %v879 = vunpack.c.h.b16 %v854
      %v880 = vunpack.c.l.b16 %v855
      %v881 = vunpack.c.h.b16 %v855
      %v882 = vunpack.c.l.b16 %v856
      %v883 = vunpack.c.h.b16 %v856
      %v884 = vunpack.c.l.b16 %v857
      %v885 = vunpack.c.h.b16 %v857
      %v886 = vunpack.c.l.b16 %v858
      %v887 = vunpack.c.h.b16 %v858
      %v888 = vpack.c.b16 %v872, %v872
      %v889 = vpack.c.b16 %v873, %v873
      %v890 = vpack.c.b16 %v874, %v874
      %v891 = vpack.c.b16 %v875, %v875
      %v892 = vpack.c.b16 %v876, %v876
      %v893 = vpack.c.b16 %v877, %v877
      %v894 = vpack.c.b16 %v878, %v878
      %v895 = vpack.c.b16 %v879, %v879
      %v896 = vpack.c.b16 %v880, %v880
      %v897 = vpack.c.b16 %v881, %v881
      %v898 = vpack.c.b16 %v882, %v882
      %v899 = vpack.c.b16 %v883, %v883
      %v900 = vpack.c.b16 %v884, %v884
      %v901 = vpack.c.b16 %v885, %v885
      %v902 = vpack.c.b16 %v886, %v886
      %v903 = vpack.c.b16 %v887, %v887
      %920 = vst.msk [vmem:[%s251 + $0x10] sm:$0xf] %vm859, %v888
      %921 = vst.msk [vmem:[%s251 + $0x14] sm:$0xf] %vm859, %v889
      %922 = vst.msk [vmem:[%s251 + $0x18] sm:$0xf] %vm859, %v890
      %923 = vst.msk [vmem:[%s251 + $0x1c] sm:$0xf] %vm859, %v891
      %924 = vst.msk [vmem:[%s251 + $0x20] sm:$0xf] %vm859, %v892
      %925 = vst.msk [vmem:[%s251 + $0x24] sm:$0xf] %vm859, %v893
      %926 = vst.msk [vmem:[%s251 + $0x28] sm:$0xf] %vm859, %v894
      %927 = vst.msk [vmem:[%s251 + $0x2c] sm:$0xf] %vm859, %v895
      %928 = vst.msk [vmem:[%s251 + $0x30] sm:$0xf] %vm859, %v896
      %929 = vst.msk [vmem:[%s251 + $0x34] sm:$0xf] %vm859, %v897
      %930 = vst.msk [vmem:[%s251 + $0x38] sm:$0xf] %vm859, %v898
      %931 = vst.msk [vmem:[%s251 + $0x3c] sm:$0xf] %vm859, %v899
      %932 = vst.msk [vmem:[%s251 + $0x40] sm:$0xf] %vm859, %v900
      %933 = vst.msk [vmem:[%s251 + $0x44] sm:$0xf] %vm859, %v901
      %934 = vst.msk [vmem:[%s251 + $0x48] sm:$0xf] %vm859, %v902
      %935 = vst.msk [vmem:[%s251 + $0x4c] sm:$0xf] %vm859, %v903
      %936 = vst.msk [vmem:[%s251 + $0x50] sm:$0xf] %vm859, 0
      %937 = vst.msk [vmem:[%s251 + $0x54] sm:$0xf] %vm859, 0
      %938 = vst.msk [vmem:[%s251 + $0x58] sm:$0xf] %vm859, 0
      %939 = vst.msk [vmem:[%s251 + $0x5c] sm:$0xf] %vm859, 0
      %p940 = scmp.lt.s32.totalorder %s17, 1
      %s941 = scalar_select %p940, %s17, 1
      %s942 = smul.addr %s941, 24
      %s943 = smul.addr %s942, 4
      %s944 = scalar_lea.vmem %s6, %s943
      // Predicated region
      $region45: #{resnet_forward.6} parent=43 // pred_check
        %p945 = pneg %p166
      $region46: #{resnet_forward.6} parent=43 // pred_check_branch
        %947 = sbr.rel (%p945) target = $region48
      $region47: #{resnet_forward.6} parent=43 // pred_region
        _
      $region48: #{resnet_forward.6} parent=43 // pred_fallthru
        _
    $region44: #{resnet_forward.6} parent=5 // pred_fallthru
      _
    %p948 = scmp.le.s32.totalorder 2, %s12
    // Predicated region
    $region49: #{resnet_forward.6} parent=5 // pred_check
      %p949 = pneg %p948
    $region50: #{resnet_forward.6} parent=5 // pred_check_branch
      %951 = sbr.rel (%p949) target = $region52
    $region51: #{resnet_forward.6} parent=5 // pred_region
      %s952 = ssub.s32 %s12, 2
      // Predicated region
      $region53: #{resnet_forward.6} parent=51 // pred_check
        %p953 = pneg %p172
      $region54: #{resnet_forward.6} parent=51 // pred_check_branch
        %955 = sbr.rel (%p953) target = $region56
      $region55: #{resnet_forward.6} parent=51 // pred_region
        %p956 = scmp.lt.s32.totalorder %s18, 1
        %s957 = scalar_select %p956, %s18, 1
        %s958 = smul.addr %s957, 24
        %s959 = smul.addr %s958, 4
        %s960 = scalar_lea.vmem %s6, %s959
      $region56: #{resnet_forward.6} parent=51 // pred_fallthru
        _
    $region52: #{resnet_forward.6} parent=5 // pred_fallthru
      _
  $region6: #{resnet_forward.6} parent=0 // loop_footer
    %s16 = sadd.s32 1, %s12
  $region7: #{resnet_forward.6} parent=0 // loop_footer_branch
    %11 = sbr.rel target = $region3
  $region8: #{resnet_forward.6} parent=0 // loop_exit
    _

// kernel: resnet_forward.5
$region0: #{resnet_forward.5}
  #allocation0 [shape = 'u32[]', space=smem, size = 0x4, offset = 0x4, fixed_abs, tag = 'smem constant byte address 0x4 - core index']
  #allocation1 [shape = 'u32[144,128]{1,0:T(1,128)}', space=vmem, size = 0x12000, scoped, tag = 'internal scratch']
  %s0 = inlined_call_operand.vmem [shape: bf16[2,192,32], index: 0, kind: input, shape index: {}]
  %s1 = inlined_call_operand.vmem [shape: bf16[9,32,64], index: 1, kind: input, shape index: {}]
  %s2 = inlined_call_operand.vmem [shape: f32[1,64], index: 2, kind: input, shape index: {}]
  %s3 = inlined_call_operand.vmem [shape: bf16[2,128,64], index: 3, kind: output, shape index: {}]
  %s4 = sld [smem:[#allocation0]]
  $region45: #{resnet_forward.5} parent=0
    _
  %s6 = ssub.s32 1, %s4
  %s7 = scalar_select 0, %s6, %s4
  loop: start=0, step=1, limit=4
  $region2: #{resnet_forward.5} parent=0 // loop_pre_header
    _
  $region3: #{resnet_forward.5} parent=0 // loop_header
    %s9 = sphi 0, %s13
    %p10 = scmp.ge.s32.totalorder %s9, 4
    %s16 = sphi 0, %s35
    %s17 = sphi 0, %s31
    %s18 = sphi 0, %s27
    %s19 = sphi 0, %s16
    %s20 = sphi 0, %s17
    %s21 = sphi 0, %s18
    %s22 = sphi 0, %s19
    %s23 = sphi 0, %s20
    %s24 = sphi 0, %s21
    %s40 = sphi 0, %s42
    %s43 = sphi 0, %s40
    %s44 = sphi 0, %s43
    %s60 = sphi 0, %s44
    %s68 = sphi 0, %s70
    %s71 = sphi 0, %s68
    %s72 = sphi 0, %s71
    %s88 = sphi 0, %s72
    %s94 = sphi 0, %s96
    %s97 = sphi 0, %s94
    %s98 = sphi 0, %s97
    %s114 = sphi 0, %s98
    %s122 = sphi 0, %s124
    %s125 = sphi 0, %s122
    %s126 = sphi 0, %s125
    %s142 = sphi 0, %s126
  $region4: #{resnet_forward.5} parent=0 // loop_header_branch
    %12 = sbr.rel (%p10) target = $region8
  $region5: #{resnet_forward.5} parent=0 // loop_body
    %s14 = ssub.s32 %s9, 1
    %s15 = ssub.s32 %s9, 2
    %s25 = sadd.s32 1, %s18
    %p26 = scmp.ge.s32.totalorder %s25, 1
    %s27 = scalar_select %p26, 0, %s25
    %s28 = sadd.s32 1, %s17
    %s29 = scalar_select %p26, %s28, %s17
    %p30 = scmp.ge.s32.totalorder %s29, 1
    %s31 = scalar_select %p30, 0, %s29
    %s32 = sadd.s32 1, %s16
    %s33 = scalar_select %p30, %s32, %s16
    %p34 = scmp.ge.s32.totalorder %s33, 2
    %s35 = scalar_select %p34, 0, %s33
    %s36 = ssub.s32 %s16, %s35
    %s37 = ssub.s32 %s18, %s27
    %s38 = sor.u32 %s36, %s37
    %p39 = scmp.eq.s32.totalorder %s38, 0
    %s41 = sadd.s32 %s40, 1
    %s42 = scalar_select %p39, %s40, %s41
    %p45 = pneg %p39
    %p46 = scmp.eq.s32.totalorder %s9, 1
    %p47 = por %p45, %p46
    %p48 = scmp.ne.s32.totalorder %s40, %s43
    %p49 = scmp.eq.s32.totalorder %s9, 0
    %p50 = por %p48, %p49
    %p51 = scmp.ne.s32.totalorder %s40, %s43
    %p52 = scmp.eq.s32.totalorder %s14, 1
    %p53 = por %p51, %p52
    %p54 = scmp.ne.s32.totalorder %s43, %s44
    %p55 = scmp.eq.s32.totalorder %s14, 0
    %p56 = por %p54, %p55
    %p57 = scmp.ne.s32.totalorder %s43, %s44
    %p58 = scmp.eq.s32.totalorder %s15, 1
    %p59 = por %p57, %p58
    %p61 = scmp.ne.s32.totalorder %s44, %s60
    %p62 = scmp.eq.s32.totalorder %s15, 0
    %p63 = por %p61, %p62
    %s64 = ssub.s32 %s18, %s27
    %s65 = ssub.s32 %s17, %s31
    %s66 = sor.u32 %s64, %s65
    %p67 = scmp.eq.s32.totalorder %s66, 0
    %s69 = sadd.s32 %s68, 1
    %s70 = scalar_select %p67, %s68, %s69
    %p73 = pneg %p67
    %p74 = scmp.eq.s32.totalorder %s9, 1
    %p75 = por %p73, %p74
    %p76 = scmp.ne.s32.totalorder %s68, %s71
    %p77 = scmp.eq.s32.totalorder %s9, 0
    %p78 = por %p76, %p77
    %p79 = scmp.ne.s32.totalorder %s68, %s71
    %p80 = scmp.eq.s32.totalorder %s14, 1
    %p81 = por %p79, %p80
    %p82 = scmp.ne.s32.totalorder %s71, %s72
    %p83 = scmp.eq.s32.totalorder %s14, 0
    %p84 = por %p82, %p83
    %p85 = scmp.ne.s32.totalorder %s71, %s72
    %p86 = scmp.eq.s32.totalorder %s15, 1
    %p87 = por %p85, %p86
    %p89 = scmp.ne.s32.totalorder %s72, %s88
    %p90 = scmp.eq.s32.totalorder %s15, 0
    %p91 = por %p89, %p90
    %s92 = ssub.s32 %s17, %s31
    %p93 = scmp.eq.s32.totalorder %s92, 0
    %s95 = sadd.s32 %s94, 1
    %s96 = scalar_select %p93, %s94, %s95
    %p99 = pneg %p93
    %p100 = scmp.eq.s32.totalorder %s9, 1
    %p101 = por %p99, %p100
    %p102 = scmp.ne.s32.totalorder %s94, %s97
    %p103 = scmp.eq.s32.totalorder %s9, 0
    %p104 = por %p102, %p103
    %p105 = scmp.ne.s32.totalorder %s94, %s97
    %p106 = scmp.eq.s32.totalorder %s14, 1
    %p107 = por %p105, %p106
    %p108 = scmp.ne.s32.totalorder %s97, %s98
    %p109 = scmp.eq.s32.totalorder %s14, 0
    %p110 = por %p108, %p109
    %p111 = scmp.ne.s32.totalorder %s97, %s98
    %p112 = scmp.eq.s32.totalorder %s15, 1
    %p113 = por %p111, %p112
    %p115 = scmp.ne.s32.totalorder %s98, %s114
    %p116 = scmp.eq.s32.totalorder %s15, 0
    %p117 = por %p115, %p116
    %s118 = ssub.s32 %s16, %s35
    %s119 = ssub.s32 %s17, %s31
    %s120 = sor.u32 %s118, %s119
    %p121 = scmp.eq.s32.totalorder %s120, 0
    %s123 = sadd.s32 %s122, 1
    %s124 = scalar_select %p121, %s122, %s123
    %p127 = pneg %p121
    %p128 = scmp.eq.s32.totalorder %s9, 1
    %p129 = por %p127, %p128
    %p130 = scmp.ne.s32.totalorder %s122, %s125
    %p131 = scmp.eq.s32.totalorder %s9, 0
    %p132 = por %p130, %p131
    %p133 = scmp.ne.s32.totalorder %s122, %s125
    %p134 = scmp.eq.s32.totalorder %s14, 1
    %p135 = por %p133, %p134
    %p136 = scmp.ne.s32.totalorder %s125, %s126
    %p137 = scmp.eq.s32.totalorder %s14, 0
    %p138 = por %p136, %p137
    %p139 = scmp.ne.s32.totalorder %s125, %s126
    %p140 = scmp.eq.s32.totalorder %s15, 1
    %p141 = por %p139, %p140
    %p143 = scmp.ne.s32.totalorder %s126, %s142
    %p144 = scmp.eq.s32.totalorder %s15, 0
    %p145 = por %p143, %p144
    %p146 = scmp.le.s32.totalorder 1, %s9
    %p147 = scmp.lt.s32.totalorder %s9, 3
    %p148 = pnand %p146, %p147
    %p149 = pneg %p148
    // Predicated region
    $region9: #{resnet_forward.5} parent=5 // pred_check
      _
    $region10: #{resnet_forward.5} parent=5 // pred_check_branch
      %151 = sbr.rel (%p148) target = $region12
    $region11: #{resnet_forward.5} parent=5 // pred_region
      %s152 = ssub.s32 %s9, 1
      // Predicated region
      $region13: #{resnet_forward.5} parent=11 // pred_check
        %p153 = pneg %p84
      $region14: #{resnet_forward.5} parent=11 // pred_check_branch
        %155 = sbr.rel (%p153) target = $region16
      $region15: #{resnet_forward.5} parent=11 // pred_region
        %s156 = smul.u32 4, %s21
        %p157 = scmp.lt.s32.totalorder %s156, 3
        %s158 = scalar_select %p157, %s156, 3
        %p159 = scmp.lt.s32.totalorder %s20, 0
        %s160 = scalar_select %p159, %s20, 0
        %s161 = sadd.s32 %s160, %s158
        %s162 = smul.addr %s161, 4
        %s163 = scalar_lea.vmem %s1, %s162
        %s164 = smul.u32 4, %s21
      $region16: #{resnet_forward.5} parent=11 // pred_fallthru
        _
      // Predicated region
      $region17: #{resnet_forward.5} parent=11 // pred_check
        %p165 = pneg %p110
      $region18: #{resnet_forward.5} parent=11 // pred_check_branch
        %167 = sbr.rel (%p165) target = $region20
      $region19: #{resnet_forward.5} parent=11 // pred_region
        %p168 = scmp.lt.s32.totalorder %s20, 0
        %s169 = scalar_select %p168, %s20, 0
        %s170 = scalar_lea.vmem %s2, %s169
      $region20: #{resnet_forward.5} parent=11 // pred_fallthru
        _
    $region12: #{resnet_forward.5} parent=5 // pred_fallthru
      _
    %p171 = scmp.lt.s32.totalorder %s9, 2
    // Predicated region
    $region21: #{resnet_forward.5} parent=5 // pred_check
      %p172 = pneg %p171
    $region22: #{resnet_forward.5} parent=5 // pred_check_branch
      %174 = sbr.rel (%p172) target = $region24
    $region23: #{resnet_forward.5} parent=5 // pred_region
      // Predicated region
      $region25: #{resnet_forward.5} parent=23 // pred_check
        %p175 = pneg %p50
      $region26: #{resnet_forward.5} parent=23 // pred_check_branch
        %177 = sbr.rel (%p175) target = $region28
      $region27: #{resnet_forward.5} parent=23 // pred_region
        %p178 = scmp.lt.s32.totalorder %s16, 1
        %s179 = scalar_select %p178, %s16, 1
        %p180 = scmp.lt.s32.totalorder %s18, 0
        %s181 = scalar_select %p180, %s18, 0
        %s182 = smul.addr %s179, 24
        %s183 = sadd.s32 %s181, %s182
        %s184 = smul.addr %s183, 4
        %s185 = scalar_lea.vmem %s0, %s184
      $region28: #{resnet_forward.5} parent=23 // pred_fallthru
        _
    $region24: #{resnet_forward.5} parent=5 // pred_fallthru
      _
    %p186 = scmp.le.s32.totalorder 1, %s9
    %p187 = scmp.lt.s32.totalorder %s9, 3
    %p188 = pnand %p186, %p187
    %p189 = pneg %p188
    // Predicated region
    $region29: #{resnet_forward.5} parent=5 // pred_check
      _
    $region30: #{resnet_forward.5} parent=5 // pred_check_branch
      %191 = sbr.rel (%p188) target = $region32
    $region31: #{resnet_forward.5} parent=5 // pred_region
      %s192 = ssub.s32 %s9, 1
      %p193 = scmp.lt.s32.totalorder %s19, 1
      %s194 = scalar_select %p193, %s19, 1
      %p195 = scmp.lt.s32.totalorder %s21, 0
      %s196 = scalar_select %p195, %s21, 0
      %s197 = smul.addr %s194, 24
      %s198 = sadd.s32 %s196, %s197
      %s199 = smul.addr %s198, 4
      %s200 = scalar_lea.vmem %s0, %s199
      %p201 = pneg %p56
      %p202 = pneg %p53
      %s203 = smul.u32 4, %s21
      %p204 = scmp.lt.s32.totalorder %s203, 3
      %s205 = scalar_select %p204, %s203, 3
      %p206 = scmp.lt.s32.totalorder %s20, 0
      %s207 = scalar_select %p206, %s20, 0
      %s208 = sadd.s32 %s207, %s205
      %s209 = smul.addr %s208, 4
      %s210 = scalar_lea.vmem %s1, %s209
      %p211 = pneg %p84
      %p212 = pneg %p81
      %p213 = scmp.lt.s32.totalorder %s20, 0
      %s214 = scalar_select %p213, %s20, 0
      %s215 = scalar_lea.vmem %s2, %s214
      %p216 = pneg %p110
      %p217 = pneg %p107
      %p218 = pneg %p138
      %p219 = pneg %p135
      %p220 = scmp.lt.s32.totalorder %s19, 1
      %s221 = scalar_select %p220, %s19, 1
      %p222 = scmp.lt.s32.totalorder %s20, 0
      %s223 = scalar_select %p222, %s20, 0
      %s224 = smul.addr %s221, 16
      %s225 = sadd.s32 %s223, %s224
      %s226 = smul.addr %s225, 4
      %s227 = scalar_lea.vmem %s3, %s226
      %p228 = scmp.lt.s32.totalorder %s19, 1
      %s229 = scalar_select %p228, %s19, 1
      %p230 = scmp.lt.s32.totalorder %s21, 0
      %s231 = scalar_select %p230, %s21, 0
      %s232 = smul.addr %s229, 24
      %s233 = sadd.s32 %s231, %s232
      %s234 = smul.addr %s233, 4
      %s235 = scalar_lea.vmem %s0, %s234
      %s236 = smul.u32 4, %s21
      %p237 = scmp.lt.s32.totalorder %s236, 3
      %s238 = scalar_select %p237, %s236, 3
      %p239 = scmp.lt.s32.totalorder %s20, 0
      %s240 = scalar_select %p239, %s20, 0
      %s241 = sadd.s32 %s240, %s238
      %s242 = smul.addr %s241, 4
      %s243 = scalar_lea.vmem %s1, %s242
      %s244 = smul.u32 4, %s21
      %p245 = scmp.lt.s32.totalorder %s20, 0
      %s246 = scalar_select %p245, %s20, 0
      %s247 = scalar_lea.vmem %s2, %s246
      %p248 = scmp.lt.s32.totalorder %s19, 1
      %s249 = scalar_select %p248, %s19, 1
      %p250 = scmp.lt.s32.totalorder %s20, 0
      %s251 = scalar_select %p250, %s20, 0
      %s252 = smul.addr %s249, 16
      %s253 = sadd.s32 %s251, %s252
      %s254 = smul.addr %s253, 4
      %s255 = scalar_lea.vmem %s3, %s254
      %v257 = vld [vmem:[%s235 + $0x4] sm:$0x8]
      %v258 = vld [vmem:[%s235 + $0x8] sm:$0xf]
      %v259 = vld [vmem:[%s235 + $0xc] sm:$0xf]
      %v260 = vld [vmem:[%s235 + $0x10] sm:$0xf]
      %v261 = vld [vmem:[%s235 + $0x14] sm:$0xf]
      %v262 = vld [vmem:[%s235 + $0x18] sm:$0xf]
      %v263 = vld [vmem:[%s235 + $0x1c] sm:$0xf]
      %v264 = vld [vmem:[%s235 + $0x20] sm:$0xf]
      %v265 = vld [vmem:[%s235 + $0x24] sm:$0xf]
      %v266 = vld [vmem:[%s235 + $0x28] sm:$0xf]
      %v267 = vld [vmem:[%s235 + $0x2c] sm:$0xf]
      %v268 = vld [vmem:[%s235 + $0x30] sm:$0xf]
      %v269 = vld [vmem:[%s235 + $0x34] sm:$0xf]
      %v270 = vld [vmem:[%s235 + $0x38] sm:$0xf]
      %v271 = vld [vmem:[%s235 + $0x3c] sm:$0xf]
      %v272 = vld [vmem:[%s235 + $0x40] sm:$0xf]
      %v273 = vld [vmem:[%s235 + $0x44] sm:$0xf]
      %v274 = vld [vmem:[%s243] sm:$0xf]
      %v275 = vld [vmem:[%s243 + $0x4] sm:$0xf]
      %v276 = vld [vmem:[%s243 + $0x8] sm:$0xf]
      %v277 = vld [vmem:[%s243 + $0xc] sm:$0xf]
      %s278 = scalar_lea.vmem %s243, 16
      %v279 = vld [vmem:[%s278] sm:$0xf]
      %v280 = vld [vmem:[%s278 + $0x4] sm:$0xf]
      %v281 = vld [vmem:[%s278 + $0x8] sm:$0xf]
      %v282 = vld [vmem:[%s278 + $0xc] sm:$0xf]
      %v299 = vunpack.c.l.b16 %v258
      %v300 = vunpack.c.l.b16 %v259
      %v301 = vunpack.c.l.b16 %v260
      %v302 = vunpack.c.l.b16 %v261
      %v303 = vunpack.c.l.b16 %v262
      %v304 = vunpack.c.l.b16 %v263
      %v305 = vunpack.c.l.b16 %v264
      %v306 = vunpack.c.l.b16 %v265
      %v307 = vunpack.c.l.b16 %v266
      %v308 = vunpack.c.l.b16 %v267
      %v309 = vunpack.c.l.b16 %v268
      %v310 = vunpack.c.l.b16 %v269
      %v311 = vunpack.c.l.b16 %v270
      %v312 = vunpack.c.l.b16 %v271
      %v313 = vunpack.c.l.b16 %v272
      %v314 = vunpack.c.l.b16 %v273
      %v315 = vpack.c.b16 %v300, %v299
      %v316 = vpack.c.b16 %v302, %v301
      %v317 = vpack.c.b16 %v304, %v303
      %v318 = vpack.c.b16 %v306, %v305
      %v319 = vpack.c.b16 %v308, %v307
      %v320 = vpack.c.b16 %v310, %v309
      %v321 = vpack.c.b16 %v312, %v311
      %v322 = vpack.c.b16 %v314, %v313
      %v327 = vunpack.c.l.b16 %v279
      %v328 = vunpack.c.l.b16 %v280
      %v329 = vunpack.c.l.b16 %v281
      %v330 = vunpack.c.l.b16 %v282
      %v331 = vpack.c.b16 %v328, %v327
      %v332 = vpack.c.b16 %v330, %v329
      %vm335 = vcmask 261120
      %v337 = vsel %vm335, %v315, 0
      %v340 = vsel %vm335, %v316, 0
      %v343 = vsel %vm335, %v317, 0
      %v346 = vsel %vm335, %v318, 0
      %v349 = vsel %vm335, %v319, 0
      %v352 = vsel %vm335, %v320, 0
      %v355 = vsel %vm335, %v321, 0
      %v358 = vsel %vm335, %v322, 0
      %360 = vmatprep.subr.bf16.mxu0 0
      %361 = vmatpush1.bf16.msra.mxu0 0
      %362 = vmatprep.subr.bf16.mxu0 0
      %363 = vmatpush1.bf16.msra.mxu0 0
      %364 = vmatprep.subr.bf16.mxu0 0
      %365 = vmatpush1.bf16.msra.mxu0 0
      %366 = vmatprep.subr.bf16.mxu0 0
      %367 = vmatpush1.bf16.msra.mxu0 0
      %368 = vmatprep.subr.bf16.mxu0 0
      %369 = vmatpush1.bf16.msra.mxu0 0
      %370 = vmatprep.subr.bf16.mxu0 0
      %371 = vmatpush1.bf16.msra.mxu0 0
      %372 = vmatprep.subr.bf16.mxu0 0
      %373 = vmatpush1.bf16.msra.mxu0 %v332
      %374 = vmatprep.subr.bf16.mxu0 0
      %375 = vmatpush1.bf16.msra.mxu0 %v331
      %376 = vmatprep.subr.bf16.mxu0 0
      %377 = vmatpush2.bf16.msra.mxu0 0
      %378 = vmatprep.subr.bf16.mxu0 0
      %379 = vmatpush2.bf16.msra.mxu0 0
      %380 = vmatprep.subr.bf16.mxu0 0
      %381 = vmatpush2.bf16.msra.mxu0 0
      %382 = vmatprep.subr.bf16.mxu0 0
      %383 = vmatpush2.bf16.msra.mxu0 0
      %384 = vmatprep.subr.bf16.mxu0 0
      %385 = vmatpush2.bf16.msra.mxu0 0
      %386 = vmatprep.subr.bf16.mxu0 0
      %387 = vmatpush2.bf16.msra.mxu0 0
      %388 = vmatprep.subr.bf16.mxu0 0
      %389 = vmatpush2.bf16.msra.mxu0 0
      %390 = vmatprep.subr.bf16.mxu0 0
      %391 = vmatpush2.bf16.msra.mxu0 0
      %392 = vmatprep.mubr.bf16.mxu0 0
      %393 = vmatmul.mubr.bf16.gmra.mxu0 %v337
      %v394 = vpop.f32.mrf.mxu0
      %v395 = vadd.f32 0.0, %v394
      %v396 = vpop.f32.mrf.mxu0
      %v397 = vpop.f32.mrf.mxu0
      %v398 = vadd.f32 0.0, %v397
      %v399 = vpop.f32.mrf.mxu0
      %400 = vmatprep.mubr.bf16.mxu0 0
      %401 = vmatmul.mubr.bf16.gmra.mxu0 %v340
      %v402 = vpop.f32.mrf.mxu0
      %v403 = vadd.f32 0.0, %v402
      %v404 = vpop.f32.mrf.mxu0
      %v405 = vpop.f32.mrf.mxu0
      %v406 = vadd.f32 0.0, %v405
      %v407 = vpop.f32.mrf.mxu0
      %408 = vmatprep.mubr.bf16.mxu0 0
      %409 = vmatmul.mubr.bf16.gmra.mxu0 %v343
      %v410 = vpop.f32.mrf.mxu0
      %v411 = vadd.f32 0.0, %v410
      %v412 = vpop.f32.mrf.mxu0
      %v413 = vpop.f32.mrf.mxu0
      %v414 = vadd.f32 0.0, %v413
      %v415 = vpop.f32.mrf.mxu0
      %416 = vmatprep.mubr.bf16.mxu0 0
      %417 = vmatmul.mubr.bf16.gmra.mxu0 %v346
      %v418 = vpop.f32.mrf.mxu0
      %v419 = vadd.f32 0.0, %v418
      %v420 = vpop.f32.mrf.mxu0
      %v421 = vpop.f32.mrf.mxu0
      %v422 = vadd.f32 0.0, %v421
      %v423 = vpop.f32.mrf.mxu0
      %424 = vmatprep.mubr.bf16.mxu0 0
      %425 = vmatmul.mubr.bf16.gmra.mxu0 %v349
      %v426 = vpop.f32.mrf.mxu0
      %v427 = vadd.f32 0.0, %v426
      %v428 = vpop.f32.mrf.mxu0
      %v429 = vpop.f32.mrf.mxu0
      %v430 = vadd.f32 0.0, %v429
      %v431 = vpop.f32.mrf.mxu0
      %432 = vmatprep.mubr.bf16.mxu0 0
      %433 = vmatmul.mubr.bf16.gmra.mxu0 %v352
      %v434 = vpop.f32.mrf.mxu0
      %v435 = vadd.f32 0.0, %v434
      %v436 = vpop.f32.mrf.mxu0
      %v437 = vpop.f32.mrf.mxu0
      %v438 = vadd.f32 0.0, %v437
      %v439 = vpop.f32.mrf.mxu0
      %440 = vmatprep.mubr.bf16.mxu0 0
      %441 = vmatmul.mubr.bf16.gmra.mxu0 %v355
      %v442 = vpop.f32.mrf.mxu0
      %v443 = vadd.f32 0.0, %v442
      %v444 = vpop.f32.mrf.mxu0
      %v445 = vpop.f32.mrf.mxu0
      %v446 = vadd.f32 0.0, %v445
      %v447 = vpop.f32.mrf.mxu0
      %448 = vmatprep.mubr.bf16.mxu0 0
      %449 = vmatmul.mubr.bf16.gmra.mxu0 %v358
      %v450 = vpop.f32.mrf.mxu0
      %v451 = vadd.f32 0.0, %v450
      %v452 = vpop.f32.mrf.mxu0
      %v453 = vpop.f32.mrf.mxu0
      %v454 = vadd.f32 0.0, %v453
      %v455 = vpop.f32.mrf.mxu0
      %456 = vdwg.mxu0
      %v458 = vunpack.c.l.b16 %v257
      %v459 = vpack.c.b16 %v299, %v458
      %v460 = vpack.c.b16 %v301, %v300
      %v461 = vpack.c.b16 %v303, %v302
      %v462 = vpack.c.b16 %v305, %v304
      %v463 = vpack.c.b16 %v307, %v306
      %v464 = vpack.c.b16 %v309, %v308
      %v465 = vpack.c.b16 %v311, %v310
      %v466 = vpack.c.b16 %v313, %v312
      %v467 = vpack.c.b16 %v314, %v314
      %vm468 = vsmask.f32 4352
      %v470 = vshrl.u32 %v459, 16
      %v472 = vrot.slane %v470, 3
      %v473 = vshll.u32 %v459, 16
      %v475 = vrot.slane %v473, 4
      %v476 = vor.u32 %v472, %v475
      %v478 = vshrl.u32 %v460, 16
      %v480 = vrot.slane %v478, 3
      %v481 = vshll.u32 %v460, 16
      %v483 = vrot.slane %v481, 4
      %v484 = vor.u32 %v480, %v483
      %v485 = vsel %vm468, %v476, %v484
      %v487 = vshrl.u32 %v461, 16
      %v489 = vrot.slane %v487, 3
      %v490 = vshll.u32 %v461, 16
      %v492 = vrot.slane %v490, 4
      %v493 = vor.u32 %v489, %v492
      %v494 = vsel %vm468, %v484, %v493
      %v496 = vshrl.u32 %v462, 16
      %v498 = vrot.slane %v496, 3
      %v499 = vshll.u32 %v462, 16
      %v501 = vrot.slane %v499, 4
      %v502 = vor.u32 %v498, %v501
      %v503 = vsel %vm468, %v493, %v502
      %v505 = vshrl.u32 %v463, 16
      %v507 = vrot.slane %v505, 3
      %v508 = vshll.u32 %v463, 16
      %v510 = vrot.slane %v508, 4
      %v511 = vor.u32 %v507, %v510
      %v512 = vsel %vm468, %v502, %v511
      %v514 = vshrl.u32 %v464, 16
      %v516 = vrot.slane %v514, 3
      %v517 = vshll.u32 %v464, 16
      %v519 = vrot.slane %v517, 4
      %v520 = vor.u32 %v516, %v519
      %v521 = vsel %vm468, %v511, %v520
      %v523 = vshrl.u32 %v465, 16
      %v525 = vrot.slane %v523, 3
      %v526 = vshll.u32 %v465, 16
      %v528 = vrot.slane %v526, 4
      %v529 = vor.u32 %v525, %v528
      %v530 = vsel %vm468, %v520, %v529
      %v532 = vshrl.u32 %v466, 16
      %v534 = vrot.slane %v532, 3
      %v535 = vshll.u32 %v466, 16
      %v537 = vrot.slane %v535, 4
      %v538 = vor.u32 %v534, %v537
      %v539 = vsel %vm468, %v529, %v538
      %v541 = vshrl.u32 %v467, 16
      %v543 = vrot.slane %v541, 3
      %v544 = vshll.u32 %v467, 16
      %v546 = vrot.slane %v544, 4
      %v547 = vor.u32 %v543, %v546
      %v548 = vsel %vm468, %v538, %v547
      %v553 = vunpack.c.l.b16 %v274
      %v554 = vunpack.c.l.b16 %v275
      %v555 = vunpack.c.l.b16 %v276
      %v556 = vunpack.c.l.b16 %v277
      %v557 = vpack.c.b16 %v554, %v553
      %v558 = vpack.c.b16 %v556, %v555
      %v562 = vsel %vm335, %v485, 0
      %v565 = vsel %vm335, %v494, 0
      %v568 = vsel %vm335, %v503, 0
      %v571 = vsel %vm335, %v512, 0
      %v574 = vsel %vm335, %v521, 0
      %v577 = vsel %vm335, %v530, 0
      %v580 = vsel %vm335, %v539, 0
      %v583 = vsel %vm335, %v548, 0
      %585 = vmatprep.subr.bf16.mxu0 0
      %586 = vmatpush1.bf16.msra.mxu0 0
      %587 = vmatprep.subr.bf16.mxu0 0
      %588 = vmatpush1.bf16.msra.mxu0 0
      %589 = vmatprep.subr.bf16.mxu0 0
      %590 = vmatpush1.bf16.msra.mxu0 0
      %591 = vmatprep.subr.bf16.mxu0 0
      %592 = vmatpush1.bf16.msra.mxu0 0
      %593 = vmatprep.subr.bf16.mxu0 0
      %594 = vmatpush1.bf16.msra.mxu0 0
      %595 = vmatprep.subr.bf16.mxu0 0
      %596 = vmatpush1.bf16.msra.mxu0 0
      %597 = vmatprep.subr.bf16.mxu0 0
      %598 = vmatpush1.bf16.msra.mxu0 %v558
      %599 = vmatprep.subr.bf16.mxu0 0
      %600 = vmatpush1.bf16.msra.mxu0 %v557
      %601 = vmatprep.subr.bf16.mxu0 0
      %602 = vmatpush2.bf16.msra.mxu0 0
      %603 = vmatprep.subr.bf16.mxu0 0
      %604 = vmatpush2.bf16.msra.mxu0 0
      %605 = vmatprep.subr.bf16.mxu0 0
      %606 = vmatpush2.bf16.msra.mxu0 0
      %607 = vmatprep.subr.bf16.mxu0 0
      %608 = vmatpush2.bf16.msra.mxu0 0
      %609 = vmatprep.subr.bf16.mxu0 0
      %610 = vmatpush2.bf16.msra.mxu0 0
      %611 = vmatprep.subr.bf16.mxu0 0
      %612 = vmatpush2.bf16.msra.mxu0 0
      %613 = vmatprep.subr.bf16.mxu0 0
      %614 = vmatpush2.bf16.msra.mxu0 0
      %615 = vmatprep.subr.bf16.mxu0 0
      %616 = vmatpush2.bf16.msra.mxu0 0
      %617 = vmatprep.mubr.bf16.mxu0 0
      %618 = vmatmul.mubr.bf16.gmra.mxu0 %v562
      %v619 = vpop.f32.mrf.mxu0
      %v620 = vadd.f32 %v395, %v619
      %v621 = vpop.f32.mrf.mxu0
      %v622 = vpop.f32.mrf.mxu0
      %v623 = vadd.f32 %v398, %v622
      %v624 = vpop.f32.mrf.mxu0
      %625 = vmatprep.mubr.bf16.mxu0 0
      %626 = vmatmul.mubr.bf16.gmra.mxu0 %v565
      %v627 = vpop.f32.mrf.mxu0
      %v628 = vadd.f32 %v403, %v627
      %v629 = vpop.f32.mrf.mxu0
      %v630 = vpop.f32.mrf.mxu0
      %v631 = vadd.f32 %v406, %v630
      %v632 = vpop.f32.mrf.mxu0
      %633 = vmatprep.mubr.bf16.mxu0 0
      %634 = vmatmul.mubr.bf16.gmra.mxu0 %v568
      %v635 = vpop.f32.mrf.mxu0
      %v636 = vadd.f32 %v411, %v635
      %v637 = vpop.f32.mrf.mxu0
      %v638 = vpop.f32.mrf.mxu0
      %v639 = vadd.f32 %v414, %v638
      %v640 = vpop.f32.mrf.mxu0
      %641 = vmatprep.mubr.bf16.mxu0 0
      %642 = vmatmul.mubr.bf16.gmra.mxu0 %v571
      %v643 = vpop.f32.mrf.mxu0
      %v644 = vadd.f32 %v419, %v643
      %v645 = vpop.f32.mrf.mxu0
      %v646 = vpop.f32.mrf.mxu0
      %v647 = vadd.f32 %v422, %v646
      %v648 = vpop.f32.mrf.mxu0
      %649 = vmatprep.mubr.bf16.mxu0 0
      %650 = vmatmul.mubr.bf16.gmra.mxu0 %v574
      %v651 = vpop.f32.mrf.mxu0
      %v652 = vadd.f32 %v427, %v651
      %v653 = vpop.f32.mrf.mxu0
      %v654 = vpop.f32.mrf.mxu0
      %v655 = vadd.f32 %v430, %v654
      %v656 = vpop.f32.mrf.mxu0
      %657 = vmatprep.mubr.bf16.mxu0 0
      %658 = vmatmul.mubr.bf16.gmra.mxu0 %v577
      %v659 = vpop.f32.mrf.mxu0
      %v660 = vadd.f32 %v435, %v659
      %v661 = vpop.f32.mrf.mxu0
      %v662 = vpop.f32.mrf.mxu0
      %v663 = vadd.f32 %v438, %v662
      %v664 = vpop.f32.mrf.mxu0
      %665 = vmatprep.mubr.bf16.mxu0 0
      %666 = vmatmul.mubr.bf16.gmra.mxu0 %v580
      %v667 = vpop.f32.mrf.mxu0
      %v668 = vadd.f32 %v443, %v667
      %v669 = vpop.f32.mrf.mxu0
      %v670 = vpop.f32.mrf.mxu0
      %v671 = vadd.f32 %v446, %v670
      %v672 = vpop.f32.mrf.mxu0
      %673 = vmatprep.mubr.bf16.mxu0 0
      %674 = vmatmul.mubr.bf16.gmra.mxu0 %v583
      %v675 = vpop.f32.mrf.mxu0
      %v676 = vadd.f32 %v451, %v675
      %v677 = vpop.f32.mrf.mxu0
      %v678 = vpop.f32.mrf.mxu0
      %v679 = vadd.f32 %v454, %v678
      %v680 = vpop.f32.mrf.mxu0
      %681 = vdwg.mxu0
      %v682 = vld [vmem:[%s235 + $0x8] sm:$0xf]
      %v683 = vld [vmem:[%s235 + $0xc] sm:$0xf]
      %v684 = vld [vmem:[%s235 + $0x10] sm:$0xf]
      %v685 = vld [vmem:[%s235 + $0x14] sm:$0xf]
      %v686 = vld [vmem:[%s235 + $0x18] sm:$0xf]
      %v687 = vld [vmem:[%s235 + $0x1c] sm:$0xf]
      %v688 = vld [vmem:[%s235 + $0x20] sm:$0xf]
      %v689 = vld [vmem:[%s235 + $0x24] sm:$0xf]
      %v690 = vld [vmem:[%s235 + $0x28] sm:$0xf]
      %v691 = vld [vmem:[%s235 + $0x2c] sm:$0xf]
      %v692 = vld [vmem:[%s235 + $0x30] sm:$0xf]
      %v693 = vld [vmem:[%s235 + $0x34] sm:$0xf]
      %v694 = vld [vmem:[%s235 + $0x38] sm:$0xf]
      %v695 = vld [vmem:[%s235 + $0x3c] sm:$0xf]
      %v696 = vld [vmem:[%s235 + $0x40] sm:$0xf]
      %v697 = vld [vmem:[%s235 + $0x44] sm:$0xf]
      %v698 = vld [vmem:[%s235 + $0x48] sm:$0x1]
      %s699 = scalar_lea.vmem %s243, 32
      %v700 = vld [vmem:[%s699] sm:$0xf]
      %v701 = vld [vmem:[%s699 + $0x4] sm:$0xf]
      %v702 = vld [vmem:[%s699 + $0x8] sm:$0xf]
      %v703 = vld [vmem:[%s699 + $0xc] sm:$0xf]
      %v721 = vunpack.c.l.b16 %v682
      %v722 = vunpack.c.l.b16 %v683
      %v723 = vunpack.c.l.b16 %v684
      %v724 = vunpack.c.l.b16 %v685
      %v725 = vunpack.c.l.b16 %v686
      %v726 = vunpack.c.l.b16 %v687
      %v727 = vunpack.c.l.b16 %v688
      %v728 = vunpack.c.l.b16 %v689
      %v729 = vunpack.c.l.b16 %v690
      %v730 = vunpack.c.l.b16 %v691
      %v731 = vunpack.c.l.b16 %v692
      %v732 = vunpack.c.l.b16 %v693
      %v733 = vunpack.c.l.b16 %v694
      %v734 = vunpack.c.l.b16 %v695
      %v735 = vunpack.c.l.b16 %v696
      %v736 = vunpack.c.l.b16 %v697
      %v737 = vunpack.c.l.b16 %v698
      %v738 = vpack.c.b16 %v722, %v721
      %v739 = vpack.c.b16 %v724, %v723
      %v740 = vpack.c.b16 %v726, %v725
      %v741 = vpack.c.b16 %v728, %v727
      %v742 = vpack.c.b16 %v730, %v729
      %v743 = vpack.c.b16 %v732, %v731
      %v744 = vpack.c.b16 %v734, %v733
      %v745 = vpack.c.b16 %v736, %v735
      %v746 = vpack.c.b16 %v737, %v737
      %vm747 = vsmask.f32 7424
      %v749 = vshrl.u32 %v738, 16
      %v751 = vshll.u32 %v738, 16
      %v753 = vrot.slane %v751, 1
      %v754 = vor.u32 %v749, %v753
      %v756 = vshll.u32 %v739, 16
      %v758 = vrot.slane %v756, 1
      %v759 = vsel %vm747, %v754, %v758
      %v760 = vshrl.u32 %v739, 16
      %v762 = vor.u32 %v760, %v758
      %v764 = vshll.u32 %v740, 16
      %v766 = vrot.slane %v764, 1
      %v767 = vsel %vm747, %v762, %v766
      %v768 = vshrl.u32 %v740, 16
      %v770 = vor.u32 %v768, %v766
      %v772 = vshll.u32 %v741, 16
      %v774 = vrot.slane %v772, 1
      %v775 = vsel %vm747, %v770, %v774
      %v776 = vshrl.u32 %v741, 16
      %v778 = vor.u32 %v776, %v774
      %v780 = vshll.u32 %v742, 16
      %v782 = vrot.slane %v780, 1
      %v783 = vsel %vm747, %v778, %v782
      %v784 = vshrl.u32 %v742, 16
      %v786 = vor.u32 %v784, %v782
      %v788 = vshll.u32 %v743, 16
      %v790 = vrot.slane %v788, 1
      %v791 = vsel %vm747, %v786, %v790
      %v792 = vshrl.u32 %v743, 16
      %v794 = vor.u32 %v792, %v790
      %v796 = vshll.u32 %v744, 16
      %v798 = vrot.slane %v796, 1
      %v799 = vsel %vm747, %v794, %v798
      %v800 = vshrl.u32 %v744, 16
      %v802 = vor.u32 %v800, %v798
      %v804 = vshll.u32 %v745, 16
      %v806 = vrot.slane %v804, 1
      %v807 = vsel %vm747, %v802, %v806
      %v808 = vshrl.u32 %v745, 16
      %v810 = vor.u32 %v808, %v806
      %v812 = vshll.u32 %v746, 16
      %v814 = vrot.slane %v812, 1
      %v815 = vsel %vm747, %v810, %v814
      %v820 = vunpack.c.l.b16 %v700
      %v821 = vunpack.c.l.b16 %v701
      %v822 = vunpack.c.l.b16 %v702
      %v823 = vunpack.c.l.b16 %v703
      %v824 = vpack.c.b16 %v821, %v820
      %v825 = vpack.c.b16 %v823, %v822
      %v829 = vsel %vm335, %v759, 0
      %v832 = vsel %vm335, %v767, 0
      %v835 = vsel %vm335, %v775, 0
      %v838 = vsel %vm335, %v783, 0
      %v841 = vsel %vm335, %v791, 0
      %v844 = vsel %vm335, %v799, 0
      %v847 = vsel %vm335, %v807, 0
      %v850 = vsel %vm335, %v815, 0
      %852 = vmatprep.subr.bf16.mxu0 0
      %853 = vmatpush1.bf16.msra.mxu0 0
      %854 = vmatprep.subr.bf16.mxu0 0
      %855 = vmatpush1.bf16.msra.mxu0 0
      %856 = vmatprep.subr.bf16.mxu0 0
      %857 = vmatpush1.bf16.msra.mxu0 0
      %858 = vmatprep.subr.bf16.mxu0 0
      %859 = vmatpush1.bf16.msra.mxu0 0
      %860 = vmatprep.subr.bf16.mxu0 0
      %861 = vmatpush1.bf16.msra.mxu0 0
      %862 = vmatprep.subr.bf16.mxu0 0
      %863 = vmatpush1.bf16.msra.mxu0 0
      %864 = vmatprep.subr.bf16.mxu0 0
      %865 = vmatpush1.bf16.msra.mxu0 %v825
      %866 = vmatprep.subr.bf16.mxu0 0
      %867 = vmatpush1.bf16.msra.mxu0 %v824
      %868 = vmatprep.subr.bf16.mxu0 0
      %869 = vmatpush2.bf16.msra.mxu0 0
      %870 = vmatprep.subr.bf16.mxu0 0
      %871 = vmatpush2.bf16.msra.mxu0 0
      %872 = vmatprep.subr.bf16.mxu0 0
      %873 = vmatpush2.bf16.msra.mxu0 0
      %874 = vmatprep.subr.bf16.mxu0 0
      %875 = vmatpush2.bf16.msra.mxu0 0
      %876 = vmatprep.subr.bf16.mxu0 0
      %877 = vmatpush2.bf16.msra.mxu0 0
      %878 = vmatprep.subr.bf16.mxu0 0
      %879 = vmatpush2.bf16.msra.mxu0 0
      %880 = vmatprep.subr.bf16.mxu0 0
      %881 = vmatpush2.bf16.msra.mxu0 0
      %882 = vmatprep.subr.bf16.mxu0 0
      %883 = vmatpush2.bf16.msra.mxu0 0
      %884 = vmatprep.mubr.bf16.mxu0 0
      %885 = vmatmul.mubr.bf16.gmra.mxu0 %v829
      %v886 = vpop.f32.mrf.mxu0
      %v887 = vadd.f32 0.0, %v886
      %v888 = vpop.f32.mrf.mxu0
      %v889 = vpop.f32.mrf.mxu0
      %v890 = vadd.f32 0.0, %v889
      %v891 = vpop.f32.mrf.mxu0
      %892 = vmatprep.mubr.bf16.mxu0 0
      %893 = vmatmul.mubr.bf16.gmra.mxu0 %v832
      %v894 = vpop.f32.mrf.mxu0
      %v895 = vadd.f32 0.0, %v894
      %v896 = vpop.f32.mrf.mxu0
      %v897 = vpop.f32.mrf.mxu0
      %v898 = vadd.f32 0.0, %v897
      %v899 = vpop.f32.mrf.mxu0
      %900 = vmatprep.mubr.bf16.mxu0 0
      %901 = vmatmul.mubr.bf16.gmra.mxu0 %v835
      %v902 = vpop.f32.mrf.mxu0
      %v903 = vadd.f32 0.0, %v902
      %v904 = vpop.f32.mrf.mxu0
      %v905 = vpop.f32.mrf.mxu0
      %v906 = vadd.f32 0.0, %v905
      %v907 = vpop.f32.mrf.mxu0
      %908 = vmatprep.mubr.bf16.mxu0 0
      %909 = vmatmul.mubr.bf16.gmra.mxu0 %v838
      %v910 = vpop.f32.mrf.mxu0
      %v911 = vadd.f32 0.0, %v910
      %v912 = vpop.f32.mrf.mxu0
      %v913 = vpop.f32.mrf.mxu0
      %v914 = vadd.f32 0.0, %v913
      %v915 = vpop.f32.mrf.mxu0
      %916 = vmatprep.mubr.bf16.mxu0 0
      %917 = vmatmul.mubr.bf16.gmra.mxu0 %v841
      %v918 = vpop.f32.mrf.mxu0
      %v919 = vadd.f32 0.0, %v918
      %v920 = vpop.f32.mrf.mxu0
      %v921 = vpop.f32.mrf.mxu0
      %v922 = vadd.f32 0.0, %v921
      %v923 = vpop.f32.mrf.mxu0
      %924 = vmatprep.mubr.bf16.mxu0 0
      %925 = vmatmul.mubr.bf16.gmra.mxu0 %v844
      %v926 = vpop.f32.mrf.mxu0
      %v927 = vadd.f32 0.0, %v926
      %v928 = vpop.f32.mrf.mxu0
      %v929 = vpop.f32.mrf.mxu0
      %v930 = vadd.f32 0.0, %v929
      %v931 = vpop.f32.mrf.mxu0
      %932 = vmatprep.mubr.bf16.mxu0 0
      %933 = vmatmul.mubr.bf16.gmra.mxu0 %v847
      %v934 = vpop.f32.mrf.mxu0
      %v935 = vadd.f32 0.0, %v934
      %v936 = vpop.f32.mrf.mxu0
      %v937 = vpop.f32.mrf.mxu0
      %v938 = vadd.f32 0.0, %v937
      %v939 = vpop.f32.mrf.mxu0
      %940 = vmatprep.mubr.bf16.mxu0 0
      %941 = vmatmul.mubr.bf16.gmra.mxu0 %v850
      %v942 = vpop.f32.mrf.mxu0
      %v943 = vadd.f32 0.0, %v942
      %v944 = vpop.f32.mrf.mxu0
      %v945 = vpop.f32.mrf.mxu0
      %v946 = vadd.f32 0.0, %v945
      %v947 = vpop.f32.mrf.mxu0
      %948 = vdwg.mxu0
      %v949 = vadd.f32 %v620, %v887
      %v950 = vadd.f32 %v623, %v890
      %v951 = vadd.f32 %v628, %v895
      %v952 = vadd.f32 %v631, %v898
      %v953 = vadd.f32 %v636, %v903
      %v954 = vadd.f32 %v639, %v906
      %v955 = vadd.f32 %v644, %v911
      %v956 = vadd.f32 %v647, %v914
      %v957 = vadd.f32 %v652, %v919
      %v958 = vadd.f32 %v655, %v922
      %v959 = vadd.f32 %v660, %v927
      %v960 = vadd.f32 %v663, %v930
      %v961 = vadd.f32 %v668, %v935
      %v962 = vadd.f32 %v671, %v938
      %v963 = vadd.f32 %v676, %v943
      %v964 = vadd.f32 %v679, %v946
      %v965 = vld [vmem:[%s235 + $0xc] sm:$0x8]
      %v966 = vld [vmem:[%s235 + $0x10] sm:$0xf]
      %v967 = vld [vmem:[%s235 + $0x14] sm:$0xf]
      %v968 = vld [vmem:[%s235 + $0x18] sm:$0xf]
      %v969 = vld [vmem:[%s235 + $0x1c] sm:$0xf]
      %v970 = vld [vmem:[%s235 + $0x20] sm:$0xf]
      %v971 = vld [vmem:[%s235 + $0x24] sm:$0xf]
      %v972 = vld [vmem:[%s235 + $0x28] sm:$0xf]
      %v973 = vld [vmem:[%s235 + $0x2c] sm:$0xf]
      %v974 = vld [vmem:[%s235 + $0x30] sm:$0xf]
      %v975 = vld [vmem:[%s235 + $0x34] sm:$0xf]
      %v976 = vld [vmem:[%s235 + $0x38] sm:$0xf]
      %v977 = vld [vmem:[%s235 + $0x3c] sm:$0xf]
      %v978 = vld [vmem:[%s235 + $0x40] sm:$0xf]
      %v979 = vld [vmem:[%s235 + $0x44] sm:$0xf]
      %v980 = vld [vmem:[%s235 + $0x48] sm:$0xf]
      %v981 = vld [vmem:[%s235 + $0x4c] sm:$0xf]
      %s982 = scalar_lea.vmem %s243, 48
      %v983 = vld [vmem:[%s982] sm:$0xf]
      %v984 = vld [vmem:[%s982 + $0x4] sm:$0xf]
      %v985 = vld [vmem:[%s982 + $0x8] sm:$0xf]
      %v986 = vld [vmem:[%s982 + $0xc] sm:$0xf]
      %v1004 = vunpack.c.l.b16 %v965
      %v1005 = vunpack.c.l.b16 %v966
      %v1006 = vunpack.c.l.b16 %v967
      %v1007 = vunpack.c.l.b16 %v968
      %v1008 = vunpack.c.l.b16 %v969
      %v1009 = vunpack.c.l.b16 %v970
      %v1010 = vunpack.c.l.b16 %v971
      %v1011 = vunpack.c.l.b16 %v972
      %v1012 = vunpack.c.l.b16 %v973
      %v1013 = vunpack.c.l.b16 %v974
      %v1014 = vunpack.c.l.b16 %v975
      %v1015 = vunpack.c.l.b16 %v976
      %v1016 = vunpack.c.l.b16 %v977
      %v1017 = vunpack.c.l.b16 %v978
      %v1018 = vunpack.c.l.b16 %v979
      %v1019 = vunpack.c.l.b16 %v980
      %v1020 = vunpack.c.l.b16 %v981
      %v1021 = vpack.c.b16 %v1005, %v1004
      %v1022 = vpack.c.b16 %v1007, %v1006
      %v1023 = vpack.c.b16 %v1009, %v1008
      %v1024 = vpack.c.b16 %v1011, %v1010
      %v1025 = vpack.c.b16 %v1013, %v1012
      %v1026 = vpack.c.b16 %v1015, %v1014
      %v1027 = vpack.c.b16 %v1017, %v1016
      %v1028 = vpack.c.b16 %v1019, %v1018
      %v1029 = vpack.c.b16 %v1020, %v1020
      %v1031 = vshrl.u32 %v1021, 16
      %v1033 = vrot.slane %v1031, 3
      %v1034 = vshll.u32 %v1021, 16
      %v1036 = vrot.slane %v1034, 4
      %v1037 = vor.u32 %v1033, %v1036
      %v1039 = vshrl.u32 %v1022, 16
      %v1041 = vrot.slane %v1039, 3
      %v1042 = vshll.u32 %v1022, 16
      %v1044 = vrot.slane %v1042, 4
      %v1045 = vor.u32 %v1041, %v1044
      %v1046 = vsel %vm468, %v1037, %v1045
      %v1048 = vshrl.u32 %v1023, 16
      %v1050 = vrot.slane %v1048, 3
      %v1051 = vshll.u32 %v1023, 16
      %v1053 = vrot.slane %v1051, 4
      %v1054 = vor.u32 %v1050, %v1053
      %v1055 = vsel %vm468, %v1045, %v1054
      %v1057 = vshrl.u32 %v1024, 16
      %v1059 = vrot.slane %v1057, 3
      %v1060 = vshll.u32 %v1024, 16
      %v1062 = vrot.slane %v1060, 4
      %v1063 = vor.u32 %v1059, %v1062
      %v1064 = vsel %vm468, %v1054, %v1063
      %v1066 = vshrl.u32 %v1025, 16
      %v1068 = vrot.slane %v1066, 3
      %v1069 = vshll.u32 %v1025, 16
      %v1071 = vrot.slane %v1069, 4
      %v1072 = vor.u32 %v1068, %v1071
      %v1073 = vsel %vm468, %v1063, %v1072
      %v1075 = vshrl.u32 %v1026, 16
      %v1077 = vrot.slane %v1075, 3
      %v1078 = vshll.u32 %v1026, 16
      %v1080 = vrot.slane %v1078, 4
      %v1081 = vor.u32 %v1077, %v1080
      %v1082 = vsel %vm468, %v1072, %v1081
      %v1084 = vshrl.u32 %v1027, 16
      %v1086 = vrot.slane %v1084, 3
      %v1087 = vshll.u32 %v1027, 16
      %v1089 = vrot.slane %v1087, 4
      %v1090 = vor.u32 %v1086, %v1089
      %v1091 = vsel %vm468, %v1081, %v1090
      %v1093 = vshrl.u32 %v1028, 16
      %v1095 = vrot.slane %v1093, 3
      %v1096 = vshll.u32 %v1028, 16
      %v1098 = vrot.slane %v1096, 4
      %v1099 = vor.u32 %v1095, %v1098
      %v1100 = vsel %vm468, %v1090, %v1099
      %v1102 = vshrl.u32 %v1029, 16
      %v1104 = vrot.slane %v1102, 3
      %v1105 = vshll.u32 %v1029, 16
      %v1107 = vrot.slane %v1105, 4
      %v1108 = vor.u32 %v1104, %v1107
      %v1109 = vsel %vm468, %v1099, %v1108
      %v1114 = vunpack.c.l.b16 %v983
      %v1115 = vunpack.c.l.b16 %v984
      %v1116 = vunpack.c.l.b16 %v985
      %v1117 = vunpack.c.l.b16 %v986
      %v1118 = vpack.c.b16 %v1115, %v1114
      %v1119 = vpack.c.b16 %v1117, %v1116
      %v1123 = vsel %vm335, %v1046, 0
      %v1126 = vsel %vm335, %v1055, 0
      %v1129 = vsel %vm335, %v1064, 0
      %v1132 = vsel %vm335, %v1073, 0
      %v1135 = vsel %vm335, %v1082, 0
      %v1138 = vsel %vm335, %v1091, 0
      %v1141 = vsel %vm335, %v1100, 0
      %v1144 = vsel %vm335, %v1109, 0
      %1146 = vmatprep.subr.bf16.mxu0 0
      %1147 = vmatpush1.bf16.msra.mxu0 0
      %1148 = vmatprep.subr.bf16.mxu0 0
      %1149 = vmatpush1.bf16.msra.mxu0 0
      %1150 = vmatprep.subr.bf16.mxu0 0
      %1151 = vmatpush1.bf16.msra.mxu0 0
      %1152 = vmatprep.subr.bf16.mxu0 0
      %1153 = vmatpush1.bf16.msra.mxu0 0
      %1154 = vmatprep.subr.bf16.mxu0 0
      %1155 = vmatpush1.bf16.msra.mxu0 0
      %1156 = vmatprep.subr.bf16.mxu0 0
      %1157 = vmatpush1.bf16.msra.mxu0 0
      %1158 = vmatprep.subr.bf16.mxu0 0
      %1159 = vmatpush1.bf16.msra.mxu0 %v1119
      %1160 = vmatprep.subr.bf16.mxu0 0
      %1161 = vmatpush1.bf16.msra.mxu0 %v1118
      %1162 = vmatprep.subr.bf16.mxu0 0
      %1163 = vmatpush2.bf16.msra.mxu0 0
      %1164 = vmatprep.subr.bf16.mxu0 0
      %1165 = vmatpush2.bf16.msra.mxu0 0
      %1166 = vmatprep.subr.bf16.mxu0 0
      %1167 = vmatpush2.bf16.msra.mxu0 0
      %1168 = vmatprep.subr.bf16.mxu0 0
      %1169 = vmatpush2.bf16.msra.mxu0 0
      %1170 = vmatprep.subr.bf16.mxu0 0
      %1171 = vmatpush2.bf16.msra.mxu0 0
      %1172 = vmatprep.subr.bf16.mxu0 0
      %1173 = vmatpush2.bf16.msra.mxu0 0
      %1174 = vmatprep.subr.bf16.mxu0 0
      %1175 = vmatpush2.bf16.msra.mxu0 0
      %1176 = vmatprep.subr.bf16.mxu0 0
      %1177 = vmatpush2.bf16.msra.mxu0 0
      %1178 = vmatprep.mubr.bf16.mxu0 0
      %1179 = vmatmul.mubr.bf16.gmra.mxu0 %v1123
      %v1180 = vpop.f32.mrf.mxu0
      %v1181 = vadd.f32 0.0, %v1180
      %v1182 = vpop.f32.mrf.mxu0
      %v1183 = vpop.f32.mrf.mxu0
      %v1184 = vadd.f32 0.0, %v1183
      %v1185 = vpop.f32.mrf.mxu0
      %1186 = vmatprep.mubr.bf16.mxu0 0
      %1187 = vmatmul.mubr.bf16.gmra.mxu0 %v1126
      %v1188 = vpop.f32.mrf.mxu0
      %v1189 = vadd.f32 0.0, %v1188
      %v1190 = vpop.f32.mrf.mxu0
      %v1191 = vpop.f32.mrf.mxu0
      %v1192 = vadd.f32 0.0, %v1191
      %v1193 = vpop.f32.mrf.mxu0
      %1194 = vmatprep.mubr.bf16.mxu0 0
      %1195 = vmatmul.mubr.bf16.gmra.mxu0 %v1129
      %v1196 = vpop.f32.mrf.mxu0
      %v1197 = vadd.f32 0.0, %v1196
      %v1198 = vpop.f32.mrf.mxu0
      %v1199 = vpop.f32.mrf.mxu0
      %v1200 = vadd.f32 0.0, %v1199
      %v1201 = vpop.f32.mrf.mxu0
      %1202 = vmatprep.mubr.bf16.mxu0 0
      %1203 = vmatmul.mubr.bf16.gmra.mxu0 %v1132
      %v1204 = vpop.f32.mrf.mxu0
      %v1205 = vadd.f32 0.0, %v1204
      %v1206 = vpop.f32.mrf.mxu0
      %v1207 = vpop.f32.mrf.mxu0
      %v1208 = vadd.f32 0.0, %v1207
      %v1209 = vpop.f32.mrf.mxu0
      %1210 = vmatprep.mubr.bf16.mxu0 0
      %1211 = vmatmul.mubr.bf16.gmra.mxu0 %v1135
      %v1212 = vpop.f32.mrf.mxu0
      %v1213 = vadd.f32 0.0, %v1212
      %v1214 = vpop.f32.mrf.mxu0
      %v1215 = vpop.f32.mrf.mxu0
      %v1216 = vadd.f32 0.0, %v1215
      %v1217 = vpop.f32.mrf.mxu0
      %1218 = vmatprep.mubr.bf16.mxu0 0
      %1219 = vmatmul.mubr.bf16.gmra.mxu0 %v1138
      %v1220 = vpop.f32.mrf.mxu0
      %v1221 = vadd.f32 0.0, %v1220
      %v1222 = vpop.f32.mrf.mxu0
      %v1223 = vpop.f32.mrf.mxu0
      %v1224 = vadd.f32 0.0, %v1223
      %v1225 = vpop.f32.mrf.mxu0
      %1226 = vmatprep.mubr.bf16.mxu0 0
      %1227 = vmatmul.mubr.bf16.gmra.mxu0 %v1141
      %v1228 = vpop.f32.mrf.mxu0
      %v1229 = vadd.f32 0.0, %v1228
      %v1230 = vpop.f32.mrf.mxu0
      %v1231 = vpop.f32.mrf.mxu0
      %v1232 = vadd.f32 0.0, %v1231
      %v1233 = vpop.f32.mrf.mxu0
      %1234 = vmatprep.mubr.bf16.mxu0 0
      %1235 = vmatmul.mubr.bf16.gmra.mxu0 %v1144
      %v1236 = vpop.f32.mrf.mxu0
      %v1237 = vadd.f32 0.0, %v1236
      %v1238 = vpop.f32.mrf.mxu0
      %v1239 = vpop.f32.mrf.mxu0
      %v1240 = vadd.f32 0.0, %v1239
      %v1241 = vpop.f32.mrf.mxu0
      %1242 = vdwg.mxu0
      %v1243 = vadd.f32 %v949, %v1181
      %v1244 = vadd.f32 %v950, %v1184
      %v1245 = vadd.f32 %v951, %v1189
      %v1246 = vadd.f32 %v952, %v1192
      %v1247 = vadd.f32 %v953, %v1197
      %v1248 = vadd.f32 %v954, %v1200
      %v1249 = vadd.f32 %v955, %v1205
      %v1250 = vadd.f32 %v956, %v1208
      %v1251 = vadd.f32 %v957, %v1213
      %v1252 = vadd.f32 %v958, %v1216
      %v1253 = vadd.f32 %v959, %v1221
      %v1254 = vadd.f32 %v960, %v1224
      %v1255 = vadd.f32 %v961, %v1229
      %v1256 = vadd.f32 %v962, %v1232
      %v1257 = vadd.f32 %v963, %v1237
      %v1258 = vadd.f32 %v964, %v1240
      %s1259 = scalar_lea.vmem %s243, 64
      %v1260 = vld [vmem:[%s1259] sm:$0xf]
      %v1261 = vld [vmem:[%s1259 + $0x4] sm:$0xf]
      %v1262 = vld [vmem:[%s1259 + $0x8] sm:$0xf]
      %v1263 = vld [vmem:[%s1259 + $0xc] sm:$0xf]
      %v1264 = vpack.c.b16 %v1006, %v1005
      %v1265 = vpack.c.b16 %v1008, %v1007
      %v1266 = vpack.c.b16 %v1010, %v1009
      %v1267 = vpack.c.b16 %v1012, %v1011
      %v1268 = vpack.c.b16 %v1014, %v1013
      %v1269 = vpack.c.b16 %v1016, %v1015
      %v1270 = vpack.c.b16 %v1018, %v1017
      %v1271 = vpack.c.b16 %v1020, %v1019
      %v1276 = vunpack.c.l.b16 %v1260
      %v1277 = vunpack.c.l.b16 %v1261
      %v1278 = vunpack.c.l.b16 %v1262
      %v1279 = vunpack.c.l.b16 %v1263
      %v1280 = vpack.c.b16 %v1277, %v1276
      %v1281 = vpack.c.b16 %v1279, %v1278
      %v1285 = vsel %vm335, %v1264, 0
      %v1288 = vsel %vm335, %v1265, 0
      %v1291 = vsel %vm335, %v1266, 0
      %v1294 = vsel %vm335, %v1267, 0
      %v1297 = vsel %vm335, %v1268, 0
      %v1300 = vsel %vm335, %v1269, 0
      %v1303 = vsel %vm335, %v1270, 0
      %v1306 = vsel %vm335, %v1271, 0
      %1308 = vmatprep.subr.bf16.mxu0 0
      %1309 = vmatpush1.bf16.msra.mxu0 0
      %1310 = vmatprep.subr.bf16.mxu0 0
      %1311 = vmatpush1.bf16.msra.mxu0 0
      %1312 = vmatprep.subr.bf16.mxu0 0
      %1313 = vmatpush1.bf16.msra.mxu0 0
      %1314 = vmatprep.subr.bf16.mxu0 0
      %1315 = vmatpush1.bf16.msra.mxu0 0
      %1316 = vmatprep.subr.bf16.mxu0 0
      %1317 = vmatpush1.bf16.msra.mxu0 0
      %1318 = vmatprep.subr.bf16.mxu0 0
      %1319 = vmatpush1.bf16.msra.mxu0 0
      %1320 = vmatprep.subr.bf16.mxu0 0
      %1321 = vmatpush1.bf16.msra.mxu0 %v1281
      %1322 = vmatprep.subr.bf16.mxu0 0
      %1323 = vmatpush1.bf16.msra.mxu0 %v1280
      %1324 = vmatprep.subr.bf16.mxu0 0
      %1325 = vmatpush2.bf16.msra.mxu0 0
      %1326 = vmatprep.subr.bf16.mxu0 0
      %1327 = vmatpush2.bf16.msra.mxu0 0
      %1328 = vmatprep.subr.bf16.mxu0 0
      %1329 = vmatpush2.bf16.msra.mxu0 0
      %1330 = vmatprep.subr.bf16.mxu0 0
      %1331 = vmatpush2.bf16.msra.mxu0 0
      %1332 = vmatprep.subr.bf16.mxu0 0
      %1333 = vmatpush2.bf16.msra.mxu0 0
      %1334 = vmatprep.subr.bf16.mxu0 0
      %1335 = vmatpush2.bf16.msra.mxu0 0
      %1336 = vmatprep.subr.bf16.mxu0 0
      %1337 = vmatpush2.bf16.msra.mxu0 0
      %1338 = vmatprep.subr.bf16.mxu0 0
      %1339 = vmatpush2.bf16.msra.mxu0 0
      %1340 = vmatprep.mubr.bf16.mxu0 0
      %1341 = vmatmul.mubr.bf16.gmra.mxu0 %v1285
      %v1342 = vpop.f32.mrf.mxu0
      %v1343 = vadd.f32 0.0, %v1342
      %v1344 = vpop.f32.mrf.mxu0
      %v1345 = vpop.f32.mrf.mxu0
      %v1346 = vadd.f32 0.0, %v1345
      %v1347 = vpop.f32.mrf.mxu0
      %1348 = vmatprep.mubr.bf16.mxu0 0
      %1349 = vmatmul.mubr.bf16.gmra.mxu0 %v1288
      %v1350 = vpop.f32.mrf.mxu0
      %v1351 = vadd.f32 0.0, %v1350
      %v1352 = vpop.f32.mrf.mxu0
      %v1353 = vpop.f32.mrf.mxu0
      %v1354 = vadd.f32 0.0, %v1353
      %v1355 = vpop.f32.mrf.mxu0
      %1356 = vmatprep.mubr.bf16.mxu0 0
      %1357 = vmatmul.mubr.bf16.gmra.mxu0 %v1291
      %v1358 = vpop.f32.mrf.mxu0
      %v1359 = vadd.f32 0.0, %v1358
      %v1360 = vpop.f32.mrf.mxu0
      %v1361 = vpop.f32.mrf.mxu0
      %v1362 = vadd.f32 0.0, %v1361
      %v1363 = vpop.f32.mrf.mxu0
      %1364 = vmatprep.mubr.bf16.mxu0 0
      %1365 = vmatmul.mubr.bf16.gmra.mxu0 %v1294
      %v1366 = vpop.f32.mrf.mxu0
      %v1367 = vadd.f32 0.0, %v1366
      %v1368 = vpop.f32.mrf.mxu0
      %v1369 = vpop.f32.mrf.mxu0
      %v1370 = vadd.f32 0.0, %v1369
      %v1371 = vpop.f32.mrf.mxu0
      %1372 = vmatprep.mubr.bf16.mxu0 0
      %1373 = vmatmul.mubr.bf16.gmra.mxu0 %v1297
      %v1374 = vpop.f32.mrf.mxu0
      %v1375 = vadd.f32 0.0, %v1374
      %v1376 = vpop.f32.mrf.mxu0
      %v1377 = vpop.f32.mrf.mxu0
      %v1378 = vadd.f32 0.0, %v1377
      %v1379 = vpop.f32.mrf.mxu0
      %1380 = vmatprep.mubr.bf16.mxu0 0
      %1381 = vmatmul.mubr.bf16.gmra.mxu0 %v1300
      %v1382 = vpop.f32.mrf.mxu0
      %v1383 = vadd.f32 0.0, %v1382
      %v1384 = vpop.f32.mrf.mxu0
      %v1385 = vpop.f32.mrf.mxu0
      %v1386 = vadd.f32 0.0, %v1385
      %v1387 = vpop.f32.mrf.mxu0
      %1388 = vmatprep.mubr.bf16.mxu0 0
      %1389 = vmatmul.mubr.bf16.gmra.mxu0 %v1303
      %v1390 = vpop.f32.mrf.mxu0
      %v1391 = vadd.f32 0.0, %v1390
      %v1392 = vpop.f32.mrf.mxu0
      %v1393 = vpop.f32.mrf.mxu0
      %v1394 = vadd.f32 0.0, %v1393
      %v1395 = vpop.f32.mrf.mxu0
      %1396 = vmatprep.mubr.bf16.mxu0 0
      %1397 = vmatmul.mubr.bf16.gmra.mxu0 %v1306
      %v1398 = vpop.f32.mrf.mxu0
      %v1399 = vadd.f32 0.0, %v1398
      %v1400 = vpop.f32.mrf.mxu0
      %v1401 = vpop.f32.mrf.mxu0
      %v1402 = vadd.f32 0.0, %v1401
      %v1403 = vpop.f32.mrf.mxu0
      %1404 = vdwg.mxu0
      %v1405 = vadd.f32 %v1243, %v1343
      %v1406 = vadd.f32 %v1244, %v1346
      %v1407 = vadd.f32 %v1245, %v1351
      %v1408 = vadd.f32 %v1246, %v1354
      %v1409 = vadd.f32 %v1247, %v1359
      %v1410 = vadd.f32 %v1248, %v1362
      %v1411 = vadd.f32 %v1249, %v1367
      %v1412 = vadd.f32 %v1250, %v1370
      %v1413 = vadd.f32 %v1251, %v1375
      %v1414 = vadd.f32 %v1252, %v1378
      %v1415 = vadd.f32 %v1253, %v1383
      %v1416 = vadd.f32 %v1254, %v1386
      %v1417 = vadd.f32 %v1255, %v1391
      %v1418 = vadd.f32 %v1256, %v1394
      %v1419 = vadd.f32 %v1257, %v1399
      %v1420 = vadd.f32 %v1258, %v1402
      %v1421 = vld [vmem:[%s235 + $0x10] sm:$0xf]
      %v1422 = vld [vmem:[%s235 + $0x14] sm:$0xf]
      %v1423 = vld [vmem:[%s235 + $0x18] sm:$0xf]
      %v1424 = vld [vmem:[%s235 + $0x1c] sm:$0xf]
      %v1425 = vld [vmem:[%s235 + $0x20] sm:$0xf]
      %v1426 = vld [vmem:[%s235 + $0x24] sm:$0xf]
      %v1427 = vld [vmem:[%s235 + $0x28] sm:$0xf]
      %v1428 = vld [vmem:[%s235 + $0x2c] sm:$0xf]
      %v1429 = vld [vmem:[%s235 + $0x30] sm:$0xf]
      %v1430 = vld [vmem:[%s235 + $0x34] sm:$0xf]
      %v1431 = vld [vmem:[%s235 + $0x38] sm:$0xf]
      %v1432 = vld [vmem:[%s235 + $0x3c] sm:$0xf]
      %v1433 = vld [vmem:[%s235 + $0x40] sm:$0xf]
      %v1434 = vld [vmem:[%s235 + $0x44] sm:$0xf]
      %v1435 = vld [vmem:[%s235 + $0x48] sm:$0xf]
      %v1436 = vld [vmem:[%s235 + $0x4c] sm:$0xf]
      %v1437 = vld [vmem:[%s235 + $0x50] sm:$0x1]
      %s1438 = scalar_lea.vmem %s243, 80
      %v1439 = vld [vmem:[%s1438] sm:$0xf]
      %v1440 = vld [vmem:[%s1438 + $0x4] sm:$0xf]
      %v1441 = vld [vmem:[%s1438 + $0x8] sm:$0xf]
      %v1442 = vld [vmem:[%s1438 + $0xc] sm:$0xf]
      %v1460 = vunpack.c.l.b16 %v1421
      %v1461 = vunpack.c.l.b16 %v1422
      %v1462 = vunpack.c.l.b16 %v1423
      %v1463 = vunpack.c.l.b16 %v1424
      %v1464 = vunpack.c.l.b16 %v1425
      %v1465 = vunpack.c.l.b16 %v1426
      %v1466 = vunpack.c.l.b16 %v1427
      %v1467 = vunpack.c.l.b16 %v1428
      %v1468 = vunpack.c.l.b16 %v1429
      %v1469 = vunpack.c.l.b16 %v1430
      %v1470 = vunpack.c.l.b16 %v1431
      %v1471 = vunpack.c.l.b16 %v1432
      %v1472 = vunpack.c.l.b16 %v1433
      %v1473 = vunpack.c.l.b16 %v1434
      %v1474 = vunpack.c.l.b16 %v1435
      %v1475 = vunpack.c.l.b16 %v1436
      %v1476 = vunpack.c.l.b16 %v1437
      %v1477 = vpack.c.b16 %v1461, %v1460
      %v1478 = vpack.c.b16 %v1463, %v1462
      %v1479 = vpack.c.b16 %v1465, %v1464
      %v1480 = vpack.c.b16 %v1467, %v1466
      %v1481 = vpack.c.b16 %v1469, %v1468
      %v1482 = vpack.c.b16 %v1471, %v1470
      %v1483 = vpack.c.b16 %v1473, %v1472
      %v1484 = vpack.c.b16 %v1475, %v1474
      %v1485 = vpack.c.b16 %v1476, %v1476
      %v1487 = vshrl.u32 %v1477, 16
      %v1489 = vshll.u32 %v1477, 16
      %v1491 = vrot.slane %v1489, 1
      %v1492 = vor.u32 %v1487, %v1491
      %v1494 = vshll.u32 %v1478, 16
      %v1496 = vrot.slane %v1494, 1
      %v1497 = vsel %vm747, %v1492, %v1496
      %v1498 = vshrl.u32 %v1478, 16
      %v1500 = vor.u32 %v1498, %v1496
      %v1502 = vshll.u32 %v1479, 16
      %v1504 = vrot.slane %v1502, 1
      %v1505 = vsel %vm747, %v1500, %v1504
      %v1506 = vshrl.u32 %v1479, 16
      %v1508 = vor.u32 %v1506, %v1504
      %v1510 = vshll.u32 %v1480, 16
      %v1512 = vrot.slane %v1510, 1
      %v1513 = vsel %vm747, %v1508, %v1512
      %v1514 = vshrl.u32 %v1480, 16
      %v1516 = vor.u32 %v1514, %v1512
      %v1518 = vshll.u32 %v1481, 16
      %v1520 = vrot.slane %v1518, 1
      %v1521 = vsel %vm747, %v1516, %v1520
      %v1522 = vshrl.u32 %v1481, 16
      %v1524 = vor.u32 %v1522, %v1520
      %v1526 = vshll.u32 %v1482, 16
      %v1528 = vrot.slane %v1526, 1
      %v1529 = vsel %vm747, %v1524, %v1528
      %v1530 = vshrl.u32 %v1482, 16
      %v1532 = vor.u32 %v1530, %v1528
      %v1534 = vshll.u32 %v1483, 16
      %v1536 = vrot.slane %v1534, 1
      %v1537 = vsel %vm747, %v1532, %v1536
      %v1538 = vshrl.u32 %v1483, 16
      %v1540 = vor.u32 %v1538, %v1536
      %v1542 = vshll.u32 %v1484, 16
      %v1544 = vrot.slane %v1542, 1
      %v1545 = vsel %vm747, %v1540, %v1544
      %v1546 = vshrl.u32 %v1484, 16
      %v1548 = vor.u32 %v1546, %v1544
      %v1550 = vshll.u32 %v1485, 16
      %v1552 = vrot.slane %v1550, 1
      %v1553 = vsel %vm747, %v1548, %v1552
      %v1558 = vunpack.c.l.b16 %v1439
      %v1559 = vunpack.c.l.b16 %v1440
      %v1560 = vunpack.c.l.b16 %v1441
      %v1561 = vunpack.c.l.b16 %v1442
      %v1562 = vpack.c.b16 %v1559, %v1558
      %v1563 = vpack.c.b16 %v1561, %v1560
      %v1567 = vsel %vm335, %v1497, 0
      %v1570 = vsel %vm335, %v1505, 0
      %v1573 = vsel %vm335, %v1513, 0
      %v1576 = vsel %vm335, %v1521, 0
      %v1579 = vsel %vm335, %v1529, 0
      %v1582 = vsel %vm335, %v1537, 0
      %v1585 = vsel %vm335, %v1545, 0
      %v1588 = vsel %vm335, %v1553, 0
      %1590 = vmatprep.subr.bf16.mxu0 0
      %1591 = vmatpush1.bf16.msra.mxu0 0
      %1592 = vmatprep.subr.bf16.mxu0 0
      %1593 = vmatpush1.bf16.msra.mxu0 0
      %1594 = vmatprep.subr.bf16.mxu0 0
      %1595 = vmatpush1.bf16.msra.mxu0 0
      %1596 = vmatprep.subr.bf16.mxu0 0
      %1597 = vmatpush1.bf16.msra.mxu0 0
      %1598 = vmatprep.subr.bf16.mxu0 0
      %1599 = vmatpush1.bf16.msra.mxu0 0
      %1600 = vmatprep.subr.bf16.mxu0 0
      %1601 = vmatpush1.bf16.msra.mxu0 0
      %1602 = vmatprep.subr.bf16.mxu0 0
      %1603 = vmatpush1.bf16.msra.mxu0 %v1563
      %1604 = vmatprep.subr.bf16.mxu0 0
      %1605 = vmatpush1.bf16.msra.mxu0 %v1562
      %1606 = vmatprep.subr.bf16.mxu0 0
      %1607 = vmatpush2.bf16.msra.mxu0 0
      %1608 = vmatprep.subr.bf16.mxu0 0
      %1609 = vmatpush2.bf16.msra.mxu0 0
      %1610 = vmatprep.subr.bf16.mxu0 0
      %1611 = vmatpush2.bf16.msra.mxu0 0
      %1612 = vmatprep.subr.bf16.mxu0 0
      %1613 = vmatpush2.bf16.msra.mxu0 0
      %1614 = vmatprep.subr.bf16.mxu0 0
      %1615 = vmatpush2.bf16.msra.mxu0 0
      %1616 = vmatprep.subr.bf16.mxu0 0
      %1617 = vmatpush2.bf16.msra.mxu0 0
      %1618 = vmatprep.subr.bf16.mxu0 0
      %1619 = vmatpush2.bf16.msra.mxu0 0
      %1620 = vmatprep.subr.bf16.mxu0 0
      %1621 = vmatpush2.bf16.msra.mxu0 0
      %1622 = vmatprep.mubr.bf16.mxu0 0
      %1623 = vmatmul.mubr.bf16.gmra.mxu0 %v1567
      %v1624 = vpop.f32.mrf.mxu0
      %v1625 = vadd.f32 0.0, %v1624
      %v1626 = vpop.f32.mrf.mxu0
      %v1627 = vpop.f32.mrf.mxu0
      %v1628 = vadd.f32 0.0, %v1627
      %v1629 = vpop.f32.mrf.mxu0
      %1630 = vmatprep.mubr.bf16.mxu0 0
      %1631 = vmatmul.mubr.bf16.gmra.mxu0 %v1570
      %v1632 = vpop.f32.mrf.mxu0
      %v1633 = vadd.f32 0.0, %v1632
      %v1634 = vpop.f32.mrf.mxu0
      %v1635 = vpop.f32.mrf.mxu0
      %v1636 = vadd.f32 0.0, %v1635
      %v1637 = vpop.f32.mrf.mxu0
      %1638 = vmatprep.mubr.bf16.mxu0 0
      %1639 = vmatmul.mubr.bf16.gmra.mxu0 %v1573
      %v1640 = vpop.f32.mrf.mxu0
      %v1641 = vadd.f32 0.0, %v1640
      %v1642 = vpop.f32.mrf.mxu0
      %v1643 = vpop.f32.mrf.mxu0
      %v1644 = vadd.f32 0.0, %v1643
      %v1645 = vpop.f32.mrf.mxu0
      %1646 = vmatprep.mubr.bf16.mxu0 0
      %1647 = vmatmul.mubr.bf16.gmra.mxu0 %v1576
      %v1648 = vpop.f32.mrf.mxu0
      %v1649 = vadd.f32 0.0, %v1648
      %v1650 = vpop.f32.mrf.mxu0
      %v1651 = vpop.f32.mrf.mxu0
      %v1652 = vadd.f32 0.0, %v1651
      %v1653 = vpop.f32.mrf.mxu0
      %1654 = vmatprep.mubr.bf16.mxu0 0
      %1655 = vmatmul.mubr.bf16.gmra.mxu0 %v1579
      %v1656 = vpop.f32.mrf.mxu0
      %v1657 = vadd.f32 0.0, %v1656
      %v1658 = vpop.f32.mrf.mxu0
      %v1659 = vpop.f32.mrf.mxu0
      %v1660 = vadd.f32 0.0, %v1659
      %v1661 = vpop.f32.mrf.mxu0
      %1662 = vmatprep.mubr.bf16.mxu0 0
      %1663 = vmatmul.mubr.bf16.gmra.mxu0 %v1582
      %v1664 = vpop.f32.mrf.mxu0
      %v1665 = vadd.f32 0.0, %v1664
      %v1666 = vpop.f32.mrf.mxu0
      %v1667 = vpop.f32.mrf.mxu0
      %v1668 = vadd.f32 0.0, %v1667
      %v1669 = vpop.f32.mrf.mxu0
      %1670 = vmatprep.mubr.bf16.mxu0 0
      %1671 = vmatmul.mubr.bf16.gmra.mxu0 %v1585
      %v1672 = vpop.f32.mrf.mxu0
      %v1673 = vadd.f32 0.0, %v1672
      %v1674 = vpop.f32.mrf.mxu0
      %v1675 = vpop.f32.mrf.mxu0
      %v1676 = vadd.f32 0.0, %v1675
      %v1677 = vpop.f32.mrf.mxu0
      %1678 = vmatprep.mubr.bf16.mxu0 0
      %1679 = vmatmul.mubr.bf16.gmra.mxu0 %v1588
      %v1680 = vpop.f32.mrf.mxu0
      %v1681 = vadd.f32 0.0, %v1680
      %v1682 = vpop.f32.mrf.mxu0
      %v1683 = vpop.f32.mrf.mxu0
      %v1684 = vadd.f32 0.0, %v1683
      %v1685 = vpop.f32.mrf.mxu0
      %1686 = vdwg.mxu0
      %v1687 = vadd.f32 %v1405, %v1625
      %v1688 = vadd.f32 %v1406, %v1628
      %v1689 = vadd.f32 %v1407, %v1633
      %v1690 = vadd.f32 %v1408, %v1636
      %v1691 = vadd.f32 %v1409, %v1641
      %v1692 = vadd.f32 %v1410, %v1644
      %v1693 = vadd.f32 %v1411, %v1649
      %v1694 = vadd.f32 %v1412, %v1652
      %v1695 = vadd.f32 %v1413, %v1657
      %v1696 = vadd.f32 %v1414, %v1660
      %v1697 = vadd.f32 %v1415, %v1665
      %v1698 = vadd.f32 %v1416, %v1668
      %v1699 = vadd.f32 %v1417, %v1673
      %v1700 = vadd.f32 %v1418, %v1676
      %v1701 = vadd.f32 %v1419, %v1681
      %v1702 = vadd.f32 %v1420, %v1684
      %v1703 = vld [vmem:[%s235 + $0x14] sm:$0x8]
      %v1704 = vld [vmem:[%s235 + $0x18] sm:$0xf]
      %v1705 = vld [vmem:[%s235 + $0x1c] sm:$0xf]
      %v1706 = vld [vmem:[%s235 + $0x20] sm:$0xf]
      %v1707 = vld [vmem:[%s235 + $0x24] sm:$0xf]
      %v1708 = vld [vmem:[%s235 + $0x28] sm:$0xf]
      %v1709 = vld [vmem:[%s235 + $0x2c] sm:$0xf]
      %v1710 = vld [vmem:[%s235 + $0x30] sm:$0xf]
      %v1711 = vld [vmem:[%s235 + $0x34] sm:$0xf]
      %v1712 = vld [vmem:[%s235 + $0x38] sm:$0xf]
      %v1713 = vld [vmem:[%s235 + $0x3c] sm:$0xf]
      %v1714 = vld [vmem:[%s235 + $0x40] sm:$0xf]
      %v1715 = vld [vmem:[%s235 + $0x44] sm:$0xf]
      %v1716 = vld [vmem:[%s235 + $0x48] sm:$0xf]
      %v1717 = vld [vmem:[%s235 + $0x4c] sm:$0xf]
      %v1718 = vld [vmem:[%s235 + $0x50] sm:$0xf]
      %v1719 = vld [vmem:[%s235 + $0x54] sm:$0xf]
      %s1720 = scalar_lea.vmem %s243, 96
      %v1721 = vld [vmem:[%s1720] sm:$0xf]
      %v1722 = vld [vmem:[%s1720 + $0x4] sm:$0xf]
      %v1723 = vld [vmem:[%s1720 + $0x8] sm:$0xf]
      %v1724 = vld [vmem:[%s1720 + $0xc] sm:$0xf]
      %v1742 = vunpack.c.l.b16 %v1703
      %v1743 = vunpack.c.l.b16 %v1704
      %v1744 = vunpack.c.l.b16 %v1705
      %v1745 = vunpack.c.l.b16 %v1706
      %v1746 = vunpack.c.l.b16 %v1707
      %v1747 = vunpack.c.l.b16 %v1708
      %v1748 = vunpack.c.l.b16 %v1709
      %v1749 = vunpack.c.l.b16 %v1710
      %v1750 = vunpack.c.l.b16 %v1711
      %v1751 = vunpack.c.l.b16 %v1712
      %v1752 = vunpack.c.l.b16 %v1713
      %v1753 = vunpack.c.l.b16 %v1714
      %v1754 = vunpack.c.l.b16 %v1715
      %v1755 = vunpack.c.l.b16 %v1716
      %v1756 = vunpack.c.l.b16 %v1717
      %v1757 = vunpack.c.l.b16 %v1718
      %v1758 = vunpack.c.l.b16 %v1719
      %v1759 = vpack.c.b16 %v1743, %v1742
      %v1760 = vpack.c.b16 %v1745, %v1744
      %v1761 = vpack.c.b16 %v1747, %v1746
      %v1762 = vpack.c.b16 %v1749, %v1748
      %v1763 = vpack.c.b16 %v1751, %v1750
      %v1764 = vpack.c.b16 %v1753, %v1752
      %v1765 = vpack.c.b16 %v1755, %v1754
      %v1766 = vpack.c.b16 %v1757, %v1756
      %v1767 = vpack.c.b16 %v1758, %v1758
      %v1769 = vshrl.u32 %v1759, 16
      %v1771 = vrot.slane %v1769, 3
      %v1772 = vshll.u32 %v1759, 16
      %v1774 = vrot.slane %v1772, 4
      %v1775 = vor.u32 %v1771, %v1774
      %v1777 = vshrl.u32 %v1760, 16
      %v1779 = vrot.slane %v1777, 3
      %v1780 = vshll.u32 %v1760, 16
      %v1782 = vrot.slane %v1780, 4
      %v1783 = vor.u32 %v1779, %v1782
      %v1784 = vsel %vm468, %v1775, %v1783
      %v1786 = vshrl.u32 %v1761, 16
      %v1788 = vrot.slane %v1786, 3
      %v1789 = vshll.u32 %v1761, 16
      %v1791 = vrot.slane %v1789, 4
      %v1792 = vor.u32 %v1788, %v1791
      %v1793 = vsel %vm468, %v1783, %v1792
      %v1795 = vshrl.u32 %v1762, 16
      %v1797 = vrot.slane %v1795, 3
      %v1798 = vshll.u32 %v1762, 16
      %v1800 = vrot.slane %v1798, 4
      %v1801 = vor.u32 %v1797, %v1800
      %v1802 = vsel %vm468, %v1792, %v1801
      %v1804 = vshrl.u32 %v1763, 16
      %v1806 = vrot.slane %v1804, 3
      %v1807 = vshll.u32 %v1763, 16
      %v1809 = vrot.slane %v1807, 4
      %v1810 = vor.u32 %v1806, %v1809
      %v1811 = vsel %vm468, %v1801, %v1810
      %v1813 = vshrl.u32 %v1764, 16
      %v1815 = vrot.slane %v1813, 3
      %v1816 = vshll.u32 %v1764, 16
      %v1818 = vrot.slane %v1816, 4
      %v1819 = vor.u32 %v1815, %v1818
      %v1820 = vsel %vm468, %v1810, %v1819
      %v1822 = vshrl.u32 %v1765, 16
      %v1824 = vrot.slane %v1822, 3
      %v1825 = vshll.u32 %v1765, 16
      %v1827 = vrot.slane %v1825, 4
      %v1828 = vor.u32 %v1824, %v1827
      %v1829 = vsel %vm468, %v1819, %v1828
      %v1831 = vshrl.u32 %v1766, 16
      %v1833 = vrot.slane %v1831, 3
      %v1834 = vshll.u32 %v1766, 16
      %v1836 = vrot.slane %v1834, 4
      %v1837 = vor.u32 %v1833, %v1836
      %v1838 = vsel %vm468, %v1828, %v1837
      %v1840 = vshrl.u32 %v1767, 16
      %v1842 = vrot.slane %v1840, 3
      %v1843 = vshll.u32 %v1767, 16
      %v1845 = vrot.slane %v1843, 4
      %v1846 = vor.u32 %v1842, %v1845
      %v1847 = vsel %vm468, %v1837, %v1846
      %v1852 = vunpack.c.l.b16 %v1721
      %v1853 = vunpack.c.l.b16 %v1722
      %v1854 = vunpack.c.l.b16 %v1723
      %v1855 = vunpack.c.l.b16 %v1724
      %v1856 = vpack.c.b16 %v1853, %v1852
      %v1857 = vpack.c.b16 %v1855, %v1854
      %v1861 = vsel %vm335, %v1784, 0
      %v1864 = vsel %vm335, %v1793, 0
      %v1867 = vsel %vm335, %v1802, 0
      %v1870 = vsel %vm335, %v1811, 0
      %v1873 = vsel %vm335, %v1820, 0
      %v1876 = vsel %vm335, %v1829, 0
      %v1879 = vsel %vm335, %v1838, 0
      %v1882 = vsel %vm335, %v1847, 0
      %1884 = vmatprep.subr.bf16.mxu0 0
      %1885 = vmatpush1.bf16.msra.mxu0 0
      %1886 = vmatprep.subr.bf16.mxu0 0
      %1887 = vmatpush1.bf16.msra.mxu0 0
      %1888 = vmatprep.subr.bf16.mxu0 0
      %1889 = vmatpush1.bf16.msra.mxu0 0
      %1890 = vmatprep.subr.bf16.mxu0 0
      %1891 = vmatpush1.bf16.msra.mxu0 0
      %1892 = vmatprep.subr.bf16.mxu0 0
      %1893 = vmatpush1.bf16.msra.mxu0 0
      %1894 = vmatprep.subr.bf16.mxu0 0
      %1895 = vmatpush1.bf16.msra.mxu0 0
      %1896 = vmatprep.subr.bf16.mxu0 0
      %1897 = vmatpush1.bf16.msra.mxu0 %v1857
      %1898 = vmatprep.subr.bf16.mxu0 0
      %1899 = vmatpush1.bf16.msra.mxu0 %v1856
      %1900 = vmatprep.subr.bf16.mxu0 0
      %1901 = vmatpush2.bf16.msra.mxu0 0
      %1902 = vmatprep.subr.bf16.mxu0 0
      %1903 = vmatpush2.bf16.msra.mxu0 0
      %1904 = vmatprep.subr.bf16.mxu0 0
      %1905 = vmatpush2.bf16.msra.mxu0 0
      %1906 = vmatprep.subr.bf16.mxu0 0
      %1907 = vmatpush2.bf16.msra.mxu0 0
      %1908 = vmatprep.subr.bf16.mxu0 0
      %1909 = vmatpush2.bf16.msra.mxu0 0
      %1910 = vmatprep.subr.bf16.mxu0 0
      %1911 = vmatpush2.bf16.msra.mxu0 0
      %1912 = vmatprep.subr.bf16.mxu0 0
      %1913 = vmatpush2.bf16.msra.mxu0 0
      %1914 = vmatprep.subr.bf16.mxu0 0
      %1915 = vmatpush2.bf16.msra.mxu0 0
      %1916 = vmatprep.mubr.bf16.mxu0 0
      %1917 = vmatmul.mubr.bf16.gmra.mxu0 %v1861
      %v1918 = vpop.f32.mrf.mxu0
      %v1919 = vadd.f32 0.0, %v1918
      %v1920 = vpop.f32.mrf.mxu0
      %v1921 = vpop.f32.mrf.mxu0
      %v1922 = vadd.f32 0.0, %v1921
      %v1923 = vpop.f32.mrf.mxu0
      %1924 = vmatprep.mubr.bf16.mxu0 0
      %1925 = vmatmul.mubr.bf16.gmra.mxu0 %v1864
      %v1926 = vpop.f32.mrf.mxu0
      %v1927 = vadd.f32 0.0, %v1926
      %v1928 = vpop.f32.mrf.mxu0
      %v1929 = vpop.f32.mrf.mxu0
      %v1930 = vadd.f32 0.0, %v1929
      %v1931 = vpop.f32.mrf.mxu0
      %1932 = vmatprep.mubr.bf16.mxu0 0
      %1933 = vmatmul.mubr.bf16.gmra.mxu0 %v1867
      %v1934 = vpop.f32.mrf.mxu0
      %v1935 = vadd.f32 0.0, %v1934
      %v1936 = vpop.f32.mrf.mxu0
      %v1937 = vpop.f32.mrf.mxu0
      %v1938 = vadd.f32 0.0, %v1937
      %v1939 = vpop.f32.mrf.mxu0
      %1940 = vmatprep.mubr.bf16.mxu0 0
      %1941 = vmatmul.mubr.bf16.gmra.mxu0 %v1870
      %v1942 = vpop.f32.mrf.mxu0
      %v1943 = vadd.f32 0.0, %v1942
      %v1944 = vpop.f32.mrf.mxu0
      %v1945 = vpop.f32.mrf.mxu0
      %v1946 = vadd.f32 0.0, %v1945
      %v1947 = vpop.f32.mrf.mxu0
      %1948 = vmatprep.mubr.bf16.mxu0 0
      %1949 = vmatmul.mubr.bf16.gmra.mxu0 %v1873
      %v1950 = vpop.f32.mrf.mxu0
      %v1951 = vadd.f32 0.0, %v1950
      %v1952 = vpop.f32.mrf.mxu0
      %v1953 = vpop.f32.mrf.mxu0
      %v1954 = vadd.f32 0.0, %v1953
      %v1955 = vpop.f32.mrf.mxu0
      %1956 = vmatprep.mubr.bf16.mxu0 0
      %1957 = vmatmul.mubr.bf16.gmra.mxu0 %v1876
      %v1958 = vpop.f32.mrf.mxu0
      %v1959 = vadd.f32 0.0, %v1958
      %v1960 = vpop.f32.mrf.mxu0
      %v1961 = vpop.f32.mrf.mxu0
      %v1962 = vadd.f32 0.0, %v1961
      %v1963 = vpop.f32.mrf.mxu0
      %1964 = vmatprep.mubr.bf16.mxu0 0
      %1965 = vmatmul.mubr.bf16.gmra.mxu0 %v1879
      %v1966 = vpop.f32.mrf.mxu0
      %v1967 = vadd.f32 0.0, %v1966
      %v1968 = vpop.f32.mrf.mxu0
      %v1969 = vpop.f32.mrf.mxu0
      %v1970 = vadd.f32 0.0, %v1969
      %v1971 = vpop.f32.mrf.mxu0
      %1972 = vmatprep.mubr.bf16.mxu0 0
      %1973 = vmatmul.mubr.bf16.gmra.mxu0 %v1882
      %v1974 = vpop.f32.mrf.mxu0
      %v1975 = vadd.f32 0.0, %v1974
      %v1976 = vpop.f32.mrf.mxu0
      %v1977 = vpop.f32.mrf.mxu0
      %v1978 = vadd.f32 0.0, %v1977
      %v1979 = vpop.f32.mrf.mxu0
      %1980 = vdwg.mxu0
      %v1981 = vadd.f32 %v1687, %v1919
      %v1982 = vadd.f32 %v1688, %v1922
      %v1983 = vadd.f32 %v1689, %v1927
      %v1984 = vadd.f32 %v1690, %v1930
      %v1985 = vadd.f32 %v1691, %v1935
      %v1986 = vadd.f32 %v1692, %v1938
      %v1987 = vadd.f32 %v1693, %v1943
      %v1988 = vadd.f32 %v1694, %v1946
      %v1989 = vadd.f32 %v1695, %v1951
      %v1990 = vadd.f32 %v1696, %v1954
      %v1991 = vadd.f32 %v1697, %v1959
      %v1992 = vadd.f32 %v1698, %v1962
      %v1993 = vadd.f32 %v1699, %v1967
      %v1994 = vadd.f32 %v1700, %v1970
      %v1995 = vadd.f32 %v1701, %v1975
      %v1996 = vadd.f32 %v1702, %v1978
      %s1997 = scalar_lea.vmem %s243, 112
      %v1998 = vld [vmem:[%s1997] sm:$0xf]
      %v1999 = vld [vmem:[%s1997 + $0x4] sm:$0xf]
      %v2000 = vld [vmem:[%s1997 + $0x8] sm:$0xf]
      %v2001 = vld [vmem:[%s1997 + $0xc] sm:$0xf]
      %v2002 = vpack.c.b16 %v1744, %v1743
      %v2003 = vpack.c.b16 %v1746, %v1745
      %v2004 = vpack.c.b16 %v1748, %v1747
      %v2005 = vpack.c.b16 %v1750, %v1749
      %v2006 = vpack.c.b16 %v1752, %v1751
      %v2007 = vpack.c.b16 %v1754, %v1753
      %v2008 = vpack.c.b16 %v1756, %v1755
      %v2009 = vpack.c.b16 %v1758, %v1757
      %v2014 = vunpack.c.l.b16 %v1998
      %v2015 = vunpack.c.l.b16 %v1999
      %v2016 = vunpack.c.l.b16 %v2000
      %v2017 = vunpack.c.l.b16 %v2001
      %v2018 = vpack.c.b16 %v2015, %v2014
      %v2019 = vpack.c.b16 %v2017, %v2016
      %v2023 = vsel %vm335, %v2002, 0
      %v2026 = vsel %vm335, %v2003, 0
      %v2029 = vsel %vm335, %v2004, 0
      %v2032 = vsel %vm335, %v2005, 0
      %v2035 = vsel %vm335, %v2006, 0
      %v2038 = vsel %vm335, %v2007, 0
      %v2041 = vsel %vm335, %v2008, 0
      %v2044 = vsel %vm335, %v2009, 0
      %2046 = vmatprep.subr.bf16.mxu0 0
      %2047 = vmatpush1.bf16.msra.mxu0 0
      %2048 = vmatprep.subr.bf16.mxu0 0
      %2049 = vmatpush1.bf16.msra.mxu0 0
      %2050 = vmatprep.subr.bf16.mxu0 0
      %2051 = vmatpush1.bf16.msra.mxu0 0
      %2052 = vmatprep.subr.bf16.mxu0 0
      %2053 = vmatpush1.bf16.msra.mxu0 0
      %2054 = vmatprep.subr.bf16.mxu0 0
      %2055 = vmatpush1.bf16.msra.mxu0 0
      %2056 = vmatprep.subr.bf16.mxu0 0
      %2057 = vmatpush1.bf16.msra.mxu0 0
      %2058 = vmatprep.subr.bf16.mxu0 0
      %2059 = vmatpush1.bf16.msra.mxu0 %v2019
      %2060 = vmatprep.subr.bf16.mxu0 0
      %2061 = vmatpush1.bf16.msra.mxu0 %v2018
      %2062 = vmatprep.subr.bf16.mxu0 0
      %2063 = vmatpush2.bf16.msra.mxu0 0
      %2064 = vmatprep.subr.bf16.mxu0 0
      %2065 = vmatpush2.bf16.msra.mxu0 0
      %2066 = vmatprep.subr.bf16.mxu0 0
      %2067 = vmatpush2.bf16.msra.mxu0 0
      %2068 = vmatprep.subr.bf16.mxu0 0
      %2069 = vmatpush2.bf16.msra.mxu0 0
      %2070 = vmatprep.subr.bf16.mxu0 0
      %2071 = vmatpush2.bf16.msra.mxu0 0
      %2072 = vmatprep.subr.bf16.mxu0 0
      %2073 = vmatpush2.bf16.msra.mxu0 0
      %2074 = vmatprep.subr.bf16.mxu0 0
      %2075 = vmatpush2.bf16.msra.mxu0 0
      %2076 = vmatprep.subr.bf16.mxu0 0
      %2077 = vmatpush2.bf16.msra.mxu0 0
      %2078 = vmatprep.mubr.bf16.mxu0 0
      %2079 = vmatmul.mubr.bf16.gmra.mxu0 %v2023
      %v2080 = vpop.f32.mrf.mxu0
      %v2081 = vadd.f32 0.0, %v2080
      %v2082 = vpop.f32.mrf.mxu0
      %v2083 = vpop.f32.mrf.mxu0
      %v2084 = vadd.f32 0.0, %v2083
      %v2085 = vpop.f32.mrf.mxu0
      %2086 = vmatprep.mubr.bf16.mxu0 0
      %2087 = vmatmul.mubr.bf16.gmra.mxu0 %v2026
      %v2088 = vpop.f32.mrf.mxu0
      %v2089 = vadd.f32 0.0, %v2088
      %v2090 = vpop.f32.mrf.mxu0
      %v2091 = vpop.f32.mrf.mxu0
      %v2092 = vadd.f32 0.0, %v2091
      %v2093 = vpop.f32.mrf.mxu0
      %2094 = vmatprep.mubr.bf16.mxu0 0
      %2095 = vmatmul.mubr.bf16.gmra.mxu0 %v2029
      %v2096 = vpop.f32.mrf.mxu0
      %v2097 = vadd.f32 0.0, %v2096
      %v2098 = vpop.f32.mrf.mxu0
      %v2099 = vpop.f32.mrf.mxu0
      %v2100 = vadd.f32 0.0, %v2099
      %v2101 = vpop.f32.mrf.mxu0
      %2102 = vmatprep.mubr.bf16.mxu0 0
      %2103 = vmatmul.mubr.bf16.gmra.mxu0 %v2032
      %v2104 = vpop.f32.mrf.mxu0
      %v2105 = vadd.f32 0.0, %v2104
      %v2106 = vpop.f32.mrf.mxu0
      %v2107 = vpop.f32.mrf.mxu0
      %v2108 = vadd.f32 0.0, %v2107
      %v2109 = vpop.f32.mrf.mxu0
      %2110 = vmatprep.mubr.bf16.mxu0 0
      %2111 = vmatmul.mubr.bf16.gmra.mxu0 %v2035
      %v2112 = vpop.f32.mrf.mxu0
      %v2113 = vadd.f32 0.0, %v2112
      %v2114 = vpop.f32.mrf.mxu0
      %v2115 = vpop.f32.mrf.mxu0
      %v2116 = vadd.f32 0.0, %v2115
      %v2117 = vpop.f32.mrf.mxu0
      %2118 = vmatprep.mubr.bf16.mxu0 0
      %2119 = vmatmul.mubr.bf16.gmra.mxu0 %v2038
      %v2120 = vpop.f32.mrf.mxu0
      %v2121 = vadd.f32 0.0, %v2120
      %v2122 = vpop.f32.mrf.mxu0
      %v2123 = vpop.f32.mrf.mxu0
      %v2124 = vadd.f32 0.0, %v2123
      %v2125 = vpop.f32.mrf.mxu0
      %2126 = vmatprep.mubr.bf16.mxu0 0
      %2127 = vmatmul.mubr.bf16.gmra.mxu0 %v2041
      %v2128 = vpop.f32.mrf.mxu0
      %v2129 = vadd.f32 0.0, %v2128
      %v2130 = vpop.f32.mrf.mxu0
      %v2131 = vpop.f32.mrf.mxu0
      %v2132 = vadd.f32 0.0, %v2131
      %v2133 = vpop.f32.mrf.mxu0
      %2134 = vmatprep.mubr.bf16.mxu0 0
      %2135 = vmatmul.mubr.bf16.gmra.mxu0 %v2044
      %v2136 = vpop.f32.mrf.mxu0
      %v2137 = vadd.f32 0.0, %v2136
      %v2138 = vpop.f32.mrf.mxu0
      %v2139 = vpop.f32.mrf.mxu0
      %v2140 = vadd.f32 0.0, %v2139
      %v2141 = vpop.f32.mrf.mxu0
      %2142 = vdwg.mxu0
      %v2143 = vadd.f32 %v1981, %v2081
      %v2144 = vadd.f32 %v1982, %v2084
      %v2145 = vadd.f32 %v1983, %v2089
      %v2146 = vadd.f32 %v1984, %v2092
      %v2147 = vadd.f32 %v1985, %v2097
      %v2148 = vadd.f32 %v1986, %v2100
      %v2149 = vadd.f32 %v1987, %v2105
      %v2150 = vadd.f32 %v1988, %v2108
      %v2151 = vadd.f32 %v1989, %v2113
      %v2152 = vadd.f32 %v1990, %v2116
      %v2153 = vadd.f32 %v1991, %v2121
      %v2154 = vadd.f32 %v1992, %v2124
      %v2155 = vadd.f32 %v1993, %v2129
      %v2156 = vadd.f32 %v1994, %v2132
      %v2157 = vadd.f32 %v1995, %v2137
      %v2158 = vadd.f32 %v1996, %v2140
      %v2159 = vld [vmem:[%s235 + $0x18] sm:$0xf]
      %v2160 = vld [vmem:[%s235 + $0x1c] sm:$0xf]
      %v2161 = vld [vmem:[%s235 + $0x20] sm:$0xf]
      %v2162 = vld [vmem:[%s235 + $0x24] sm:$0xf]
      %v2163 = vld [vmem:[%s235 + $0x28] sm:$0xf]
      %v2164 = vld [vmem:[%s235 + $0x2c] sm:$0xf]
      %v2165 = vld [vmem:[%s235 + $0x30] sm:$0xf]
      %v2166 = vld [vmem:[%s235 + $0x34] sm:$0xf]
      %v2167 = vld [vmem:[%s235 + $0x38] sm:$0xf]
      %v2168 = vld [vmem:[%s235 + $0x3c] sm:$0xf]
      %v2169 = vld [vmem:[%s235 + $0x40] sm:$0xf]
      %v2170 = vld [vmem:[%s235 + $0x44] sm:$0xf]
      %v2171 = vld [vmem:[%s235 + $0x48] sm:$0xf]
      %v2172 = vld [vmem:[%s235 + $0x4c] sm:$0xf]
      %v2173 = vld [vmem:[%s235 + $0x50] sm:$0xf]
      %v2174 = vld [vmem:[%s235 + $0x54] sm:$0xf]
      %v2175 = vld [vmem:[%s235 + $0x58] sm:$0x1]
      %s2176 = scalar_lea.vmem %s243, 128
      %v2177 = vld [vmem:[%s2176] sm:$0xf]
      %v2178 = vld [vmem:[%s2176 + $0x4] sm:$0xf]
      %v2179 = vld [vmem:[%s2176 + $0x8] sm:$0xf]
      %v2180 = vld [vmem:[%s2176 + $0xc] sm:$0xf]
      %v2198 = vunpack.c.l.b16 %v2159
      %v2199 = vunpack.c.l.b16 %v2160
      %v2200 = vunpack.c.l.b16 %v2161
      %v2201 = vunpack.c.l.b16 %v2162
      %v2202 = vunpack.c.l.b16 %v2163
      %v2203 = vunpack.c.l.b16 %v2164
      %v2204 = vunpack.c.l.b16 %v2165
      %v2205 = vunpack.c.l.b16 %v2166
      %v2206 = vunpack.c.l.b16 %v2167
      %v2207 = vunpack.c.l.b16 %v2168
      %v2208 = vunpack.c.l.b16 %v2169
      %v2209 = vunpack.c.l.b16 %v2170
      %v2210 = vunpack.c.l.b16 %v2171
      %v2211 = vunpack.c.l.b16 %v2172
      %v2212 = vunpack.c.l.b16 %v2173
      %v2213 = vunpack.c.l.b16 %v2174
      %v2214 = vunpack.c.l.b16 %v2175
      %v2215 = vpack.c.b16 %v2199, %v2198
      %v2216 = vpack.c.b16 %v2201, %v2200
      %v2217 = vpack.c.b16 %v2203, %v2202
      %v2218 = vpack.c.b16 %v2205, %v2204
      %v2219 = vpack.c.b16 %v2207, %v2206
      %v2220 = vpack.c.b16 %v2209, %v2208
      %v2221 = vpack.c.b16 %v2211, %v2210
      %v2222 = vpack.c.b16 %v2213, %v2212
      %v2223 = vpack.c.b16 %v2214, %v2214
      %v2225 = vshrl.u32 %v2215, 16
      %v2227 = vshll.u32 %v2215, 16
      %v2229 = vrot.slane %v2227, 1
      %v2230 = vor.u32 %v2225, %v2229
      %v2232 = vshll.u32 %v2216, 16
      %v2234 = vrot.slane %v2232, 1
      %v2235 = vsel %vm747, %v2230, %v2234
      %v2236 = vshrl.u32 %v2216, 16
      %v2238 = vor.u32 %v2236, %v2234
      %v2240 = vshll.u32 %v2217, 16
      %v2242 = vrot.slane %v2240, 1
      %v2243 = vsel %vm747, %v2238, %v2242
      %v2244 = vshrl.u32 %v2217, 16
      %v2246 = vor.u32 %v2244, %v2242
      %v2248 = vshll.u32 %v2218, 16
      %v2250 = vrot.slane %v2248, 1
      %v2251 = vsel %vm747, %v2246, %v2250
      %v2252 = vshrl.u32 %v2218, 16
      %v2254 = vor.u32 %v2252, %v2250
      %v2256 = vshll.u32 %v2219, 16
      %v2258 = vrot.slane %v2256, 1
      %v2259 = vsel %vm747, %v2254, %v2258
      %v2260 = vshrl.u32 %v2219, 16
      %v2262 = vor.u32 %v2260, %v2258
      %v2264 = vshll.u32 %v2220, 16
      %v2266 = vrot.slane %v2264, 1
      %v2267 = vsel %vm747, %v2262, %v2266
      %v2268 = vshrl.u32 %v2220, 16
      %v2270 = vor.u32 %v2268, %v2266
      %v2272 = vshll.u32 %v2221, 16
      %v2274 = vrot.slane %v2272, 1
      %v2275 = vsel %vm747, %v2270, %v2274
      %v2276 = vshrl.u32 %v2221, 16
      %v2278 = vor.u32 %v2276, %v2274
      %v2280 = vshll.u32 %v2222, 16
      %v2282 = vrot.slane %v2280, 1
      %v2283 = vsel %vm747, %v2278, %v2282
      %v2284 = vshrl.u32 %v2222, 16
      %v2286 = vor.u32 %v2284, %v2282
      %v2288 = vshll.u32 %v2223, 16
      %v2290 = vrot.slane %v2288, 1
      %v2291 = vsel %vm747, %v2286, %v2290
      %v2296 = vunpack.c.l.b16 %v2177
      %v2297 = vunpack.c.l.b16 %v2178
      %v2298 = vunpack.c.l.b16 %v2179
      %v2299 = vunpack.c.l.b16 %v2180
      %v2300 = vpack.c.b16 %v2297, %v2296
      %v2301 = vpack.c.b16 %v2299, %v2298
      %v2305 = vsel %vm335, %v2235, 0
      %v2308 = vsel %vm335, %v2243, 0
      %v2311 = vsel %vm335, %v2251, 0
      %v2314 = vsel %vm335, %v2259, 0
      %v2317 = vsel %vm335, %v2267, 0
      %v2320 = vsel %vm335, %v2275, 0
      %v2323 = vsel %vm335, %v2283, 0
      %v2326 = vsel %vm335, %v2291, 0
      %2328 = vmatprep.subr.bf16.mxu0 0
      %2329 = vmatpush1.bf16.msra.mxu0 0
      %2330 = vmatprep.subr.bf16.mxu0 0
      %2331 = vmatpush1.bf16.msra.mxu0 0
      %2332 = vmatprep.subr.bf16.mxu0 0
      %2333 = vmatpush1.bf16.msra.mxu0 0
      %2334 = vmatprep.subr.bf16.mxu0 0
      %2335 = vmatpush1.bf16.msra.mxu0 0
      %2336 = vmatprep.subr.bf16.mxu0 0
      %2337 = vmatpush1.bf16.msra.mxu0 0
      %2338 = vmatprep.subr.bf16.mxu0 0
      %2339 = vmatpush1.bf16.msra.mxu0 0
      %2340 = vmatprep.subr.bf16.mxu0 0
      %2341 = vmatpush1.bf16.msra.mxu0 %v2301
      %2342 = vmatprep.subr.bf16.mxu0 0
      %2343 = vmatpush1.bf16.msra.mxu0 %v2300
      %2344 = vmatprep.subr.bf16.mxu0 0
      %2345 = vmatpush2.bf16.msra.mxu0 0
      %2346 = vmatprep.subr.bf16.mxu0 0
      %2347 = vmatpush2.bf16.msra.mxu0 0
      %2348 = vmatprep.subr.bf16.mxu0 0
      %2349 = vmatpush2.bf16.msra.mxu0 0
      %2350 = vmatprep.subr.bf16.mxu0 0
      %2351 = vmatpush2.bf16.msra.mxu0 0
      %2352 = vmatprep.subr.bf16.mxu0 0
      %2353 = vmatpush2.bf16.msra.mxu0 0
      %2354 = vmatprep.subr.bf16.mxu0 0
      %2355 = vmatpush2.bf16.msra.mxu0 0
      %2356 = vmatprep.subr.bf16.mxu0 0
      %2357 = vmatpush2.bf16.msra.mxu0 0
      %2358 = vmatprep.subr.bf16.mxu0 0
      %2359 = vmatpush2.bf16.msra.mxu0 0
      %2360 = vmatprep.mubr.bf16.mxu0 0
      %2361 = vmatmul.mubr.bf16.gmra.mxu0 %v2305
      %v2362 = vpop.f32.mrf.mxu0
      %v2363 = vadd.f32 0.0, %v2362
      %v2364 = vpop.f32.mrf.mxu0
      %v2365 = vpop.f32.mrf.mxu0
      %v2366 = vadd.f32 0.0, %v2365
      %v2367 = vpop.f32.mrf.mxu0
      %2368 = vmatprep.mubr.bf16.mxu0 0
      %2369 = vmatmul.mubr.bf16.gmra.mxu0 %v2308
      %v2370 = vpop.f32.mrf.mxu0
      %v2371 = vadd.f32 0.0, %v2370
      %v2372 = vpop.f32.mrf.mxu0
      %v2373 = vpop.f32.mrf.mxu0
      %v2374 = vadd.f32 0.0, %v2373
      %v2375 = vpop.f32.mrf.mxu0
      %2376 = vmatprep.mubr.bf16.mxu0 0
      %2377 = vmatmul.mubr.bf16.gmra.mxu0 %v2311
      %v2378 = vpop.f32.mrf.mxu0
      %v2379 = vadd.f32 0.0, %v2378
      %v2380 = vpop.f32.mrf.mxu0
      %v2381 = vpop.f32.mrf.mxu0
      %v2382 = vadd.f32 0.0, %v2381
      %v2383 = vpop.f32.mrf.mxu0
      %2384 = vmatprep.mubr.bf16.mxu0 0
      %2385 = vmatmul.mubr.bf16.gmra.mxu0 %v2314
      %v2386 = vpop.f32.mrf.mxu0
      %v2387 = vadd.f32 0.0, %v2386
      %v2388 = vpop.f32.mrf.mxu0
      %v2389 = vpop.f32.mrf.mxu0
      %v2390 = vadd.f32 0.0, %v2389
      %v2391 = vpop.f32.mrf.mxu0
      %2392 = vmatprep.mubr.bf16.mxu0 0
      %2393 = vmatmul.mubr.bf16.gmra.mxu0 %v2317
      %v2394 = vpop.f32.mrf.mxu0
      %v2395 = vadd.f32 0.0, %v2394
      %v2396 = vpop.f32.mrf.mxu0
      %v2397 = vpop.f32.mrf.mxu0
      %v2398 = vadd.f32 0.0, %v2397
      %v2399 = vpop.f32.mrf.mxu0
      %2400 = vmatprep.mubr.bf16.mxu0 0
      %2401 = vmatmul.mubr.bf16.gmra.mxu0 %v2320
      %v2402 = vpop.f32.mrf.mxu0
      %v2403 = vadd.f32 0.0, %v2402
      %v2404 = vpop.f32.mrf.mxu0
      %v2405 = vpop.f32.mrf.mxu0
      %v2406 = vadd.f32 0.0, %v2405
      %v2407 = vpop.f32.mrf.mxu0
      %2408 = vmatprep.mubr.bf16.mxu0 0
      %2409 = vmatmul.mubr.bf16.gmra.mxu0 %v2323
      %v2410 = vpop.f32.mrf.mxu0
      %v2411 = vadd.f32 0.0, %v2410
      %v2412 = vpop.f32.mrf.mxu0
      %v2413 = vpop.f32.mrf.mxu0
      %v2414 = vadd.f32 0.0, %v2413
      %v2415 = vpop.f32.mrf.mxu0
      %2416 = vmatprep.mubr.bf16.mxu0 0
      %2417 = vmatmul.mubr.bf16.gmra.mxu0 %v2326
      %v2418 = vpop.f32.mrf.mxu0
      %v2419 = vadd.f32 0.0, %v2418
      %v2420 = vpop.f32.mrf.mxu0
      %v2421 = vpop.f32.mrf.mxu0
      %v2422 = vadd.f32 0.0, %v2421
      %v2423 = vpop.f32.mrf.mxu0
      %2424 = vdwg.mxu0
      %v2425 = vadd.f32 %v2143, %v2363
      %v2426 = vadd.f32 %v2144, %v2366
      %v2427 = vadd.f32 %v2145, %v2371
      %v2428 = vadd.f32 %v2146, %v2374
      %v2429 = vadd.f32 %v2147, %v2379
      %v2430 = vadd.f32 %v2148, %v2382
      %v2431 = vadd.f32 %v2149, %v2387
      %v2432 = vadd.f32 %v2150, %v2390
      %v2433 = vadd.f32 %v2151, %v2395
      %v2434 = vadd.f32 %v2152, %v2398
      %v2435 = vadd.f32 %v2153, %v2403
      %v2436 = vadd.f32 %v2154, %v2406
      %v2437 = vadd.f32 %v2155, %v2411
      %v2438 = vadd.f32 %v2156, %v2414
      %v2439 = vadd.f32 %v2157, %v2419
      %v2440 = vadd.f32 %v2158, %v2422
      %v2441 = vld [vmem:[%s247] sm:$0x1]
      %v2443 = vlaneseq
      %v2444 = vshrl.u32 %v2443, 7
      %v2445 = vsub.s32 0, %v2444
      %v2446 = vrot.slane %v2441, %v2445
      %v2448 = vadd.f32 %v2425, %v2446
      %v2449 = vadd.f32 %v2426, %v2446
      %v2450 = vadd.f32 %v2427, %v2446
      %v2451 = vadd.f32 %v2428, %v2446
      %v2452 = vadd.f32 %v2429, %v2446
      %v2453 = vadd.f32 %v2430, %v2446
      %v2454 = vadd.f32 %v2431, %v2446
      %v2455 = vadd.f32 %v2432, %v2446
      %v2456 = vadd.f32 %v2433, %v2446
      %v2457 = vadd.f32 %v2434, %v2446
      %v2458 = vadd.f32 %v2435, %v2446
      %v2459 = vadd.f32 %v2436, %v2446
      %v2460 = vadd.f32 %v2437, %v2446
      %v2461 = vadd.f32 %v2438, %v2446
      %v2462 = vadd.f32 %v2439, %v2446
      %v2463 = vadd.f32 %v2440, %v2446
      %v2464 = vpack.c.bf16 %v2449, %v2448
      %v2465 = vpack.c.bf16 %v2451, %v2450
      %v2466 = vpack.c.bf16 %v2453, %v2452
      %v2467 = vpack.c.bf16 %v2455, %v2454
      %v2468 = vpack.c.bf16 %v2457, %v2456
      %v2469 = vpack.c.bf16 %v2459, %v2458
      %v2470 = vpack.c.bf16 %v2461, %v2460
      %v2471 = vpack.c.bf16 %v2463, %v2462
      %v2480 = vunpack.c.l.b16 %v2464
      %v2481 = vunpack.c.h.b16 %v2464
      %v2482 = vunpack.c.l.b16 %v2465
      %v2483 = vunpack.c.h.b16 %v2465
      %v2484 = vunpack.c.l.b16 %v2466
      %v2485 = vunpack.c.h.b16 %v2466
      %v2486 = vunpack.c.l.b16 %v2467
      %v2487 = vunpack.c.h.b16 %v2467
      %v2488 = vunpack.c.l.b16 %v2468
      %v2489 = vunpack.c.h.b16 %v2468
      %v2490 = vunpack.c.l.b16 %v2469
      %v2491 = vunpack.c.h.b16 %v2469
      %v2492 = vunpack.c.l.b16 %v2470
      %v2493 = vunpack.c.h.b16 %v2470
      %v2494 = vunpack.c.l.b16 %v2471
      %v2495 = vunpack.c.h.b16 %v2471
      %v2496 = vpack.c.b16 %v2480, %v2480
      %v2497 = vpack.c.b16 %v2481, %v2481
      %v2498 = vpack.c.b16 %v2482, %v2482
      %v2499 = vpack.c.b16 %v2483, %v2483
      %v2500 = vpack.c.b16 %v2484, %v2484
      %v2501 = vpack.c.b16 %v2485, %v2485
      %v2502 = vpack.c.b16 %v2486, %v2486
      %v2503 = vpack.c.b16 %v2487, %v2487
      %v2504 = vpack.c.b16 %v2488, %v2488
      %v2505 = vpack.c.b16 %v2489, %v2489
      %v2506 = vpack.c.b16 %v2490, %v2490
      %v2507 = vpack.c.b16 %v2491, %v2491
      %v2508 = vpack.c.b16 %v2492, %v2492
      %v2509 = vpack.c.b16 %v2493, %v2493
      %v2510 = vpack.c.b16 %v2494, %v2494
      %v2511 = vpack.c.b16 %v2495, %v2495
      %vm2528 = vcmask 519168
      %2529 = vst.msk [vmem:[%s255] sm:$0xf] %vm2528, %v2496
      %2530 = vst.msk [vmem:[%s255 + $0x4] sm:$0xf] %vm2528, %v2497
      %2531 = vst.msk [vmem:[%s255 + $0x8] sm:$0xf] %vm2528, %v2498
      %2532 = vst.msk [vmem:[%s255 + $0xc] sm:$0xf] %vm2528, %v2499
      %2533 = vst.msk [vmem:[%s255 + $0x10] sm:$0xf] %vm2528, %v2500
      %2534 = vst.msk [vmem:[%s255 + $0x14] sm:$0xf] %vm2528, %v2501
      %2535 = vst.msk [vmem:[%s255 + $0x18] sm:$0xf] %vm2528, %v2502
      %2536 = vst.msk [vmem:[%s255 + $0x1c] sm:$0xf] %vm2528, %v2503
      %2537 = vst.msk [vmem:[%s255 + $0x20] sm:$0xf] %vm2528, %v2504
      %2538 = vst.msk [vmem:[%s255 + $0x24] sm:$0xf] %vm2528, %v2505
      %2539 = vst.msk [vmem:[%s255 + $0x28] sm:$0xf] %vm2528, %v2506
      %2540 = vst.msk [vmem:[%s255 + $0x2c] sm:$0xf] %vm2528, %v2507
      %2541 = vst.msk [vmem:[%s255 + $0x30] sm:$0xf] %vm2528, %v2508
      %2542 = vst.msk [vmem:[%s255 + $0x34] sm:$0xf] %vm2528, %v2509
      %2543 = vst.msk [vmem:[%s255 + $0x38] sm:$0xf] %vm2528, %v2510
      %2544 = vst.msk [vmem:[%s255 + $0x3c] sm:$0xf] %vm2528, %v2511
      %p2545 = scmp.lt.s32.totalorder %s19, 1
      %s2546 = scalar_select %p2545, %s19, 1
      %p2547 = scmp.lt.s32.totalorder %s20, 0
      %s2548 = scalar_select %p2547, %s20, 0
      %s2549 = smul.addr %s2546, 16
      %s2550 = sadd.s32 %s2548, %s2549
      %s2551 = smul.addr %s2550, 4
      %s2552 = scalar_lea.vmem %s3, %s2551
      // Predicated region
      $region33: #{resnet_forward.5} parent=31 // pred_check
        %p2553 = pneg %p135
      $region34: #{resnet_forward.5} parent=31 // pred_check_branch
        %2555 = sbr.rel (%p2553) target = $region36
      $region35: #{resnet_forward.5} parent=31 // pred_region
        _
      $region36: #{resnet_forward.5} parent=31 // pred_fallthru
        _
    $region32: #{resnet_forward.5} parent=5 // pred_fallthru
      _
    %p2556 = scmp.le.s32.totalorder 2, %s9
    // Predicated region
    $region37: #{resnet_forward.5} parent=5 // pred_check
      %p2557 = pneg %p2556
    $region38: #{resnet_forward.5} parent=5 // pred_check_branch
      %2559 = sbr.rel (%p2557) target = $region40
    $region39: #{resnet_forward.5} parent=5 // pred_region
      %s2560 = ssub.s32 %s9, 2
      // Predicated region
      $region41: #{resnet_forward.5} parent=39 // pred_check
        %p2561 = pneg %p141
      $region42: #{resnet_forward.5} parent=39 // pred_check_branch
        %2563 = sbr.rel (%p2561) target = $region44
      $region43: #{resnet_forward.5} parent=39 // pred_region
        %p2564 = scmp.lt.s32.totalorder %s22, 1
        %s2565 = scalar_select %p2564, %s22, 1
        %p2566 = scmp.lt.s32.totalorder %s23, 0
        %s2567 = scalar_select %p2566, %s23, 0
        %s2568 = smul.addr %s2565, 16
        %s2569 = sadd.s32 %s2567, %s2568
        %s2570 = smul.addr %s2569, 4
        %s2571 = scalar_lea.vmem %s3, %s2570
      $region44: #{resnet_forward.5} parent=39 // pred_fallthru
        _
    $region40: #{resnet_forward.5} parent=5 // pred_fallthru
      _
  $region6: #{resnet_forward.5} parent=0 // loop_footer
    %s13 = sadd.s32 1, %s9
  $region7: #{resnet_forward.5} parent=0 // loop_footer_branch
    %8 = sbr.rel target = $region3
  $region8: #{resnet_forward.5} parent=0 // loop_exit
    _

// kernel: resnet_forward.7
$region0: #{resnet_forward.7}
  #allocation0 [shape = 'u32[]', space=smem, size = 0x4, offset = 0x4, fixed_abs, tag = 'smem constant byte address 0x4 - core index']
  #allocation1 [shape = 'u32[144,128]{1,0:T(1,128)}', space=vmem, size = 0x12000, scoped, tag = 'internal scratch']
  %s0 = inlined_call_operand.vmem [shape: bf16[2,192,64], index: 0, kind: input, shape index: {}]
  %s1 = inlined_call_operand.vmem [shape: bf16[9,64,64], index: 1, kind: input, shape index: {}]
  %s2 = inlined_call_operand.vmem [shape: f32[1,64], index: 2, kind: input, shape index: {}]
  %s3 = inlined_call_operand.vmem [shape: bf16[2,128,32], index: 3, kind: input, shape index: {}]
  %s4 = inlined_call_operand.vmem [shape: bf16[32,64], index: 4, kind: input, shape index: {}]
  %s5 = inlined_call_operand.vmem [shape: f32[1,64], index: 5, kind: input, shape index: {}]
  %s6 = inlined_call_operand.vmem [shape: f32[2,128,64], index: 6, kind: output, shape index: {}]
  %s7 = sld [smem:[#allocation0]]
  $region57: #{resnet_forward.7} parent=0
    _
  %s9 = ssub.s32 1, %s7
  %s10 = scalar_select 0, %s9, %s7
  loop: start=0, step=1, limit=4
  $region2: #{resnet_forward.7} parent=0 // loop_pre_header
    _
  $region3: #{resnet_forward.7} parent=0 // loop_header
    %s12 = sphi 0, %s16
    %p13 = scmp.ge.s32.totalorder %s12, 4
    %s19 = sphi 0, %s38
    %s20 = sphi 0, %s34
    %s21 = sphi 0, %s30
    %s22 = sphi 0, %s19
    %s23 = sphi 0, %s20
    %s24 = sphi 0, %s21
    %s25 = sphi 0, %s22
    %s26 = sphi 0, %s23
    %s27 = sphi 0, %s24
    %s43 = sphi 0, %s45
    %s46 = sphi 0, %s43
    %s47 = sphi 0, %s46
    %s63 = sphi 0, %s47
    %s71 = sphi 0, %s73
    %s74 = sphi 0, %s71
    %s75 = sphi 0, %s74
    %s91 = sphi 0, %s75
    %s97 = sphi 0, %s99
    %s100 = sphi 0, %s97
    %s101 = sphi 0, %s100
    %s117 = sphi 0, %s101
    %s123 = sphi 0, %s125
    %s126 = sphi 0, %s123
    %s127 = sphi 0, %s126
    %s143 = sphi 0, %s127
    %s149 = sphi 0, %s151
    %s152 = sphi 0, %s149
    %s153 = sphi 0, %s152
    %s169 = sphi 0, %s153
    %s175 = sphi 0, %s177
    %s178 = sphi 0, %s175
    %s179 = sphi 0, %s178
    %s195 = sphi 0, %s179
    %s203 = sphi 0, %s205
    %s206 = sphi 0, %s203
    %s207 = sphi 0, %s206
    %s223 = sphi 0, %s207
  $region4: #{resnet_forward.7} parent=0 // loop_header_branch
    %15 = sbr.rel (%p13) target = $region8
  $region5: #{resnet_forward.7} parent=0 // loop_body
    %s17 = ssub.s32 %s12, 1
    %s18 = ssub.s32 %s12, 2
    %s28 = sadd.s32 1, %s21
    %p29 = scmp.ge.s32.totalorder %s28, 1
    %s30 = scalar_select %p29, 0, %s28
    %s31 = sadd.s32 1, %s20
    %s32 = scalar_select %p29, %s31, %s20
    %p33 = scmp.ge.s32.totalorder %s32, 1
    %s34 = scalar_select %p33, 0, %s32
    %s35 = sadd.s32 1, %s19
    %s36 = scalar_select %p33, %s35, %s19
    %p37 = scmp.ge.s32.totalorder %s36, 2
    %s38 = scalar_select %p37, 0, %s36
    %s39 = ssub.s32 %s19, %s38
    %s40 = ssub.s32 %s21, %s30
    %s41 = sor.u32 %s39, %s40
    %p42 = scmp.eq.s32.totalorder %s41, 0
    %s44 = sadd.s32 %s43, 1
    %s45 = scalar_select %p42, %s43, %s44
    %p48 = pneg %p42
    %p49 = scmp.eq.s32.totalorder %s12, 1
    %p50 = por %p48, %p49
    %p51 = scmp.ne.s32.totalorder %s43, %s46
    %p52 = scmp.eq.s32.totalorder %s12, 0
    %p53 = por %p51, %p52
    %p54 = scmp.ne.s32.totalorder %s43, %s46
    %p55 = scmp.eq.s32.totalorder %s17, 1
    %p56 = por %p54, %p55
    %p57 = scmp.ne.s32.totalorder %s46, %s47
    %p58 = scmp.eq.s32.totalorder %s17, 0
    %p59 = por %p57, %p58
    %p60 = scmp.ne.s32.totalorder %s46, %s47
    %p61 = scmp.eq.s32.totalorder %s18, 1
    %p62 = por %p60, %p61
    %p64 = scmp.ne.s32.totalorder %s47, %s63
    %p65 = scmp.eq.s32.totalorder %s18, 0
    %p66 = por %p64, %p65
    %s67 = ssub.s32 %s21, %s30
    %s68 = ssub.s32 %s20, %s34
    %s69 = sor.u32 %s67, %s68
    %p70 = scmp.eq.s32.totalorder %s69, 0
    %s72 = sadd.s32 %s71, 1
    %s73 = scalar_select %p70, %s71, %s72
    %p76 = pneg %p70
    %p77 = scmp.eq.s32.totalorder %s12, 1
    %p78 = por %p76, %p77
    %p79 = scmp.ne.s32.totalorder %s71, %s74
    %p80 = scmp.eq.s32.totalorder %s12, 0
    %p81 = por %p79, %p80
    %p82 = scmp.ne.s32.totalorder %s71, %s74
    %p83 = scmp.eq.s32.totalorder %s17, 1
    %p84 = por %p82, %p83
    %p85 = scmp.ne.s32.totalorder %s74, %s75
    %p86 = scmp.eq.s32.totalorder %s17, 0
    %p87 = por %p85, %p86
    %p88 = scmp.ne.s32.totalorder %s74, %s75
    %p89 = scmp.eq.s32.totalorder %s18, 1
    %p90 = por %p88, %p89
    %p92 = scmp.ne.s32.totalorder %s75, %s91
    %p93 = scmp.eq.s32.totalorder %s18, 0
    %p94 = por %p92, %p93
    %s95 = ssub.s32 %s20, %s34
    %p96 = scmp.eq.s32.totalorder %s95, 0
    %s98 = sadd.s32 %s97, 1
    %s99 = scalar_select %p96, %s97, %s98
    %p102 = pneg %p96
    %p103 = scmp.eq.s32.totalorder %s12, 1
    %p104 = por %p102, %p103
    %p105 = scmp.ne.s32.totalorder %s97, %s100
    %p106 = scmp.eq.s32.totalorder %s12, 0
    %p107 = por %p105, %p106
    %p108 = scmp.ne.s32.totalorder %s97, %s100
    %p109 = scmp.eq.s32.totalorder %s17, 1
    %p110 = por %p108, %p109
    %p111 = scmp.ne.s32.totalorder %s100, %s101
    %p112 = scmp.eq.s32.totalorder %s17, 0
    %p113 = por %p111, %p112
    %p114 = scmp.ne.s32.totalorder %s100, %s101
    %p115 = scmp.eq.s32.totalorder %s18, 1
    %p116 = por %p114, %p115
    %p118 = scmp.ne.s32.totalorder %s101, %s117
    %p119 = scmp.eq.s32.totalorder %s18, 0
    %p120 = por %p118, %p119
    %s121 = ssub.s32 %s19, %s38
    %p122 = scmp.eq.s32.totalorder %s121, 0
    %s124 = sadd.s32 %s123, 1
    %s125 = scalar_select %p122, %s123, %s124
    %p128 = pneg %p122
    %p129 = scmp.eq.s32.totalorder %s12, 1
    %p130 = por %p128, %p129
    %p131 = scmp.ne.s32.totalorder %s123, %s126
    %p132 = scmp.eq.s32.totalorder %s12, 0
    %p133 = por %p131, %p132
    %p134 = scmp.ne.s32.totalorder %s123, %s126
    %p135 = scmp.eq.s32.totalorder %s17, 1
    %p136 = por %p134, %p135
    %p137 = scmp.ne.s32.totalorder %s126, %s127
    %p138 = scmp.eq.s32.totalorder %s17, 0
    %p139 = por %p137, %p138
    %p140 = scmp.ne.s32.totalorder %s126, %s127
    %p141 = scmp.eq.s32.totalorder %s18, 1
    %p142 = por %p140, %p141
    %p144 = scmp.ne.s32.totalorder %s127, %s143
    %p145 = scmp.eq.s32.totalorder %s18, 0
    %p146 = por %p144, %p145
    %s147 = ssub.s32 %s20, %s34
    %p148 = scmp.eq.s32.totalorder %s147, 0
    %s150 = sadd.s32 %s149, 1
    %s151 = scalar_select %p148, %s149, %s150
    %p154 = pneg %p148
    %p155 = scmp.eq.s32.totalorder %s12, 1
    %p156 = por %p154, %p155
    %p157 = scmp.ne.s32.totalorder %s149, %s152
    %p158 = scmp.eq.s32.totalorder %s12, 0
    %p159 = por %p157, %p158
    %p160 = scmp.ne.s32.totalorder %s149, %s152
    %p161 = scmp.eq.s32.totalorder %s17, 1
    %p162 = por %p160, %p161
    %p163 = scmp.ne.s32.totalorder %s152, %s153
    %p164 = scmp.eq.s32.totalorder %s17, 0
    %p165 = por %p163, %p164
    %p166 = scmp.ne.s32.totalorder %s152, %s153
    %p167 = scmp.eq.s32.totalorder %s18, 1
    %p168 = por %p166, %p167
    %p170 = scmp.ne.s32.totalorder %s153, %s169
    %p171 = scmp.eq.s32.totalorder %s18, 0
    %p172 = por %p170, %p171
    %s173 = ssub.s32 %s20, %s34
    %p174 = scmp.eq.s32.totalorder %s173, 0
    %s176 = sadd.s32 %s175, 1
    %s177 = scalar_select %p174, %s175, %s176
    %p180 = pneg %p174
    %p181 = scmp.eq.s32.totalorder %s12, 1
    %p182 = por %p180, %p181
    %p183 = scmp.ne.s32.totalorder %s175, %s178
    %p184 = scmp.eq.s32.totalorder %s12, 0
    %p185 = por %p183, %p184
    %p186 = scmp.ne.s32.totalorder %s175, %s178
    %p187 = scmp.eq.s32.totalorder %s17, 1
    %p188 = por %p186, %p187
    %p189 = scmp.ne.s32.totalorder %s178, %s179
    %p190 = scmp.eq.s32.totalorder %s17, 0
    %p191 = por %p189, %p190
    %p192 = scmp.ne.s32.totalorder %s178, %s179
    %p193 = scmp.eq.s32.totalorder %s18, 1
    %p194 = por %p192, %p193
    %p196 = scmp.ne.s32.totalorder %s179, %s195
    %p197 = scmp.eq.s32.totalorder %s18, 0
    %p198 = por %p196, %p197
    %s199 = ssub.s32 %s19, %s38
    %s200 = ssub.s32 %s20, %s34
    %s201 = sor.u32 %s199, %s200
    %p202 = scmp.eq.s32.totalorder %s201, 0
    %s204 = sadd.s32 %s203, 1
    %s205 = scalar_select %p202, %s203, %s204
    %p208 = pneg %p202
    %p209 = scmp.eq.s32.totalorder %s12, 1
    %p210 = por %p208, %p209
    %p211 = scmp.ne.s32.totalorder %s203, %s206
    %p212 = scmp.eq.s32.totalorder %s12, 0
    %p213 = por %p211, %p212
    %p214 = scmp.ne.s32.totalorder %s203, %s206
    %p215 = scmp.eq.s32.totalorder %s17, 1
    %p216 = por %p214, %p215
    %p217 = scmp.ne.s32.totalorder %s206, %s207
    %p218 = scmp.eq.s32.totalorder %s17, 0
    %p219 = por %p217, %p218
    %p220 = scmp.ne.s32.totalorder %s206, %s207
    %p221 = scmp.eq.s32.totalorder %s18, 1
    %p222 = por %p220, %p221
    %p224 = scmp.ne.s32.totalorder %s207, %s223
    %p225 = scmp.eq.s32.totalorder %s18, 0
    %p226 = por %p224, %p225
    %p227 = scmp.le.s32.totalorder 1, %s12
    %p228 = scmp.lt.s32.totalorder %s12, 3
    %p229 = pnand %p227, %p228
    %p230 = pneg %p229
    // Predicated region
    $region9: #{resnet_forward.7} parent=5 // pred_check
      _
    $region10: #{resnet_forward.7} parent=5 // pred_check_branch
      %232 = sbr.rel (%p229) target = $region12
    $region11: #{resnet_forward.7} parent=5 // pred_region
      %s233 = ssub.s32 %s12, 1
      // Predicated region
      $region13: #{resnet_forward.7} parent=11 // pred_check
        %p234 = pneg %p87
      $region14: #{resnet_forward.7} parent=11 // pred_check_branch
        %236 = sbr.rel (%p234) target = $region16
      $region15: #{resnet_forward.7} parent=11 // pred_region
        %s237 = smul.u32 8, %s24
        %p238 = scmp.lt.s32.totalorder %s237, 7
        %s239 = scalar_select %p238, %s237, 7
        %p240 = scmp.lt.s32.totalorder %s23, 0
        %s241 = scalar_select %p240, %s23, 0
        %s242 = sadd.s32 %s241, %s239
        %s243 = smul.addr %s242, 4
        %s244 = scalar_lea.vmem %s1, %s243
        %s245 = smul.u32 8, %s24
      $region16: #{resnet_forward.7} parent=11 // pred_fallthru
        _
      // Predicated region
      $region17: #{resnet_forward.7} parent=11 // pred_check
        %p246 = pneg %p113
      $region18: #{resnet_forward.7} parent=11 // pred_check_branch
        %248 = sbr.rel (%p246) target = $region20
      $region19: #{resnet_forward.7} parent=11 // pred_region
        %p249 = scmp.lt.s32.totalorder %s23, 0
        %s250 = scalar_select %p249, %s23, 0
        %s251 = scalar_lea.vmem %s2, %s250
      $region20: #{resnet_forward.7} parent=11 // pred_fallthru
        _
      // Predicated region
      $region21: #{resnet_forward.7} parent=11 // pred_check
        %p252 = pneg %p165
      $region22: #{resnet_forward.7} parent=11 // pred_check_branch
        %254 = sbr.rel (%p252) target = $region24
      $region23: #{resnet_forward.7} parent=11 // pred_region
        %p255 = scmp.lt.s32.totalorder %s23, 0
        %s256 = scalar_select %p255, %s23, 0
        %s257 = smul.addr %s256, 4
        %s258 = scalar_lea.vmem %s4, %s257
      $region24: #{resnet_forward.7} parent=11 // pred_fallthru
        _
      // Predicated region
      $region25: #{resnet_forward.7} parent=11 // pred_check
        %p259 = pneg %p191
      $region26: #{resnet_forward.7} parent=11 // pred_check_branch
        %261 = sbr.rel (%p259) target = $region28
      $region27: #{resnet_forward.7} parent=11 // pred_region
        %p262 = scmp.lt.s32.totalorder %s23, 0
        %s263 = scalar_select %p262, %s23, 0
        %s264 = scalar_lea.vmem %s5, %s263
      $region28: #{resnet_forward.7} parent=11 // pred_fallthru
        _
    $region12: #{resnet_forward.7} parent=5 // pred_fallthru
      _
    %p265 = scmp.lt.s32.totalorder %s12, 2
    // Predicated region
    $region29: #{resnet_forward.7} parent=5 // pred_check
      %p266 = pneg %p265
    $region30: #{resnet_forward.7} parent=5 // pred_check_branch
      %268 = sbr.rel (%p266) target = $region32
    $region31: #{resnet_forward.7} parent=5 // pred_region
      // Predicated region
      $region33: #{resnet_forward.7} parent=31 // pred_check
        %p269 = pneg %p53
      $region34: #{resnet_forward.7} parent=31 // pred_check_branch
        %271 = sbr.rel (%p269) target = $region36
      $region35: #{resnet_forward.7} parent=31 // pred_region
        %p272 = scmp.lt.s32.totalorder %s19, 1
        %s273 = scalar_select %p272, %s19, 1
        %p274 = scmp.lt.s32.totalorder %s21, 0
        %s275 = scalar_select %p274, %s21, 0
        %s276 = smul.addr %s273, 24
        %s277 = sadd.s32 %s275, %s276
        %s278 = smul.addr %s277, 4
        %s279 = scalar_lea.vmem %s0, %s278
      $region36: #{resnet_forward.7} parent=31 // pred_fallthru
        _
      // Predicated region
      $region37: #{resnet_forward.7} parent=31 // pred_check
        %p280 = pneg %p133
      $region38: #{resnet_forward.7} parent=31 // pred_check_branch
        %282 = sbr.rel (%p280) target = $region40
      $region39: #{resnet_forward.7} parent=31 // pred_region
        %p283 = scmp.lt.s32.totalorder %s19, 1
        %s284 = scalar_select %p283, %s19, 1
        %s285 = smul.addr %s284, 16
        %s286 = smul.addr %s285, 4
        %s287 = scalar_lea.vmem %s3, %s286
      $region40: #{resnet_forward.7} parent=31 // pred_fallthru
        _
    $region32: #{resnet_forward.7} parent=5 // pred_fallthru
      _
    %p288 = scmp.le.s32.totalorder 1, %s12
    %p289 = scmp.lt.s32.totalorder %s12, 3
    %p290 = pnand %p288, %p289
    %p291 = pneg %p290
    // Predicated region
    $region41: #{resnet_forward.7} parent=5 // pred_check
      _
    $region42: #{resnet_forward.7} parent=5 // pred_check_branch
      %293 = sbr.rel (%p290) target = $region44
    $region43: #{resnet_forward.7} parent=5 // pred_region
      %s294 = ssub.s32 %s12, 1
      %p295 = scmp.lt.s32.totalorder %s22, 1
      %s296 = scalar_select %p295, %s22, 1
      %p297 = scmp.lt.s32.totalorder %s24, 0
      %s298 = scalar_select %p297, %s24, 0
      %s299 = smul.addr %s296, 24
      %s300 = sadd.s32 %s298, %s299
      %s301 = smul.addr %s300, 4
      %s302 = scalar_lea.vmem %s0, %s301
      %p303 = pneg %p59
      %p304 = pneg %p56
      %s305 = smul.u32 8, %s24
      %p306 = scmp.lt.s32.totalorder %s305, 7
      %s307 = scalar_select %p306, %s305, 7
      %p308 = scmp.lt.s32.totalorder %s23, 0
      %s309 = scalar_select %p308, %s23, 0
      %s310 = sadd.s32 %s309, %s307
      %s311 = smul.addr %s310, 4
      %s312 = scalar_lea.vmem %s1, %s311
      %p313 = pneg %p87
      %p314 = pneg %p84
      %p315 = scmp.lt.s32.totalorder %s23, 0
      %s316 = scalar_select %p315, %s23, 0
      %s317 = scalar_lea.vmem %s2, %s316
      %p318 = pneg %p113
      %p319 = pneg %p110
      %p320 = scmp.lt.s32.totalorder %s22, 1
      %s321 = scalar_select %p320, %s22, 1
      %s322 = smul.addr %s321, 16
      %s323 = smul.addr %s322, 4
      %s324 = scalar_lea.vmem %s3, %s323
      %p325 = pneg %p139
      %p326 = pneg %p136
      %p327 = scmp.lt.s32.totalorder %s23, 0
      %s328 = scalar_select %p327, %s23, 0
      %s329 = smul.addr %s328, 4
      %s330 = scalar_lea.vmem %s4, %s329
      %p331 = pneg %p165
      %p332 = pneg %p162
      %p333 = scmp.lt.s32.totalorder %s23, 0
      %s334 = scalar_select %p333, %s23, 0
      %s335 = scalar_lea.vmem %s5, %s334
      %p336 = pneg %p191
      %p337 = pneg %p188
      %p338 = pneg %p219
      %p339 = pneg %p216
      %p340 = scmp.lt.s32.totalorder %s22, 1
      %s341 = scalar_select %p340, %s22, 1
      %p342 = scmp.lt.s32.totalorder %s23, 0
      %s343 = scalar_select %p342, %s23, 0
      %s344 = smul.addr %s341, 16
      %s345 = sadd.s32 %s343, %s344
      %s346 = smul.addr %s345, 8
      %s347 = scalar_lea.vmem %s6, %s346
      %p348 = scmp.lt.s32.totalorder %s22, 1
      %s349 = scalar_select %p348, %s22, 1
      %p350 = scmp.lt.s32.totalorder %s24, 0
      %s351 = scalar_select %p350, %s24, 0
      %s352 = smul.addr %s349, 24
      %s353 = sadd.s32 %s351, %s352
      %s354 = smul.addr %s353, 4
      %s355 = scalar_lea.vmem %s0, %s354
      %s356 = smul.u32 8, %s24
      %p357 = scmp.lt.s32.totalorder %s356, 7
      %s358 = scalar_select %p357, %s356, 7
      %p359 = scmp.lt.s32.totalorder %s23, 0
      %s360 = scalar_select %p359, %s23, 0
      %s361 = sadd.s32 %s360, %s358
      %s362 = smul.addr %s361, 4
      %s363 = scalar_lea.vmem %s1, %s362
      %s364 = smul.u32 8, %s24
      %p365 = scmp.lt.s32.totalorder %s23, 0
      %s366 = scalar_select %p365, %s23, 0
      %s367 = scalar_lea.vmem %s2, %s366
      %p368 = scmp.lt.s32.totalorder %s22, 1
      %s369 = scalar_select %p368, %s22, 1
      %s370 = smul.addr %s369, 16
      %s371 = smul.addr %s370, 4
      %s372 = scalar_lea.vmem %s3, %s371
      %p373 = scmp.lt.s32.totalorder %s23, 0
      %s374 = scalar_select %p373, %s23, 0
      %s375 = smul.addr %s374, 4
      %s376 = scalar_lea.vmem %s4, %s375
      %p377 = scmp.lt.s32.totalorder %s23, 0
      %s378 = scalar_select %p377, %s23, 0
      %s379 = scalar_lea.vmem %s5, %s378
      %p380 = scmp.lt.s32.totalorder %s22, 1
      %s381 = scalar_select %p380, %s22, 1
      %p382 = scmp.lt.s32.totalorder %s23, 0
      %s383 = scalar_select %p382, %s23, 0
      %s384 = smul.addr %s381, 16
      %s385 = sadd.s32 %s383, %s384
      %s386 = smul.addr %s385, 8
      %s387 = scalar_lea.vmem %s6, %s386
      %v389 = vld [vmem:[%s372] sm:$0xf]
      %v390 = vld [vmem:[%s372 + $0x4] sm:$0xf]
      %v391 = vld [vmem:[%s372 + $0x8] sm:$0xf]
      %v392 = vld [vmem:[%s372 + $0xc] sm:$0xf]
      %v393 = vld [vmem:[%s372 + $0x10] sm:$0xf]
      %v394 = vld [vmem:[%s372 + $0x14] sm:$0xf]
      %v395 = vld [vmem:[%s372 + $0x18] sm:$0xf]
      %v396 = vld [vmem:[%s372 + $0x1c] sm:$0xf]
      %v397 = vld [vmem:[%s372 + $0x20] sm:$0xf]
      %v398 = vld [vmem:[%s372 + $0x24] sm:$0xf]
      %v399 = vld [vmem:[%s372 + $0x28] sm:$0xf]
      %v400 = vld [vmem:[%s372 + $0x2c] sm:$0xf]
      %v401 = vld [vmem:[%s372 + $0x30] sm:$0xf]
      %v402 = vld [vmem:[%s372 + $0x34] sm:$0xf]
      %v403 = vld [vmem:[%s372 + $0x38] sm:$0xf]
      %v404 = vld [vmem:[%s372 + $0x3c] sm:$0xf]
      %v405 = vld [vmem:[%s376] sm:$0xf]
      %v406 = vld [vmem:[%s376 + $0x4] sm:$0xf]
      %v407 = vld [vmem:[%s376 + $0x8] sm:$0xf]
      %v408 = vld [vmem:[%s376 + $0xc] sm:$0xf]
      %v409 = vld [vmem:[%s379] sm:$0x1]
      %v411 = vlaneseq
      %v412 = vshrl.u32 %v411, 7
      %v413 = vsub.s32 0, %v412
      %v414 = vrot.slane %v409, %v413
      %v432 = vunpack.c.l.b16 %v389
      %v433 = vunpack.c.l.b16 %v390
      %v434 = vunpack.c.l.b16 %v391
      %v435 = vunpack.c.l.b16 %v392
      %v436 = vunpack.c.l.b16 %v393
      %v437 = vunpack.c.l.b16 %v394
      %v438 = vunpack.c.l.b16 %v395
      %v439 = vunpack.c.l.b16 %v396
      %v440 = vunpack.c.l.b16 %v397
      %v441 = vunpack.c.l.b16 %v398
      %v442 = vunpack.c.l.b16 %v399
      %v443 = vunpack.c.l.b16 %v400
      %v444 = vunpack.c.l.b16 %v401
      %v445 = vunpack.c.l.b16 %v402
      %v446 = vunpack.c.l.b16 %v403
      %v447 = vunpack.c.l.b16 %v404
      %v448 = vpack.c.b16 %v433, %v432
      %v449 = vpack.c.b16 %v435, %v434
      %v450 = vpack.c.b16 %v437, %v436
      %v451 = vpack.c.b16 %v439, %v438
      %v452 = vpack.c.b16 %v441, %v440
      %v453 = vpack.c.b16 %v443, %v442
      %v454 = vpack.c.b16 %v445, %v444
      %v455 = vpack.c.b16 %v447, %v446
      %v460 = vunpack.c.l.b16 %v405
      %v461 = vunpack.c.l.b16 %v406
      %v462 = vunpack.c.l.b16 %v407
      %v463 = vunpack.c.l.b16 %v408
      %v464 = vpack.c.b16 %v461, %v460
      %v465 = vpack.c.b16 %v463, %v462
      %vm468 = vcmask 261120
      %v470 = vsel %vm468, %v448, 0
      %v473 = vsel %vm468, %v449, 0
      %v476 = vsel %vm468, %v450, 0
      %v479 = vsel %vm468, %v451, 0
      %v482 = vsel %vm468, %v452, 0
      %v485 = vsel %vm468, %v453, 0
      %v488 = vsel %vm468, %v454, 0
      %v491 = vsel %vm468, %v455, 0
      %493 = vmatprep.subr.bf16.mxu0 0
      %494 = vmatpush1.bf16.msra.mxu0 0
      %495 = vmatprep.subr.bf16.mxu0 0
      %496 = vmatpush1.bf16.msra.mxu0 0
      %497 = vmatprep.subr.bf16.mxu0 0
      %498 = vmatpush1.bf16.msra.mxu0 0
      %499 = vmatprep.subr.bf16.mxu0 0
      %500 = vmatpush1.bf16.msra.mxu0 0
      %501 = vmatprep.subr.bf16.mxu0 0
      %502 = vmatpush1.bf16.msra.mxu0 0
      %503 = vmatprep.subr.bf16.mxu0 0
      %504 = vmatpush1.bf16.msra.mxu0 0
      %505 = vmatprep.subr.bf16.mxu0 0
      %506 = vmatpush1.bf16.msra.mxu0 %v465
      %507 = vmatprep.subr.bf16.mxu0 0
      %508 = vmatpush1.bf16.msra.mxu0 %v464
      %509 = vmatprep.subr.bf16.mxu0 0
      %510 = vmatpush2.bf16.msra.mxu0 0
      %511 = vmatprep.subr.bf16.mxu0 0
      %512 = vmatpush2.bf16.msra.mxu0 0
      %513 = vmatprep.subr.bf16.mxu0 0
      %514 = vmatpush2.bf16.msra.mxu0 0
      %515 = vmatprep.subr.bf16.mxu0 0
      %516 = vmatpush2.bf16.msra.mxu0 0
      %517 = vmatprep.subr.bf16.mxu0 0
      %518 = vmatpush2.bf16.msra.mxu0 0
      %519 = vmatprep.subr.bf16.mxu0 0
      %520 = vmatpush2.bf16.msra.mxu0 0
      %521 = vmatprep.subr.bf16.mxu0 0
      %522 = vmatpush2.bf16.msra.mxu0 0
      %523 = vmatprep.subr.bf16.mxu0 0
      %524 = vmatpush2.bf16.msra.mxu0 0
      %525 = vmatprep.mubr.bf16.mxu0 0
      %526 = vmatmul.mubr.bf16.gmra.mxu0 %v470
      %v527 = vpop.f32.mrf.mxu0
      %v528 = vadd.f32 %v414, %v527
      %v529 = vpop.f32.mrf.mxu0
      %v530 = vpop.f32.mrf.mxu0
      %v531 = vadd.f32 %v414, %v530
      %v532 = vpop.f32.mrf.mxu0
      %533 = vmatprep.mubr.bf16.mxu0 0
      %534 = vmatmul.mubr.bf16.gmra.mxu0 %v473
      %v535 = vpop.f32.mrf.mxu0
      %v536 = vadd.f32 %v414, %v535
      %v537 = vpop.f32.mrf.mxu0
      %v538 = vpop.f32.mrf.mxu0
      %v539 = vadd.f32 %v414, %v538
      %v540 = vpop.f32.mrf.mxu0
      %541 = vmatprep.mubr.bf16.mxu0 0
      %542 = vmatmul.mubr.bf16.gmra.mxu0 %v476
      %v543 = vpop.f32.mrf.mxu0
      %v544 = vadd.f32 %v414, %v543
      %v545 = vpop.f32.mrf.mxu0
      %v546 = vpop.f32.mrf.mxu0
      %v547 = vadd.f32 %v414, %v546
      %v548 = vpop.f32.mrf.mxu0
      %549 = vmatprep.mubr.bf16.mxu0 0
      %550 = vmatmul.mubr.bf16.gmra.mxu0 %v479
      %v551 = vpop.f32.mrf.mxu0
      %v552 = vadd.f32 %v414, %v551
      %v553 = vpop.f32.mrf.mxu0
      %v554 = vpop.f32.mrf.mxu0
      %v555 = vadd.f32 %v414, %v554
      %v556 = vpop.f32.mrf.mxu0
      %557 = vmatprep.mubr.bf16.mxu0 0
      %558 = vmatmul.mubr.bf16.gmra.mxu0 %v482
      %v559 = vpop.f32.mrf.mxu0
      %v560 = vadd.f32 %v414, %v559
      %v561 = vpop.f32.mrf.mxu0
      %v562 = vpop.f32.mrf.mxu0
      %v563 = vadd.f32 %v414, %v562
      %v564 = vpop.f32.mrf.mxu0
      %565 = vmatprep.mubr.bf16.mxu0 0
      %566 = vmatmul.mubr.bf16.gmra.mxu0 %v485
      %v567 = vpop.f32.mrf.mxu0
      %v568 = vadd.f32 %v414, %v567
      %v569 = vpop.f32.mrf.mxu0
      %v570 = vpop.f32.mrf.mxu0
      %v571 = vadd.f32 %v414, %v570
      %v572 = vpop.f32.mrf.mxu0
      %573 = vmatprep.mubr.bf16.mxu0 0
      %574 = vmatmul.mubr.bf16.gmra.mxu0 %v488
      %v575 = vpop.f32.mrf.mxu0
      %v576 = vadd.f32 %v414, %v575
      %v577 = vpop.f32.mrf.mxu0
      %v578 = vpop.f32.mrf.mxu0
      %v579 = vadd.f32 %v414, %v578
      %v580 = vpop.f32.mrf.mxu0
      %581 = vmatprep.mubr.bf16.mxu0 0
      %582 = vmatmul.mubr.bf16.gmra.mxu0 %v491
      %v583 = vpop.f32.mrf.mxu0
      %v584 = vadd.f32 %v414, %v583
      %v585 = vpop.f32.mrf.mxu0
      %v586 = vpop.f32.mrf.mxu0
      %v587 = vadd.f32 %v414, %v586
      %v588 = vpop.f32.mrf.mxu0
      %589 = vdwg.mxu0
      %v590 = vld [vmem:[%s355 + $0x4] sm:$0x8]
      %v591 = vld [vmem:[%s355 + $0x8] sm:$0xf]
      %v592 = vld [vmem:[%s355 + $0xc] sm:$0xf]
      %v593 = vld [vmem:[%s355 + $0x10] sm:$0xf]
      %v594 = vld [vmem:[%s355 + $0x14] sm:$0xf]
      %v595 = vld [vmem:[%s355 + $0x18] sm:$0xf]
      %v596 = vld [vmem:[%s355 + $0x1c] sm:$0xf]
      %v597 = vld [vmem:[%s355 + $0x20] sm:$0xf]
      %v598 = vld [vmem:[%s355 + $0x24] sm:$0xf]
      %v599 = vld [vmem:[%s355 + $0x28] sm:$0xf]
      %v600 = vld [vmem:[%s355 + $0x2c] sm:$0xf]
      %v601 = vld [vmem:[%s355 + $0x30] sm:$0xf]
      %v602 = vld [vmem:[%s355 + $0x34] sm:$0xf]
      %v603 = vld [vmem:[%s355 + $0x38] sm:$0xf]
      %v604 = vld [vmem:[%s355 + $0x3c] sm:$0xf]
      %v605 = vld [vmem:[%s355 + $0x40] sm:$0xf]
      %v606 = vld [vmem:[%s355 + $0x44] sm:$0xf]
      %v607 = vld [vmem:[%s363] sm:$0xf]
      %v608 = vld [vmem:[%s363 + $0x4] sm:$0xf]
      %v609 = vld [vmem:[%s363 + $0x8] sm:$0xf]
      %v610 = vld [vmem:[%s363 + $0xc] sm:$0xf]
      %v611 = vld [vmem:[%s363 + $0x10] sm:$0xf]
      %v612 = vld [vmem:[%s363 + $0x14] sm:$0xf]
      %v613 = vld [vmem:[%s363 + $0x18] sm:$0xf]
      %v614 = vld [vmem:[%s363 + $0x1c] sm:$0xf]
      %s615 = scalar_lea.vmem %s363, 32
      %v616 = vld [vmem:[%s615] sm:$0xf]
      %v617 = vld [vmem:[%s615 + $0x4] sm:$0xf]
      %v618 = vld [vmem:[%s615 + $0x8] sm:$0xf]
      %v619 = vld [vmem:[%s615 + $0xc] sm:$0xf]
      %v620 = vld [vmem:[%s615 + $0x10] sm:$0xf]
      %v621 = vld [vmem:[%s615 + $0x14] sm:$0xf]
      %v622 = vld [vmem:[%s615 + $0x18] sm:$0xf]
      %v623 = vld [vmem:[%s615 + $0x1c] sm:$0xf]
      %v640 = vunpack.c.l.b16 %v591
      %v641 = vunpack.c.l.b16 %v592
      %v642 = vunpack.c.l.b16 %v593
      %v643 = vunpack.c.l.b16 %v594
      %v644 = vunpack.c.l.b16 %v595
      %v645 = vunpack.c.l.b16 %v596
      %v646 = vunpack.c.l.b16 %v597
      %v647 = vunpack.c.l.b16 %v598
      %v648 = vunpack.c.l.b16 %v599
      %v649 = vunpack.c.l.b16 %v600
      %v650 = vunpack.c.l.b16 %v601
      %v651 = vunpack.c.l.b16 %v602
      %v652 = vunpack.c.l.b16 %v603
      %v653 = vunpack.c.l.b16 %v604
      %v654 = vunpack.c.l.b16 %v605
      %v655 = vunpack.c.l.b16 %v606
      %v656 = vpack.c.b16 %v641, %v640
      %v657 = vpack.c.b16 %v643, %v642
      %v658 = vpack.c.b16 %v645, %v644
      %v659 = vpack.c.b16 %v647, %v646
      %v660 = vpack.c.b16 %v649, %v648
      %v661 = vpack.c.b16 %v651, %v650
      %v662 = vpack.c.b16 %v653, %v652
      %v663 = vpack.c.b16 %v655, %v654
      %v672 = vunpack.c.l.b16 %v616
      %v673 = vunpack.c.l.b16 %v617
      %v674 = vunpack.c.l.b16 %v618
      %v675 = vunpack.c.l.b16 %v619
      %v676 = vunpack.c.l.b16 %v620
      %v677 = vunpack.c.l.b16 %v621
      %v678 = vunpack.c.l.b16 %v622
      %v679 = vunpack.c.l.b16 %v623
      %v680 = vpack.c.b16 %v673, %v672
      %v681 = vpack.c.b16 %v675, %v674
      %v682 = vpack.c.b16 %v677, %v676
      %v683 = vpack.c.b16 %v679, %v678
      %vm688 = vcmask 523264
      %v690 = vsel %vm688, %v656, 0
      %v693 = vsel %vm688, %v657, 0
      %v696 = vsel %vm688, %v658, 0
      %v699 = vsel %vm688, %v659, 0
      %v702 = vsel %vm688, %v660, 0
      %v705 = vsel %vm688, %v661, 0
      %v708 = vsel %vm688, %v662, 0
      %v711 = vsel %vm688, %v663, 0
      %713 = vmatprep.subr.bf16.mxu0 0
      %714 = vmatpush1.bf16.msra.mxu0 0
      %715 = vmatprep.subr.bf16.mxu0 0
      %716 = vmatpush1.bf16.msra.mxu0 0
      %717 = vmatprep.subr.bf16.mxu0 0
      %718 = vmatpush1.bf16.msra.mxu0 0
      %719 = vmatprep.subr.bf16.mxu0 0
      %720 = vmatpush1.bf16.msra.mxu0 0
      %721 = vmatprep.subr.bf16.mxu0 0
      %722 = vmatpush1.bf16.msra.mxu0 %v683
      %723 = vmatprep.subr.bf16.mxu0 0
      %724 = vmatpush1.bf16.msra.mxu0 %v682
      %725 = vmatprep.subr.bf16.mxu0 0
      %726 = vmatpush1.bf16.msra.mxu0 %v681
      %727 = vmatprep.subr.bf16.mxu0 0
      %728 = vmatpush1.bf16.msra.mxu0 %v680
      %729 = vmatprep.subr.bf16.mxu0 0
      %730 = vmatpush2.bf16.msra.mxu0 0
      %731 = vmatprep.subr.bf16.mxu0 0
      %732 = vmatpush2.bf16.msra.mxu0 0
      %733 = vmatprep.subr.bf16.mxu0 0
      %734 = vmatpush2.bf16.msra.mxu0 0
      %735 = vmatprep.subr.bf16.mxu0 0
      %736 = vmatpush2.bf16.msra.mxu0 0
      %737 = vmatprep.subr.bf16.mxu0 0
      %738 = vmatpush2.bf16.msra.mxu0 0
      %739 = vmatprep.subr.bf16.mxu0 0
      %740 = vmatpush2.bf16.msra.mxu0 0
      %741 = vmatprep.subr.bf16.mxu0 0
      %742 = vmatpush2.bf16.msra.mxu0 0
      %743 = vmatprep.subr.bf16.mxu0 0
      %744 = vmatpush2.bf16.msra.mxu0 0
      %745 = vmatprep.mubr.bf16.mxu0 0
      %746 = vmatmul.mubr.bf16.gmra.mxu0 %v690
      %v747 = vpop.f32.mrf.mxu0
      %v748 = vadd.f32 0.0, %v747
      %v749 = vpop.f32.mrf.mxu0
      %v750 = vpop.f32.mrf.mxu0
      %v751 = vadd.f32 0.0, %v750
      %v752 = vpop.f32.mrf.mxu0
      %753 = vmatprep.mubr.bf16.mxu0 0
      %754 = vmatmul.mubr.bf16.gmra.mxu0 %v693
      %v755 = vpop.f32.mrf.mxu0
      %v756 = vadd.f32 0.0, %v755
      %v757 = vpop.f32.mrf.mxu0
      %v758 = vpop.f32.mrf.mxu0
      %v759 = vadd.f32 0.0, %v758
      %v760 = vpop.f32.mrf.mxu0
      %761 = vmatprep.mubr.bf16.mxu0 0
      %762 = vmatmul.mubr.bf16.gmra.mxu0 %v696
      %v763 = vpop.f32.mrf.mxu0
      %v764 = vadd.f32 0.0, %v763
      %v765 = vpop.f32.mrf.mxu0
      %v766 = vpop.f32.mrf.mxu0
      %v767 = vadd.f32 0.0, %v766
      %v768 = vpop.f32.mrf.mxu0
      %769 = vmatprep.mubr.bf16.mxu0 0
      %770 = vmatmul.mubr.bf16.gmra.mxu0 %v699
      %v771 = vpop.f32.mrf.mxu0
      %v772 = vadd.f32 0.0, %v771
      %v773 = vpop.f32.mrf.mxu0
      %v774 = vpop.f32.mrf.mxu0
      %v775 = vadd.f32 0.0, %v774
      %v776 = vpop.f32.mrf.mxu0
      %777 = vmatprep.mubr.bf16.mxu0 0
      %778 = vmatmul.mubr.bf16.gmra.mxu0 %v702
      %v779 = vpop.f32.mrf.mxu0
      %v780 = vadd.f32 0.0, %v779
      %v781 = vpop.f32.mrf.mxu0
      %v782 = vpop.f32.mrf.mxu0
      %v783 = vadd.f32 0.0, %v782
      %v784 = vpop.f32.mrf.mxu0
      %785 = vmatprep.mubr.bf16.mxu0 0
      %786 = vmatmul.mubr.bf16.gmra.mxu0 %v705
      %v787 = vpop.f32.mrf.mxu0
      %v788 = vadd.f32 0.0, %v787
      %v789 = vpop.f32.mrf.mxu0
      %v790 = vpop.f32.mrf.mxu0
      %v791 = vadd.f32 0.0, %v790
      %v792 = vpop.f32.mrf.mxu0
      %793 = vmatprep.mubr.bf16.mxu0 0
      %794 = vmatmul.mubr.bf16.gmra.mxu0 %v708
      %v795 = vpop.f32.mrf.mxu0
      %v796 = vadd.f32 0.0, %v795
      %v797 = vpop.f32.mrf.mxu0
      %v798 = vpop.f32.mrf.mxu0
      %v799 = vadd.f32 0.0, %v798
      %v800 = vpop.f32.mrf.mxu0
      %801 = vmatprep.mubr.bf16.mxu0 0
      %802 = vmatmul.mubr.bf16.gmra.mxu0 %v711
      %v803 = vpop.f32.mrf.mxu0
      %v804 = vadd.f32 0.0, %v803
      %v805 = vpop.f32.mrf.mxu0
      %v806 = vpop.f32.mrf.mxu0
      %v807 = vadd.f32 0.0, %v806
      %v808 = vpop.f32.mrf.mxu0
      %809 = vdwg.mxu0
      %v811 = vunpack.c.l.b16 %v590
      %v812 = vpack.c.b16 %v640, %v811
      %v813 = vpack.c.b16 %v642, %v641
      %v814 = vpack.c.b16 %v644, %v643
      %v815 = vpack.c.b16 %v646, %v645
      %v816 = vpack.c.b16 %v648, %v647
      %v817 = vpack.c.b16 %v650, %v649
      %v818 = vpack.c.b16 %v652, %v651
      %v819 = vpack.c.b16 %v654, %v653
      %v820 = vpack.c.b16 %v655, %v655
      %vm821 = vsmask.f32 4352
      %v823 = vshrl.u32 %v812, 16
      %v825 = vrot.slane %v823, 3
      %v826 = vshll.u32 %v812, 16
      %v828 = vrot.slane %v826, 4
      %v829 = vor.u32 %v825, %v828
      %v831 = vshrl.u32 %v813, 16
      %v833 = vrot.slane %v831, 3
      %v834 = vshll.u32 %v813, 16
      %v836 = vrot.slane %v834, 4
      %v837 = vor.u32 %v833, %v836
      %v838 = vsel %vm821, %v829, %v837
      %v840 = vshrl.u32 %v814, 16
      %v842 = vrot.slane %v840, 3
      %v843 = vshll.u32 %v814, 16
      %v845 = vrot.slane %v843, 4
      %v846 = vor.u32 %v842, %v845
      %v847 = vsel %vm821, %v837, %v846
      %v849 = vshrl.u32 %v815, 16
      %v851 = vrot.slane %v849, 3
      %v852 = vshll.u32 %v815, 16
      %v854 = vrot.slane %v852, 4
      %v855 = vor.u32 %v851, %v854
      %v856 = vsel %vm821, %v846, %v855
      %v858 = vshrl.u32 %v816, 16
      %v860 = vrot.slane %v858, 3
      %v861 = vshll.u32 %v816, 16
      %v863 = vrot.slane %v861, 4
      %v864 = vor.u32 %v860, %v863
      %v865 = vsel %vm821, %v855, %v864
      %v867 = vshrl.u32 %v817, 16
      %v869 = vrot.slane %v867, 3
      %v870 = vshll.u32 %v817, 16
      %v872 = vrot.slane %v870, 4
      %v873 = vor.u32 %v869, %v872
      %v874 = vsel %vm821, %v864, %v873
      %v876 = vshrl.u32 %v818, 16
      %v878 = vrot.slane %v876, 3
      %v879 = vshll.u32 %v818, 16
      %v881 = vrot.slane %v879, 4
      %v882 = vor.u32 %v878, %v881
      %v883 = vsel %vm821, %v873, %v882
      %v885 = vshrl.u32 %v819, 16
      %v887 = vrot.slane %v885, 3
      %v888 = vshll.u32 %v819, 16
      %v890 = vrot.slane %v888, 4
      %v891 = vor.u32 %v887, %v890
      %v892 = vsel %vm821, %v882, %v891
      %v894 = vshrl.u32 %v820, 16
      %v896 = vrot.slane %v894, 3
      %v897 = vshll.u32 %v820, 16
      %v899 = vrot.slane %v897, 4
      %v900 = vor.u32 %v896, %v899
      %v901 = vsel %vm821, %v891, %v900
      %v910 = vunpack.c.l.b16 %v607
      %v911 = vunpack.c.l.b16 %v608
      %v912 = vunpack.c.l.b16 %v609
      %v913 = vunpack.c.l.b16 %v610
      %v914 = vunpack.c.l.b16 %v611
      %v915 = vunpack.c.l.b16 %v612
      %v916 = vunpack.c.l.b16 %v613
      %v917 = vunpack.c.l.b16 %v614
      %v918 = vpack.c.b16 %v911, %v910
      %v919 = vpack.c.b16 %v913, %v912
      %v920 = vpack.c.b16 %v915, %v914
      %v921 = vpack.c.b16 %v917, %v916
      %v927 = vsel %vm688, %v838, 0
      %v930 = vsel %vm688, %v847, 0
      %v933 = vsel %vm688, %v856, 0
      %v936 = vsel %vm688, %v865, 0
      %v939 = vsel %vm688, %v874, 0
      %v942 = vsel %vm688, %v883, 0
      %v945 = vsel %vm688, %v892, 0
      %v948 = vsel %vm688, %v901, 0
      %950 = vmatprep.subr.bf16.mxu0 0
      %951 = vmatpush1.bf16.msra.mxu0 0
      %952 = vmatprep.subr.bf16.mxu0 0
      %953 = vmatpush1.bf16.msra.mxu0 0
      %954 = vmatprep.subr.bf16.mxu0 0
      %955 = vmatpush1.bf16.msra.mxu0 0
      %956 = vmatprep.subr.bf16.mxu0 0
      %957 = vmatpush1.bf16.msra.mxu0 0
      %958 = vmatprep.subr.bf16.mxu0 0
      %959 = vmatpush1.bf16.msra.mxu0 %v921
      %960 = vmatprep.subr.bf16.mxu0 0
      %961 = vmatpush1.bf16.msra.mxu0 %v920
      %962 = vmatprep.subr.bf16.mxu0 0
      %963 = vmatpush1.bf16.msra.mxu0 %v919
      %964 = vmatprep.subr.bf16.mxu0 0
      %965 = vmatpush1.bf16.msra.mxu0 %v918
      %966 = vmatprep.subr.bf16.mxu0 0
      %967 = vmatpush2.bf16.msra.mxu0 0
      %968 = vmatprep.subr.bf16.mxu0 0
      %969 = vmatpush2.bf16.msra.mxu0 0
      %970 = vmatprep.subr.bf16.mxu0 0
      %971 = vmatpush2.bf16.msra.mxu0 0
      %972 = vmatprep.subr.bf16.mxu0 0
      %973 = vmatpush2.bf16.msra.mxu0 0
      %974 = vmatprep.subr.bf16.mxu0 0
      %975 = vmatpush2.bf16.msra.mxu0 0
      %976 = vmatprep.subr.bf16.mxu0 0
      %977 = vmatpush2.bf16.msra.mxu0 0
      %978 = vmatprep.subr.bf16.mxu0 0
      %979 = vmatpush2.bf16.msra.mxu0 0
      %980 = vmatprep.subr.bf16.mxu0 0
      %981 = vmatpush2.bf16.msra.mxu0 0
      %982 = vmatprep.mubr.bf16.mxu0 0
      %983 = vmatmul.mubr.bf16.gmra.mxu0 %v927
      %v984 = vpop.f32.mrf.mxu0
      %v985 = vadd.f32 %v748, %v984
      %v986 = vpop.f32.mrf.mxu0
      %v987 = vpop.f32.mrf.mxu0
      %v988 = vadd.f32 %v751, %v987
      %v989 = vpop.f32.mrf.mxu0
      %990 = vmatprep.mubr.bf16.mxu0 0
      %991 = vmatmul.mubr.bf16.gmra.mxu0 %v930
      %v992 = vpop.f32.mrf.mxu0
      %v993 = vadd.f32 %v756, %v992
      %v994 = vpop.f32.mrf.mxu0
      %v995 = vpop.f32.mrf.mxu0
      %v996 = vadd.f32 %v759, %v995
      %v997 = vpop.f32.mrf.mxu0
      %998 = vmatprep.mubr.bf16.mxu0 0
      %999 = vmatmul.mubr.bf16.gmra.mxu0 %v933
      %v1000 = vpop.f32.mrf.mxu0
      %v1001 = vadd.f32 %v764, %v1000
      %v1002 = vpop.f32.mrf.mxu0
      %v1003 = vpop.f32.mrf.mxu0
      %v1004 = vadd.f32 %v767, %v1003
      %v1005 = vpop.f32.mrf.mxu0
      %1006 = vmatprep.mubr.bf16.mxu0 0
      %1007 = vmatmul.mubr.bf16.gmra.mxu0 %v936
      %v1008 = vpop.f32.mrf.mxu0
      %v1009 = vadd.f32 %v772, %v1008
      %v1010 = vpop.f32.mrf.mxu0
      %v1011 = vpop.f32.mrf.mxu0
      %v1012 = vadd.f32 %v775, %v1011
      %v1013 = vpop.f32.mrf.mxu0
      %1014 = vmatprep.mubr.bf16.mxu0 0
      %1015 = vmatmul.mubr.bf16.gmra.mxu0 %v939
      %v1016 = vpop.f32.mrf.mxu0
      %v1017 = vadd.f32 %v780, %v1016
      %v1018 = vpop.f32.mrf.mxu0
      %v1019 = vpop.f32.mrf.mxu0
      %v1020 = vadd.f32 %v783, %v1019
      %v1021 = vpop.f32.mrf.mxu0
      %1022 = vmatprep.mubr.bf16.mxu0 0
      %1023 = vmatmul.mubr.bf16.gmra.mxu0 %v942
      %v1024 = vpop.f32.mrf.mxu0
      %v1025 = vadd.f32 %v788, %v1024
      %v1026 = vpop.f32.mrf.mxu0
      %v1027 = vpop.f32.mrf.mxu0
      %v1028 = vadd.f32 %v791, %v1027
      %v1029 = vpop.f32.mrf.mxu0
      %1030 = vmatprep.mubr.bf16.mxu0 0
      %1031 = vmatmul.mubr.bf16.gmra.mxu0 %v945
      %v1032 = vpop.f32.mrf.mxu0
      %v1033 = vadd.f32 %v796, %v1032
      %v1034 = vpop.f32.mrf.mxu0
      %v1035 = vpop.f32.mrf.mxu0
      %v1036 = vadd.f32 %v799, %v1035
      %v1037 = vpop.f32.mrf.mxu0
      %1038 = vmatprep.mubr.bf16.mxu0 0
      %1039 = vmatmul.mubr.bf16.gmra.mxu0 %v948
      %v1040 = vpop.f32.mrf.mxu0
      %v1041 = vadd.f32 %v804, %v1040
      %v1042 = vpop.f32.mrf.mxu0
      %v1043 = vpop.f32.mrf.mxu0
      %v1044 = vadd.f32 %v807, %v1043
      %v1045 = vpop.f32.mrf.mxu0
      %1046 = vdwg.mxu0
      %v1047 = vld [vmem:[%s355 + $0x8] sm:$0xf]
      %v1048 = vld [vmem:[%s355 + $0xc] sm:$0xf]
      %v1049 = vld [vmem:[%s355 + $0x10] sm:$0xf]
      %v1050 = vld [vmem:[%s355 + $0x14] sm:$0xf]
      %v1051 = vld [vmem:[%s355 + $0x18] sm:$0xf]
      %v1052 = vld [vmem:[%s355 + $0x1c] sm:$0xf]
      %v1053 = vld [vmem:[%s355 + $0x20] sm:$0xf]
      %v1054 = vld [vmem:[%s355 + $0x24] sm:$0xf]
      %v1055 = vld [vmem:[%s355 + $0x28] sm:$0xf]
      %v1056 = vld [vmem:[%s355 + $0x2c] sm:$0xf]
      %v1057 = vld [vmem:[%s355 + $0x30] sm:$0xf]
      %v1058 = vld [vmem:[%s355 + $0x34] sm:$0xf]
      %v1059 = vld [vmem:[%s355 + $0x38] sm:$0xf]
      %v1060 = vld [vmem:[%s355 + $0x3c] sm:$0xf]
      %v1061 = vld [vmem:[%s355 + $0x40] sm:$0xf]
      %v1062 = vld [vmem:[%s355 + $0x44] sm:$0xf]
      %v1063 = vld [vmem:[%s355 + $0x48] sm:$0x1]
      %s1064 = scalar_lea.vmem %s363, 64
      %v1065 = vld [vmem:[%s1064] sm:$0xf]
      %v1066 = vld [vmem:[%s1064 + $0x4] sm:$0xf]
      %v1067 = vld [vmem:[%s1064 + $0x8] sm:$0xf]
      %v1068 = vld [vmem:[%s1064 + $0xc] sm:$0xf]
      %v1069 = vld [vmem:[%s1064 + $0x10] sm:$0xf]
      %v1070 = vld [vmem:[%s1064 + $0x14] sm:$0xf]
      %v1071 = vld [vmem:[%s1064 + $0x18] sm:$0xf]
      %v1072 = vld [vmem:[%s1064 + $0x1c] sm:$0xf]
      %v1090 = vunpack.c.l.b16 %v1047
      %v1091 = vunpack.c.l.b16 %v1048
      %v1092 = vunpack.c.l.b16 %v1049
      %v1093 = vunpack.c.l.b16 %v1050
      %v1094 = vunpack.c.l.b16 %v1051
      %v1095 = vunpack.c.l.b16 %v1052
      %v1096 = vunpack.c.l.b16 %v1053
      %v1097 = vunpack.c.l.b16 %v1054
      %v1098 = vunpack.c.l.b16 %v1055
      %v1099 = vunpack.c.l.b16 %v1056
      %v1100 = vunpack.c.l.b16 %v1057
      %v1101 = vunpack.c.l.b16 %v1058
      %v1102 = vunpack.c.l.b16 %v1059
      %v1103 = vunpack.c.l.b16 %v1060
      %v1104 = vunpack.c.l.b16 %v1061
      %v1105 = vunpack.c.l.b16 %v1062
      %v1106 = vunpack.c.l.b16 %v1063
      %v1107 = vpack.c.b16 %v1091, %v1090
      %v1108 = vpack.c.b16 %v1093, %v1092
      %v1109 = vpack.c.b16 %v1095, %v1094
      %v1110 = vpack.c.b16 %v1097, %v1096
      %v1111 = vpack.c.b16 %v1099, %v1098
      %v1112 = vpack.c.b16 %v1101, %v1100
      %v1113 = vpack.c.b16 %v1103, %v1102
      %v1114 = vpack.c.b16 %v1105, %v1104
      %v1115 = vpack.c.b16 %v1106, %v1106
      %vm1116 = vsmask.f32 7424
      %v1118 = vshrl.u32 %v1107, 16
      %v1120 = vshll.u32 %v1107, 16
      %v1122 = vrot.slane %v1120, 1
      %v1123 = vor.u32 %v1118, %v1122
      %v1125 = vshll.u32 %v1108, 16
      %v1127 = vrot.slane %v1125, 1
      %v1128 = vsel %vm1116, %v1123, %v1127
      %v1129 = vshrl.u32 %v1108, 16
      %v1131 = vor.u32 %v1129, %v1127
      %v1133 = vshll.u32 %v1109, 16
      %v1135 = vrot.slane %v1133, 1
      %v1136 = vsel %vm1116, %v1131, %v1135
      %v1137 = vshrl.u32 %v1109, 16
      %v1139 = vor.u32 %v1137, %v1135
      %v1141 = vshll.u32 %v1110, 16
      %v1143 = vrot.slane %v1141, 1
      %v1144 = vsel %vm1116, %v1139, %v1143
      %v1145 = vshrl.u32 %v1110, 16
      %v1147 = vor.u32 %v1145, %v1143
      %v1149 = vshll.u32 %v1111, 16
      %v1151 = vrot.slane %v1149, 1
      %v1152 = vsel %vm1116, %v1147, %v1151
      %v1153 = vshrl.u32 %v1111, 16
      %v1155 = vor.u32 %v1153, %v1151
      %v1157 = vshll.u32 %v1112, 16
      %v1159 = vrot.slane %v1157, 1
      %v1160 = vsel %vm1116, %v1155, %v1159
      %v1161 = vshrl.u32 %v1112, 16
      %v1163 = vor.u32 %v1161, %v1159
      %v1165 = vshll.u32 %v1113, 16
      %v1167 = vrot.slane %v1165, 1
      %v1168 = vsel %vm1116, %v1163, %v1167
      %v1169 = vshrl.u32 %v1113, 16
      %v1171 = vor.u32 %v1169, %v1167
      %v1173 = vshll.u32 %v1114, 16
      %v1175 = vrot.slane %v1173, 1
      %v1176 = vsel %vm1116, %v1171, %v1175
      %v1177 = vshrl.u32 %v1114, 16
      %v1179 = vor.u32 %v1177, %v1175
      %v1181 = vshll.u32 %v1115, 16
      %v1183 = vrot.slane %v1181, 1
      %v1184 = vsel %vm1116, %v1179, %v1183
      %v1193 = vunpack.c.l.b16 %v1065
      %v1194 = vunpack.c.l.b16 %v1066
      %v1195 = vunpack.c.l.b16 %v1067
      %v1196 = vunpack.c.l.b16 %v1068
      %v1197 = vunpack.c.l.b16 %v1069
      %v1198 = vunpack.c.l.b16 %v1070
      %v1199 = vunpack.c.l.b16 %v1071
      %v1200 = vunpack.c.l.b16 %v1072
      %v1201 = vpack.c.b16 %v1194, %v1193
      %v1202 = vpack.c.b16 %v1196, %v1195
      %v1203 = vpack.c.b16 %v1198, %v1197
      %v1204 = vpack.c.b16 %v1200, %v1199
      %v1210 = vsel %vm688, %v1128, 0
      %v1213 = vsel %vm688, %v1136, 0
      %v1216 = vsel %vm688, %v1144, 0
      %v1219 = vsel %vm688, %v1152, 0
      %v1222 = vsel %vm688, %v1160, 0
      %v1225 = vsel %vm688, %v1168, 0
      %v1228 = vsel %vm688, %v1176, 0
      %v1231 = vsel %vm688, %v1184, 0
      %1233 = vmatprep.subr.bf16.mxu0 0
      %1234 = vmatpush1.bf16.msra.mxu0 0
      %1235 = vmatprep.subr.bf16.mxu0 0
      %1236 = vmatpush1.bf16.msra.mxu0 0
      %1237 = vmatprep.subr.bf16.mxu0 0
      %1238 = vmatpush1.bf16.msra.mxu0 0
      %1239 = vmatprep.subr.bf16.mxu0 0
      %1240 = vmatpush1.bf16.msra.mxu0 0
      %1241 = vmatprep.subr.bf16.mxu0 0
      %1242 = vmatpush1.bf16.msra.mxu0 %v1204
      %1243 = vmatprep.subr.bf16.mxu0 0
      %1244 = vmatpush1.bf16.msra.mxu0 %v1203
      %1245 = vmatprep.subr.bf16.mxu0 0
      %1246 = vmatpush1.bf16.msra.mxu0 %v1202
      %1247 = vmatprep.subr.bf16.mxu0 0
      %1248 = vmatpush1.bf16.msra.mxu0 %v1201
      %1249 = vmatprep.subr.bf16.mxu0 0
      %1250 = vmatpush2.bf16.msra.mxu0 0
      %1251 = vmatprep.subr.bf16.mxu0 0
      %1252 = vmatpush2.bf16.msra.mxu0 0
      %1253 = vmatprep.subr.bf16.mxu0 0
      %1254 = vmatpush2.bf16.msra.mxu0 0
      %1255 = vmatprep.subr.bf16.mxu0 0
      %1256 = vmatpush2.bf16.msra.mxu0 0
      %1257 = vmatprep.subr.bf16.mxu0 0
      %1258 = vmatpush2.bf16.msra.mxu0 0
      %1259 = vmatprep.subr.bf16.mxu0 0
      %1260 = vmatpush2.bf16.msra.mxu0 0
      %1261 = vmatprep.subr.bf16.mxu0 0
      %1262 = vmatpush2.bf16.msra.mxu0 0
      %1263 = vmatprep.subr.bf16.mxu0 0
      %1264 = vmatpush2.bf16.msra.mxu0 0
      %1265 = vmatprep.mubr.bf16.mxu0 0
      %1266 = vmatmul.mubr.bf16.gmra.mxu0 %v1210
      %v1267 = vpop.f32.mrf.mxu0
      %v1268 = vadd.f32 0.0, %v1267
      %v1269 = vpop.f32.mrf.mxu0
      %v1270 = vpop.f32.mrf.mxu0
      %v1271 = vadd.f32 0.0, %v1270
      %v1272 = vpop.f32.mrf.mxu0
      %1273 = vmatprep.mubr.bf16.mxu0 0
      %1274 = vmatmul.mubr.bf16.gmra.mxu0 %v1213
      %v1275 = vpop.f32.mrf.mxu0
      %v1276 = vadd.f32 0.0, %v1275
      %v1277 = vpop.f32.mrf.mxu0
      %v1278 = vpop.f32.mrf.mxu0
      %v1279 = vadd.f32 0.0, %v1278
      %v1280 = vpop.f32.mrf.mxu0
      %1281 = vmatprep.mubr.bf16.mxu0 0
      %1282 = vmatmul.mubr.bf16.gmra.mxu0 %v1216
      %v1283 = vpop.f32.mrf.mxu0
      %v1284 = vadd.f32 0.0, %v1283
      %v1285 = vpop.f32.mrf.mxu0
      %v1286 = vpop.f32.mrf.mxu0
      %v1287 = vadd.f32 0.0, %v1286
      %v1288 = vpop.f32.mrf.mxu0
      %1289 = vmatprep.mubr.bf16.mxu0 0
      %1290 = vmatmul.mubr.bf16.gmra.mxu0 %v1219
      %v1291 = vpop.f32.mrf.mxu0
      %v1292 = vadd.f32 0.0, %v1291
      %v1293 = vpop.f32.mrf.mxu0
      %v1294 = vpop.f32.mrf.mxu0
      %v1295 = vadd.f32 0.0, %v1294
      %v1296 = vpop.f32.mrf.mxu0
      %1297 = vmatprep.mubr.bf16.mxu0 0
      %1298 = vmatmul.mubr.bf16.gmra.mxu0 %v1222
      %v1299 = vpop.f32.mrf.mxu0
      %v1300 = vadd.f32 0.0, %v1299
      %v1301 = vpop.f32.mrf.mxu0
      %v1302 = vpop.f32.mrf.mxu0
      %v1303 = vadd.f32 0.0, %v1302
      %v1304 = vpop.f32.mrf.mxu0
      %1305 = vmatprep.mubr.bf16.mxu0 0
      %1306 = vmatmul.mubr.bf16.gmra.mxu0 %v1225
      %v1307 = vpop.f32.mrf.mxu0
      %v1308 = vadd.f32 0.0, %v1307
      %v1309 = vpop.f32.mrf.mxu0
      %v1310 = vpop.f32.mrf.mxu0
      %v1311 = vadd.f32 0.0, %v1310
      %v1312 = vpop.f32.mrf.mxu0
      %1313 = vmatprep.mubr.bf16.mxu0 0
      %1314 = vmatmul.mubr.bf16.gmra.mxu0 %v1228
      %v1315 = vpop.f32.mrf.mxu0
      %v1316 = vadd.f32 0.0, %v1315
      %v1317 = vpop.f32.mrf.mxu0
      %v1318 = vpop.f32.mrf.mxu0
      %v1319 = vadd.f32 0.0, %v1318
      %v1320 = vpop.f32.mrf.mxu0
      %1321 = vmatprep.mubr.bf16.mxu0 0
      %1322 = vmatmul.mubr.bf16.gmra.mxu0 %v1231
      %v1323 = vpop.f32.mrf.mxu0
      %v1324 = vadd.f32 0.0, %v1323
      %v1325 = vpop.f32.mrf.mxu0
      %v1326 = vpop.f32.mrf.mxu0
      %v1327 = vadd.f32 0.0, %v1326
      %v1328 = vpop.f32.mrf.mxu0
      %1329 = vdwg.mxu0
      %v1330 = vadd.f32 %v985, %v1268
      %v1331 = vadd.f32 %v988, %v1271
      %v1332 = vadd.f32 %v993, %v1276
      %v1333 = vadd.f32 %v996, %v1279
      %v1334 = vadd.f32 %v1001, %v1284
      %v1335 = vadd.f32 %v1004, %v1287
      %v1336 = vadd.f32 %v1009, %v1292
      %v1337 = vadd.f32 %v1012, %v1295
      %v1338 = vadd.f32 %v1017, %v1300
      %v1339 = vadd.f32 %v1020, %v1303
      %v1340 = vadd.f32 %v1025, %v1308
      %v1341 = vadd.f32 %v1028, %v1311
      %v1342 = vadd.f32 %v1033, %v1316
      %v1343 = vadd.f32 %v1036, %v1319
      %v1344 = vadd.f32 %v1041, %v1324
      %v1345 = vadd.f32 %v1044, %v1327
      %v1346 = vld [vmem:[%s355 + $0xc] sm:$0x8]
      %v1347 = vld [vmem:[%s355 + $0x10] sm:$0xf]
      %v1348 = vld [vmem:[%s355 + $0x14] sm:$0xf]
      %v1349 = vld [vmem:[%s355 + $0x18] sm:$0xf]
      %v1350 = vld [vmem:[%s355 + $0x1c] sm:$0xf]
      %v1351 = vld [vmem:[%s355 + $0x20] sm:$0xf]
      %v1352 = vld [vmem:[%s355 + $0x24] sm:$0xf]
      %v1353 = vld [vmem:[%s355 + $0x28] sm:$0xf]
      %v1354 = vld [vmem:[%s355 + $0x2c] sm:$0xf]
      %v1355 = vld [vmem:[%s355 + $0x30] sm:$0xf]
      %v1356 = vld [vmem:[%s355 + $0x34] sm:$0xf]
      %v1357 = vld [vmem:[%s355 + $0x38] sm:$0xf]
      %v1358 = vld [vmem:[%s355 + $0x3c] sm:$0xf]
      %v1359 = vld [vmem:[%s355 + $0x40] sm:$0xf]
      %v1360 = vld [vmem:[%s355 + $0x44] sm:$0xf]
      %v1361 = vld [vmem:[%s355 + $0x48] sm:$0xf]
      %v1362 = vld [vmem:[%s355 + $0x4c] sm:$0xf]
      %s1363 = scalar_lea.vmem %s363, 96
      %v1364 = vld [vmem:[%s1363] sm:$0xf]
      %v1365 = vld [vmem:[%s1363 + $0x4] sm:$0xf]
      %v1366 = vld [vmem:[%s1363 + $0x8] sm:$0xf]
      %v1367 = vld [vmem:[%s1363 + $0xc] sm:$0xf]
      %v1368 = vld [vmem:[%s1363 + $0x10] sm:$0xf]
      %v1369 = vld [vmem:[%s1363 + $0x14] sm:$0xf]
      %v1370 = vld [vmem:[%s1363 + $0x18] sm:$0xf]
      %v1371 = vld [vmem:[%s1363 + $0x1c] sm:$0xf]
      %v1389 = vunpack.c.l.b16 %v1346
      %v1390 = vunpack.c.l.b16 %v1347
      %v1391 = vunpack.c.l.b16 %v1348
      %v1392 = vunpack.c.l.b16 %v1349
      %v1393 = vunpack.c.l.b16 %v1350
      %v1394 = vunpack.c.l.b16 %v1351
      %v1395 = vunpack.c.l.b16 %v1352
      %v1396 = vunpack.c.l.b16 %v1353
      %v1397 = vunpack.c.l.b16 %v1354
      %v1398 = vunpack.c.l.b16 %v1355
      %v1399 = vunpack.c.l.b16 %v1356
      %v1400 = vunpack.c.l.b16 %v1357
      %v1401 = vunpack.c.l.b16 %v1358
      %v1402 = vunpack.c.l.b16 %v1359
      %v1403 = vunpack.c.l.b16 %v1360
      %v1404 = vunpack.c.l.b16 %v1361
      %v1405 = vunpack.c.l.b16 %v1362
      %v1406 = vpack.c.b16 %v1390, %v1389
      %v1407 = vpack.c.b16 %v1392, %v1391
      %v1408 = vpack.c.b16 %v1394, %v1393
      %v1409 = vpack.c.b16 %v1396, %v1395
      %v1410 = vpack.c.b16 %v1398, %v1397
      %v1411 = vpack.c.b16 %v1400, %v1399
      %v1412 = vpack.c.b16 %v1402, %v1401
      %v1413 = vpack.c.b16 %v1404, %v1403
      %v1414 = vpack.c.b16 %v1405, %v1405
      %v1416 = vshrl.u32 %v1406, 16
      %v1418 = vrot.slane %v1416, 3
      %v1419 = vshll.u32 %v1406, 16
      %v1421 = vrot.slane %v1419, 4
      %v1422 = vor.u32 %v1418, %v1421
      %v1424 = vshrl.u32 %v1407, 16
      %v1426 = vrot.slane %v1424, 3
      %v1427 = vshll.u32 %v1407, 16
      %v1429 = vrot.slane %v1427, 4
      %v1430 = vor.u32 %v1426, %v1429
      %v1431 = vsel %vm821, %v1422, %v1430
      %v1433 = vshrl.u32 %v1408, 16
      %v1435 = vrot.slane %v1433, 3
      %v1436 = vshll.u32 %v1408, 16
      %v1438 = vrot.slane %v1436, 4
      %v1439 = vor.u32 %v1435, %v1438
      %v1440 = vsel %vm821, %v1430, %v1439
      %v1442 = vshrl.u32 %v1409, 16
      %v1444 = vrot.slane %v1442, 3
      %v1445 = vshll.u32 %v1409, 16
      %v1447 = vrot.slane %v1445, 4
      %v1448 = vor.u32 %v1444, %v1447
      %v1449 = vsel %vm821, %v1439, %v1448
      %v1451 = vshrl.u32 %v1410, 16
      %v1453 = vrot.slane %v1451, 3
      %v1454 = vshll.u32 %v1410, 16
      %v1456 = vrot.slane %v1454, 4
      %v1457 = vor.u32 %v1453, %v1456
      %v1458 = vsel %vm821, %v1448, %v1457
      %v1460 = vshrl.u32 %v1411, 16
      %v1462 = vrot.slane %v1460, 3
      %v1463 = vshll.u32 %v1411, 16
      %v1465 = vrot.slane %v1463, 4
      %v1466 = vor.u32 %v1462, %v1465
      %v1467 = vsel %vm821, %v1457, %v1466
      %v1469 = vshrl.u32 %v1412, 16
      %v1471 = vrot.slane %v1469, 3
      %v1472 = vshll.u32 %v1412, 16
      %v1474 = vrot.slane %v1472, 4
      %v1475 = vor.u32 %v1471, %v1474
      %v1476 = vsel %vm821, %v1466, %v1475
      %v1478 = vshrl.u32 %v1413, 16
      %v1480 = vrot.slane %v1478, 3
      %v1481 = vshll.u32 %v1413, 16
      %v1483 = vrot.slane %v1481, 4
      %v1484 = vor.u32 %v1480, %v1483
      %v1485 = vsel %vm821, %v1475, %v1484
      %v1487 = vshrl.u32 %v1414, 16
      %v1489 = vrot.slane %v1487, 3
      %v1490 = vshll.u32 %v1414, 16
      %v1492 = vrot.slane %v1490, 4
      %v1493 = vor.u32 %v1489, %v1492
      %v1494 = vsel %vm821, %v1484, %v1493
      %v1503 = vunpack.c.l.b16 %v1364
      %v1504 = vunpack.c.l.b16 %v1365
      %v1505 = vunpack.c.l.b16 %v1366
      %v1506 = vunpack.c.l.b16 %v1367
      %v1507 = vunpack.c.l.b16 %v1368
      %v1508 = vunpack.c.l.b16 %v1369
      %v1509 = vunpack.c.l.b16 %v1370
      %v1510 = vunpack.c.l.b16 %v1371
      %v1511 = vpack.c.b16 %v1504, %v1503
      %v1512 = vpack.c.b16 %v1506, %v1505
      %v1513 = vpack.c.b16 %v1508, %v1507
      %v1514 = vpack.c.b16 %v1510, %v1509
      %v1520 = vsel %vm688, %v1431, 0
      %v1523 = vsel %vm688, %v1440, 0
      %v1526 = vsel %vm688, %v1449, 0
      %v1529 = vsel %vm688, %v1458, 0
      %v1532 = vsel %vm688, %v1467, 0
      %v1535 = vsel %vm688, %v1476, 0
      %v1538 = vsel %vm688, %v1485, 0
      %v1541 = vsel %vm688, %v1494, 0
      %1543 = vmatprep.subr.bf16.mxu0 0
      %1544 = vmatpush1.bf16.msra.mxu0 0
      %1545 = vmatprep.subr.bf16.mxu0 0
      %1546 = vmatpush1.bf16.msra.mxu0 0
      %1547 = vmatprep.subr.bf16.mxu0 0
      %1548 = vmatpush1.bf16.msra.mxu0 0
      %1549 = vmatprep.subr.bf16.mxu0 0
      %1550 = vmatpush1.bf16.msra.mxu0 0
      %1551 = vmatprep.subr.bf16.mxu0 0
      %1552 = vmatpush1.bf16.msra.mxu0 %v1514
      %1553 = vmatprep.subr.bf16.mxu0 0
      %1554 = vmatpush1.bf16.msra.mxu0 %v1513
      %1555 = vmatprep.subr.bf16.mxu0 0
      %1556 = vmatpush1.bf16.msra.mxu0 %v1512
      %1557 = vmatprep.subr.bf16.mxu0 0
      %1558 = vmatpush1.bf16.msra.mxu0 %v1511
      %1559 = vmatprep.subr.bf16.mxu0 0
      %1560 = vmatpush2.bf16.msra.mxu0 0
      %1561 = vmatprep.subr.bf16.mxu0 0
      %1562 = vmatpush2.bf16.msra.mxu0 0
      %1563 = vmatprep.subr.bf16.mxu0 0
      %1564 = vmatpush2.bf16.msra.mxu0 0
      %1565 = vmatprep.subr.bf16.mxu0 0
      %1566 = vmatpush2.bf16.msra.mxu0 0
      %1567 = vmatprep.subr.bf16.mxu0 0
      %1568 = vmatpush2.bf16.msra.mxu0 0
      %1569 = vmatprep.subr.bf16.mxu0 0
      %1570 = vmatpush2.bf16.msra.mxu0 0
      %1571 = vmatprep.subr.bf16.mxu0 0
      %1572 = vmatpush2.bf16.msra.mxu0 0
      %1573 = vmatprep.subr.bf16.mxu0 0
      %1574 = vmatpush2.bf16.msra.mxu0 0
      %1575 = vmatprep.mubr.bf16.mxu0 0
      %1576 = vmatmul.mubr.bf16.gmra.mxu0 %v1520
      %v1577 = vpop.f32.mrf.mxu0
      %v1578 = vadd.f32 0.0, %v1577
      %v1579 = vpop.f32.mrf.mxu0
      %v1580 = vpop.f32.mrf.mxu0
      %v1581 = vadd.f32 0.0, %v1580
      %v1582 = vpop.f32.mrf.mxu0
      %1583 = vmatprep.mubr.bf16.mxu0 0
      %1584 = vmatmul.mubr.bf16.gmra.mxu0 %v1523
      %v1585 = vpop.f32.mrf.mxu0
      %v1586 = vadd.f32 0.0, %v1585
      %v1587 = vpop.f32.mrf.mxu0
      %v1588 = vpop.f32.mrf.mxu0
      %v1589 = vadd.f32 0.0, %v1588
      %v1590 = vpop.f32.mrf.mxu0
      %1591 = vmatprep.mubr.bf16.mxu0 0
      %1592 = vmatmul.mubr.bf16.gmra.mxu0 %v1526
      %v1593 = vpop.f32.mrf.mxu0
      %v1594 = vadd.f32 0.0, %v1593
      %v1595 = vpop.f32.mrf.mxu0
      %v1596 = vpop.f32.mrf.mxu0
      %v1597 = vadd.f32 0.0, %v1596
      %v1598 = vpop.f32.mrf.mxu0
      %1599 = vmatprep.mubr.bf16.mxu0 0
      %1600 = vmatmul.mubr.bf16.gmra.mxu0 %v1529
      %v1601 = vpop.f32.mrf.mxu0
      %v1602 = vadd.f32 0.0, %v1601
      %v1603 = vpop.f32.mrf.mxu0
      %v1604 = vpop.f32.mrf.mxu0
      %v1605 = vadd.f32 0.0, %v1604
      %v1606 = vpop.f32.mrf.mxu0
      %1607 = vmatprep.mubr.bf16.mxu0 0
      %1608 = vmatmul.mubr.bf16.gmra.mxu0 %v1532
      %v1609 = vpop.f32.mrf.mxu0
      %v1610 = vadd.f32 0.0, %v1609
      %v1611 = vpop.f32.mrf.mxu0
      %v1612 = vpop.f32.mrf.mxu0
      %v1613 = vadd.f32 0.0, %v1612
      %v1614 = vpop.f32.mrf.mxu0
      %1615 = vmatprep.mubr.bf16.mxu0 0
      %1616 = vmatmul.mubr.bf16.gmra.mxu0 %v1535
      %v1617 = vpop.f32.mrf.mxu0
      %v1618 = vadd.f32 0.0, %v1617
      %v1619 = vpop.f32.mrf.mxu0
      %v1620 = vpop.f32.mrf.mxu0
      %v1621 = vadd.f32 0.0, %v1620
      %v1622 = vpop.f32.mrf.mxu0
      %1623 = vmatprep.mubr.bf16.mxu0 0
      %1624 = vmatmul.mubr.bf16.gmra.mxu0 %v1538
      %v1625 = vpop.f32.mrf.mxu0
      %v1626 = vadd.f32 0.0, %v1625
      %v1627 = vpop.f32.mrf.mxu0
      %v1628 = vpop.f32.mrf.mxu0
      %v1629 = vadd.f32 0.0, %v1628
      %v1630 = vpop.f32.mrf.mxu0
      %1631 = vmatprep.mubr.bf16.mxu0 0
      %1632 = vmatmul.mubr.bf16.gmra.mxu0 %v1541
      %v1633 = vpop.f32.mrf.mxu0
      %v1634 = vadd.f32 0.0, %v1633
      %v1635 = vpop.f32.mrf.mxu0
      %v1636 = vpop.f32.mrf.mxu0
      %v1637 = vadd.f32 0.0, %v1636
      %v1638 = vpop.f32.mrf.mxu0
      %1639 = vdwg.mxu0
      %v1640 = vadd.f32 %v1330, %v1578
      %v1641 = vadd.f32 %v1331, %v1581
      %v1642 = vadd.f32 %v1332, %v1586
      %v1643 = vadd.f32 %v1333, %v1589
      %v1644 = vadd.f32 %v1334, %v1594
      %v1645 = vadd.f32 %v1335, %v1597
      %v1646 = vadd.f32 %v1336, %v1602
      %v1647 = vadd.f32 %v1337, %v1605
      %v1648 = vadd.f32 %v1338, %v1610
      %v1649 = vadd.f32 %v1339, %v1613
      %v1650 = vadd.f32 %v1340, %v1618
      %v1651 = vadd.f32 %v1341, %v1621
      %v1652 = vadd.f32 %v1342, %v1626
      %v1653 = vadd.f32 %v1343, %v1629
      %v1654 = vadd.f32 %v1344, %v1634
      %v1655 = vadd.f32 %v1345, %v1637
      %s1656 = scalar_lea.vmem %s363, 128
      %v1657 = vld [vmem:[%s1656] sm:$0xf]
      %v1658 = vld [vmem:[%s1656 + $0x4] sm:$0xf]
      %v1659 = vld [vmem:[%s1656 + $0x8] sm:$0xf]
      %v1660 = vld [vmem:[%s1656 + $0xc] sm:$0xf]
      %v1661 = vld [vmem:[%s1656 + $0x10] sm:$0xf]
      %v1662 = vld [vmem:[%s1656 + $0x14] sm:$0xf]
      %v1663 = vld [vmem:[%s1656 + $0x18] sm:$0xf]
      %v1664 = vld [vmem:[%s1656 + $0x1c] sm:$0xf]
      %v1665 = vpack.c.b16 %v1391, %v1390
      %v1666 = vpack.c.b16 %v1393, %v1392
      %v1667 = vpack.c.b16 %v1395, %v1394
      %v1668 = vpack.c.b16 %v1397, %v1396
      %v1669 = vpack.c.b16 %v1399, %v1398
      %v1670 = vpack.c.b16 %v1401, %v1400
      %v1671 = vpack.c.b16 %v1403, %v1402
      %v1672 = vpack.c.b16 %v1405, %v1404
      %v1681 = vunpack.c.l.b16 %v1657
      %v1682 = vunpack.c.l.b16 %v1658
      %v1683 = vunpack.c.l.b16 %v1659
      %v1684 = vunpack.c.l.b16 %v1660
      %v1685 = vunpack.c.l.b16 %v1661
      %v1686 = vunpack.c.l.b16 %v1662
      %v1687 = vunpack.c.l.b16 %v1663
      %v1688 = vunpack.c.l.b16 %v1664
      %v1689 = vpack.c.b16 %v1682, %v1681
      %v1690 = vpack.c.b16 %v1684, %v1683
      %v1691 = vpack.c.b16 %v1686, %v1685
      %v1692 = vpack.c.b16 %v1688, %v1687
      %v1698 = vsel %vm688, %v1665, 0
      %v1701 = vsel %vm688, %v1666, 0
      %v1704 = vsel %vm688, %v1667, 0
      %v1707 = vsel %vm688, %v1668, 0
      %v1710 = vsel %vm688, %v1669, 0
      %v1713 = vsel %vm688, %v1670, 0
      %v1716 = vsel %vm688, %v1671, 0
      %v1719 = vsel %vm688, %v1672, 0
      %1721 = vmatprep.subr.bf16.mxu0 0
      %1722 = vmatpush1.bf16.msra.mxu0 0
      %1723 = vmatprep.subr.bf16.mxu0 0
      %1724 = vmatpush1.bf16.msra.mxu0 0
      %1725 = vmatprep.subr.bf16.mxu0 0
      %1726 = vmatpush1.bf16.msra.mxu0 0
      %1727 = vmatprep.subr.bf16.mxu0 0
      %1728 = vmatpush1.bf16.msra.mxu0 0
      %1729 = vmatprep.subr.bf16.mxu0 0
      %1730 = vmatpush1.bf16.msra.mxu0 %v1692
      %1731 = vmatprep.subr.bf16.mxu0 0
      %1732 = vmatpush1.bf16.msra.mxu0 %v1691
      %1733 = vmatprep.subr.bf16.mxu0 0
      %1734 = vmatpush1.bf16.msra.mxu0 %v1690
      %1735 = vmatprep.subr.bf16.mxu0 0
      %1736 = vmatpush1.bf16.msra.mxu0 %v1689
      %1737 = vmatprep.subr.bf16.mxu0 0
      %1738 = vmatpush2.bf16.msra.mxu0 0
      %1739 = vmatprep.subr.bf16.mxu0 0
      %1740 = vmatpush2.bf16.msra.mxu0 0
      %1741 = vmatprep.subr.bf16.mxu0 0
      %1742 = vmatpush2.bf16.msra.mxu0 0
      %1743 = vmatprep.subr.bf16.mxu0 0
      %1744 = vmatpush2.bf16.msra.mxu0 0
      %1745 = vmatprep.subr.bf16.mxu0 0
      %1746 = vmatpush2.bf16.msra.mxu0 0
      %1747 = vmatprep.subr.bf16.mxu0 0
      %1748 = vmatpush2.bf16.msra.mxu0 0
      %1749 = vmatprep.subr.bf16.mxu0 0
      %1750 = vmatpush2.bf16.msra.mxu0 0
      %1751 = vmatprep.subr.bf16.mxu0 0
      %1752 = vmatpush2.bf16.msra.mxu0 0
      %1753 = vmatprep.mubr.bf16.mxu0 0
      %1754 = vmatmul.mubr.bf16.gmra.mxu0 %v1698
      %v1755 = vpop.f32.mrf.mxu0
      %v1756 = vadd.f32 0.0, %v1755
      %v1757 = vpop.f32.mrf.mxu0
      %v1758 = vpop.f32.mrf.mxu0
      %v1759 = vadd.f32 0.0, %v1758
      %v1760 = vpop.f32.mrf.mxu0
      %1761 = vmatprep.mubr.bf16.mxu0 0
      %1762 = vmatmul.mubr.bf16.gmra.mxu0 %v1701
      %v1763 = vpop.f32.mrf.mxu0
      %v1764 = vadd.f32 0.0, %v1763
      %v1765 = vpop.f32.mrf.mxu0
      %v1766 = vpop.f32.mrf.mxu0
      %v1767 = vadd.f32 0.0, %v1766
      %v1768 = vpop.f32.mrf.mxu0
      %1769 = vmatprep.mubr.bf16.mxu0 0
      %1770 = vmatmul.mubr.bf16.gmra.mxu0 %v1704
      %v1771 = vpop.f32.mrf.mxu0
      %v1772 = vadd.f32 0.0, %v1771
      %v1773 = vpop.f32.mrf.mxu0
      %v1774 = vpop.f32.mrf.mxu0
      %v1775 = vadd.f32 0.0, %v1774
      %v1776 = vpop.f32.mrf.mxu0
      %1777 = vmatprep.mubr.bf16.mxu0 0
      %1778 = vmatmul.mubr.bf16.gmra.mxu0 %v1707
      %v1779 = vpop.f32.mrf.mxu0
      %v1780 = vadd.f32 0.0, %v1779
      %v1781 = vpop.f32.mrf.mxu0
      %v1782 = vpop.f32.mrf.mxu0
      %v1783 = vadd.f32 0.0, %v1782
      %v1784 = vpop.f32.mrf.mxu0
      %1785 = vmatprep.mubr.bf16.mxu0 0
      %1786 = vmatmul.mubr.bf16.gmra.mxu0 %v1710
      %v1787 = vpop.f32.mrf.mxu0
      %v1788 = vadd.f32 0.0, %v1787
      %v1789 = vpop.f32.mrf.mxu0
      %v1790 = vpop.f32.mrf.mxu0
      %v1791 = vadd.f32 0.0, %v1790
      %v1792 = vpop.f32.mrf.mxu0
      %1793 = vmatprep.mubr.bf16.mxu0 0
      %1794 = vmatmul.mubr.bf16.gmra.mxu0 %v1713
      %v1795 = vpop.f32.mrf.mxu0
      %v1796 = vadd.f32 0.0, %v1795
      %v1797 = vpop.f32.mrf.mxu0
      %v1798 = vpop.f32.mrf.mxu0
      %v1799 = vadd.f32 0.0, %v1798
      %v1800 = vpop.f32.mrf.mxu0
      %1801 = vmatprep.mubr.bf16.mxu0 0
      %1802 = vmatmul.mubr.bf16.gmra.mxu0 %v1716
      %v1803 = vpop.f32.mrf.mxu0
      %v1804 = vadd.f32 0.0, %v1803
      %v1805 = vpop.f32.mrf.mxu0
      %v1806 = vpop.f32.mrf.mxu0
      %v1807 = vadd.f32 0.0, %v1806
      %v1808 = vpop.f32.mrf.mxu0
      %1809 = vmatprep.mubr.bf16.mxu0 0
      %1810 = vmatmul.mubr.bf16.gmra.mxu0 %v1719
      %v1811 = vpop.f32.mrf.mxu0
      %v1812 = vadd.f32 0.0, %v1811
      %v1813 = vpop.f32.mrf.mxu0
      %v1814 = vpop.f32.mrf.mxu0
      %v1815 = vadd.f32 0.0, %v1814
      %v1816 = vpop.f32.mrf.mxu0
      %1817 = vdwg.mxu0
      %v1818 = vadd.f32 %v1640, %v1756
      %v1819 = vadd.f32 %v1641, %v1759
      %v1820 = vadd.f32 %v1642, %v1764
      %v1821 = vadd.f32 %v1643, %v1767
      %v1822 = vadd.f32 %v1644, %v1772
      %v1823 = vadd.f32 %v1645, %v1775
      %v1824 = vadd.f32 %v1646, %v1780
      %v1825 = vadd.f32 %v1647, %v1783
      %v1826 = vadd.f32 %v1648, %v1788
      %v1827 = vadd.f32 %v1649, %v1791
      %v1828 = vadd.f32 %v1650, %v1796
      %v1829 = vadd.f32 %v1651, %v1799
      %v1830 = vadd.f32 %v1652, %v1804
      %v1831 = vadd.f32 %v1653, %v1807
      %v1832 = vadd.f32 %v1654, %v1812
      %v1833 = vadd.f32 %v1655, %v1815
      %v1834 = vld [vmem:[%s355 + $0x10] sm:$0xf]
      %v1835 = vld [vmem:[%s355 + $0x14] sm:$0xf]
      %v1836 = vld [vmem:[%s355 + $0x18] sm:$0xf]
      %v1837 = vld [vmem:[%s355 + $0x1c] sm:$0xf]
      %v1838 = vld [vmem:[%s355 + $0x20] sm:$0xf]
      %v1839 = vld [vmem:[%s355 + $0x24] sm:$0xf]
      %v1840 = vld [vmem:[%s355 + $0x28] sm:$0xf]
      %v1841 = vld [vmem:[%s355 + $0x2c] sm:$0xf]
      %v1842 = vld [vmem:[%s355 + $0x30] sm:$0xf]
      %v1843 = vld [vmem:[%s355 + $0x34] sm:$0xf]
      %v1844 = vld [vmem:[%s355 + $0x38] sm:$0xf]
      %v1845 = vld [vmem:[%s355 + $0x3c] sm:$0xf]
      %v1846 = vld [vmem:[%s355 + $0x40] sm:$0xf]
      %v1847 = vld [vmem:[%s355 + $0x44] sm:$0xf]
      %v1848 = vld [vmem:[%s355 + $0x48] sm:$0xf]
      %v1849 = vld [vmem:[%s355 + $0x4c] sm:$0xf]
      %v1850 = vld [vmem:[%s355 + $0x50] sm:$0x1]
      %s1851 = scalar_lea.vmem %s363, 160
      %v1852 = vld [vmem:[%s1851] sm:$0xf]
      %v1853 = vld [vmem:[%s1851 + $0x4] sm:$0xf]
      %v1854 = vld [vmem:[%s1851 + $0x8] sm:$0xf]
      %v1855 = vld [vmem:[%s1851 + $0xc] sm:$0xf]
      %v1856 = vld [vmem:[%s1851 + $0x10] sm:$0xf]
      %v1857 = vld [vmem:[%s1851 + $0x14] sm:$0xf]
      %v1858 = vld [vmem:[%s1851 + $0x18] sm:$0xf]
      %v1859 = vld [vmem:[%s1851 + $0x1c] sm:$0xf]
      %v1877 = vunpack.c.l.b16 %v1834
      %v1878 = vunpack.c.l.b16 %v1835
      %v1879 = vunpack.c.l.b16 %v1836
      %v1880 = vunpack.c.l.b16 %v1837
      %v1881 = vunpack.c.l.b16 %v1838
      %v1882 = vunpack.c.l.b16 %v1839
      %v1883 = vunpack.c.l.b16 %v1840
      %v1884 = vunpack.c.l.b16 %v1841
      %v1885 = vunpack.c.l.b16 %v1842
      %v1886 = vunpack.c.l.b16 %v1843
      %v1887 = vunpack.c.l.b16 %v1844
      %v1888 = vunpack.c.l.b16 %v1845
      %v1889 = vunpack.c.l.b16 %v1846
      %v1890 = vunpack.c.l.b16 %v1847
      %v1891 = vunpack.c.l.b16 %v1848
      %v1892 = vunpack.c.l.b16 %v1849
      %v1893 = vunpack.c.l.b16 %v1850
      %v1894 = vpack.c.b16 %v1878, %v1877
      %v1895 = vpack.c.b16 %v1880, %v1879
      %v1896 = vpack.c.b16 %v1882, %v1881
      %v1897 = vpack.c.b16 %v1884, %v1883
      %v1898 = vpack.c.b16 %v1886, %v1885
      %v1899 = vpack.c.b16 %v1888, %v1887
      %v1900 = vpack.c.b16 %v1890, %v1889
      %v1901 = vpack.c.b16 %v1892, %v1891
      %v1902 = vpack.c.b16 %v1893, %v1893
      %v1904 = vshrl.u32 %v1894, 16
      %v1906 = vshll.u32 %v1894, 16
      %v1908 = vrot.slane %v1906, 1
      %v1909 = vor.u32 %v1904, %v1908
      %v1911 = vshll.u32 %v1895, 16
      %v1913 = vrot.slane %v1911, 1
      %v1914 = vsel %vm1116, %v1909, %v1913
      %v1915 = vshrl.u32 %v1895, 16
      %v1917 = vor.u32 %v1915, %v1913
      %v1919 = vshll.u32 %v1896, 16
      %v1921 = vrot.slane %v1919, 1
      %v1922 = vsel %vm1116, %v1917, %v1921
      %v1923 = vshrl.u32 %v1896, 16
      %v1925 = vor.u32 %v1923, %v1921
      %v1927 = vshll.u32 %v1897, 16
      %v1929 = vrot.slane %v1927, 1
      %v1930 = vsel %vm1116, %v1925, %v1929
      %v1931 = vshrl.u32 %v1897, 16
      %v1933 = vor.u32 %v1931, %v1929
      %v1935 = vshll.u32 %v1898, 16
      %v1937 = vrot.slane %v1935, 1
      %v1938 = vsel %vm1116, %v1933, %v1937
      %v1939 = vshrl.u32 %v1898, 16
      %v1941 = vor.u32 %v1939, %v1937
      %v1943 = vshll.u32 %v1899, 16
      %v1945 = vrot.slane %v1943, 1
      %v1946 = vsel %vm1116, %v1941, %v1945
      %v1947 = vshrl.u32 %v1899, 16
      %v1949 = vor.u32 %v1947, %v1945
      %v1951 = vshll.u32 %v1900, 16
      %v1953 = vrot.slane %v1951, 1
      %v1954 = vsel %vm1116, %v1949, %v1953
      %v1955 = vshrl.u32 %v1900, 16
      %v1957 = vor.u32 %v1955, %v1953
      %v1959 = vshll.u32 %v1901, 16
      %v1961 = vrot.slane %v1959, 1
      %v1962 = vsel %vm1116, %v1957, %v1961
      %v1963 = vshrl.u32 %v1901, 16
      %v1965 = vor.u32 %v1963, %v1961
      %v1967 = vshll.u32 %v1902, 16
      %v1969 = vrot.slane %v1967, 1
      %v1970 = vsel %vm1116, %v1965, %v1969
      %v1979 = vunpack.c.l.b16 %v1852
      %v1980 = vunpack.c.l.b16 %v1853
      %v1981 = vunpack.c.l.b16 %v1854
      %v1982 = vunpack.c.l.b16 %v1855
      %v1983 = vunpack.c.l.b16 %v1856
      %v1984 = vunpack.c.l.b16 %v1857
      %v1985 = vunpack.c.l.b16 %v1858
      %v1986 = vunpack.c.l.b16 %v1859
      %v1987 = vpack.c.b16 %v1980, %v1979
      %v1988 = vpack.c.b16 %v1982, %v1981
      %v1989 = vpack.c.b16 %v1984, %v1983
      %v1990 = vpack.c.b16 %v1986, %v1985
      %v1996 = vsel %vm688, %v1914, 0
      %v1999 = vsel %vm688, %v1922, 0
      %v2002 = vsel %vm688, %v1930, 0
      %v2005 = vsel %vm688, %v1938, 0
      %v2008 = vsel %vm688, %v1946, 0
      %v2011 = vsel %vm688, %v1954, 0
      %v2014 = vsel %vm688, %v1962, 0
      %v2017 = vsel %vm688, %v1970, 0
      %2019 = vmatprep.subr.bf16.mxu0 0
      %2020 = vmatpush1.bf16.msra.mxu0 0
      %2021 = vmatprep.subr.bf16.mxu0 0
      %2022 = vmatpush1.bf16.msra.mxu0 0
      %2023 = vmatprep.subr.bf16.mxu0 0
      %2024 = vmatpush1.bf16.msra.mxu0 0
      %2025 = vmatprep.subr.bf16.mxu0 0
      %2026 = vmatpush1.bf16.msra.mxu0 0
      %2027 = vmatprep.subr.bf16.mxu0 0
      %2028 = vmatpush1.bf16.msra.mxu0 %v1990
      %2029 = vmatprep.subr.bf16.mxu0 0
      %2030 = vmatpush1.bf16.msra.mxu0 %v1989
      %2031 = vmatprep.subr.bf16.mxu0 0
      %2032 = vmatpush1.bf16.msra.mxu0 %v1988
      %2033 = vmatprep.subr.bf16.mxu0 0
      %2034 = vmatpush1.bf16.msra.mxu0 %v1987
      %2035 = vmatprep.subr.bf16.mxu0 0
      %2036 = vmatpush2.bf16.msra.mxu0 0
      %2037 = vmatprep.subr.bf16.mxu0 0
      %2038 = vmatpush2.bf16.msra.mxu0 0
      %2039 = vmatprep.subr.bf16.mxu0 0
      %2040 = vmatpush2.bf16.msra.mxu0 0
      %2041 = vmatprep.subr.bf16.mxu0 0
      %2042 = vmatpush2.bf16.msra.mxu0 0
      %2043 = vmatprep.subr.bf16.mxu0 0
      %2044 = vmatpush2.bf16.msra.mxu0 0
      %2045 = vmatprep.subr.bf16.mxu0 0
      %2046 = vmatpush2.bf16.msra.mxu0 0
      %2047 = vmatprep.subr.bf16.mxu0 0
      %2048 = vmatpush2.bf16.msra.mxu0 0
      %2049 = vmatprep.subr.bf16.mxu0 0
      %2050 = vmatpush2.bf16.msra.mxu0 0
      %2051 = vmatprep.mubr.bf16.mxu0 0
      %2052 = vmatmul.mubr.bf16.gmra.mxu0 %v1996
      %v2053 = vpop.f32.mrf.mxu0
      %v2054 = vadd.f32 0.0, %v2053
      %v2055 = vpop.f32.mrf.mxu0
      %v2056 = vpop.f32.mrf.mxu0
      %v2057 = vadd.f32 0.0, %v2056
      %v2058 = vpop.f32.mrf.mxu0
      %2059 = vmatprep.mubr.bf16.mxu0 0
      %2060 = vmatmul.mubr.bf16.gmra.mxu0 %v1999
      %v2061 = vpop.f32.mrf.mxu0
      %v2062 = vadd.f32 0.0, %v2061
      %v2063 = vpop.f32.mrf.mxu0
      %v2064 = vpop.f32.mrf.mxu0
      %v2065 = vadd.f32 0.0, %v2064
      %v2066 = vpop.f32.mrf.mxu0
      %2067 = vmatprep.mubr.bf16.mxu0 0
      %2068 = vmatmul.mubr.bf16.gmra.mxu0 %v2002
      %v2069 = vpop.f32.mrf.mxu0
      %v2070 = vadd.f32 0.0, %v2069
      %v2071 = vpop.f32.mrf.mxu0
      %v2072 = vpop.f32.mrf.mxu0
      %v2073 = vadd.f32 0.0, %v2072
      %v2074 = vpop.f32.mrf.mxu0
      %2075 = vmatprep.mubr.bf16.mxu0 0
      %2076 = vmatmul.mubr.bf16.gmra.mxu0 %v2005
      %v2077 = vpop.f32.mrf.mxu0
      %v2078 = vadd.f32 0.0, %v2077
      %v2079 = vpop.f32.mrf.mxu0
      %v2080 = vpop.f32.mrf.mxu0
      %v2081 = vadd.f32 0.0, %v2080
      %v2082 = vpop.f32.mrf.mxu0
      %2083 = vmatprep.mubr.bf16.mxu0 0
      %2084 = vmatmul.mubr.bf16.gmra.mxu0 %v2008
      %v2085 = vpop.f32.mrf.mxu0
      %v2086 = vadd.f32 0.0, %v2085
      %v2087 = vpop.f32.mrf.mxu0
      %v2088 = vpop.f32.mrf.mxu0
      %v2089 = vadd.f32 0.0, %v2088
      %v2090 = vpop.f32.mrf.mxu0
      %2091 = vmatprep.mubr.bf16.mxu0 0
      %2092 = vmatmul.mubr.bf16.gmra.mxu0 %v2011
      %v2093 = vpop.f32.mrf.mxu0
      %v2094 = vadd.f32 0.0, %v2093
      %v2095 = vpop.f32.mrf.mxu0
      %v2096 = vpop.f32.mrf.mxu0
      %v2097 = vadd.f32 0.0, %v2096
      %v2098 = vpop.f32.mrf.mxu0
      %2099 = vmatprep.mubr.bf16.mxu0 0
      %2100 = vmatmul.mubr.bf16.gmra.mxu0 %v2014
      %v2101 = vpop.f32.mrf.mxu0
      %v2102 = vadd.f32 0.0, %v2101
      %v2103 = vpop.f32.mrf.mxu0
      %v2104 = vpop.f32.mrf.mxu0
      %v2105 = vadd.f32 0.0, %v2104
      %v2106 = vpop.f32.mrf.mxu0
      %2107 = vmatprep.mubr.bf16.mxu0 0
      %2108 = vmatmul.mubr.bf16.gmra.mxu0 %v2017
      %v2109 = vpop.f32.mrf.mxu0
      %v2110 = vadd.f32 0.0, %v2109
      %v2111 = vpop.f32.mrf.mxu0
      %v2112 = vpop.f32.mrf.mxu0
      %v2113 = vadd.f32 0.0, %v2112
      %v2114 = vpop.f32.mrf.mxu0
      %2115 = vdwg.mxu0
      %v2116 = vadd.f32 %v1818, %v2054
      %v2117 = vadd.f32 %v1819, %v2057
      %v2118 = vadd.f32 %v1820, %v2062
      %v2119 = vadd.f32 %v1821, %v2065
      %v2120 = vadd.f32 %v1822, %v2070
      %v2121 = vadd.f32 %v1823, %v2073
      %v2122 = vadd.f32 %v1824, %v2078
      %v2123 = vadd.f32 %v1825, %v2081
      %v2124 = vadd.f32 %v1826, %v2086
      %v2125 = vadd.f32 %v1827, %v2089
      %v2126 = vadd.f32 %v1828, %v2094
      %v2127 = vadd.f32 %v1829, %v2097
      %v2128 = vadd.f32 %v1830, %v2102
      %v2129 = vadd.f32 %v1831, %v2105
      %v2130 = vadd.f32 %v1832, %v2110
      %v2131 = vadd.f32 %v1833, %v2113
      %v2132 = vld [vmem:[%s355 + $0x14] sm:$0x8]
      %v2133 = vld [vmem:[%s355 + $0x18] sm:$0xf]
      %v2134 = vld [vmem:[%s355 + $0x1c] sm:$0xf]
      %v2135 = vld [vmem:[%s355 + $0x20] sm:$0xf]
      %v2136 = vld [vmem:[%s355 + $0x24] sm:$0xf]
      %v2137 = vld [vmem:[%s355 + $0x28] sm:$0xf]
      %v2138 = vld [vmem:[%s355 + $0x2c] sm:$0xf]
      %v2139 = vld [vmem:[%s355 + $0x30] sm:$0xf]
      %v2140 = vld [vmem:[%s355 + $0x34] sm:$0xf]
      %v2141 = vld [vmem:[%s355 + $0x38] sm:$0xf]
      %v2142 = vld [vmem:[%s355 + $0x3c] sm:$0xf]
      %v2143 = vld [vmem:[%s355 + $0x40] sm:$0xf]
      %v2144 = vld [vmem:[%s355 + $0x44] sm:$0xf]
      %v2145 = vld [vmem:[%s355 + $0x48] sm:$0xf]
      %v2146 = vld [vmem:[%s355 + $0x4c] sm:$0xf]
      %v2147 = vld [vmem:[%s355 + $0x50] sm:$0xf]
      %v2148 = vld [vmem:[%s355 + $0x54] sm:$0xf]
      %s2149 = scalar_lea.vmem %s363, 192
      %v2150 = vld [vmem:[%s2149] sm:$0xf]
      %v2151 = vld [vmem:[%s2149 + $0x4] sm:$0xf]
      %v2152 = vld [vmem:[%s2149 + $0x8] sm:$0xf]
      %v2153 = vld [vmem:[%s2149 + $0xc] sm:$0xf]
      %v2154 = vld [vmem:[%s2149 + $0x10] sm:$0xf]
      %v2155 = vld [vmem:[%s2149 + $0x14] sm:$0xf]
      %v2156 = vld [vmem:[%s2149 + $0x18] sm:$0xf]
      %v2157 = vld [vmem:[%s2149 + $0x1c] sm:$0xf]
      %v2175 = vunpack.c.l.b16 %v2132
      %v2176 = vunpack.c.l.b16 %v2133
      %v2177 = vunpack.c.l.b16 %v2134
      %v2178 = vunpack.c.l.b16 %v2135
      %v2179 = vunpack.c.l.b16 %v2136
      %v2180 = vunpack.c.l.b16 %v2137
      %v2181 = vunpack.c.l.b16 %v2138
      %v2182 = vunpack.c.l.b16 %v2139
      %v2183 = vunpack.c.l.b16 %v2140
      %v2184 = vunpack.c.l.b16 %v2141
      %v2185 = vunpack.c.l.b16 %v2142
      %v2186 = vunpack.c.l.b16 %v2143
      %v2187 = vunpack.c.l.b16 %v2144
      %v2188 = vunpack.c.l.b16 %v2145
      %v2189 = vunpack.c.l.b16 %v2146
      %v2190 = vunpack.c.l.b16 %v2147
      %v2191 = vunpack.c.l.b16 %v2148
      %v2192 = vpack.c.b16 %v2176, %v2175
      %v2193 = vpack.c.b16 %v2178, %v2177
      %v2194 = vpack.c.b16 %v2180, %v2179
      %v2195 = vpack.c.b16 %v2182, %v2181
      %v2196 = vpack.c.b16 %v2184, %v2183
      %v2197 = vpack.c.b16 %v2186, %v2185
      %v2198 = vpack.c.b16 %v2188, %v2187
      %v2199 = vpack.c.b16 %v2190, %v2189
      %v2200 = vpack.c.b16 %v2191, %v2191
      %v2202 = vshrl.u32 %v2192, 16
      %v2204 = vrot.slane %v2202, 3
      %v2205 = vshll.u32 %v2192, 16
      %v2207 = vrot.slane %v2205, 4
      %v2208 = vor.u32 %v2204, %v2207
      %v2210 = vshrl.u32 %v2193, 16
      %v2212 = vrot.slane %v2210, 3
      %v2213 = vshll.u32 %v2193, 16
      %v2215 = vrot.slane %v2213, 4
      %v2216 = vor.u32 %v2212, %v2215
      %v2217 = vsel %vm821, %v2208, %v2216
      %v2219 = vshrl.u32 %v2194, 16
      %v2221 = vrot.slane %v2219, 3
      %v2222 = vshll.u32 %v2194, 16
      %v2224 = vrot.slane %v2222, 4
      %v2225 = vor.u32 %v2221, %v2224
      %v2226 = vsel %vm821, %v2216, %v2225
      %v2228 = vshrl.u32 %v2195, 16
      %v2230 = vrot.slane %v2228, 3
      %v2231 = vshll.u32 %v2195, 16
      %v2233 = vrot.slane %v2231, 4
      %v2234 = vor.u32 %v2230, %v2233
      %v2235 = vsel %vm821, %v2225, %v2234
      %v2237 = vshrl.u32 %v2196, 16
      %v2239 = vrot.slane %v2237, 3
      %v2240 = vshll.u32 %v2196, 16
      %v2242 = vrot.slane %v2240, 4
      %v2243 = vor.u32 %v2239, %v2242
      %v2244 = vsel %vm821, %v2234, %v2243
      %v2246 = vshrl.u32 %v2197, 16
      %v2248 = vrot.slane %v2246, 3
      %v2249 = vshll.u32 %v2197, 16
      %v2251 = vrot.slane %v2249, 4
      %v2252 = vor.u32 %v2248, %v2251
      %v2253 = vsel %vm821, %v2243, %v2252
      %v2255 = vshrl.u32 %v2198, 16
      %v2257 = vrot.slane %v2255, 3
      %v2258 = vshll.u32 %v2198, 16
      %v2260 = vrot.slane %v2258, 4
      %v2261 = vor.u32 %v2257, %v2260
      %v2262 = vsel %vm821, %v2252, %v2261
      %v2264 = vshrl.u32 %v2199, 16
      %v2266 = vrot.slane %v2264, 3
      %v2267 = vshll.u32 %v2199, 16
      %v2269 = vrot.slane %v2267, 4
      %v2270 = vor.u32 %v2266, %v2269
      %v2271 = vsel %vm821, %v2261, %v2270
      %v2273 = vshrl.u32 %v2200, 16
      %v2275 = vrot.slane %v2273, 3
      %v2276 = vshll.u32 %v2200, 16
      %v2278 = vrot.slane %v2276, 4
      %v2279 = vor.u32 %v2275, %v2278
      %v2280 = vsel %vm821, %v2270, %v2279
      %v2289 = vunpack.c.l.b16 %v2150
      %v2290 = vunpack.c.l.b16 %v2151
      %v2291 = vunpack.c.l.b16 %v2152
      %v2292 = vunpack.c.l.b16 %v2153
      %v2293 = vunpack.c.l.b16 %v2154
      %v2294 = vunpack.c.l.b16 %v2155
      %v2295 = vunpack.c.l.b16 %v2156
      %v2296 = vunpack.c.l.b16 %v2157
      %v2297 = vpack.c.b16 %v2290, %v2289
      %v2298 = vpack.c.b16 %v2292, %v2291
      %v2299 = vpack.c.b16 %v2294, %v2293
      %v2300 = vpack.c.b16 %v2296, %v2295
      %v2306 = vsel %vm688, %v2217, 0
      %v2309 = vsel %vm688, %v2226, 0
      %v2312 = vsel %vm688, %v2235, 0
      %v2315 = vsel %vm688, %v2244, 0
      %v2318 = vsel %vm688, %v2253, 0
      %v2321 = vsel %vm688, %v2262, 0
      %v2324 = vsel %vm688, %v2271, 0
      %v2327 = vsel %vm688, %v2280, 0
      %2329 = vmatprep.subr.bf16.mxu0 0
      %2330 = vmatpush1.bf16.msra.mxu0 0
      %2331 = vmatprep.subr.bf16.mxu0 0
      %2332 = vmatpush1.bf16.msra.mxu0 0
      %2333 = vmatprep.subr.bf16.mxu0 0
      %2334 = vmatpush1.bf16.msra.mxu0 0
      %2335 = vmatprep.subr.bf16.mxu0 0
      %2336 = vmatpush1.bf16.msra.mxu0 0
      %2337 = vmatprep.subr.bf16.mxu0 0
      %2338 = vmatpush1.bf16.msra.mxu0 %v2300
      %2339 = vmatprep.subr.bf16.mxu0 0
      %2340 = vmatpush1.bf16.msra.mxu0 %v2299
      %2341 = vmatprep.subr.bf16.mxu0 0
      %2342 = vmatpush1.bf16.msra.mxu0 %v2298
      %2343 = vmatprep.subr.bf16.mxu0 0
      %2344 = vmatpush1.bf16.msra.mxu0 %v2297
      %2345 = vmatprep.subr.bf16.mxu0 0
      %2346 = vmatpush2.bf16.msra.mxu0 0
      %2347 = vmatprep.subr.bf16.mxu0 0
      %2348 = vmatpush2.bf16.msra.mxu0 0
      %2349 = vmatprep.subr.bf16.mxu0 0
      %2350 = vmatpush2.bf16.msra.mxu0 0
      %2351 = vmatprep.subr.bf16.mxu0 0
      %2352 = vmatpush2.bf16.msra.mxu0 0
      %2353 = vmatprep.subr.bf16.mxu0 0
      %2354 = vmatpush2.bf16.msra.mxu0 0
      %2355 = vmatprep.subr.bf16.mxu0 0
      %2356 = vmatpush2.bf16.msra.mxu0 0
      %2357 = vmatprep.subr.bf16.mxu0 0
      %2358 = vmatpush2.bf16.msra.mxu0 0
      %2359 = vmatprep.subr.bf16.mxu0 0
      %2360 = vmatpush2.bf16.msra.mxu0 0
      %2361 = vmatprep.mubr.bf16.mxu0 0
      %2362 = vmatmul.mubr.bf16.gmra.mxu0 %v2306
      %v2363 = vpop.f32.mrf.mxu0
      %v2364 = vadd.f32 0.0, %v2363
      %v2365 = vpop.f32.mrf.mxu0
      %v2366 = vpop.f32.mrf.mxu0
      %v2367 = vadd.f32 0.0, %v2366
      %v2368 = vpop.f32.mrf.mxu0
      %2369 = vmatprep.mubr.bf16.mxu0 0
      %2370 = vmatmul.mubr.bf16.gmra.mxu0 %v2309
      %v2371 = vpop.f32.mrf.mxu0
      %v2372 = vadd.f32 0.0, %v2371
      %v2373 = vpop.f32.mrf.mxu0
      %v2374 = vpop.f32.mrf.mxu0
      %v2375 = vadd.f32 0.0, %v2374
      %v2376 = vpop.f32.mrf.mxu0
      %2377 = vmatprep.mubr.bf16.mxu0 0
      %2378 = vmatmul.mubr.bf16.gmra.mxu0 %v2312
      %v2379 = vpop.f32.mrf.mxu0
      %v2380 = vadd.f32 0.0, %v2379
      %v2381 = vpop.f32.mrf.mxu0
      %v2382 = vpop.f32.mrf.mxu0
      %v2383 = vadd.f32 0.0, %v2382
      %v2384 = vpop.f32.mrf.mxu0
      %2385 = vmatprep.mubr.bf16.mxu0 0
      %2386 = vmatmul.mubr.bf16.gmra.mxu0 %v2315
      %v2387 = vpop.f32.mrf.mxu0
      %v2388 = vadd.f32 0.0, %v2387
      %v2389 = vpop.f32.mrf.mxu0
      %v2390 = vpop.f32.mrf.mxu0
      %v2391 = vadd.f32 0.0, %v2390
      %v2392 = vpop.f32.mrf.mxu0
      %2393 = vmatprep.mubr.bf16.mxu0 0
      %2394 = vmatmul.mubr.bf16.gmra.mxu0 %v2318
      %v2395 = vpop.f32.mrf.mxu0
      %v2396 = vadd.f32 0.0, %v2395
      %v2397 = vpop.f32.mrf.mxu0
      %v2398 = vpop.f32.mrf.mxu0
      %v2399 = vadd.f32 0.0, %v2398
      %v2400 = vpop.f32.mrf.mxu0
      %2401 = vmatprep.mubr.bf16.mxu0 0
      %2402 = vmatmul.mubr.bf16.gmra.mxu0 %v2321
      %v2403 = vpop.f32.mrf.mxu0
      %v2404 = vadd.f32 0.0, %v2403
      %v2405 = vpop.f32.mrf.mxu0
      %v2406 = vpop.f32.mrf.mxu0
      %v2407 = vadd.f32 0.0, %v2406
      %v2408 = vpop.f32.mrf.mxu0
      %2409 = vmatprep.mubr.bf16.mxu0 0
      %2410 = vmatmul.mubr.bf16.gmra.mxu0 %v2324
      %v2411 = vpop.f32.mrf.mxu0
      %v2412 = vadd.f32 0.0, %v2411
      %v2413 = vpop.f32.mrf.mxu0
      %v2414 = vpop.f32.mrf.mxu0
      %v2415 = vadd.f32 0.0, %v2414
      %v2416 = vpop.f32.mrf.mxu0
      %2417 = vmatprep.mubr.bf16.mxu0 0
      %2418 = vmatmul.mubr.bf16.gmra.mxu0 %v2327
      %v2419 = vpop.f32.mrf.mxu0
      %v2420 = vadd.f32 0.0, %v2419
      %v2421 = vpop.f32.mrf.mxu0
      %v2422 = vpop.f32.mrf.mxu0
      %v2423 = vadd.f32 0.0, %v2422
      %v2424 = vpop.f32.mrf.mxu0
      %2425 = vdwg.mxu0
      %v2426 = vadd.f32 %v2116, %v2364
      %v2427 = vadd.f32 %v2117, %v2367
      %v2428 = vadd.f32 %v2118, %v2372
      %v2429 = vadd.f32 %v2119, %v2375
      %v2430 = vadd.f32 %v2120, %v2380
      %v2431 = vadd.f32 %v2121, %v2383
      %v2432 = vadd.f32 %v2122, %v2388
      %v2433 = vadd.f32 %v2123, %v2391
      %v2434 = vadd.f32 %v2124, %v2396
      %v2435 = vadd.f32 %v2125, %v2399
      %v2436 = vadd.f32 %v2126, %v2404
      %v2437 = vadd.f32 %v2127, %v2407
      %v2438 = vadd.f32 %v2128, %v2412
      %v2439 = vadd.f32 %v2129, %v2415
      %v2440 = vadd.f32 %v2130, %v2420
      %v2441 = vadd.f32 %v2131, %v2423
      %s2442 = scalar_lea.vmem %s363, 224
      %v2443 = vld [vmem:[%s2442] sm:$0xf]
      %v2444 = vld [vmem:[%s2442 + $0x4] sm:$0xf]
      %v2445 = vld [vmem:[%s2442 + $0x8] sm:$0xf]
      %v2446 = vld [vmem:[%s2442 + $0xc] sm:$0xf]
      %v2447 = vld [vmem:[%s2442 + $0x10] sm:$0xf]
      %v2448 = vld [vmem:[%s2442 + $0x14] sm:$0xf]
      %v2449 = vld [vmem:[%s2442 + $0x18] sm:$0xf]
      %v2450 = vld [vmem:[%s2442 + $0x1c] sm:$0xf]
      %v2451 = vpack.c.b16 %v2177, %v2176
      %v2452 = vpack.c.b16 %v2179, %v2178
      %v2453 = vpack.c.b16 %v2181, %v2180
      %v2454 = vpack.c.b16 %v2183, %v2182
      %v2455 = vpack.c.b16 %v2185, %v2184
      %v2456 = vpack.c.b16 %v2187, %v2186
      %v2457 = vpack.c.b16 %v2189, %v2188
      %v2458 = vpack.c.b16 %v2191, %v2190
      %v2467 = vunpack.c.l.b16 %v2443
      %v2468 = vunpack.c.l.b16 %v2444
      %v2469 = vunpack.c.l.b16 %v2445
      %v2470 = vunpack.c.l.b16 %v2446
      %v2471 = vunpack.c.l.b16 %v2447
      %v2472 = vunpack.c.l.b16 %v2448
      %v2473 = vunpack.c.l.b16 %v2449
      %v2474 = vunpack.c.l.b16 %v2450
      %v2475 = vpack.c.b16 %v2468, %v2467
      %v2476 = vpack.c.b16 %v2470, %v2469
      %v2477 = vpack.c.b16 %v2472, %v2471
      %v2478 = vpack.c.b16 %v2474, %v2473
      %v2484 = vsel %vm688, %v2451, 0
      %v2487 = vsel %vm688, %v2452, 0
      %v2490 = vsel %vm688, %v2453, 0
      %v2493 = vsel %vm688, %v2454, 0
      %v2496 = vsel %vm688, %v2455, 0
      %v2499 = vsel %vm688, %v2456, 0
      %v2502 = vsel %vm688, %v2457, 0
      %v2505 = vsel %vm688, %v2458, 0
      %2507 = vmatprep.subr.bf16.mxu0 0
      %2508 = vmatpush1.bf16.msra.mxu0 0
      %2509 = vmatprep.subr.bf16.mxu0 0
      %2510 = vmatpush1.bf16.msra.mxu0 0
      %2511 = vmatprep.subr.bf16.mxu0 0
      %2512 = vmatpush1.bf16.msra.mxu0 0
      %2513 = vmatprep.subr.bf16.mxu0 0
      %2514 = vmatpush1.bf16.msra.mxu0 0
      %2515 = vmatprep.subr.bf16.mxu0 0
      %2516 = vmatpush1.bf16.msra.mxu0 %v2478
      %2517 = vmatprep.subr.bf16.mxu0 0
      %2518 = vmatpush1.bf16.msra.mxu0 %v2477
      %2519 = vmatprep.subr.bf16.mxu0 0
      %2520 = vmatpush1.bf16.msra.mxu0 %v2476
      %2521 = vmatprep.subr.bf16.mxu0 0
      %2522 = vmatpush1.bf16.msra.mxu0 %v2475
      %2523 = vmatprep.subr.bf16.mxu0 0
      %2524 = vmatpush2.bf16.msra.mxu0 0
      %2525 = vmatprep.subr.bf16.mxu0 0
      %2526 = vmatpush2.bf16.msra.mxu0 0
      %2527 = vmatprep.subr.bf16.mxu0 0
      %2528 = vmatpush2.bf16.msra.mxu0 0
      %2529 = vmatprep.subr.bf16.mxu0 0
      %2530 = vmatpush2.bf16.msra.mxu0 0
      %2531 = vmatprep.subr.bf16.mxu0 0
      %2532 = vmatpush2.bf16.msra.mxu0 0
      %2533 = vmatprep.subr.bf16.mxu0 0
      %2534 = vmatpush2.bf16.msra.mxu0 0
      %2535 = vmatprep.subr.bf16.mxu0 0
      %2536 = vmatpush2.bf16.msra.mxu0 0
      %2537 = vmatprep.subr.bf16.mxu0 0
      %2538 = vmatpush2.bf16.msra.mxu0 0
      %2539 = vmatprep.mubr.bf16.mxu0 0
      %2540 = vmatmul.mubr.bf16.gmra.mxu0 %v2484
      %v2541 = vpop.f32.mrf.mxu0
      %v2542 = vadd.f32 0.0, %v2541
      %v2543 = vpop.f32.mrf.mxu0
      %v2544 = vpop.f32.mrf.mxu0
      %v2545 = vadd.f32 0.0, %v2544
      %v2546 = vpop.f32.mrf.mxu0
      %2547 = vmatprep.mubr.bf16.mxu0 0
      %2548 = vmatmul.mubr.bf16.gmra.mxu0 %v2487
      %v2549 = vpop.f32.mrf.mxu0
      %v2550 = vadd.f32 0.0, %v2549
      %v2551 = vpop.f32.mrf.mxu0
      %v2552 = vpop.f32.mrf.mxu0
      %v2553 = vadd.f32 0.0, %v2552
      %v2554 = vpop.f32.mrf.mxu0
      %2555 = vmatprep.mubr.bf16.mxu0 0
      %2556 = vmatmul.mubr.bf16.gmra.mxu0 %v2490
      %v2557 = vpop.f32.mrf.mxu0
      %v2558 = vadd.f32 0.0, %v2557
      %v2559 = vpop.f32.mrf.mxu0
      %v2560 = vpop.f32.mrf.mxu0
      %v2561 = vadd.f32 0.0, %v2560
      %v2562 = vpop.f32.mrf.mxu0
      %2563 = vmatprep.mubr.bf16.mxu0 0
      %2564 = vmatmul.mubr.bf16.gmra.mxu0 %v2493
      %v2565 = vpop.f32.mrf.mxu0
      %v2566 = vadd.f32 0.0, %v2565
      %v2567 = vpop.f32.mrf.mxu0
      %v2568 = vpop.f32.mrf.mxu0
      %v2569 = vadd.f32 0.0, %v2568
      %v2570 = vpop.f32.mrf.mxu0
      %2571 = vmatprep.mubr.bf16.mxu0 0
      %2572 = vmatmul.mubr.bf16.gmra.mxu0 %v2496
      %v2573 = vpop.f32.mrf.mxu0
      %v2574 = vadd.f32 0.0, %v2573
      %v2575 = vpop.f32.mrf.mxu0
      %v2576 = vpop.f32.mrf.mxu0
      %v2577 = vadd.f32 0.0, %v2576
      %v2578 = vpop.f32.mrf.mxu0
      %2579 = vmatprep.mubr.bf16.mxu0 0
      %2580 = vmatmul.mubr.bf16.gmra.mxu0 %v2499
      %v2581 = vpop.f32.mrf.mxu0
      %v2582 = vadd.f32 0.0, %v2581
      %v2583 = vpop.f32.mrf.mxu0
      %v2584 = vpop.f32.mrf.mxu0
      %v2585 = vadd.f32 0.0, %v2584
      %v2586 = vpop.f32.mrf.mxu0
      %2587 = vmatprep.mubr.bf16.mxu0 0
      %2588 = vmatmul.mubr.bf16.gmra.mxu0 %v2502
      %v2589 = vpop.f32.mrf.mxu0
      %v2590 = vadd.f32 0.0, %v2589
      %v2591 = vpop.f32.mrf.mxu0
      %v2592 = vpop.f32.mrf.mxu0
      %v2593 = vadd.f32 0.0, %v2592
      %v2594 = vpop.f32.mrf.mxu0
      %2595 = vmatprep.mubr.bf16.mxu0 0
      %2596 = vmatmul.mubr.bf16.gmra.mxu0 %v2505
      %v2597 = vpop.f32.mrf.mxu0
      %v2598 = vadd.f32 0.0, %v2597
      %v2599 = vpop.f32.mrf.mxu0
      %v2600 = vpop.f32.mrf.mxu0
      %v2601 = vadd.f32 0.0, %v2600
      %v2602 = vpop.f32.mrf.mxu0
      %2603 = vdwg.mxu0
      %v2604 = vadd.f32 %v2426, %v2542
      %v2605 = vadd.f32 %v2427, %v2545
      %v2606 = vadd.f32 %v2428, %v2550
      %v2607 = vadd.f32 %v2429, %v2553
      %v2608 = vadd.f32 %v2430, %v2558
      %v2609 = vadd.f32 %v2431, %v2561
      %v2610 = vadd.f32 %v2432, %v2566
      %v2611 = vadd.f32 %v2433, %v2569
      %v2612 = vadd.f32 %v2434, %v2574
      %v2613 = vadd.f32 %v2435, %v2577
      %v2614 = vadd.f32 %v2436, %v2582
      %v2615 = vadd.f32 %v2437, %v2585
      %v2616 = vadd.f32 %v2438, %v2590
      %v2617 = vadd.f32 %v2439, %v2593
      %v2618 = vadd.f32 %v2440, %v2598
      %v2619 = vadd.f32 %v2441, %v2601
      %v2620 = vld [vmem:[%s355 + $0x18] sm:$0xf]
      %v2621 = vld [vmem:[%s355 + $0x1c] sm:$0xf]
      %v2622 = vld [vmem:[%s355 + $0x20] sm:$0xf]
      %v2623 = vld [vmem:[%s355 + $0x24] sm:$0xf]
      %v2624 = vld [vmem:[%s355 + $0x28] sm:$0xf]
      %v2625 = vld [vmem:[%s355 + $0x2c] sm:$0xf]
      %v2626 = vld [vmem:[%s355 + $0x30] sm:$0xf]
      %v2627 = vld [vmem:[%s355 + $0x34] sm:$0xf]
      %v2628 = vld [vmem:[%s355 + $0x38] sm:$0xf]
      %v2629 = vld [vmem:[%s355 + $0x3c] sm:$0xf]
      %v2630 = vld [vmem:[%s355 + $0x40] sm:$0xf]
      %v2631 = vld [vmem:[%s355 + $0x44] sm:$0xf]
      %v2632 = vld [vmem:[%s355 + $0x48] sm:$0xf]
      %v2633 = vld [vmem:[%s355 + $0x4c] sm:$0xf]
      %v2634 = vld [vmem:[%s355 + $0x50] sm:$0xf]
      %v2635 = vld [vmem:[%s355 + $0x54] sm:$0xf]
      %v2636 = vld [vmem:[%s355 + $0x58] sm:$0x1]
      %s2637 = scalar_lea.vmem %s363, 256
      %v2638 = vld [vmem:[%s2637] sm:$0xf]
      %v2639 = vld [vmem:[%s2637 + $0x4] sm:$0xf]
      %v2640 = vld [vmem:[%s2637 + $0x8] sm:$0xf]
      %v2641 = vld [vmem:[%s2637 + $0xc] sm:$0xf]
      %v2642 = vld [vmem:[%s2637 + $0x10] sm:$0xf]
      %v2643 = vld [vmem:[%s2637 + $0x14] sm:$0xf]
      %v2644 = vld [vmem:[%s2637 + $0x18] sm:$0xf]
      %v2645 = vld [vmem:[%s2637 + $0x1c] sm:$0xf]
      %v2663 = vunpack.c.l.b16 %v2620
      %v2664 = vunpack.c.l.b16 %v2621
      %v2665 = vunpack.c.l.b16 %v2622
      %v2666 = vunpack.c.l.b16 %v2623
      %v2667 = vunpack.c.l.b16 %v2624
      %v2668 = vunpack.c.l.b16 %v2625
      %v2669 = vunpack.c.l.b16 %v2626
      %v2670 = vunpack.c.l.b16 %v2627
      %v2671 = vunpack.c.l.b16 %v2628
      %v2672 = vunpack.c.l.b16 %v2629
      %v2673 = vunpack.c.l.b16 %v2630
      %v2674 = vunpack.c.l.b16 %v2631
      %v2675 = vunpack.c.l.b16 %v2632
      %v2676 = vunpack.c.l.b16 %v2633
      %v2677 = vunpack.c.l.b16 %v2634
      %v2678 = vunpack.c.l.b16 %v2635
      %v2679 = vunpack.c.l.b16 %v2636
      %v2680 = vpack.c.b16 %v2664, %v2663
      %v2681 = vpack.c.b16 %v2666, %v2665
      %v2682 = vpack.c.b16 %v2668, %v2667
      %v2683 = vpack.c.b16 %v2670, %v2669
      %v2684 = vpack.c.b16 %v2672, %v2671
      %v2685 = vpack.c.b16 %v2674, %v2673
      %v2686 = vpack.c.b16 %v2676, %v2675
      %v2687 = vpack.c.b16 %v2678, %v2677
      %v2688 = vpack.c.b16 %v2679, %v2679
      %v2690 = vshrl.u32 %v2680, 16
      %v2692 = vshll.u32 %v2680, 16
      %v2694 = vrot.slane %v2692, 1
      %v2695 = vor.u32 %v2690, %v2694
      %v2697 = vshll.u32 %v2681, 16
      %v2699 = vrot.slane %v2697, 1
      %v2700 = vsel %vm1116, %v2695, %v2699
      %v2701 = vshrl.u32 %v2681, 16
      %v2703 = vor.u32 %v2701, %v2699
      %v2705 = vshll.u32 %v2682, 16
      %v2707 = vrot.slane %v2705, 1
      %v2708 = vsel %vm1116, %v2703, %v2707
      %v2709 = vshrl.u32 %v2682, 16
      %v2711 = vor.u32 %v2709, %v2707
      %v2713 = vshll.u32 %v2683, 16
      %v2715 = vrot.slane %v2713, 1
      %v2716 = vsel %vm1116, %v2711, %v2715
      %v2717 = vshrl.u32 %v2683, 16
      %v2719 = vor.u32 %v2717, %v2715
      %v2721 = vshll.u32 %v2684, 16
      %v2723 = vrot.slane %v2721, 1
      %v2724 = vsel %vm1116, %v2719, %v2723
      %v2725 = vshrl.u32 %v2684, 16
      %v2727 = vor.u32 %v2725, %v2723
      %v2729 = vshll.u32 %v2685, 16
      %v2731 = vrot.slane %v2729, 1
      %v2732 = vsel %vm1116, %v2727, %v2731
      %v2733 = vshrl.u32 %v2685, 16
      %v2735 = vor.u32 %v2733, %v2731
      %v2737 = vshll.u32 %v2686, 16
      %v2739 = vrot.slane %v2737, 1
      %v2740 = vsel %vm1116, %v2735, %v2739
      %v2741 = vshrl.u32 %v2686, 16
      %v2743 = vor.u32 %v2741, %v2739
      %v2745 = vshll.u32 %v2687, 16
      %v2747 = vrot.slane %v2745, 1
      %v2748 = vsel %vm1116, %v2743, %v2747
      %v2749 = vshrl.u32 %v2687, 16
      %v2751 = vor.u32 %v2749, %v2747
      %v2753 = vshll.u32 %v2688, 16
      %v2755 = vrot.slane %v2753, 1
      %v2756 = vsel %vm1116, %v2751, %v2755
      %v2765 = vunpack.c.l.b16 %v2638
      %v2766 = vunpack.c.l.b16 %v2639
      %v2767 = vunpack.c.l.b16 %v2640
      %v2768 = vunpack.c.l.b16 %v2641
      %v2769 = vunpack.c.l.b16 %v2642
      %v2770 = vunpack.c.l.b16 %v2643
      %v2771 = vunpack.c.l.b16 %v2644
      %v2772 = vunpack.c.l.b16 %v2645
      %v2773 = vpack.c.b16 %v2766, %v2765
      %v2774 = vpack.c.b16 %v2768, %v2767
      %v2775 = vpack.c.b16 %v2770, %v2769
      %v2776 = vpack.c.b16 %v2772, %v2771
      %v2782 = vsel %vm688, %v2700, 0
      %v2785 = vsel %vm688, %v2708, 0
      %v2788 = vsel %vm688, %v2716, 0
      %v2791 = vsel %vm688, %v2724, 0
      %v2794 = vsel %vm688, %v2732, 0
      %v2797 = vsel %vm688, %v2740, 0
      %v2800 = vsel %vm688, %v2748, 0
      %v2803 = vsel %vm688, %v2756, 0
      %2805 = vmatprep.subr.bf16.mxu0 0
      %2806 = vmatpush1.bf16.msra.mxu0 0
      %2807 = vmatprep.subr.bf16.mxu0 0
      %2808 = vmatpush1.bf16.msra.mxu0 0
      %2809 = vmatprep.subr.bf16.mxu0 0
      %2810 = vmatpush1.bf16.msra.mxu0 0
      %2811 = vmatprep.subr.bf16.mxu0 0
      %2812 = vmatpush1.bf16.msra.mxu0 0
      %2813 = vmatprep.subr.bf16.mxu0 0
      %2814 = vmatpush1.bf16.msra.mxu0 %v2776
      %2815 = vmatprep.subr.bf16.mxu0 0
      %2816 = vmatpush1.bf16.msra.mxu0 %v2775
      %2817 = vmatprep.subr.bf16.mxu0 0
      %2818 = vmatpush1.bf16.msra.mxu0 %v2774
      %2819 = vmatprep.subr.bf16.mxu0 0
      %2820 = vmatpush1.bf16.msra.mxu0 %v2773
      %2821 = vmatprep.subr.bf16.mxu0 0
      %2822 = vmatpush2.bf16.msra.mxu0 0
      %2823 = vmatprep.subr.bf16.mxu0 0
      %2824 = vmatpush2.bf16.msra.mxu0 0
      %2825 = vmatprep.subr.bf16.mxu0 0
      %2826 = vmatpush2.bf16.msra.mxu0 0
      %2827 = vmatprep.subr.bf16.mxu0 0
      %2828 = vmatpush2.bf16.msra.mxu0 0
      %2829 = vmatprep.subr.bf16.mxu0 0
      %2830 = vmatpush2.bf16.msra.mxu0 0
      %2831 = vmatprep.subr.bf16.mxu0 0
      %2832 = vmatpush2.bf16.msra.mxu0 0
      %2833 = vmatprep.subr.bf16.mxu0 0
      %2834 = vmatpush2.bf16.msra.mxu0 0
      %2835 = vmatprep.subr.bf16.mxu0 0
      %2836 = vmatpush2.bf16.msra.mxu0 0
      %2837 = vmatprep.mubr.bf16.mxu0 0
      %2838 = vmatmul.mubr.bf16.gmra.mxu0 %v2782
      %v2839 = vpop.f32.mrf.mxu0
      %v2840 = vadd.f32 0.0, %v2839
      %v2841 = vpop.f32.mrf.mxu0
      %v2842 = vpop.f32.mrf.mxu0
      %v2843 = vadd.f32 0.0, %v2842
      %v2844 = vpop.f32.mrf.mxu0
      %2845 = vmatprep.mubr.bf16.mxu0 0
      %2846 = vmatmul.mubr.bf16.gmra.mxu0 %v2785
      %v2847 = vpop.f32.mrf.mxu0
      %v2848 = vadd.f32 0.0, %v2847
      %v2849 = vpop.f32.mrf.mxu0
      %v2850 = vpop.f32.mrf.mxu0
      %v2851 = vadd.f32 0.0, %v2850
      %v2852 = vpop.f32.mrf.mxu0
      %2853 = vmatprep.mubr.bf16.mxu0 0
      %2854 = vmatmul.mubr.bf16.gmra.mxu0 %v2788
      %v2855 = vpop.f32.mrf.mxu0
      %v2856 = vadd.f32 0.0, %v2855
      %v2857 = vpop.f32.mrf.mxu0
      %v2858 = vpop.f32.mrf.mxu0
      %v2859 = vadd.f32 0.0, %v2858
      %v2860 = vpop.f32.mrf.mxu0
      %2861 = vmatprep.mubr.bf16.mxu0 0
      %2862 = vmatmul.mubr.bf16.gmra.mxu0 %v2791
      %v2863 = vpop.f32.mrf.mxu0
      %v2864 = vadd.f32 0.0, %v2863
      %v2865 = vpop.f32.mrf.mxu0
      %v2866 = vpop.f32.mrf.mxu0
      %v2867 = vadd.f32 0.0, %v2866
      %v2868 = vpop.f32.mrf.mxu0
      %2869 = vmatprep.mubr.bf16.mxu0 0
      %2870 = vmatmul.mubr.bf16.gmra.mxu0 %v2794
      %v2871 = vpop.f32.mrf.mxu0
      %v2872 = vadd.f32 0.0, %v2871
      %v2873 = vpop.f32.mrf.mxu0
      %v2874 = vpop.f32.mrf.mxu0
      %v2875 = vadd.f32 0.0, %v2874
      %v2876 = vpop.f32.mrf.mxu0
      %2877 = vmatprep.mubr.bf16.mxu0 0
      %2878 = vmatmul.mubr.bf16.gmra.mxu0 %v2797
      %v2879 = vpop.f32.mrf.mxu0
      %v2880 = vadd.f32 0.0, %v2879
      %v2881 = vpop.f32.mrf.mxu0
      %v2882 = vpop.f32.mrf.mxu0
      %v2883 = vadd.f32 0.0, %v2882
      %v2884 = vpop.f32.mrf.mxu0
      %2885 = vmatprep.mubr.bf16.mxu0 0
      %2886 = vmatmul.mubr.bf16.gmra.mxu0 %v2800
      %v2887 = vpop.f32.mrf.mxu0
      %v2888 = vadd.f32 0.0, %v2887
      %v2889 = vpop.f32.mrf.mxu0
      %v2890 = vpop.f32.mrf.mxu0
      %v2891 = vadd.f32 0.0, %v2890
      %v2892 = vpop.f32.mrf.mxu0
      %2893 = vmatprep.mubr.bf16.mxu0 0
      %2894 = vmatmul.mubr.bf16.gmra.mxu0 %v2803
      %v2895 = vpop.f32.mrf.mxu0
      %v2896 = vadd.f32 0.0, %v2895
      %v2897 = vpop.f32.mrf.mxu0
      %v2898 = vpop.f32.mrf.mxu0
      %v2899 = vadd.f32 0.0, %v2898
      %v2900 = vpop.f32.mrf.mxu0
      %2901 = vdwg.mxu0
      %v2902 = vadd.f32 %v2604, %v2840
      %v2903 = vadd.f32 %v2605, %v2843
      %v2904 = vadd.f32 %v2606, %v2848
      %v2905 = vadd.f32 %v2607, %v2851
      %v2906 = vadd.f32 %v2608, %v2856
      %v2907 = vadd.f32 %v2609, %v2859
      %v2908 = vadd.f32 %v2610, %v2864
      %v2909 = vadd.f32 %v2611, %v2867
      %v2910 = vadd.f32 %v2612, %v2872
      %v2911 = vadd.f32 %v2613, %v2875
      %v2912 = vadd.f32 %v2614, %v2880
      %v2913 = vadd.f32 %v2615, %v2883
      %v2914 = vadd.f32 %v2616, %v2888
      %v2915 = vadd.f32 %v2617, %v2891
      %v2916 = vadd.f32 %v2618, %v2896
      %v2917 = vadd.f32 %v2619, %v2899
      %v2918 = vld [vmem:[%s367] sm:$0x1]
      %v2920 = vlaneseq
      %v2921 = vshrl.u32 %v2920, 7
      %v2922 = vsub.s32 0, %v2921
      %v2923 = vrot.slane %v2918, %v2922
      %v2925 = vadd.f32 %v2902, %v2923
      %v2926 = vadd.f32 %v2903, %v2923
      %v2927 = vadd.f32 %v2904, %v2923
      %v2928 = vadd.f32 %v2905, %v2923
      %v2929 = vadd.f32 %v2906, %v2923
      %v2930 = vadd.f32 %v2907, %v2923
      %v2931 = vadd.f32 %v2908, %v2923
      %v2932 = vadd.f32 %v2909, %v2923
      %v2933 = vadd.f32 %v2910, %v2923
      %v2934 = vadd.f32 %v2911, %v2923
      %v2935 = vadd.f32 %v2912, %v2923
      %v2936 = vadd.f32 %v2913, %v2923
      %v2937 = vadd.f32 %v2914, %v2923
      %v2938 = vadd.f32 %v2915, %v2923
      %v2939 = vadd.f32 %v2916, %v2923
      %v2940 = vadd.f32 %v2917, %v2923
      %v2941 = vadd.f32 %v2925, %v528
      %v2942 = vadd.f32 %v2926, %v531
      %v2943 = vadd.f32 %v2927, %v536
      %v2944 = vadd.f32 %v2928, %v539
      %v2945 = vadd.f32 %v2929, %v544
      %v2946 = vadd.f32 %v2930, %v547
      %v2947 = vadd.f32 %v2931, %v552
      %v2948 = vadd.f32 %v2932, %v555
      %v2949 = vadd.f32 %v2933, %v560
      %v2950 = vadd.f32 %v2934, %v563
      %v2951 = vadd.f32 %v2935, %v568
      %v2952 = vadd.f32 %v2936, %v571
      %v2953 = vadd.f32 %v2937, %v576
      %v2954 = vadd.f32 %v2938, %v579
      %v2955 = vadd.f32 %v2939, %v584
      %v2956 = vadd.f32 %v2940, %v587
      %2957 = vst.msk [vmem:[%s387] sm:$0xff] %vm688, %v2941
      %2958 = vst.msk [vmem:[%s387 + $0x8] sm:$0xff] %vm688, %v2942
      %2959 = vst.msk [vmem:[%s387 + $0x10] sm:$0xff] %vm688, %v2943
      %2960 = vst.msk [vmem:[%s387 + $0x18] sm:$0xff] %vm688, %v2944
      %2961 = vst.msk [vmem:[%s387 + $0x20] sm:$0xff] %vm688, %v2945
      %2962 = vst.msk [vmem:[%s387 + $0x28] sm:$0xff] %vm688, %v2946
      %2963 = vst.msk [vmem:[%s387 + $0x30] sm:$0xff] %vm688, %v2947
      %2964 = vst.msk [vmem:[%s387 + $0x38] sm:$0xff] %vm688, %v2948
      %2965 = vst.msk [vmem:[%s387 + $0x40] sm:$0xff] %vm688, %v2949
      %2966 = vst.msk [vmem:[%s387 + $0x48] sm:$0xff] %vm688, %v2950
      %2967 = vst.msk [vmem:[%s387 + $0x50] sm:$0xff] %vm688, %v2951
      %2968 = vst.msk [vmem:[%s387 + $0x58] sm:$0xff] %vm688, %v2952
      %2969 = vst.msk [vmem:[%s387 + $0x60] sm:$0xff] %vm688, %v2953
      %2970 = vst.msk [vmem:[%s387 + $0x68] sm:$0xff] %vm688, %v2954
      %2971 = vst.msk [vmem:[%s387 + $0x70] sm:$0xff] %vm688, %v2955
      %2972 = vst.msk [vmem:[%s387 + $0x78] sm:$0xff] %vm688, %v2956
      %p2973 = scmp.lt.s32.totalorder %s22, 1
      %s2974 = scalar_select %p2973, %s22, 1
      %p2975 = scmp.lt.s32.totalorder %s23, 0
      %s2976 = scalar_select %p2975, %s23, 0
      %s2977 = smul.addr %s2974, 16
      %s2978 = sadd.s32 %s2976, %s2977
      %s2979 = smul.addr %s2978, 8
      %s2980 = scalar_lea.vmem %s6, %s2979
      // Predicated region
      $region45: #{resnet_forward.7} parent=43 // pred_check
        %p2981 = pneg %p216
      $region46: #{resnet_forward.7} parent=43 // pred_check_branch
        %2983 = sbr.rel (%p2981) target = $region48
      $region47: #{resnet_forward.7} parent=43 // pred_region
        _
      $region48: #{resnet_forward.7} parent=43 // pred_fallthru
        _
    $region44: #{resnet_forward.7} parent=5 // pred_fallthru
      _
    %p2984 = scmp.le.s32.totalorder 2, %s12
    // Predicated region
    $region49: #{resnet_forward.7} parent=5 // pred_check
      %p2985 = pneg %p2984
    $region50: #{resnet_forward.7} parent=5 // pred_check_branch
      %2987 = sbr.rel (%p2985) target = $region52
    $region51: #{resnet_forward.7} parent=5 // pred_region
      %s2988 = ssub.s32 %s12, 2
      // Predicated region
      $region53: #{resnet_forward.7} parent=51 // pred_check
        %p2989 = pneg %p222
      $region54: #{resnet_forward.7} parent=51 // pred_check_branch
        %2991 = sbr.rel (%p2989) target = $region56
      $region55: #{resnet_forward.7} parent=51 // pred_region
        %p2992 = scmp.lt.s32.totalorder %s25, 1
        %s2993 = scalar_select %p2992, %s25, 1
        %p2994 = scmp.lt.s32.totalorder %s26, 0
        %s2995 = scalar_select %p2994, %s26, 0
        %s2996 = smul.addr %s2993, 16
        %s2997 = sadd.s32 %s2995, %s2996
        %s2998 = smul.addr %s2997, 8
        %s2999 = scalar_lea.vmem %s6, %s2998
      $region56: #{resnet_forward.7} parent=51 // pred_fallthru
        _
    $region52: #{resnet_forward.7} parent=5 // pred_fallthru
      _
  $region6: #{resnet_forward.7} parent=0 // loop_footer
    %s16 = sadd.s32 1, %s12
  $region7: #{resnet_forward.7} parent=0 // loop_footer_branch
    %11 = sbr.rel target = $region3
  $region8: #{resnet_forward.7} parent=0 // loop_exit
    _

</llo_original>
